<compile_context>
chip_gen: v6e
topology: v6e:2x2x1
jax: 0.10.0
libtpu: 0.0.40
codegen_flags: <defaults>
</compile_context>

<pallas_src>
import functools

import jax
import jax.numpy as jnp
from jax.experimental import pallas as pl
from jax.experimental.pallas import tpu as pltpu

LEAK = 0.2
EPS = 1e-5            # nn.InstanceNorm2d default eps (affine=False, biased variance)
USE_BF16_GEMM = True  # bf16 MXU inputs, f32 accumulation + f32 epilogue


# ----------------------------- Pallas kernels ------------------------------ #

def _conv_gemm_kernel(x_ref, w_ref, b_ref, o_ref, *, s_valid, epilogue):
    """One batch's im2col GEMM with fused bias + (LeakyReLU | InstanceNorm+LeakyReLU).

    x_ref: (s_pad, K) patches of one batch (pad rows are zero)
    w_ref: (K, N) weight matrix
    b_ref: (1, N) f32 bias
    o_ref: (s_pad, N) f32 output
    """
    y = jnp.dot(x_ref[...], w_ref[...], preferred_element_type=jnp.float32)
    y = y + b_ref[...]

    if epilogue == "lrelu":
        y = jnp.maximum(y, LEAK * y)
    elif epilogue == "in_lrelu":
        s_pad = y.shape[0]
        if s_valid == s_pad:
            mean = jnp.mean(y, axis=0, keepdims=True)
            var = jnp.mean((y - mean) ** 2, axis=0, keepdims=True)
        else:
            # Pad rows (= bias only) must not contaminate the per-(b, c) stats.
            rows = jax.lax.broadcasted_iota(jnp.int32, y.shape, 0)
            valid = (rows < s_valid).astype(jnp.float32)
            inv_n = 1.0 / float(s_valid)
            mean = jnp.sum(y * valid, axis=0, keepdims=True) * inv_n
            var = jnp.sum((valid * (y - mean)) ** 2, axis=0, keepdims=True) * inv_n
        y = (y - mean) * jax.lax.rsqrt(var + EPS)
        y = jnp.maximum(y, LEAK * y)

    o_ref[...] = y.astype(o_ref.dtype)


def conv_gemm(patches, wmat, bias, *, s_pad, s_valid, epilogue):
    """patches:(B*s_pad, K) @ wmat:(K, N) + bias, fused epilogue, grid over batch."""
    M, K = patches.shape
    N = wmat.shape[1]
    B = M // s_pad
    kernel = functools.partial(_conv_gemm_kernel, s_valid=s_valid, epilogue=epilogue)
    return pl.pallas_call(
        kernel,
        out_shape=jax.ShapeDtypeStruct((M, N), jnp.float32),
        grid=(B,),
        in_specs=[
            pl.BlockSpec((s_pad, K), lambda b: (b, 0)),
            pl.BlockSpec((K, N), lambda b: (0, 0)),
            pl.BlockSpec((1, N), lambda b: (0, 0)),
        ],
        out_specs=pl.BlockSpec((s_pad, N), lambda b: (b, 0)),
        compiler_params=pltpu.CompilerParams(
            dimension_semantics=("parallel",),
        ),
    )(patches, wmat, bias.reshape(1, N).astype(jnp.float32))


def _final_conv_pool_kernel(p_ref, w_ref, b_ref, o_ref):
    """Fused final Conv2d(512->1) + global average pool (pure VPU/XLU, no MXU).

    out[b] = mean_p(patch[b, p, :] @ w + bias) = (mean_p patch[b, p, :]) . w + bias
    """
    p = p_ref[...].astype(jnp.float32)            # (B, spp, K)
    w = w_ref[...]                                # (1, K)
    m = jnp.mean(p, axis=1)                       # (B, K)   spatial mean (sublane reduce)
    y = jnp.sum(m * w, axis=-1, keepdims=True)    # (B, 1)   lane reduce
    o_ref[...] = y + b_ref[...]


def final_conv_pool(patches, wrow, bias):
    """patches:(B, spp, K), wrow:(1, K), bias scalar -> (B, 1)."""
    B, spp, K = patches.shape
    return pl.pallas_call(
        _final_conv_pool_kernel,
        out_shape=jax.ShapeDtypeStruct((B, 1), jnp.float32),
        grid=(1,),
        in_specs=[
            pl.BlockSpec((B, spp, K), lambda i: (0, 0, 0)),
            pl.BlockSpec((1, K), lambda i: (0, 0)),
            pl.BlockSpec((1, 1), lambda i: (0, 0)),
        ],
        out_specs=pl.BlockSpec((B, 1), lambda i: (0, 0)),
    )(patches.astype(jnp.float32), wrow, bias.reshape(1, 1).astype(jnp.float32))


# ------------------------------ JAX glue ----------------------------------- #
# TODO(synk): im2col patch extraction / zero-padding stays as plain XLA ops; at
# production resolutions this should become an in-kernel K-axis accumulation.

def im2col_nhwc(x, k, stride, pad):
    """x:(B,H,W,C) -> (B, Ho*Wo, k*k*C) patches, column order (ki, kj, Cin)."""
    B, H, W, C = x.shape
    xp = jnp.pad(x, ((0, 0), (pad, pad), (pad, pad), (0, 0)))
    Hp, Wp = H + 2 * pad, W + 2 * pad
    Ho = (Hp - k) // stride + 1
    Wo = (Wp - k) // stride + 1
    cols = []
    for i in range(k):
        for j in range(k):
            cols.append(xp[:, i:i + stride * Ho:stride, j:j + stride * Wo:stride, :])
    p = jnp.stack(cols, axis=3)                     # (B, Ho, Wo, k*k, C)
    p = p.reshape(B, Ho * Wo, k * k * C)
    return p, Ho, Wo


def conv_layer(x_nhwc, weight, bias, *, stride, epilogue):
    """PyTorch-semantics Conv2d (weight (Cout,Cin,k,k)) on NHWC activations."""
    B, H, W, Cin = x_nhwc.shape
    Cout, _, k, _ = weight.shape
    patches, Ho, Wo = im2col_nhwc(x_nhwc, k, stride, 1)
    S = Ho * Wo
    s_pad = -(-S // 8) * 8                          # sublane-align rows per batch
    if s_pad != S:
        patches = jnp.pad(patches, ((0, 0), (0, s_pad - S), (0, 0)))
    K = Cin * k * k
    patches = patches.reshape(B * s_pad, K)
    wmat = weight.transpose(2, 3, 1, 0).reshape(K, Cout)   # matches (ki, kj, Cin) cols
    if USE_BF16_GEMM:
        patches = patches.astype(jnp.bfloat16)
        wmat = wmat.astype(jnp.bfloat16)
    y = conv_gemm(patches, wmat, bias, s_pad=s_pad, s_valid=S, epilogue=epilogue)
    y = y.reshape(B, s_pad, Cout)
    if s_pad != S:
        y = y[:, :S, :]
    return y.reshape(B, Ho, Wo, Cout)


def final_layer(x_nhwc, weight, bias):
    """Final Conv2d(512->1, k4 s1 p1) + avg_pool over the full spatial extent."""
    B, H, W, Cin = x_nhwc.shape
    Cout, _, k, _ = weight.shape                    # Cout == 1
    patches, Ho, Wo = im2col_nhwc(x_nhwc, k, 1, 1)  # (B, Ho*Wo, K)
    K = Cin * k * k
    wrow = weight.transpose(2, 3, 1, 0).reshape(1, K).astype(jnp.float32)
    return final_conv_pool(patches, wrow, bias)     # (B, 1)


def discriminator2d_forward(x_nchw, params):
    x = jnp.transpose(x_nchw, (0, 2, 3, 1))         # single NCHW -> NHWC conversion

    # Conv(input_nc -> 64, k4 s2 p1) + LeakyReLU(0.2)
    x = conv_layer(x, params["w1"], params["b1"], stride=2, epilogue="lrelu")
    # Conv + InstanceNorm2d + LeakyReLU(0.2) blocks (norm fused into GEMM epilogue)
    x = conv_layer(x, params["w2"], params["b2"], stride=2, epilogue="in_lrelu")
    x = conv_layer(x, params["w3"], params["b3"], stride=2, epilogue="in_lrelu")
    x = conv_layer(x, params["w4"], params["b4"], stride=1, epilogue="in_lrelu")
    # Final Conv(512 -> 1, k4 s1 p1) + global avg pool, fused (then .view(B, -1))
    return final_layer(x, params["w5"], params["b5"])


def init_params(key, input_nc, base_nc=64):
    ks = jax.random.split(key, 10)

    def conv_init(kw, kb, cout, cin, k=4, scale=0.02):
        w = scale * jax.random.normal(kw, (cout, cin, k, k), dtype=jnp.float32)
        b = scale * jax.random.normal(kb, (cout,), dtype=jnp.float32)
        return w, b

    p = {}
    p["w1"], p["b1"] = conv_init(ks[0], ks[1], base_nc, input_nc)
    p["w2"], p["b2"] = conv_init(ks[2], ks[3], base_nc * 2, base_nc)
    p["w3"], p["b3"] = conv_init(ks[4], ks[5], base_nc * 4, base_nc * 2)
    p["w4"], p["b4"] = conv_init(ks[6], ks[7], base_nc * 8, base_nc * 4)
    p["w5"], p["b5"] = conv_init(ks[8], ks[9], 1, base_nc * 8)
    return p


# --------------------------------- main ------------------------------------ #

if __name__ == "__main__":
    key = jax.random.PRNGKey(0)
    k_param, k_x = jax.random.split(key)

    input_nc = 3
    B, H, W = 2, 32, 32          # smallest power-of-2 input the stride stack supports
    params = init_params(k_param, input_nc)
    x = jax.random.normal(k_x, (B, input_nc, H, W), dtype=jnp.float32)

    fwd = jax.jit(discriminator2d_forward)
    out = fwd(x, params)
    jax.block_until_ready(out)

    assert out.shape == (B, 1), out.shape
    assert out.dtype == jnp.float32
    assert bool(jnp.all(jnp.isfinite(out)))
    print("KERNEL_OK")
</pallas_src>

<mosaic_0001>
module attributes {stable_mosaic.version = 11 : i64} {
  func.func @_conv_gemm_kernel(%arg0: i32, %arg1: memref<256x48xbf16, #tpu.memory_space<vmem>>, %arg2: memref<48x64xbf16, #tpu.memory_space<vmem>>, %arg3: memref<1x64xf32, #tpu.memory_space<vmem>>, %arg4: memref<256x64xf32, #tpu.memory_space<vmem>>) attributes {dimension_semantics = [#tpu.dimension_semantics<parallel>], iteration_bounds = array<i64: 2>, scalar_prefetch = 0 : i64, scratch_operands = 0 : i64, tpu.core_type = #tpu.core_type<tc>, window_params = [{transform_indices = @transform_0, window_bounds = array<i64: 256, 48>}, {pipeline_mode = #tpu.pipeline_mode<synchronous>, transform_indices = @transform_1, window_bounds = array<i64: 48, 64>}, {pipeline_mode = #tpu.pipeline_mode<synchronous>, transform_indices = @transform_2, window_bounds = array<i64: 1, 64>}, {transform_indices = @transform_3, window_bounds = array<i64: 256, 64>}]} {
    %c0 = arith.constant 0 : index
    %c0_0 = arith.constant 0 : index
    %0 = vector.load %arg1[%c0, %c0_0] : memref<256x48xbf16, #tpu.memory_space<vmem>>, vector<256x48xbf16>
    %c0_1 = arith.constant 0 : index
    %c0_2 = arith.constant 0 : index
    %1 = vector.load %arg2[%c0_1, %c0_2] : memref<48x64xbf16, #tpu.memory_space<vmem>>, vector<48x64xbf16>
    %cst = arith.constant dense<0.000000e+00> : vector<256x64xf32>
    %2 = tpu.matmul %0, %1, %cst {dimension_numbers = #tpu.dot_dimension_numbers<[1], [0], [0], [1], [0, 0, 1, 1], [], []>} : vector<256x48xbf16>, vector<48x64xbf16>, vector<256x64xf32> -> vector<256x64xf32>
    %c0_3 = arith.constant 0 : index
    %c0_4 = arith.constant 0 : index
    %3 = vector.load %arg3[%c0_3, %c0_4] : memref<1x64xf32, #tpu.memory_space<vmem>>, vector<1x64xf32>
    %4 = vector.broadcast %3 : vector<1x64xf32> to vector<256x64xf32>
    %5 = arith.addf %2, %4 : vector<256x64xf32>
    %cst_5 = arith.constant 2.000000e-01 : f32
    %6 = vector.broadcast %cst_5 : f32 to vector<256x64xf32>
    %7 = arith.mulf %6, %5 : vector<256x64xf32>
    %8 = arith.maximumf %5, %7 : vector<256x64xf32>
    %c0_6 = arith.constant 0 : index
    %c0_7 = arith.constant 0 : index
    %9 = vector.load %arg4[%c0_6, %c0_7] : memref<256x64xf32, #tpu.memory_space<vmem>>, vector<256x64xf32>
    tpu.vector_store %arg4[%c0_6, %c0_7], %8 {strides = array<i32>} : memref<256x64xf32, #tpu.memory_space<vmem>>, vector<256x64xf32>,
    return
  }
  func.func @transform_0(%arg0: i32) -> (i32, i32) {
    %c0_i32 = arith.constant 0 : i32
    %c0_i32_0 = arith.constant 0 : i32
    return %arg0, %c0_i32 : i32, i32
  }
  func.func @transform_1(%arg0: i32) -> (i32, i32) {
    %c0_i32 = arith.constant 0 : i32
    %c0_i32_0 = arith.constant 0 : i32
    %c0_i32_1 = arith.constant 0 : i32
    return %c0_i32, %c0_i32_0 : i32, i32
  }
  func.func @transform_2(%arg0: i32) -> (i32, i32) {
    %c0_i32 = arith.constant 0 : i32
    %c0_i32_0 = arith.constant 0 : i32
    %c0_i32_1 = arith.constant 0 : i32
    return %c0_i32, %c0_i32_0 : i32, i32
  }
  func.func @transform_3(%arg0: i32) -> (i32, i32) {
    %c0_i32 = arith.constant 0 : i32
    %c0_i32_0 = arith.constant 0 : i32
    return %arg0, %c0_i32 : i32, i32
  }
}

module attributes {stable_mosaic.version = 11 : i64} {
  func.func @_conv_gemm_kernel(%arg0: i32, %arg1: memref<64x1024xbf16, #tpu.memory_space<vmem>>, %arg2: memref<1024x128xbf16, #tpu.memory_space<vmem>>, %arg3: memref<1x128xf32, #tpu.memory_space<vmem>>, %arg4: memref<64x128xf32, #tpu.memory_space<vmem>>) attributes {dimension_semantics = [#tpu.dimension_semantics<parallel>], iteration_bounds = array<i64: 2>, scalar_prefetch = 0 : i64, scratch_operands = 0 : i64, tpu.core_type = #tpu.core_type<tc>, window_params = [{transform_indices = @transform_0, window_bounds = array<i64: 64, 1024>}, {pipeline_mode = #tpu.pipeline_mode<synchronous>, transform_indices = @transform_1, window_bounds = array<i64: 1024, 128>}, {pipeline_mode = #tpu.pipeline_mode<synchronous>, transform_indices = @transform_2, window_bounds = array<i64: 1, 128>}, {transform_indices = @transform_3, window_bounds = array<i64: 64, 128>}]} {
    %c0 = arith.constant 0 : index
    %c0_0 = arith.constant 0 : index
    %0 = vector.load %arg1[%c0, %c0_0] : memref<64x1024xbf16, #tpu.memory_space<vmem>>, vector<64x1024xbf16>
    %c0_1 = arith.constant 0 : index
    %c0_2 = arith.constant 0 : index
    %1 = vector.load %arg2[%c0_1, %c0_2] : memref<1024x128xbf16, #tpu.memory_space<vmem>>, vector<1024x128xbf16>
    %cst = arith.constant dense<0.000000e+00> : vector<64x128xf32>
    %2 = tpu.matmul %0, %1, %cst {dimension_numbers = #tpu.dot_dimension_numbers<[1], [0], [0], [1], [0, 0, 1, 1], [], []>} : vector<64x1024xbf16>, vector<1024x128xbf16>, vector<64x128xf32> -> vector<64x128xf32>
    %c0_3 = arith.constant 0 : index
    %c0_4 = arith.constant 0 : index
    %3 = vector.load %arg3[%c0_3, %c0_4] : memref<1x128xf32, #tpu.memory_space<vmem>>, vector<1x128xf32>
    %4 = vector.broadcast %3 : vector<1x128xf32> to vector<64x128xf32>
    %5 = arith.addf %2, %4 : vector<64x128xf32>
    %cst_5 = arith.constant dense<0.000000e+00> : vector<128xf32>
    %6 = vector.multi_reduction <add>, %5, %cst_5 [0] : vector<64x128xf32> to vector<128xf32>
    %7 = vector.shape_cast %6 : vector<128xf32> to vector<1x128xf32>
    %cst_6 = arith.constant 6.400000e+01 : f32
    %8 = vector.broadcast %cst_6 : f32 to vector<1x128xf32>
    %9 = arith.divf %7, %8 : vector<1x128xf32>
    %10 = vector.broadcast %9 : vector<1x128xf32> to vector<64x128xf32>
    %11 = arith.subf %5, %10 : vector<64x128xf32>
    %12 = arith.mulf %11, %11 : vector<64x128xf32>
    %cst_7 = arith.constant dense<0.000000e+00> : vector<128xf32>
    %13 = vector.multi_reduction <add>, %12, %cst_7 [0] : vector<64x128xf32> to vector<128xf32>
    %14 = vector.shape_cast %13 : vector<128xf32> to vector<1x128xf32>
    %cst_8 = arith.constant 6.400000e+01 : f32
    %15 = vector.broadcast %cst_8 : f32 to vector<1x128xf32>
    %16 = arith.divf %14, %15 : vector<1x128xf32>
    %17 = vector.broadcast %9 : vector<1x128xf32> to vector<64x128xf32>
    %18 = arith.subf %5, %17 : vector<64x128xf32>
    %cst_9 = arith.constant 9.99999974E-6 : f32
    %19 = vector.broadcast %cst_9 : f32 to vector<1x128xf32>
    %20 = arith.addf %16, %19 : vector<1x128xf32>
    %21 = math.rsqrt %20 : vector<1x128xf32>
    %22 = vector.broadcast %21 : vector<1x128xf32> to vector<64x128xf32>
    %23 = arith.mulf %18, %22 : vector<64x128xf32>
    %cst_10 = arith.constant 2.000000e-01 : f32
    %24 = vector.broadcast %cst_10 : f32 to vector<64x128xf32>
    %25 = arith.mulf %24, %23 : vector<64x128xf32>
    %26 = arith.maximumf %23, %25 : vector<64x128xf32>
    %c0_11 = arith.constant 0 : index
    %c0_12 = arith.constant 0 : index
    %27 = vector.load %arg4[%c0_11, %c0_12] : memref<64x128xf32, #tpu.memory_space<vmem>>, vector<64x128xf32>
    tpu.vector_store %arg4[%c0_11, %c0_12], %26 {strides = array<i32>} : memref<64x128xf32, #tpu.memory_space<vmem>>, vector<64x128xf32>,
    return
  }
  func.func @transform_0(%arg0: i32) -> (i32, i32) {
    %c0_i32 = arith.constant 0 : i32
    %c0_i32_0 = arith.constant 0 : i32
    return %arg0, %c0_i32 : i32, i32
  }
  func.func @transform_1(%arg0: i32) -> (i32, i32) {
    %c0_i32 = arith.constant 0 : i32
    %c0_i32_0 = arith.constant 0 : i32
    %c0_i32_1 = arith.constant 0 : i32
    return %c0_i32, %c0_i32_0 : i32, i32
  }
  func.func @transform_2(%arg0: i32) -> (i32, i32) {
    %c0_i32 = arith.constant 0 : i32
    %c0_i32_0 = arith.constant 0 : i32
    %c0_i32_1 = arith.constant 0 : i32
    return %c0_i32, %c0_i32_0 : i32, i32
  }
  func.func @transform_3(%arg0: i32) -> (i32, i32) {
    %c0_i32 = arith.constant 0 : i32
    %c0_i32_0 = arith.constant 0 : i32
    return %arg0, %c0_i32 : i32, i32
  }
}

module attributes {stable_mosaic.version = 11 : i64} {
  func.func @_conv_gemm_kernel(%arg0: i32, %arg1: memref<16x2048xbf16, #tpu.memory_space<vmem>>, %arg2: memref<2048x256xbf16, #tpu.memory_space<vmem>>, %arg3: memref<1x256xf32, #tpu.memory_space<vmem>>, %arg4: memref<16x256xf32, #tpu.memory_space<vmem>>) attributes {dimension_semantics = [#tpu.dimension_semantics<parallel>], iteration_bounds = array<i64: 2>, scalar_prefetch = 0 : i64, scratch_operands = 0 : i64, tpu.core_type = #tpu.core_type<tc>, window_params = [{transform_indices = @transform_0, window_bounds = array<i64: 16, 2048>}, {pipeline_mode = #tpu.pipeline_mode<synchronous>, transform_indices = @transform_1, window_bounds = array<i64: 2048, 256>}, {pipeline_mode = #tpu.pipeline_mode<synchronous>, transform_indices = @transform_2, window_bounds = array<i64: 1, 256>}, {transform_indices = @transform_3, window_bounds = array<i64: 16, 256>}]} {
    %c0 = arith.constant 0 : index
    %c0_0 = arith.constant 0 : index
    %0 = vector.load %arg1[%c0, %c0_0] : memref<16x2048xbf16, #tpu.memory_space<vmem>>, vector<16x2048xbf16>
    %c0_1 = arith.constant 0 : index
    %c0_2 = arith.constant 0 : index
    %1 = vector.load %arg2[%c0_1, %c0_2] : memref<2048x256xbf16, #tpu.memory_space<vmem>>, vector<2048x256xbf16>
    %cst = arith.constant dense<0.000000e+00> : vector<16x256xf32>
    %2 = tpu.matmul %0, %1, %cst {dimension_numbers = #tpu.dot_dimension_numbers<[1], [0], [0], [1], [0, 0, 1, 1], [], []>} : vector<16x2048xbf16>, vector<2048x256xbf16>, vector<16x256xf32> -> vector<16x256xf32>
    %c0_3 = arith.constant 0 : index
    %c0_4 = arith.constant 0 : index
    %3 = vector.load %arg3[%c0_3, %c0_4] : memref<1x256xf32, #tpu.memory_space<vmem>>, vector<1x256xf32>
    %4 = vector.broadcast %3 : vector<1x256xf32> to vector<16x256xf32>
    %5 = arith.addf %2, %4 : vector<16x256xf32>
    %cst_5 = arith.constant dense<0.000000e+00> : vector<256xf32>
    %6 = vector.multi_reduction <add>, %5, %cst_5 [0] : vector<16x256xf32> to vector<256xf32>
    %7 = vector.shape_cast %6 : vector<256xf32> to vector<1x256xf32>
    %cst_6 = arith.constant 1.600000e+01 : f32
    %8 = vector.broadcast %cst_6 : f32 to vector<1x256xf32>
    %9 = arith.divf %7, %8 : vector<1x256xf32>
    %10 = vector.broadcast %9 : vector<1x256xf32> to vector<16x256xf32>
    %11 = arith.subf %5, %10 : vector<16x256xf32>
    %12 = arith.mulf %11, %11 : vector<16x256xf32>
    %cst_7 = arith.constant dense<0.000000e+00> : vector<256xf32>
    %13 = vector.multi_reduction <add>, %12, %cst_7 [0] : vector<16x256xf32> to vector<256xf32>
    %14 = vector.shape_cast %13 : vector<256xf32> to vector<1x256xf32>
    %cst_8 = arith.constant 1.600000e+01 : f32
    %15 = vector.broadcast %cst_8 : f32 to vector<1x256xf32>
    %16 = arith.divf %14, %15 : vector<1x256xf32>
    %17 = vector.broadcast %9 : vector<1x256xf32> to vector<16x256xf32>
    %18 = arith.subf %5, %17 : vector<16x256xf32>
    %cst_9 = arith.constant 9.99999974E-6 : f32
    %19 = vector.broadcast %cst_9 : f32 to vector<1x256xf32>
    %20 = arith.addf %16, %19 : vector<1x256xf32>
    %21 = math.rsqrt %20 : vector<1x256xf32>
    %22 = vector.broadcast %21 : vector<1x256xf32> to vector<16x256xf32>
    %23 = arith.mulf %18, %22 : vector<16x256xf32>
    %cst_10 = arith.constant 2.000000e-01 : f32
    %24 = vector.broadcast %cst_10 : f32 to vector<16x256xf32>
    %25 = arith.mulf %24, %23 : vector<16x256xf32>
    %26 = arith.maximumf %23, %25 : vector<16x256xf32>
    %c0_11 = arith.constant 0 : index
    %c0_12 = arith.constant 0 : index
    %27 = vector.load %arg4[%c0_11, %c0_12] : memref<16x256xf32, #tpu.memory_space<vmem>>, vector<16x256xf32>
    tpu.vector_store %arg4[%c0_11, %c0_12], %26 {strides = array<i32>} : memref<16x256xf32, #tpu.memory_space<vmem>>, vector<16x256xf32>,
    return
  }
  func.func @transform_0(%arg0: i32) -> (i32, i32) {
    %c0_i32 = arith.constant 0 : i32
    %c0_i32_0 = arith.constant 0 : i32
    return %arg0, %c0_i32 : i32, i32
  }
  func.func @transform_1(%arg0: i32) -> (i32, i32) {
    %c0_i32 = arith.constant 0 : i32
    %c0_i32_0 = arith.constant 0 : i32
    %c0_i32_1 = arith.constant 0 : i32
    return %c0_i32, %c0_i32_0 : i32, i32
  }
  func.func @transform_2(%arg0: i32) -> (i32, i32) {
    %c0_i32 = arith.constant 0 : i32
    %c0_i32_0 = arith.constant 0 : i32
    %c0_i32_1 = arith.constant 0 : i32
    return %c0_i32, %c0_i32_0 : i32, i32
  }
  func.func @transform_3(%arg0: i32) -> (i32, i32) {
    %c0_i32 = arith.constant 0 : i32
    %c0_i32_0 = arith.constant 0 : i32
    return %arg0, %c0_i32 : i32, i32
  }
}

module attributes {stable_mosaic.version = 11 : i64} {
  func.func @_conv_gemm_kernel(%arg0: i32, %arg1: memref<16x4096xbf16, #tpu.memory_space<vmem>>, %arg2: memref<4096x512xbf16, #tpu.memory_space<vmem>>, %arg3: memref<1x512xf32, #tpu.memory_space<vmem>>, %arg4: memref<16x512xf32, #tpu.memory_space<vmem>>) attributes {dimension_semantics = [#tpu.dimension_semantics<parallel>], iteration_bounds = array<i64: 2>, scalar_prefetch = 0 : i64, scratch_operands = 0 : i64, tpu.core_type = #tpu.core_type<tc>, window_params = [{transform_indices = @transform_0, window_bounds = array<i64: 16, 4096>}, {pipeline_mode = #tpu.pipeline_mode<synchronous>, transform_indices = @transform_1, window_bounds = array<i64: 4096, 512>}, {pipeline_mode = #tpu.pipeline_mode<synchronous>, transform_indices = @transform_2, window_bounds = array<i64: 1, 512>}, {transform_indices = @transform_3, window_bounds = array<i64: 16, 512>}]} {
    %c0 = arith.constant 0 : index
    %c0_0 = arith.constant 0 : index
    %0 = vector.load %arg1[%c0, %c0_0] : memref<16x4096xbf16, #tpu.memory_space<vmem>>, vector<16x4096xbf16>
    %c0_1 = arith.constant 0 : index
    %c0_2 = arith.constant 0 : index
    %1 = vector.load %arg2[%c0_1, %c0_2] : memref<4096x512xbf16, #tpu.memory_space<vmem>>, vector<4096x512xbf16>
    %cst = arith.constant dense<0.000000e+00> : vector<16x512xf32>
    %2 = tpu.matmul %0, %1, %cst {dimension_numbers = #tpu.dot_dimension_numbers<[1], [0], [0], [1], [0, 0, 1, 1], [], []>} : vector<16x4096xbf16>, vector<4096x512xbf16>, vector<16x512xf32> -> vector<16x512xf32>
    %c0_3 = arith.constant 0 : index
    %c0_4 = arith.constant 0 : index
    %3 = vector.load %arg3[%c0_3, %c0_4] : memref<1x512xf32, #tpu.memory_space<vmem>>, vector<1x512xf32>
    %4 = vector.broadcast %3 : vector<1x512xf32> to vector<16x512xf32>
    %5 = arith.addf %2, %4 : vector<16x512xf32>
    %6 = tpu.iota {dimensions = array<i32: 0>} : vector<16x512xi32>
    %c9_i32 = arith.constant 9 : i32
    %7 = vector.broadcast %c9_i32 : i32 to vector<16x512xi32>
    %8 = arith.cmpi slt, %6, %7 : vector<16x512xi32>
    %9 = arith.extui %8 : vector<16x512xi1> to vector<16x512xi32>
    %10 = arith.sitofp %9 : vector<16x512xi32> to vector<16x512xf32>
    %11 = arith.mulf %5, %10 : vector<16x512xf32>
    %cst_5 = arith.constant dense<0.000000e+00> : vector<512xf32>
    %12 = vector.multi_reduction <add>, %11, %cst_5 [0] : vector<16x512xf32> to vector<512xf32>
    %13 = vector.shape_cast %12 : vector<512xf32> to vector<1x512xf32>
    %cst_6 = arith.constant 0.111111112 : f32
    %14 = vector.broadcast %cst_6 : f32 to vector<1x512xf32>
    %15 = arith.mulf %13, %14 : vector<1x512xf32>
    %16 = vector.broadcast %15 : vector<1x512xf32> to vector<16x512xf32>
    %17 = arith.subf %5, %16 : vector<16x512xf32>
    %18 = arith.mulf %10, %17 : vector<16x512xf32>
    %19 = arith.mulf %18, %18 : vector<16x512xf32>
    %cst_7 = arith.constant dense<0.000000e+00> : vector<512xf32>
    %20 = vector.multi_reduction <add>, %19, %cst_7 [0] : vector<16x512xf32> to vector<512xf32>
    %21 = vector.shape_cast %20 : vector<512xf32> to vector<1x512xf32>
    %cst_8 = arith.constant 0.111111112 : f32
    %22 = vector.broadcast %cst_8 : f32 to vector<1x512xf32>
    %23 = arith.mulf %21, %22 : vector<1x512xf32>
    %24 = vector.broadcast %15 : vector<1x512xf32> to vector<16x512xf32>
    %25 = arith.subf %5, %24 : vector<16x512xf32>
    %cst_9 = arith.constant 9.99999974E-6 : f32
    %26 = vector.broadcast %cst_9 : f32 to vector<1x512xf32>
    %27 = arith.addf %23, %26 : vector<1x512xf32>
    %28 = math.rsqrt %27 : vector<1x512xf32>
    %29 = vector.broadcast %28 : vector<1x512xf32> to vector<16x512xf32>
    %30 = arith.mulf %25, %29 : vector<16x512xf32>
    %cst_10 = arith.constant 2.000000e-01 : f32
    %31 = vector.broadcast %cst_10 : f32 to vector<16x512xf32>
    %32 = arith.mulf %31, %30 : vector<16x512xf32>
    %33 = arith.maximumf %30, %32 : vector<16x512xf32>
    %c0_11 = arith.constant 0 : index
    %c0_12 = arith.constant 0 : index
    %34 = vector.load %arg4[%c0_11, %c0_12] : memref<16x512xf32, #tpu.memory_space<vmem>>, vector<16x512xf32>
    tpu.vector_store %arg4[%c0_11, %c0_12], %33 {strides = array<i32>} : memref<16x512xf32, #tpu.memory_space<vmem>>, vector<16x512xf32>,
    return
  }
  func.func @transform_0(%arg0: i32) -> (i32, i32) {
    %c0_i32 = arith.constant 0 : i32
    %c0_i32_0 = arith.constant 0 : i32
    return %arg0, %c0_i32 : i32, i32
  }
  func.func @transform_1(%arg0: i32) -> (i32, i32) {
    %c0_i32 = arith.constant 0 : i32
    %c0_i32_0 = arith.constant 0 : i32
    %c0_i32_1 = arith.constant 0 : i32
    return %c0_i32, %c0_i32_0 : i32, i32
  }
  func.func @transform_2(%arg0: i32) -> (i32, i32) {
    %c0_i32 = arith.constant 0 : i32
    %c0_i32_0 = arith.constant 0 : i32
    %c0_i32_1 = arith.constant 0 : i32
    return %c0_i32, %c0_i32_0 : i32, i32
  }
  func.func @transform_3(%arg0: i32) -> (i32, i32) {
    %c0_i32 = arith.constant 0 : i32
    %c0_i32_0 = arith.constant 0 : i32
    return %arg0, %c0_i32 : i32, i32
  }
}

module attributes {stable_mosaic.version = 11 : i64} {
  func.func @_final_conv_pool_kernel(%arg0: i32, %arg1: memref<2x4x8192xf32, #tpu.memory_space<vmem>>, %arg2: memref<1x8192xf32, #tpu.memory_space<vmem>>, %arg3: memref<1x1xf32, #tpu.memory_space<vmem>>, %arg4: memref<2x1xf32, #tpu.memory_space<vmem>>) attributes {dimension_semantics = [#tpu.dimension_semantics<arbitrary>], iteration_bounds = array<i64: 1>, scalar_prefetch = 0 : i64, scratch_operands = 0 : i64, tpu.core_type = #tpu.core_type<tc>, window_params = [{pipeline_mode = #tpu.pipeline_mode<synchronous>, transform_indices = @transform_0, window_bounds = array<i64: 2, 4, 8192>}, {pipeline_mode = #tpu.pipeline_mode<synchronous>, transform_indices = @transform_1, window_bounds = array<i64: 1, 8192>}, {pipeline_mode = #tpu.pipeline_mode<synchronous>, transform_indices = @transform_2, window_bounds = array<i64: 1, 1>}, {pipeline_mode = #tpu.pipeline_mode<synchronous>, transform_indices = @transform_3, window_bounds = array<i64: 2, 1>}]} {
    %c0 = arith.constant 0 : index
    %c0_0 = arith.constant 0 : index
    %c0_1 = arith.constant 0 : index
    %0 = vector.load %arg1[%c0, %c0_0, %c0_1] : memref<2x4x8192xf32, #tpu.memory_space<vmem>>, vector<2x4x8192xf32>
    %c0_2 = arith.constant 0 : index
    %c0_3 = arith.constant 0 : index
    %1 = vector.load %arg2[%c0_2, %c0_3] : memref<1x8192xf32, #tpu.memory_space<vmem>>, vector<1x8192xf32>
    %cst = arith.constant dense<0.000000e+00> : vector<2x8192xf32>
    %2 = vector.multi_reduction <add>, %0, %cst [1] : vector<2x4x8192xf32> to vector<2x8192xf32>
    %cst_4 = arith.constant 4.000000e+00 : f32
    %3 = vector.broadcast %cst_4 : f32 to vector<2x8192xf32>
    %4 = arith.divf %2, %3 : vector<2x8192xf32>
    %5 = vector.broadcast %1 : vector<1x8192xf32> to vector<2x8192xf32>
    %6 = arith.mulf %4, %5 : vector<2x8192xf32>
    %cst_5 = arith.constant dense<0.000000e+00> : vector<2xf32>
    %7 = vector.multi_reduction <add>, %6, %cst_5 [1] : vector<2x8192xf32> to vector<2xf32>
    %8 = vector.shape_cast %7 : vector<2xf32> to vector<2x1xf32>
    %c0_6 = arith.constant 0 : index
    %c0_7 = arith.constant 0 : index
    %9 = vector.load %arg3[%c0_6, %c0_7] : memref<1x1xf32, #tpu.memory_space<vmem>>, vector<1x1xf32>
    %10 = vector.broadcast %9 : vector<1x1xf32> to vector<2x1xf32>
    %11 = arith.addf %8, %10 : vector<2x1xf32>
    %c0_8 = arith.constant 0 : index
    %c0_9 = arith.constant 0 : index
    %12 = vector.load %arg4[%c0_8, %c0_9] : memref<2x1xf32, #tpu.memory_space<vmem>>, vector<2x1xf32>
    tpu.vector_store %arg4[%c0_8, %c0_9], %11 {strides = array<i32>} : memref<2x1xf32, #tpu.memory_space<vmem>>, vector<2x1xf32>,
    return
  }
  func.func @transform_0(%arg0: i32) -> (i32, i32, i32) {
    %c0_i32 = arith.constant 0 : i32
    %c0_i32_0 = arith.constant 0 : i32
    %c0_i32_1 = arith.constant 0 : i32
    %c0_i32_2 = arith.constant 0 : i32
    return %c0_i32, %c0_i32_0, %c0_i32_1 : i32, i32, i32
  }
  func.func @transform_1(%arg0: i32) -> (i32, i32) {
    %c0_i32 = arith.constant 0 : i32
    %c0_i32_0 = arith.constant 0 : i32
    %c0_i32_1 = arith.constant 0 : i32
    return %c0_i32, %c0_i32_0 : i32, i32
  }
  func.func @transform_2(%arg0: i32) -> (i32, i32) {
    %c0_i32 = arith.constant 0 : i32
    %c0_i32_0 = arith.constant 0 : i32
    %c0_i32_1 = arith.constant 0 : i32
    return %c0_i32, %c0_i32_0 : i32, i32
  }
  func.func @transform_3(%arg0: i32) -> (i32, i32) {
    %c0_i32 = arith.constant 0 : i32
    %c0_i32_0 = arith.constant 0 : i32
    %c0_i32_1 = arith.constant 0 : i32
    return %c0_i32, %c0_i32_0 : i32, i32
  }
}

</mosaic_0001>

<llo_original>
// kernel: discriminator2d_forward.5
$region0: #{discriminator2d_forward.5}
  #allocation0 [shape = 'u32[]', space=smem, size = 0x4, offset = 0x4, fixed_abs, tag = 'smem constant byte address 0x4 - core index']
  #allocation1 [shape = 'u32[144,128]{1,0:T(1,128)}', space=vmem, size = 0x12000, scoped, tag = 'internal scratch']
  %s0 = inlined_call_operand.vmem [shape: bf16[512,48], index: 0, kind: input, shape index: {}]
  %s1 = inlined_call_operand.vmem [shape: bf16[48,64], index: 1, kind: input, shape index: {}]
  %s2 = inlined_call_operand.hbm [shape: f32[1,64], index: 2, kind: input, shape index: {}]
  %s3 = inlined_call_operand.vmem [shape: f32[512,64], index: 3, kind: output, shape index: {}]
  %s4 = sld [smem:[#allocation0]]
  $region49: #{discriminator2d_forward.5} parent=0
    _
  %s6 = ssub.s32 1, %s4
  %s7 = scalar_select 0, %s6, %s4
  $region1: #{discriminator2d_forward.5} parent=0
    #allocation2 [shape = 'u8[512]{0}', space=vmem, size = 0x400, scoped, tag = 'input window, operand 2, single buffered']
    #allocation3 [shape = 's32[2]{0}', space=sflag, size = 0x8, scoped, tag = 'scoped memory for discriminator2d_forward.5']
    %8 = vsyncpa [#allocation3], 0
    loop: start=0, step=1, limit=4
    $region2: #{discriminator2d_forward.5} parent=1 // loop_pre_header
      _
    $region3: #{discriminator2d_forward.5} parent=1 // loop_header
      %s10 = sphi 0, %s14
      %p11 = scmp.ge.s32.totalorder %s10, 4
      %s20 = sphi 0, %s22
      %s23 = sphi 0, %s20
      %s24 = sphi 0, %s23
      %s40 = sphi 0, %s24
      %s44 = sphi 0, %s44
      %s46 = sphi 0, %s44
      %s47 = sphi 0, %s46
      %s61 = sphi 0, %s47
      %s65 = sphi 0, %s65
      %s67 = sphi 0, %s65
      %s68 = sphi 0, %s67
      %s82 = sphi 0, %s68
      %s88 = sphi 0, %s90
      %s91 = sphi 0, %s88
      %s92 = sphi 0, %s91
      %s108 = sphi 0, %s92
    $region4: #{discriminator2d_forward.5} parent=1 // loop_header_branch
      %13 = sbr.rel (%p11) target = $region8
    $region5: #{discriminator2d_forward.5} parent=1 // loop_body
      %s15 = ssub.s32 %s10, 1
      %s16 = ssub.s32 %s10, 2
      %s17 = sadd.s32 %s10, 1
      %s18 = ssub.s32 %s10, %s17
      %p19 = scmp.eq.s32.totalorder %s18, 0
      %s21 = sadd.s32 %s20, 1
      %s22 = scalar_select %p19, %s20, %s21
      %p25 = pneg %p19
      %p26 = scmp.eq.s32.totalorder %s10, 1
      %p27 = por %p25, %p26
      %p28 = scmp.ne.s32.totalorder %s20, %s23
      %p29 = scmp.eq.s32.totalorder %s10, 0
      %p30 = por %p28, %p29
      %p31 = scmp.ne.s32.totalorder %s20, %s23
      %p32 = scmp.eq.s32.totalorder %s15, 1
      %p33 = por %p31, %p32
      %p34 = scmp.ne.s32.totalorder %s23, %s24
      %p35 = scmp.eq.s32.totalorder %s15, 0
      %p36 = por %p34, %p35
      %p37 = scmp.ne.s32.totalorder %s23, %s24
      %p38 = scmp.eq.s32.totalorder %s16, 1
      %p39 = por %p37, %p38
      %p41 = scmp.ne.s32.totalorder %s24, %s40
      %p42 = scmp.eq.s32.totalorder %s16, 0
      %p43 = por %p41, %p42
      %s45 = sadd.s32 %s44, 1
      %p48 = scmp.eq.s32.totalorder %s10, 1
      %p49 = scmp.ne.s32.totalorder %s44, %s46
      %p50 = scmp.eq.s32.totalorder %s10, 0
      %p51 = por %p49, %p50
      %p52 = scmp.ne.s32.totalorder %s44, %s46
      %p53 = scmp.eq.s32.totalorder %s15, 1
      %p54 = por %p52, %p53
      %p55 = scmp.ne.s32.totalorder %s46, %s47
      %p56 = scmp.eq.s32.totalorder %s15, 0
      %p57 = por %p55, %p56
      %p58 = scmp.ne.s32.totalorder %s46, %s47
      %p59 = scmp.eq.s32.totalorder %s16, 1
      %p60 = por %p58, %p59
      %p62 = scmp.ne.s32.totalorder %s47, %s61
      %p63 = scmp.eq.s32.totalorder %s16, 0
      %p64 = por %p62, %p63
      %s66 = sadd.s32 %s65, 1
      %p69 = scmp.eq.s32.totalorder %s10, 1
      %p70 = scmp.ne.s32.totalorder %s65, %s67
      %p71 = scmp.eq.s32.totalorder %s10, 0
      %p72 = por %p70, %p71
      %p73 = scmp.ne.s32.totalorder %s65, %s67
      %p74 = scmp.eq.s32.totalorder %s15, 1
      %p75 = por %p73, %p74
      %p76 = scmp.ne.s32.totalorder %s67, %s68
      %p77 = scmp.eq.s32.totalorder %s15, 0
      %p78 = por %p76, %p77
      %p79 = scmp.ne.s32.totalorder %s67, %s68
      %p80 = scmp.eq.s32.totalorder %s16, 1
      %p81 = por %p79, %p80
      %p83 = scmp.ne.s32.totalorder %s68, %s82
      %p84 = scmp.eq.s32.totalorder %s16, 0
      %p85 = por %p83, %p84
      %s86 = ssub.s32 %s10, %s17
      %p87 = scmp.eq.s32.totalorder %s86, 0
      %s89 = sadd.s32 %s88, 1
      %s90 = scalar_select %p87, %s88, %s89
      %p93 = pneg %p87
      %p94 = scmp.eq.s32.totalorder %s10, 1
      %p95 = por %p93, %p94
      %p96 = scmp.ne.s32.totalorder %s88, %s91
      %p97 = scmp.eq.s32.totalorder %s10, 0
      %p98 = por %p96, %p97
      %p99 = scmp.ne.s32.totalorder %s88, %s91
      %p100 = scmp.eq.s32.totalorder %s15, 1
      %p101 = por %p99, %p100
      %p102 = scmp.ne.s32.totalorder %s91, %s92
      %p103 = scmp.eq.s32.totalorder %s15, 0
      %p104 = por %p102, %p103
      %p105 = scmp.ne.s32.totalorder %s91, %s92
      %p106 = scmp.eq.s32.totalorder %s16, 1
      %p107 = por %p105, %p106
      %p109 = scmp.ne.s32.totalorder %s92, %s108
      %p110 = scmp.eq.s32.totalorder %s16, 0
      %p111 = por %p109, %p110
      %p112 = scmp.le.s32.totalorder 1, %s10
      %p113 = scmp.lt.s32.totalorder %s10, 3
      %p114 = pnand %p112, %p113
      %p115 = pneg %p114
      // Predicated region
      $region9: #{discriminator2d_forward.5} parent=5 // pred_check
        _
      $region10: #{discriminator2d_forward.5} parent=5 // pred_check_branch
        %117 = sbr.rel (%p114) target = $region12
      $region11: #{discriminator2d_forward.5} parent=5 // pred_region
        %s118 = ssub.s32 %s10, 1
        // Predicated region
        $region13: #{discriminator2d_forward.5} parent=11 // pred_check
          %p119 = pneg %p57
        $region14: #{discriminator2d_forward.5} parent=11 // pred_check_branch
          %121 = sbr.rel (%p119) target = $region16
        $region15: #{discriminator2d_forward.5} parent=11 // pred_region
          _
        $region16: #{discriminator2d_forward.5} parent=11 // pred_fallthru
          _
        // Predicated region
        $region17: #{discriminator2d_forward.5} parent=11 // pred_check
          %p122 = pneg %p78
        $region18: #{discriminator2d_forward.5} parent=11 // pred_check_branch
          %124 = sbr.rel (%p122) target = $region20
        $region19: #{discriminator2d_forward.5} parent=11 // pred_region
          %s126 = ssub.s32 16, 16
          %127 = vsyncadd [#allocation3], %s126
          %s129 = sshll.u32 [#allocation2], 4
          %s130 = int_to_ptr.vmem [resolvable:$true] %s129
          %132 = dma.hbm_to_vmem [thread:$0]  %s2, 16, %s130, [#allocation3]
        $region20: #{discriminator2d_forward.5} parent=11 // pred_fallthru
          _
      $region12: #{discriminator2d_forward.5} parent=5 // pred_fallthru
        _
      %p133 = scmp.lt.s32.totalorder %s10, 2
      // Predicated region
      $region21: #{discriminator2d_forward.5} parent=5 // pred_check
        %p134 = pneg %p133
      $region22: #{discriminator2d_forward.5} parent=5 // pred_check_branch
        %136 = sbr.rel (%p134) target = $region24
      $region23: #{discriminator2d_forward.5} parent=5 // pred_region
        // Predicated region
        $region25: #{discriminator2d_forward.5} parent=23 // pred_check
          %p137 = pneg %p30
        $region26: #{discriminator2d_forward.5} parent=23 // pred_check_branch
          %139 = sbr.rel (%p137) target = $region28
        $region27: #{discriminator2d_forward.5} parent=23 // pred_region
          %s140 = smul.u32 32, %s10
          %p141 = scmp.lt.s32.totalorder %s140, 63
          %s142 = scalar_select %p141, %s140, 63
          %s143 = smul.addr %s142, 4
          %s144 = scalar_lea.vmem %s0, %s143
          %s145 = smul.u32 32, %s10
        $region28: #{discriminator2d_forward.5} parent=23 // pred_fallthru
          _
      $region24: #{discriminator2d_forward.5} parent=5 // pred_fallthru
        _
      %p146 = scmp.le.s32.totalorder 1, %s10
      %p147 = scmp.lt.s32.totalorder %s10, 3
      %p148 = pnand %p146, %p147
      %p149 = pneg %p148
      // Predicated region
      $region29: #{discriminator2d_forward.5} parent=5 // pred_check
        _
      $region30: #{discriminator2d_forward.5} parent=5 // pred_check_branch
        %151 = sbr.rel (%p148) target = $region32
      $region31: #{discriminator2d_forward.5} parent=5 // pred_region
        %s152 = ssub.s32 %s10, 1
        // Predicated region
        $region33: #{discriminator2d_forward.5} parent=31 // pred_check
          %p153 = pneg %p78
        $region34: #{discriminator2d_forward.5} parent=31 // pred_check_branch
          %155 = sbr.rel (%p153) target = $region36
        $region35: #{discriminator2d_forward.5} parent=31 // pred_region
          %156 = dma.done [#allocation3], 16
        $region36: #{discriminator2d_forward.5} parent=31 // pred_fallthru
          _
        %s157 = smul.u32 32, %s15
        %p158 = scmp.lt.s32.totalorder %s157, 63
        %s159 = scalar_select %p158, %s157, 63
        %s160 = smul.addr %s159, 4
        %s161 = scalar_lea.vmem %s0, %s160
        %p162 = pneg %p36
        %p163 = pneg %p33
        %p164 = pneg %p57
        %p165 = pneg %p54
        %p166 = pneg %p78
        %p167 = pneg %p75
        %p168 = pneg %p104
        %p169 = pneg %p101
        %s170 = smul.u32 32, %s15
        %p171 = scmp.lt.s32.totalorder %s170, 63
        %s172 = scalar_select %p171, %s170, 63
        %s173 = smul.addr %s172, 8
        %s174 = scalar_lea.vmem %s3, %s173
        %s175 = smul.u32 32, %s15
        %p176 = scmp.lt.s32.totalorder %s175, 63
        %s177 = scalar_select %p176, %s175, 63
        %s178 = smul.addr %s177, 4
        %s179 = scalar_lea.vmem %s0, %s178
        %s180 = smul.u32 32, %s15
        %s181 = smul.u32 32, %s15
        %p182 = scmp.lt.s32.totalorder %s181, 63
        %s183 = scalar_select %p182, %s181, 63
        %s184 = smul.addr %s183, 8
        %s185 = scalar_lea.vmem %s3, %s184
        %s186 = smul.u32 32, %s15
        %v188 = vld [vmem:[%s179] sm:$0xf]
        %v189 = vld [vmem:[%s179 + $0x4] sm:$0xf]
        %v190 = vld [vmem:[%s179 + $0x8] sm:$0xf]
        %v191 = vld [vmem:[%s179 + $0xc] sm:$0xf]
        %v192 = vld [vmem:[%s179 + $0x10] sm:$0xf]
        %v193 = vld [vmem:[%s179 + $0x14] sm:$0xf]
        %v194 = vld [vmem:[%s179 + $0x18] sm:$0xf]
        %v195 = vld [vmem:[%s179 + $0x1c] sm:$0xf]
        %v196 = vld [vmem:[%s179 + $0x20] sm:$0xf]
        %v197 = vld [vmem:[%s179 + $0x24] sm:$0xf]
        %v198 = vld [vmem:[%s179 + $0x28] sm:$0xf]
        %v199 = vld [vmem:[%s179 + $0x2c] sm:$0xf]
        %v200 = vld [vmem:[%s179 + $0x30] sm:$0xf]
        %v201 = vld [vmem:[%s179 + $0x34] sm:$0xf]
        %v202 = vld [vmem:[%s179 + $0x38] sm:$0xf]
        %v203 = vld [vmem:[%s179 + $0x3c] sm:$0xf]
        %v204 = vld [vmem:[%s179 + $0x40] sm:$0xf]
        %v205 = vld [vmem:[%s179 + $0x44] sm:$0xf]
        %v206 = vld [vmem:[%s179 + $0x48] sm:$0xf]
        %v207 = vld [vmem:[%s179 + $0x4c] sm:$0xf]
        %v208 = vld [vmem:[%s179 + $0x50] sm:$0xf]
        %v209 = vld [vmem:[%s179 + $0x54] sm:$0xf]
        %v210 = vld [vmem:[%s179 + $0x58] sm:$0xf]
        %v211 = vld [vmem:[%s179 + $0x5c] sm:$0xf]
        %v212 = vld [vmem:[%s179 + $0x60] sm:$0xf]
        %v213 = vld [vmem:[%s179 + $0x64] sm:$0xf]
        %v214 = vld [vmem:[%s179 + $0x68] sm:$0xf]
        %v215 = vld [vmem:[%s179 + $0x6c] sm:$0xf]
        %v216 = vld [vmem:[%s179 + $0x70] sm:$0xf]
        %v217 = vld [vmem:[%s179 + $0x74] sm:$0xf]
        %v218 = vld [vmem:[%s179 + $0x78] sm:$0xf]
        %v219 = vld [vmem:[%s179 + $0x7c] sm:$0xf]
        %v220 = vld [vmem:[%s1] sm:$0xf]
        %v221 = vld [vmem:[%s1 + $0x4] sm:$0xf]
        %v222 = vld [vmem:[%s1 + $0x8] sm:$0xf]
        %v223 = vld [vmem:[%s1 + $0xc] sm:$0xf]
        %v224 = vld [vmem:[%s1 + $0x10] sm:$0xf]
        %v225 = vld [vmem:[%s1 + $0x14] sm:$0xf]
        %v226 = vld [vmem:[#allocation2] sm:$0x1]
        %v228 = vlaneseq
        %v229 = vshrl.u32 %v228, 7
        %v230 = vsub.s32 0, %v229
        %v231 = vrot.slane %v226, %v230
        %v265 = vunpack.c.l.b16 %v188
        %v266 = vunpack.c.l.b16 %v189
        %v267 = vunpack.c.l.b16 %v190
        %v268 = vunpack.c.l.b16 %v191
        %v269 = vunpack.c.l.b16 %v192
        %v270 = vunpack.c.l.b16 %v193
        %v271 = vunpack.c.l.b16 %v194
        %v272 = vunpack.c.l.b16 %v195
        %v273 = vunpack.c.l.b16 %v196
        %v274 = vunpack.c.l.b16 %v197
        %v275 = vunpack.c.l.b16 %v198
        %v276 = vunpack.c.l.b16 %v199
        %v277 = vunpack.c.l.b16 %v200
        %v278 = vunpack.c.l.b16 %v201
        %v279 = vunpack.c.l.b16 %v202
        %v280 = vunpack.c.l.b16 %v203
        %v281 = vunpack.c.l.b16 %v204
        %v282 = vunpack.c.l.b16 %v205
        %v283 = vunpack.c.l.b16 %v206
        %v284 = vunpack.c.l.b16 %v207
        %v285 = vunpack.c.l.b16 %v208
        %v286 = vunpack.c.l.b16 %v209
        %v287 = vunpack.c.l.b16 %v210
        %v288 = vunpack.c.l.b16 %v211
        %v289 = vunpack.c.l.b16 %v212
        %v290 = vunpack.c.l.b16 %v213
        %v291 = vunpack.c.l.b16 %v214
        %v292 = vunpack.c.l.b16 %v215
        %v293 = vunpack.c.l.b16 %v216
        %v294 = vunpack.c.l.b16 %v217
        %v295 = vunpack.c.l.b16 %v218
        %v296 = vunpack.c.l.b16 %v219
        %v297 = vpack.c.b16 %v266, %v265
        %v298 = vpack.c.b16 %v268, %v267
        %v299 = vpack.c.b16 %v270, %v269
        %v300 = vpack.c.b16 %v272, %v271
        %v301 = vpack.c.b16 %v274, %v273
        %v302 = vpack.c.b16 %v276, %v275
        %v303 = vpack.c.b16 %v278, %v277
        %v304 = vpack.c.b16 %v280, %v279
        %v305 = vpack.c.b16 %v282, %v281
        %v306 = vpack.c.b16 %v284, %v283
        %v307 = vpack.c.b16 %v286, %v285
        %v308 = vpack.c.b16 %v288, %v287
        %v309 = vpack.c.b16 %v290, %v289
        %v310 = vpack.c.b16 %v292, %v291
        %v311 = vpack.c.b16 %v294, %v293
        %v312 = vpack.c.b16 %v296, %v295
        %v319 = vunpack.c.l.b16 %v220
        %v320 = vunpack.c.l.b16 %v221
        %v321 = vunpack.c.l.b16 %v222
        %v322 = vunpack.c.l.b16 %v223
        %v323 = vunpack.c.l.b16 %v224
        %v324 = vunpack.c.l.b16 %v225
        %v325 = vpack.c.b16 %v320, %v319
        %v326 = vpack.c.b16 %v322, %v321
        %v327 = vpack.c.b16 %v324, %v323
        %vm331 = vcmask 392192
        %v333 = vsel %vm331, %v297, 0
        %v336 = vsel %vm331, %v298, 0
        %v339 = vsel %vm331, %v299, 0
        %v342 = vsel %vm331, %v300, 0
        %v345 = vsel %vm331, %v301, 0
        %v348 = vsel %vm331, %v302, 0
        %v351 = vsel %vm331, %v303, 0
        %v354 = vsel %vm331, %v304, 0
        %v357 = vsel %vm331, %v305, 0
        %v360 = vsel %vm331, %v306, 0
        %v363 = vsel %vm331, %v307, 0
        %v366 = vsel %vm331, %v308, 0
        %v369 = vsel %vm331, %v309, 0
        %v372 = vsel %vm331, %v310, 0
        %v375 = vsel %vm331, %v311, 0
        %v378 = vsel %vm331, %v312, 0
        %380 = vmatprep.subr.bf16.mxu0 0
        %381 = vmatpush1.bf16.msra.mxu0 0
        %382 = vmatprep.subr.bf16.mxu0 0
        %383 = vmatpush1.bf16.msra.mxu0 0
        %384 = vmatprep.subr.bf16.mxu0 0
        %385 = vmatpush1.bf16.msra.mxu0 0
        %386 = vmatprep.subr.bf16.mxu0 0
        %387 = vmatpush1.bf16.msra.mxu0 0
        %388 = vmatprep.subr.bf16.mxu0 0
        %389 = vmatpush1.bf16.msra.mxu0 0
        %390 = vmatprep.subr.bf16.mxu0 0
        %391 = vmatpush1.bf16.msra.mxu0 %v327
        %392 = vmatprep.subr.bf16.mxu0 0
        %393 = vmatpush1.bf16.msra.mxu0 %v326
        %394 = vmatprep.subr.bf16.mxu0 0
        %395 = vmatpush1.bf16.msra.mxu0 %v325
        %396 = vmatprep.subr.bf16.mxu0 0
        %397 = vmatpush2.bf16.msra.mxu0 0
        %398 = vmatprep.subr.bf16.mxu0 0
        %399 = vmatpush2.bf16.msra.mxu0 0
        %400 = vmatprep.subr.bf16.mxu0 0
        %401 = vmatpush2.bf16.msra.mxu0 0
        %402 = vmatprep.subr.bf16.mxu0 0
        %403 = vmatpush2.bf16.msra.mxu0 0
        %404 = vmatprep.subr.bf16.mxu0 0
        %405 = vmatpush2.bf16.msra.mxu0 0
        %406 = vmatprep.subr.bf16.mxu0 0
        %407 = vmatpush2.bf16.msra.mxu0 0
        %408 = vmatprep.subr.bf16.mxu0 0
        %409 = vmatpush2.bf16.msra.mxu0 0
        %410 = vmatprep.subr.bf16.mxu0 0
        %411 = vmatpush2.bf16.msra.mxu0 0
        %412 = vmatprep.mubr.bf16.mxu0 0
        %413 = vmatmul.mubr.bf16.gmra.mxu0 %v333
        %v414 = vpop.f32.mrf.mxu0
        %v415 = vadd.f32 %v231, %v414
        %v416 = vpop.f32.mrf.mxu0
        %v417 = vpop.f32.mrf.mxu0
        %v418 = vadd.f32 %v231, %v417
        %v419 = vpop.f32.mrf.mxu0
        %420 = vmatprep.mubr.bf16.mxu0 0
        %421 = vmatmul.mubr.bf16.gmra.mxu0 %v336
        %v422 = vpop.f32.mrf.mxu0
        %v423 = vadd.f32 %v231, %v422
        %v424 = vpop.f32.mrf.mxu0
        %v425 = vpop.f32.mrf.mxu0
        %v426 = vadd.f32 %v231, %v425
        %v427 = vpop.f32.mrf.mxu0
        %428 = vmatprep.mubr.bf16.mxu0 0
        %429 = vmatmul.mubr.bf16.gmra.mxu0 %v339
        %v430 = vpop.f32.mrf.mxu0
        %v431 = vadd.f32 %v231, %v430
        %v432 = vpop.f32.mrf.mxu0
        %v433 = vpop.f32.mrf.mxu0
        %v434 = vadd.f32 %v231, %v433
        %v435 = vpop.f32.mrf.mxu0
        %436 = vmatprep.mubr.bf16.mxu0 0
        %437 = vmatmul.mubr.bf16.gmra.mxu0 %v342
        %v438 = vpop.f32.mrf.mxu0
        %v439 = vadd.f32 %v231, %v438
        %v440 = vpop.f32.mrf.mxu0
        %v441 = vpop.f32.mrf.mxu0
        %v442 = vadd.f32 %v231, %v441
        %v443 = vpop.f32.mrf.mxu0
        %444 = vmatprep.mubr.bf16.mxu0 0
        %445 = vmatmul.mubr.bf16.gmra.mxu0 %v345
        %v446 = vpop.f32.mrf.mxu0
        %v447 = vadd.f32 %v231, %v446
        %v448 = vpop.f32.mrf.mxu0
        %v449 = vpop.f32.mrf.mxu0
        %v450 = vadd.f32 %v231, %v449
        %v451 = vpop.f32.mrf.mxu0
        %452 = vmatprep.mubr.bf16.mxu0 0
        %453 = vmatmul.mubr.bf16.gmra.mxu0 %v348
        %v454 = vpop.f32.mrf.mxu0
        %v455 = vadd.f32 %v231, %v454
        %v456 = vpop.f32.mrf.mxu0
        %v457 = vpop.f32.mrf.mxu0
        %v458 = vadd.f32 %v231, %v457
        %v459 = vpop.f32.mrf.mxu0
        %460 = vmatprep.mubr.bf16.mxu0 0
        %461 = vmatmul.mubr.bf16.gmra.mxu0 %v351
        %v462 = vpop.f32.mrf.mxu0
        %v463 = vadd.f32 %v231, %v462
        %v464 = vpop.f32.mrf.mxu0
        %v465 = vpop.f32.mrf.mxu0
        %v466 = vadd.f32 %v231, %v465
        %v467 = vpop.f32.mrf.mxu0
        %468 = vmatprep.mubr.bf16.mxu0 0
        %469 = vmatmul.mubr.bf16.gmra.mxu0 %v354
        %v470 = vpop.f32.mrf.mxu0
        %v471 = vadd.f32 %v231, %v470
        %v472 = vpop.f32.mrf.mxu0
        %v473 = vpop.f32.mrf.mxu0
        %v474 = vadd.f32 %v231, %v473
        %v475 = vpop.f32.mrf.mxu0
        %476 = vmatprep.mubr.bf16.mxu0 0
        %477 = vmatmul.mubr.bf16.gmra.mxu0 %v357
        %v478 = vpop.f32.mrf.mxu0
        %v479 = vadd.f32 %v231, %v478
        %v480 = vpop.f32.mrf.mxu0
        %v481 = vpop.f32.mrf.mxu0
        %v482 = vadd.f32 %v231, %v481
        %v483 = vpop.f32.mrf.mxu0
        %484 = vmatprep.mubr.bf16.mxu0 0
        %485 = vmatmul.mubr.bf16.gmra.mxu0 %v360
        %v486 = vpop.f32.mrf.mxu0
        %v487 = vadd.f32 %v231, %v486
        %v488 = vpop.f32.mrf.mxu0
        %v489 = vpop.f32.mrf.mxu0
        %v490 = vadd.f32 %v231, %v489
        %v491 = vpop.f32.mrf.mxu0
        %492 = vmatprep.mubr.bf16.mxu0 0
        %493 = vmatmul.mubr.bf16.gmra.mxu0 %v363
        %v494 = vpop.f32.mrf.mxu0
        %v495 = vadd.f32 %v231, %v494
        %v496 = vpop.f32.mrf.mxu0
        %v497 = vpop.f32.mrf.mxu0
        %v498 = vadd.f32 %v231, %v497
        %v499 = vpop.f32.mrf.mxu0
        %500 = vmatprep.mubr.bf16.mxu0 0
        %501 = vmatmul.mubr.bf16.gmra.mxu0 %v366
        %v502 = vpop.f32.mrf.mxu0
        %v503 = vadd.f32 %v231, %v502
        %v504 = vpop.f32.mrf.mxu0
        %v505 = vpop.f32.mrf.mxu0
        %v506 = vadd.f32 %v231, %v505
        %v507 = vpop.f32.mrf.mxu0
        %508 = vmatprep.mubr.bf16.mxu0 0
        %509 = vmatmul.mubr.bf16.gmra.mxu0 %v369
        %v510 = vpop.f32.mrf.mxu0
        %v511 = vadd.f32 %v231, %v510
        %v512 = vpop.f32.mrf.mxu0
        %v513 = vpop.f32.mrf.mxu0
        %v514 = vadd.f32 %v231, %v513
        %v515 = vpop.f32.mrf.mxu0
        %516 = vmatprep.mubr.bf16.mxu0 0
        %517 = vmatmul.mubr.bf16.gmra.mxu0 %v372
        %v518 = vpop.f32.mrf.mxu0
        %v519 = vadd.f32 %v231, %v518
        %v520 = vpop.f32.mrf.mxu0
        %v521 = vpop.f32.mrf.mxu0
        %v522 = vadd.f32 %v231, %v521
        %v523 = vpop.f32.mrf.mxu0
        %524 = vmatprep.mubr.bf16.mxu0 0
        %525 = vmatmul.mubr.bf16.gmra.mxu0 %v375
        %v526 = vpop.f32.mrf.mxu0
        %v527 = vadd.f32 %v231, %v526
        %v528 = vpop.f32.mrf.mxu0
        %v529 = vpop.f32.mrf.mxu0
        %v530 = vadd.f32 %v231, %v529
        %v531 = vpop.f32.mrf.mxu0
        %532 = vmatprep.mubr.bf16.mxu0 0
        %533 = vmatmul.mubr.bf16.gmra.mxu0 %v378
        %v534 = vpop.f32.mrf.mxu0
        %v535 = vadd.f32 %v231, %v534
        %v536 = vpop.f32.mrf.mxu0
        %v537 = vpop.f32.mrf.mxu0
        %v538 = vadd.f32 %v231, %v537
        %v539 = vpop.f32.mrf.mxu0
        %540 = vdwg.mxu0
        %v541 = vmul.f32 %v415, 0.2
        %v542 = vmul.f32 %v418, 0.2
        %v543 = vmul.f32 %v423, 0.2
        %v544 = vmul.f32 %v426, 0.2
        %v545 = vmul.f32 %v431, 0.2
        %v546 = vmul.f32 %v434, 0.2
        %v547 = vmul.f32 %v439, 0.2
        %v548 = vmul.f32 %v442, 0.2
        %v549 = vmul.f32 %v447, 0.2
        %v550 = vmul.f32 %v450, 0.2
        %v551 = vmul.f32 %v455, 0.2
        %v552 = vmul.f32 %v458, 0.2
        %v553 = vmul.f32 %v463, 0.2
        %v554 = vmul.f32 %v466, 0.2
        %v555 = vmul.f32 %v471, 0.2
        %v556 = vmul.f32 %v474, 0.2
        %v557 = vmul.f32 %v479, 0.2
        %v558 = vmul.f32 %v482, 0.2
        %v559 = vmul.f32 %v487, 0.2
        %v560 = vmul.f32 %v490, 0.2
        %v561 = vmul.f32 %v495, 0.2
        %v562 = vmul.f32 %v498, 0.2
        %v563 = vmul.f32 %v503, 0.2
        %v564 = vmul.f32 %v506, 0.2
        %v565 = vmul.f32 %v511, 0.2
        %v566 = vmul.f32 %v514, 0.2
        %v567 = vmul.f32 %v519, 0.2
        %v568 = vmul.f32 %v522, 0.2
        %v569 = vmul.f32 %v527, 0.2
        %v570 = vmul.f32 %v530, 0.2
        %v571 = vmul.f32 %v535, 0.2
        %v572 = vmul.f32 %v538, 0.2
        %v573 = vmax.f32 %v415, %v541
        %v574 = vmax.f32 %v418, %v542
        %v575 = vmax.f32 %v423, %v543
        %v576 = vmax.f32 %v426, %v544
        %v577 = vmax.f32 %v431, %v545
        %v578 = vmax.f32 %v434, %v546
        %v579 = vmax.f32 %v439, %v547
        %v580 = vmax.f32 %v442, %v548
        %v581 = vmax.f32 %v447, %v549
        %v582 = vmax.f32 %v450, %v550
        %v583 = vmax.f32 %v455, %v551
        %v584 = vmax.f32 %v458, %v552
        %v585 = vmax.f32 %v463, %v553
        %v586 = vmax.f32 %v466, %v554
        %v587 = vmax.f32 %v471, %v555
        %v588 = vmax.f32 %v474, %v556
        %v589 = vmax.f32 %v479, %v557
        %v590 = vmax.f32 %v482, %v558
        %v591 = vmax.f32 %v487, %v559
        %v592 = vmax.f32 %v490, %v560
        %v593 = vmax.f32 %v495, %v561
        %v594 = vmax.f32 %v498, %v562
        %v595 = vmax.f32 %v503, %v563
        %v596 = vmax.f32 %v506, %v564
        %v597 = vmax.f32 %v511, %v565
        %v598 = vmax.f32 %v514, %v566
        %v599 = vmax.f32 %v519, %v567
        %v600 = vmax.f32 %v522, %v568
        %v601 = vmax.f32 %v527, %v569
        %v602 = vmax.f32 %v530, %v570
        %v603 = vmax.f32 %v535, %v571
        %v604 = vmax.f32 %v538, %v572
        %vm605 = vcmask 523264
        %606 = vst.msk [vmem:[%s185] sm:$0xff] %vm605, %v573
        %607 = vst.msk [vmem:[%s185 + $0x8] sm:$0xff] %vm605, %v574
        %608 = vst.msk [vmem:[%s185 + $0x10] sm:$0xff] %vm605, %v575
        %609 = vst.msk [vmem:[%s185 + $0x18] sm:$0xff] %vm605, %v576
        %610 = vst.msk [vmem:[%s185 + $0x20] sm:$0xff] %vm605, %v577
        %611 = vst.msk [vmem:[%s185 + $0x28] sm:$0xff] %vm605, %v578
        %612 = vst.msk [vmem:[%s185 + $0x30] sm:$0xff] %vm605, %v579
        %613 = vst.msk [vmem:[%s185 + $0x38] sm:$0xff] %vm605, %v580
        %614 = vst.msk [vmem:[%s185 + $0x40] sm:$0xff] %vm605, %v581
        %615 = vst.msk [vmem:[%s185 + $0x48] sm:$0xff] %vm605, %v582
        %616 = vst.msk [vmem:[%s185 + $0x50] sm:$0xff] %vm605, %v583
        %617 = vst.msk [vmem:[%s185 + $0x58] sm:$0xff] %vm605, %v584
        %618 = vst.msk [vmem:[%s185 + $0x60] sm:$0xff] %vm605, %v585
        %619 = vst.msk [vmem:[%s185 + $0x68] sm:$0xff] %vm605, %v586
        %620 = vst.msk [vmem:[%s185 + $0x70] sm:$0xff] %vm605, %v587
        %621 = vst.msk [vmem:[%s185 + $0x78] sm:$0xff] %vm605, %v588
        %622 = vst.msk [vmem:[%s185 + $0x80] sm:$0xff] %vm605, %v589
        %623 = vst.msk [vmem:[%s185 + $0x88] sm:$0xff] %vm605, %v590
        %624 = vst.msk [vmem:[%s185 + $0x90] sm:$0xff] %vm605, %v591
        %625 = vst.msk [vmem:[%s185 + $0x98] sm:$0xff] %vm605, %v592
        %626 = vst.msk [vmem:[%s185 + $0xa0] sm:$0xff] %vm605, %v593
        %627 = vst.msk [vmem:[%s185 + $0xa8] sm:$0xff] %vm605, %v594
        %628 = vst.msk [vmem:[%s185 + $0xb0] sm:$0xff] %vm605, %v595
        %629 = vst.msk [vmem:[%s185 + $0xb8] sm:$0xff] %vm605, %v596
        %630 = vst.msk [vmem:[%s185 + $0xc0] sm:$0xff] %vm605, %v597
        %631 = vst.msk [vmem:[%s185 + $0xc8] sm:$0xff] %vm605, %v598
        %632 = vst.msk [vmem:[%s185 + $0xd0] sm:$0xff] %vm605, %v599
        %633 = vst.msk [vmem:[%s185 + $0xd8] sm:$0xff] %vm605, %v600
        %634 = vst.msk [vmem:[%s185 + $0xe0] sm:$0xff] %vm605, %v601
        %635 = vst.msk [vmem:[%s185 + $0xe8] sm:$0xff] %vm605, %v602
        %636 = vst.msk [vmem:[%s185 + $0xf0] sm:$0xff] %vm605, %v603
        %637 = vst.msk [vmem:[%s185 + $0xf8] sm:$0xff] %vm605, %v604
        %s638 = smul.u32 32, %s15
        %p639 = scmp.lt.s32.totalorder %s638, 63
        %s640 = scalar_select %p639, %s638, 63
        %s641 = smul.addr %s640, 8
        %s642 = scalar_lea.vmem %s3, %s641
        // Predicated region
        $region37: #{discriminator2d_forward.5} parent=31 // pred_check
          %p643 = pneg %p101
        $region38: #{discriminator2d_forward.5} parent=31 // pred_check_branch
          %645 = sbr.rel (%p643) target = $region40
        $region39: #{discriminator2d_forward.5} parent=31 // pred_region
          %s646 = smul.u32 32, %s15
        $region40: #{discriminator2d_forward.5} parent=31 // pred_fallthru
          _
      $region32: #{discriminator2d_forward.5} parent=5 // pred_fallthru
        _
      %p647 = scmp.le.s32.totalorder 2, %s10
      // Predicated region
      $region41: #{discriminator2d_forward.5} parent=5 // pred_check
        %p648 = pneg %p647
      $region42: #{discriminator2d_forward.5} parent=5 // pred_check_branch
        %650 = sbr.rel (%p648) target = $region44
      $region43: #{discriminator2d_forward.5} parent=5 // pred_region
        %s651 = ssub.s32 %s10, 2
        // Predicated region
        $region45: #{discriminator2d_forward.5} parent=43 // pred_check
          %p652 = pneg %p107
        $region46: #{discriminator2d_forward.5} parent=43 // pred_check_branch
          %654 = sbr.rel (%p652) target = $region48
        $region47: #{discriminator2d_forward.5} parent=43 // pred_region
          %s655 = smul.u32 32, %s16
          %p656 = scmp.lt.s32.totalorder %s655, 63
          %s657 = scalar_select %p656, %s655, 63
          %s658 = smul.addr %s657, 8
          %s659 = scalar_lea.vmem %s3, %s658
        $region48: #{discriminator2d_forward.5} parent=43 // pred_fallthru
          _
      $region44: #{discriminator2d_forward.5} parent=5 // pred_fallthru
        _
    $region6: #{discriminator2d_forward.5} parent=1 // loop_footer
      %s14 = sadd.s32 1, %s10
    $region7: #{discriminator2d_forward.5} parent=1 // loop_footer_branch
      %9 = sbr.rel target = $region3
    $region8: #{discriminator2d_forward.5} parent=1 // loop_exit
      _
    %660 = vsyncpa [#allocation3], 1
    %s661 = scalar_lea.sflag [#allocation3], 1
    %662 = vsyncpa %s661, 1

// kernel: discriminator2d_forward.6
$region0: #{discriminator2d_forward.6}
  #allocation0 [shape = 'u32[]', space=smem, size = 0x4, offset = 0x4, fixed_abs, tag = 'smem constant byte address 0x4 - core index']
  #allocation1 [shape = 'u32[144,128]{1,0:T(1,128)}', space=vmem, size = 0x12000, scoped, tag = 'internal scratch']
  %s0 = inlined_call_operand.vmem [shape: bf16[128,1024], index: 0, kind: input, shape index: {}]
  %s1 = inlined_call_operand.vmem [shape: bf16[1024,128], index: 1, kind: input, shape index: {}]
  %s2 = inlined_call_operand.vmem [shape: f32[1,128], index: 2, kind: input, shape index: {}]
  %s3 = inlined_call_operand.vmem [shape: f32[128,128], index: 3, kind: output, shape index: {}]
  %s4 = sld [smem:[#allocation0]]
  $region45: #{discriminator2d_forward.6} parent=0
    _
  %s6 = ssub.s32 1, %s4
  %s7 = scalar_select 0, %s6, %s4
  loop: start=0, step=1, limit=4
  $region2: #{discriminator2d_forward.6} parent=0 // loop_pre_header
    _
  $region3: #{discriminator2d_forward.6} parent=0 // loop_header
    %s9 = sphi 0, %s13
    %p10 = scmp.ge.s32.totalorder %s9, 4
    %s19 = sphi 0, %s21
    %s22 = sphi 0, %s19
    %s23 = sphi 0, %s22
    %s39 = sphi 0, %s23
    %s43 = sphi 0, %s43
    %s45 = sphi 0, %s43
    %s46 = sphi 0, %s45
    %s60 = sphi 0, %s46
    %s64 = sphi 0, %s64
    %s66 = sphi 0, %s64
    %s67 = sphi 0, %s66
    %s81 = sphi 0, %s67
    %s87 = sphi 0, %s89
    %s90 = sphi 0, %s87
    %s91 = sphi 0, %s90
    %s107 = sphi 0, %s91
  $region4: #{discriminator2d_forward.6} parent=0 // loop_header_branch
    %12 = sbr.rel (%p10) target = $region8
  $region5: #{discriminator2d_forward.6} parent=0 // loop_body
    %s14 = ssub.s32 %s9, 1
    %s15 = ssub.s32 %s9, 2
    %s16 = sadd.s32 %s9, 1
    %s17 = ssub.s32 %s9, %s16
    %p18 = scmp.eq.s32.totalorder %s17, 0
    %s20 = sadd.s32 %s19, 1
    %s21 = scalar_select %p18, %s19, %s20
    %p24 = pneg %p18
    %p25 = scmp.eq.s32.totalorder %s9, 1
    %p26 = por %p24, %p25
    %p27 = scmp.ne.s32.totalorder %s19, %s22
    %p28 = scmp.eq.s32.totalorder %s9, 0
    %p29 = por %p27, %p28
    %p30 = scmp.ne.s32.totalorder %s19, %s22
    %p31 = scmp.eq.s32.totalorder %s14, 1
    %p32 = por %p30, %p31
    %p33 = scmp.ne.s32.totalorder %s22, %s23
    %p34 = scmp.eq.s32.totalorder %s14, 0
    %p35 = por %p33, %p34
    %p36 = scmp.ne.s32.totalorder %s22, %s23
    %p37 = scmp.eq.s32.totalorder %s15, 1
    %p38 = por %p36, %p37
    %p40 = scmp.ne.s32.totalorder %s23, %s39
    %p41 = scmp.eq.s32.totalorder %s15, 0
    %p42 = por %p40, %p41
    %s44 = sadd.s32 %s43, 1
    %p47 = scmp.eq.s32.totalorder %s9, 1
    %p48 = scmp.ne.s32.totalorder %s43, %s45
    %p49 = scmp.eq.s32.totalorder %s9, 0
    %p50 = por %p48, %p49
    %p51 = scmp.ne.s32.totalorder %s43, %s45
    %p52 = scmp.eq.s32.totalorder %s14, 1
    %p53 = por %p51, %p52
    %p54 = scmp.ne.s32.totalorder %s45, %s46
    %p55 = scmp.eq.s32.totalorder %s14, 0
    %p56 = por %p54, %p55
    %p57 = scmp.ne.s32.totalorder %s45, %s46
    %p58 = scmp.eq.s32.totalorder %s15, 1
    %p59 = por %p57, %p58
    %p61 = scmp.ne.s32.totalorder %s46, %s60
    %p62 = scmp.eq.s32.totalorder %s15, 0
    %p63 = por %p61, %p62
    %s65 = sadd.s32 %s64, 1
    %p68 = scmp.eq.s32.totalorder %s9, 1
    %p69 = scmp.ne.s32.totalorder %s64, %s66
    %p70 = scmp.eq.s32.totalorder %s9, 0
    %p71 = por %p69, %p70
    %p72 = scmp.ne.s32.totalorder %s64, %s66
    %p73 = scmp.eq.s32.totalorder %s14, 1
    %p74 = por %p72, %p73
    %p75 = scmp.ne.s32.totalorder %s66, %s67
    %p76 = scmp.eq.s32.totalorder %s14, 0
    %p77 = por %p75, %p76
    %p78 = scmp.ne.s32.totalorder %s66, %s67
    %p79 = scmp.eq.s32.totalorder %s15, 1
    %p80 = por %p78, %p79
    %p82 = scmp.ne.s32.totalorder %s67, %s81
    %p83 = scmp.eq.s32.totalorder %s15, 0
    %p84 = por %p82, %p83
    %s85 = ssub.s32 %s9, %s16
    %p86 = scmp.eq.s32.totalorder %s85, 0
    %s88 = sadd.s32 %s87, 1
    %s89 = scalar_select %p86, %s87, %s88
    %p92 = pneg %p86
    %p93 = scmp.eq.s32.totalorder %s9, 1
    %p94 = por %p92, %p93
    %p95 = scmp.ne.s32.totalorder %s87, %s90
    %p96 = scmp.eq.s32.totalorder %s9, 0
    %p97 = por %p95, %p96
    %p98 = scmp.ne.s32.totalorder %s87, %s90
    %p99 = scmp.eq.s32.totalorder %s14, 1
    %p100 = por %p98, %p99
    %p101 = scmp.ne.s32.totalorder %s90, %s91
    %p102 = scmp.eq.s32.totalorder %s14, 0
    %p103 = por %p101, %p102
    %p104 = scmp.ne.s32.totalorder %s90, %s91
    %p105 = scmp.eq.s32.totalorder %s15, 1
    %p106 = por %p104, %p105
    %p108 = scmp.ne.s32.totalorder %s91, %s107
    %p109 = scmp.eq.s32.totalorder %s15, 0
    %p110 = por %p108, %p109
    %p111 = scmp.le.s32.totalorder 1, %s9
    %p112 = scmp.lt.s32.totalorder %s9, 3
    %p113 = pnand %p111, %p112
    %p114 = pneg %p113
    // Predicated region
    $region9: #{discriminator2d_forward.6} parent=5 // pred_check
      _
    $region10: #{discriminator2d_forward.6} parent=5 // pred_check_branch
      %116 = sbr.rel (%p113) target = $region12
    $region11: #{discriminator2d_forward.6} parent=5 // pred_region
      %s117 = ssub.s32 %s9, 1
      // Predicated region
      $region13: #{discriminator2d_forward.6} parent=11 // pred_check
        %p118 = pneg %p56
      $region14: #{discriminator2d_forward.6} parent=11 // pred_check_branch
        %120 = sbr.rel (%p118) target = $region16
      $region15: #{discriminator2d_forward.6} parent=11 // pred_region
        _
      $region16: #{discriminator2d_forward.6} parent=11 // pred_fallthru
        _
      // Predicated region
      $region17: #{discriminator2d_forward.6} parent=11 // pred_check
        %p121 = pneg %p77
      $region18: #{discriminator2d_forward.6} parent=11 // pred_check_branch
        %123 = sbr.rel (%p121) target = $region20
      $region19: #{discriminator2d_forward.6} parent=11 // pred_region
        _
      $region20: #{discriminator2d_forward.6} parent=11 // pred_fallthru
        _
    $region12: #{discriminator2d_forward.6} parent=5 // pred_fallthru
      _
    %p124 = scmp.lt.s32.totalorder %s9, 2
    // Predicated region
    $region21: #{discriminator2d_forward.6} parent=5 // pred_check
      %p125 = pneg %p124
    $region22: #{discriminator2d_forward.6} parent=5 // pred_check_branch
      %127 = sbr.rel (%p125) target = $region24
    $region23: #{discriminator2d_forward.6} parent=5 // pred_region
      // Predicated region
      $region25: #{discriminator2d_forward.6} parent=23 // pred_check
        %p128 = pneg %p29
      $region26: #{discriminator2d_forward.6} parent=23 // pred_check_branch
        %130 = sbr.rel (%p128) target = $region28
      $region27: #{discriminator2d_forward.6} parent=23 // pred_region
        %s131 = smul.u32 8, %s9
        %p132 = scmp.lt.s32.totalorder %s131, 15
        %s133 = scalar_select %p132, %s131, 15
        %s134 = smul.addr %s133, 8
        %s135 = smul.addr %s134, 4
        %s136 = scalar_lea.vmem %s0, %s135
        %s137 = smul.u32 8, %s9
      $region28: #{discriminator2d_forward.6} parent=23 // pred_fallthru
        _
    $region24: #{discriminator2d_forward.6} parent=5 // pred_fallthru
      _
    %p138 = scmp.le.s32.totalorder 1, %s9
    %p139 = scmp.lt.s32.totalorder %s9, 3
    %p140 = pnand %p138, %p139
    %p141 = pneg %p140
    // Predicated region
    $region29: #{discriminator2d_forward.6} parent=5 // pred_check
      _
    $region30: #{discriminator2d_forward.6} parent=5 // pred_check_branch
      %143 = sbr.rel (%p140) target = $region32
    $region31: #{discriminator2d_forward.6} parent=5 // pred_region
      %s144 = ssub.s32 %s9, 1
      %s145 = smul.u32 8, %s14
      %p146 = scmp.lt.s32.totalorder %s145, 15
      %s147 = scalar_select %p146, %s145, 15
      %s148 = smul.addr %s147, 8
      %s149 = smul.addr %s148, 4
      %s150 = scalar_lea.vmem %s0, %s149
      %p151 = pneg %p35
      %p152 = pneg %p32
      %p153 = pneg %p56
      %p154 = pneg %p53
      %p155 = pneg %p77
      %p156 = pneg %p74
      %p157 = pneg %p103
      %p158 = pneg %p100
      %s159 = smul.u32 8, %s14
      %p160 = scmp.lt.s32.totalorder %s159, 15
      %s161 = scalar_select %p160, %s159, 15
      %s162 = smul.addr %s161, 8
      %s163 = scalar_lea.vmem %s3, %s162
      %s164 = smul.u32 8, %s14
      %p165 = scmp.lt.s32.totalorder %s164, 15
      %s166 = scalar_select %p165, %s164, 15
      %s167 = smul.addr %s166, 8
      %s168 = smul.addr %s167, 4
      %s169 = scalar_lea.vmem %s0, %s168
      %s170 = smul.u32 8, %s14
      %s171 = smul.u32 8, %s14
      %p172 = scmp.lt.s32.totalorder %s171, 15
      %s173 = scalar_select %p172, %s171, 15
      %s174 = smul.addr %s173, 8
      %s175 = scalar_lea.vmem %s3, %s174
      %s176 = smul.u32 8, %s14
      %v178 = vld [vmem:[%s169] sm:$0xff]
      %v179 = vld [vmem:[%s169 + $0x8] sm:$0xff]
      %v180 = vld [vmem:[%s169 + $0x10] sm:$0xff]
      %v181 = vld [vmem:[%s169 + $0x18] sm:$0xff]
      %v182 = vld [vmem:[%s169 + $0x20] sm:$0xff]
      %v183 = vld [vmem:[%s169 + $0x28] sm:$0xff]
      %v184 = vld [vmem:[%s169 + $0x30] sm:$0xff]
      %v185 = vld [vmem:[%s169 + $0x38] sm:$0xff]
      %v186 = vld [vmem:[%s169 + $0x40] sm:$0xff]
      %v187 = vld [vmem:[%s169 + $0x48] sm:$0xff]
      %v188 = vld [vmem:[%s169 + $0x50] sm:$0xff]
      %v189 = vld [vmem:[%s169 + $0x58] sm:$0xff]
      %v190 = vld [vmem:[%s169 + $0x60] sm:$0xff]
      %v191 = vld [vmem:[%s169 + $0x68] sm:$0xff]
      %v192 = vld [vmem:[%s169 + $0x70] sm:$0xff]
      %v193 = vld [vmem:[%s169 + $0x78] sm:$0xff]
      %v194 = vld [vmem:[%s169 + $0x80] sm:$0xff]
      %v195 = vld [vmem:[%s169 + $0x88] sm:$0xff]
      %v196 = vld [vmem:[%s169 + $0x90] sm:$0xff]
      %v197 = vld [vmem:[%s169 + $0x98] sm:$0xff]
      %v198 = vld [vmem:[%s169 + $0xa0] sm:$0xff]
      %v199 = vld [vmem:[%s169 + $0xa8] sm:$0xff]
      %v200 = vld [vmem:[%s169 + $0xb0] sm:$0xff]
      %v201 = vld [vmem:[%s169 + $0xb8] sm:$0xff]
      %v202 = vld [vmem:[%s169 + $0xc0] sm:$0xff]
      %v203 = vld [vmem:[%s169 + $0xc8] sm:$0xff]
      %v204 = vld [vmem:[%s169 + $0xd0] sm:$0xff]
      %v205 = vld [vmem:[%s169 + $0xd8] sm:$0xff]
      %v206 = vld [vmem:[%s169 + $0xe0] sm:$0xff]
      %v207 = vld [vmem:[%s169 + $0xe8] sm:$0xff]
      %v208 = vld [vmem:[%s169 + $0xf0] sm:$0xff]
      %v209 = vld [vmem:[%s169 + $0xf8] sm:$0xff]
      %v210 = vld [vmem:[%s1] sm:$0xf]
      %v211 = vld [vmem:[%s1 + $0x4] sm:$0xf]
      %v212 = vld [vmem:[%s1 + $0x8] sm:$0xf]
      %v213 = vld [vmem:[%s1 + $0xc] sm:$0xf]
      %v214 = vld [vmem:[%s1 + $0x10] sm:$0xf]
      %v215 = vld [vmem:[%s1 + $0x14] sm:$0xf]
      %v216 = vld [vmem:[%s1 + $0x18] sm:$0xf]
      %v217 = vld [vmem:[%s1 + $0x1c] sm:$0xf]
      %v218 = vld [vmem:[%s1 + $0x20] sm:$0xf]
      %v219 = vld [vmem:[%s1 + $0x24] sm:$0xf]
      %v220 = vld [vmem:[%s1 + $0x28] sm:$0xf]
      %v221 = vld [vmem:[%s1 + $0x2c] sm:$0xf]
      %v222 = vld [vmem:[%s1 + $0x30] sm:$0xf]
      %v223 = vld [vmem:[%s1 + $0x34] sm:$0xf]
      %v224 = vld [vmem:[%s1 + $0x38] sm:$0xf]
      %v225 = vld [vmem:[%s1 + $0x3c] sm:$0xf]
      %v226 = vld [vmem:[%s1 + $0x40] sm:$0xf]
      %v227 = vld [vmem:[%s1 + $0x44] sm:$0xf]
      %v228 = vld [vmem:[%s1 + $0x48] sm:$0xf]
      %v229 = vld [vmem:[%s1 + $0x4c] sm:$0xf]
      %v230 = vld [vmem:[%s1 + $0x50] sm:$0xf]
      %v231 = vld [vmem:[%s1 + $0x54] sm:$0xf]
      %v232 = vld [vmem:[%s1 + $0x58] sm:$0xf]
      %v233 = vld [vmem:[%s1 + $0x5c] sm:$0xf]
      %v234 = vld [vmem:[%s1 + $0x60] sm:$0xf]
      %v235 = vld [vmem:[%s1 + $0x64] sm:$0xf]
      %v236 = vld [vmem:[%s1 + $0x68] sm:$0xf]
      %v237 = vld [vmem:[%s1 + $0x6c] sm:$0xf]
      %v238 = vld [vmem:[%s1 + $0x70] sm:$0xf]
      %v239 = vld [vmem:[%s1 + $0x74] sm:$0xf]
      %v240 = vld [vmem:[%s1 + $0x78] sm:$0xf]
      %v241 = vld [vmem:[%s1 + $0x7c] sm:$0xf]
      %v242 = vld [vmem:[%s1 + $0x80] sm:$0xf]
      %v243 = vld [vmem:[%s1 + $0x84] sm:$0xf]
      %v244 = vld [vmem:[%s1 + $0x88] sm:$0xf]
      %v245 = vld [vmem:[%s1 + $0x8c] sm:$0xf]
      %v246 = vld [vmem:[%s1 + $0x90] sm:$0xf]
      %v247 = vld [vmem:[%s1 + $0x94] sm:$0xf]
      %v248 = vld [vmem:[%s1 + $0x98] sm:$0xf]
      %v249 = vld [vmem:[%s1 + $0x9c] sm:$0xf]
      %v250 = vld [vmem:[%s1 + $0xa0] sm:$0xf]
      %v251 = vld [vmem:[%s1 + $0xa4] sm:$0xf]
      %v252 = vld [vmem:[%s1 + $0xa8] sm:$0xf]
      %v253 = vld [vmem:[%s1 + $0xac] sm:$0xf]
      %v254 = vld [vmem:[%s1 + $0xb0] sm:$0xf]
      %v255 = vld [vmem:[%s1 + $0xb4] sm:$0xf]
      %v256 = vld [vmem:[%s1 + $0xb8] sm:$0xf]
      %v257 = vld [vmem:[%s1 + $0xbc] sm:$0xf]
      %v258 = vld [vmem:[%s1 + $0xc0] sm:$0xf]
      %v259 = vld [vmem:[%s1 + $0xc4] sm:$0xf]
      %v260 = vld [vmem:[%s1 + $0xc8] sm:$0xf]
      %v261 = vld [vmem:[%s1 + $0xcc] sm:$0xf]
      %v262 = vld [vmem:[%s1 + $0xd0] sm:$0xf]
      %v263 = vld [vmem:[%s1 + $0xd4] sm:$0xf]
      %v264 = vld [vmem:[%s1 + $0xd8] sm:$0xf]
      %v265 = vld [vmem:[%s1 + $0xdc] sm:$0xf]
      %v266 = vld [vmem:[%s1 + $0xe0] sm:$0xf]
      %v267 = vld [vmem:[%s1 + $0xe4] sm:$0xf]
      %v268 = vld [vmem:[%s1 + $0xe8] sm:$0xf]
      %v269 = vld [vmem:[%s1 + $0xec] sm:$0xf]
      %v270 = vld [vmem:[%s1 + $0xf0] sm:$0xf]
      %v271 = vld [vmem:[%s1 + $0xf4] sm:$0xf]
      %v272 = vld [vmem:[%s1 + $0xf8] sm:$0xf]
      %v273 = vld [vmem:[%s1 + $0xfc] sm:$0xf]
      %v274 = vld [vmem:[%s1 + $0x100] sm:$0xf]
      %v275 = vld [vmem:[%s1 + $0x104] sm:$0xf]
      %v276 = vld [vmem:[%s1 + $0x108] sm:$0xf]
      %v277 = vld [vmem:[%s1 + $0x10c] sm:$0xf]
      %v278 = vld [vmem:[%s1 + $0x110] sm:$0xf]
      %v279 = vld [vmem:[%s1 + $0x114] sm:$0xf]
      %v280 = vld [vmem:[%s1 + $0x118] sm:$0xf]
      %v281 = vld [vmem:[%s1 + $0x11c] sm:$0xf]
      %v282 = vld [vmem:[%s1 + $0x120] sm:$0xf]
      %v283 = vld [vmem:[%s1 + $0x124] sm:$0xf]
      %v284 = vld [vmem:[%s1 + $0x128] sm:$0xf]
      %v285 = vld [vmem:[%s1 + $0x12c] sm:$0xf]
      %v286 = vld [vmem:[%s1 + $0x130] sm:$0xf]
      %v287 = vld [vmem:[%s1 + $0x134] sm:$0xf]
      %v288 = vld [vmem:[%s1 + $0x138] sm:$0xf]
      %v289 = vld [vmem:[%s1 + $0x13c] sm:$0xf]
      %v290 = vld [vmem:[%s1 + $0x140] sm:$0xf]
      %v291 = vld [vmem:[%s1 + $0x144] sm:$0xf]
      %v292 = vld [vmem:[%s1 + $0x148] sm:$0xf]
      %v293 = vld [vmem:[%s1 + $0x14c] sm:$0xf]
      %v294 = vld [vmem:[%s1 + $0x150] sm:$0xf]
      %v295 = vld [vmem:[%s1 + $0x154] sm:$0xf]
      %v296 = vld [vmem:[%s1 + $0x158] sm:$0xf]
      %v297 = vld [vmem:[%s1 + $0x15c] sm:$0xf]
      %v298 = vld [vmem:[%s1 + $0x160] sm:$0xf]
      %v299 = vld [vmem:[%s1 + $0x164] sm:$0xf]
      %v300 = vld [vmem:[%s1 + $0x168] sm:$0xf]
      %v301 = vld [vmem:[%s1 + $0x16c] sm:$0xf]
      %v302 = vld [vmem:[%s1 + $0x170] sm:$0xf]
      %v303 = vld [vmem:[%s1 + $0x174] sm:$0xf]
      %v304 = vld [vmem:[%s1 + $0x178] sm:$0xf]
      %v305 = vld [vmem:[%s1 + $0x17c] sm:$0xf]
      %v306 = vld [vmem:[%s1 + $0x180] sm:$0xf]
      %v307 = vld [vmem:[%s1 + $0x184] sm:$0xf]
      %v308 = vld [vmem:[%s1 + $0x188] sm:$0xf]
      %v309 = vld [vmem:[%s1 + $0x18c] sm:$0xf]
      %v310 = vld [vmem:[%s1 + $0x190] sm:$0xf]
      %v311 = vld [vmem:[%s1 + $0x194] sm:$0xf]
      %v312 = vld [vmem:[%s1 + $0x198] sm:$0xf]
      %v313 = vld [vmem:[%s1 + $0x19c] sm:$0xf]
      %v314 = vld [vmem:[%s1 + $0x1a0] sm:$0xf]
      %v315 = vld [vmem:[%s1 + $0x1a4] sm:$0xf]
      %v316 = vld [vmem:[%s1 + $0x1a8] sm:$0xf]
      %v317 = vld [vmem:[%s1 + $0x1ac] sm:$0xf]
      %v318 = vld [vmem:[%s1 + $0x1b0] sm:$0xf]
      %v319 = vld [vmem:[%s1 + $0x1b4] sm:$0xf]
      %v320 = vld [vmem:[%s1 + $0x1b8] sm:$0xf]
      %v321 = vld [vmem:[%s1 + $0x1bc] sm:$0xf]
      %v322 = vld [vmem:[%s1 + $0x1c0] sm:$0xf]
      %v323 = vld [vmem:[%s1 + $0x1c4] sm:$0xf]
      %v324 = vld [vmem:[%s1 + $0x1c8] sm:$0xf]
      %v325 = vld [vmem:[%s1 + $0x1cc] sm:$0xf]
      %v326 = vld [vmem:[%s1 + $0x1d0] sm:$0xf]
      %v327 = vld [vmem:[%s1 + $0x1d4] sm:$0xf]
      %v328 = vld [vmem:[%s1 + $0x1d8] sm:$0xf]
      %v329 = vld [vmem:[%s1 + $0x1dc] sm:$0xf]
      %v330 = vld [vmem:[%s1 + $0x1e0] sm:$0xf]
      %v331 = vld [vmem:[%s1 + $0x1e4] sm:$0xf]
      %v332 = vld [vmem:[%s1 + $0x1e8] sm:$0xf]
      %v333 = vld [vmem:[%s1 + $0x1ec] sm:$0xf]
      %v334 = vld [vmem:[%s1 + $0x1f0] sm:$0xf]
      %v335 = vld [vmem:[%s1 + $0x1f4] sm:$0xf]
      %v336 = vld [vmem:[%s1 + $0x1f8] sm:$0xf]
      %v337 = vld [vmem:[%s1 + $0x1fc] sm:$0xf]
      %v338 = vld [vmem:[%s2] sm:$0x1]
      %v340 = vlaneseq
      %v341 = vshrl.u32 %v340, 7
      %v342 = vsub.s32 0, %v341
      %v343 = vrot.slane %v338, %v342
      %v377 = vunpack.c.l.b16 %v178
      %v378 = vunpack.c.h.b16 %v178
      %v379 = vunpack.c.l.b16 %v179
      %v380 = vunpack.c.h.b16 %v179
      %v381 = vunpack.c.l.b16 %v180
      %v382 = vunpack.c.h.b16 %v180
      %v383 = vunpack.c.l.b16 %v181
      %v384 = vunpack.c.h.b16 %v181
      %v385 = vunpack.c.l.b16 %v182
      %v386 = vunpack.c.h.b16 %v182
      %v387 = vunpack.c.l.b16 %v183
      %v388 = vunpack.c.h.b16 %v183
      %v389 = vunpack.c.l.b16 %v184
      %v390 = vunpack.c.h.b16 %v184
      %v391 = vunpack.c.l.b16 %v185
      %v392 = vunpack.c.h.b16 %v185
      %v393 = vunpack.c.l.b16 %v186
      %v394 = vunpack.c.h.b16 %v186
      %v395 = vunpack.c.l.b16 %v187
      %v396 = vunpack.c.h.b16 %v187
      %v397 = vunpack.c.l.b16 %v188
      %v398 = vunpack.c.h.b16 %v188
      %v399 = vunpack.c.l.b16 %v189
      %v400 = vunpack.c.h.b16 %v189
      %v401 = vunpack.c.l.b16 %v190
      %v402 = vunpack.c.h.b16 %v190
      %v403 = vunpack.c.l.b16 %v191
      %v404 = vunpack.c.h.b16 %v191
      %v405 = vunpack.c.l.b16 %v192
      %v406 = vunpack.c.h.b16 %v192
      %v407 = vunpack.c.l.b16 %v193
      %v408 = vunpack.c.h.b16 %v193
      %v409 = vunpack.c.l.b16 %v194
      %v410 = vunpack.c.h.b16 %v194
      %v411 = vunpack.c.l.b16 %v195
      %v412 = vunpack.c.h.b16 %v195
      %v413 = vunpack.c.l.b16 %v196
      %v414 = vunpack.c.h.b16 %v196
      %v415 = vunpack.c.l.b16 %v197
      %v416 = vunpack.c.h.b16 %v197
      %v417 = vunpack.c.l.b16 %v198
      %v418 = vunpack.c.h.b16 %v198
      %v419 = vunpack.c.l.b16 %v199
      %v420 = vunpack.c.h.b16 %v199
      %v421 = vunpack.c.l.b16 %v200
      %v422 = vunpack.c.h.b16 %v200
      %v423 = vunpack.c.l.b16 %v201
      %v424 = vunpack.c.h.b16 %v201
      %v425 = vunpack.c.l.b16 %v202
      %v426 = vunpack.c.h.b16 %v202
      %v427 = vunpack.c.l.b16 %v203
      %v428 = vunpack.c.h.b16 %v203
      %v429 = vunpack.c.l.b16 %v204
      %v430 = vunpack.c.h.b16 %v204
      %v431 = vunpack.c.l.b16 %v205
      %v432 = vunpack.c.h.b16 %v205
      %v433 = vunpack.c.l.b16 %v206
      %v434 = vunpack.c.h.b16 %v206
      %v435 = vunpack.c.l.b16 %v207
      %v436 = vunpack.c.h.b16 %v207
      %v437 = vunpack.c.l.b16 %v208
      %v438 = vunpack.c.h.b16 %v208
      %v439 = vunpack.c.l.b16 %v209
      %v440 = vunpack.c.h.b16 %v209
      %v441 = vpack.c.b16 %v385, %v377
      %v442 = vpack.c.b16 %v386, %v378
      %v443 = vpack.c.b16 %v387, %v379
      %v444 = vpack.c.b16 %v388, %v380
      %v445 = vpack.c.b16 %v389, %v381
      %v446 = vpack.c.b16 %v390, %v382
      %v447 = vpack.c.b16 %v391, %v383
      %v448 = vpack.c.b16 %v392, %v384
      %v449 = vpack.c.b16 %v401, %v393
      %v450 = vpack.c.b16 %v402, %v394
      %v451 = vpack.c.b16 %v403, %v395
      %v452 = vpack.c.b16 %v404, %v396
      %v453 = vpack.c.b16 %v405, %v397
      %v454 = vpack.c.b16 %v406, %v398
      %v455 = vpack.c.b16 %v407, %v399
      %v456 = vpack.c.b16 %v408, %v400
      %v457 = vpack.c.b16 %v417, %v409
      %v458 = vpack.c.b16 %v418, %v410
      %v459 = vpack.c.b16 %v419, %v411
      %v460 = vpack.c.b16 %v420, %v412
      %v461 = vpack.c.b16 %v421, %v413
      %v462 = vpack.c.b16 %v422, %v414
      %v463 = vpack.c.b16 %v423, %v415
      %v464 = vpack.c.b16 %v424, %v416
      %v465 = vpack.c.b16 %v433, %v425
      %v466 = vpack.c.b16 %v434, %v426
      %v467 = vpack.c.b16 %v435, %v427
      %v468 = vpack.c.b16 %v436, %v428
      %v469 = vpack.c.b16 %v437, %v429
      %v470 = vpack.c.b16 %v438, %v430
      %v471 = vpack.c.b16 %v439, %v431
      %v472 = vpack.c.b16 %v440, %v432
      %v633 = vunpack.c.l.b16 %v210
      %v634 = vunpack.c.l.b16 %v211
      %v635 = vunpack.c.l.b16 %v212
      %v636 = vunpack.c.l.b16 %v213
      %v637 = vunpack.c.l.b16 %v214
      %v638 = vunpack.c.l.b16 %v215
      %v639 = vunpack.c.l.b16 %v216
      %v640 = vunpack.c.l.b16 %v217
      %v641 = vunpack.c.l.b16 %v218
      %v642 = vunpack.c.l.b16 %v219
      %v643 = vunpack.c.l.b16 %v220
      %v644 = vunpack.c.l.b16 %v221
      %v645 = vunpack.c.l.b16 %v222
      %v646 = vunpack.c.l.b16 %v223
      %v647 = vunpack.c.l.b16 %v224
      %v648 = vunpack.c.l.b16 %v225
      %v649 = vunpack.c.l.b16 %v226
      %v650 = vunpack.c.l.b16 %v227
      %v651 = vunpack.c.l.b16 %v228
      %v652 = vunpack.c.l.b16 %v229
      %v653 = vunpack.c.l.b16 %v230
      %v654 = vunpack.c.l.b16 %v231
      %v655 = vunpack.c.l.b16 %v232
      %v656 = vunpack.c.l.b16 %v233
      %v657 = vunpack.c.l.b16 %v234
      %v658 = vunpack.c.l.b16 %v235
      %v659 = vunpack.c.l.b16 %v236
      %v660 = vunpack.c.l.b16 %v237
      %v661 = vunpack.c.l.b16 %v238
      %v662 = vunpack.c.l.b16 %v239
      %v663 = vunpack.c.l.b16 %v240
      %v664 = vunpack.c.l.b16 %v241
      %v665 = vunpack.c.l.b16 %v242
      %v666 = vunpack.c.l.b16 %v243
      %v667 = vunpack.c.l.b16 %v244
      %v668 = vunpack.c.l.b16 %v245
      %v669 = vunpack.c.l.b16 %v246
      %v670 = vunpack.c.l.b16 %v247
      %v671 = vunpack.c.l.b16 %v248
      %v672 = vunpack.c.l.b16 %v249
      %v673 = vunpack.c.l.b16 %v250
      %v674 = vunpack.c.l.b16 %v251
      %v675 = vunpack.c.l.b16 %v252
      %v676 = vunpack.c.l.b16 %v253
      %v677 = vunpack.c.l.b16 %v254
      %v678 = vunpack.c.l.b16 %v255
      %v679 = vunpack.c.l.b16 %v256
      %v680 = vunpack.c.l.b16 %v257
      %v681 = vunpack.c.l.b16 %v258
      %v682 = vunpack.c.l.b16 %v259
      %v683 = vunpack.c.l.b16 %v260
      %v684 = vunpack.c.l.b16 %v261
      %v685 = vunpack.c.l.b16 %v262
      %v686 = vunpack.c.l.b16 %v263
      %v687 = vunpack.c.l.b16 %v264
      %v688 = vunpack.c.l.b16 %v265
      %v689 = vunpack.c.l.b16 %v266
      %v690 = vunpack.c.l.b16 %v267
      %v691 = vunpack.c.l.b16 %v268
      %v692 = vunpack.c.l.b16 %v269
      %v693 = vunpack.c.l.b16 %v270
      %v694 = vunpack.c.l.b16 %v271
      %v695 = vunpack.c.l.b16 %v272
      %v696 = vunpack.c.l.b16 %v273
      %v697 = vunpack.c.l.b16 %v274
      %v698 = vunpack.c.l.b16 %v275
      %v699 = vunpack.c.l.b16 %v276
      %v700 = vunpack.c.l.b16 %v277
      %v701 = vunpack.c.l.b16 %v278
      %v702 = vunpack.c.l.b16 %v279
      %v703 = vunpack.c.l.b16 %v280
      %v704 = vunpack.c.l.b16 %v281
      %v705 = vunpack.c.l.b16 %v282
      %v706 = vunpack.c.l.b16 %v283
      %v707 = vunpack.c.l.b16 %v284
      %v708 = vunpack.c.l.b16 %v285
      %v709 = vunpack.c.l.b16 %v286
      %v710 = vunpack.c.l.b16 %v287
      %v711 = vunpack.c.l.b16 %v288
      %v712 = vunpack.c.l.b16 %v289
      %v713 = vunpack.c.l.b16 %v290
      %v714 = vunpack.c.l.b16 %v291
      %v715 = vunpack.c.l.b16 %v292
      %v716 = vunpack.c.l.b16 %v293
      %v717 = vunpack.c.l.b16 %v294
      %v718 = vunpack.c.l.b16 %v295
      %v719 = vunpack.c.l.b16 %v296
      %v720 = vunpack.c.l.b16 %v297
      %v721 = vunpack.c.l.b16 %v298
      %v722 = vunpack.c.l.b16 %v299
      %v723 = vunpack.c.l.b16 %v300
      %v724 = vunpack.c.l.b16 %v301
      %v725 = vunpack.c.l.b16 %v302
      %v726 = vunpack.c.l.b16 %v303
      %v727 = vunpack.c.l.b16 %v304
      %v728 = vunpack.c.l.b16 %v305
      %v729 = vunpack.c.l.b16 %v306
      %v730 = vunpack.c.l.b16 %v307
      %v731 = vunpack.c.l.b16 %v308
      %v732 = vunpack.c.l.b16 %v309
      %v733 = vunpack.c.l.b16 %v310
      %v734 = vunpack.c.l.b16 %v311
      %v735 = vunpack.c.l.b16 %v312
      %v736 = vunpack.c.l.b16 %v313
      %v737 = vunpack.c.l.b16 %v314
      %v738 = vunpack.c.l.b16 %v315
      %v739 = vunpack.c.l.b16 %v316
      %v740 = vunpack.c.l.b16 %v317
      %v741 = vunpack.c.l.b16 %v318
      %v742 = vunpack.c.l.b16 %v319
      %v743 = vunpack.c.l.b16 %v320
      %v744 = vunpack.c.l.b16 %v321
      %v745 = vunpack.c.l.b16 %v322
      %v746 = vunpack.c.l.b16 %v323
      %v747 = vunpack.c.l.b16 %v324
      %v748 = vunpack.c.l.b16 %v325
      %v749 = vunpack.c.l.b16 %v326
      %v750 = vunpack.c.l.b16 %v327
      %v751 = vunpack.c.l.b16 %v328
      %v752 = vunpack.c.l.b16 %v329
      %v753 = vunpack.c.l.b16 %v330
      %v754 = vunpack.c.l.b16 %v331
      %v755 = vunpack.c.l.b16 %v332
      %v756 = vunpack.c.l.b16 %v333
      %v757 = vunpack.c.l.b16 %v334
      %v758 = vunpack.c.l.b16 %v335
      %v759 = vunpack.c.l.b16 %v336
      %v760 = vunpack.c.l.b16 %v337
      %v761 = vpack.c.b16 %v634, %v633
      %v762 = vpack.c.b16 %v636, %v635
      %v763 = vpack.c.b16 %v638, %v637
      %v764 = vpack.c.b16 %v640, %v639
      %v765 = vpack.c.b16 %v642, %v641
      %v766 = vpack.c.b16 %v644, %v643
      %v767 = vpack.c.b16 %v646, %v645
      %v768 = vpack.c.b16 %v648, %v647
      %v769 = vpack.c.b16 %v650, %v649
      %v770 = vpack.c.b16 %v652, %v651
      %v771 = vpack.c.b16 %v654, %v653
      %v772 = vpack.c.b16 %v656, %v655
      %v773 = vpack.c.b16 %v658, %v657
      %v774 = vpack.c.b16 %v660, %v659
      %v775 = vpack.c.b16 %v662, %v661
      %v776 = vpack.c.b16 %v664, %v663
      %v777 = vpack.c.b16 %v666, %v665
      %v778 = vpack.c.b16 %v668, %v667
      %v779 = vpack.c.b16 %v670, %v669
      %v780 = vpack.c.b16 %v672, %v671
      %v781 = vpack.c.b16 %v674, %v673
      %v782 = vpack.c.b16 %v676, %v675
      %v783 = vpack.c.b16 %v678, %v677
      %v784 = vpack.c.b16 %v680, %v679
      %v785 = vpack.c.b16 %v682, %v681
      %v786 = vpack.c.b16 %v684, %v683
      %v787 = vpack.c.b16 %v686, %v685
      %v788 = vpack.c.b16 %v688, %v687
      %v789 = vpack.c.b16 %v690, %v689
      %v790 = vpack.c.b16 %v692, %v691
      %v791 = vpack.c.b16 %v694, %v693
      %v792 = vpack.c.b16 %v696, %v695
      %v793 = vpack.c.b16 %v698, %v697
      %v794 = vpack.c.b16 %v700, %v699
      %v795 = vpack.c.b16 %v702, %v701
      %v796 = vpack.c.b16 %v704, %v703
      %v797 = vpack.c.b16 %v706, %v705
      %v798 = vpack.c.b16 %v708, %v707
      %v799 = vpack.c.b16 %v710, %v709
      %v800 = vpack.c.b16 %v712, %v711
      %v801 = vpack.c.b16 %v714, %v713
      %v802 = vpack.c.b16 %v716, %v715
      %v803 = vpack.c.b16 %v718, %v717
      %v804 = vpack.c.b16 %v720, %v719
      %v805 = vpack.c.b16 %v722, %v721
      %v806 = vpack.c.b16 %v724, %v723
      %v807 = vpack.c.b16 %v726, %v725
      %v808 = vpack.c.b16 %v728, %v727
      %v809 = vpack.c.b16 %v730, %v729
      %v810 = vpack.c.b16 %v732, %v731
      %v811 = vpack.c.b16 %v734, %v733
      %v812 = vpack.c.b16 %v736, %v735
      %v813 = vpack.c.b16 %v738, %v737
      %v814 = vpack.c.b16 %v740, %v739
      %v815 = vpack.c.b16 %v742, %v741
      %v816 = vpack.c.b16 %v744, %v743
      %v817 = vpack.c.b16 %v746, %v745
      %v818 = vpack.c.b16 %v748, %v747
      %v819 = vpack.c.b16 %v750, %v749
      %v820 = vpack.c.b16 %v752, %v751
      %v821 = vpack.c.b16 %v754, %v753
      %v822 = vpack.c.b16 %v756, %v755
      %v823 = vpack.c.b16 %v758, %v757
      %v824 = vpack.c.b16 %v760, %v759
      %889 = vmatprep.subr.bf16.mxu0 0
      %890 = vmatpush1.bf16.msra.mxu0 %v768
      %891 = vmatprep.subr.bf16.mxu0 0
      %892 = vmatpush1.bf16.msra.mxu0 %v767
      %893 = vmatprep.subr.bf16.mxu0 0
      %894 = vmatpush1.bf16.msra.mxu0 %v766
      %895 = vmatprep.subr.bf16.mxu0 0
      %896 = vmatpush1.bf16.msra.mxu0 %v765
      %897 = vmatprep.subr.bf16.mxu0 0
      %898 = vmatpush1.bf16.msra.mxu0 %v764
      %899 = vmatprep.subr.bf16.mxu0 0
      %900 = vmatpush1.bf16.msra.mxu0 %v763
      %901 = vmatprep.subr.bf16.mxu0 0
      %902 = vmatpush1.bf16.msra.mxu0 %v762
      %903 = vmatprep.subr.bf16.mxu0 0
      %904 = vmatpush1.bf16.msra.mxu0 %v761
      %905 = vmatprep.subr.bf16.mxu0 0
      %906 = vmatpush2.bf16.msra.mxu0 %v776
      %907 = vmatprep.subr.bf16.mxu0 0
      %908 = vmatpush2.bf16.msra.mxu0 %v775
      %909 = vmatprep.subr.bf16.mxu0 0
      %910 = vmatpush2.bf16.msra.mxu0 %v774
      %911 = vmatprep.subr.bf16.mxu0 0
      %912 = vmatpush2.bf16.msra.mxu0 %v773
      %913 = vmatprep.subr.bf16.mxu0 0
      %914 = vmatpush2.bf16.msra.mxu0 %v772
      %915 = vmatprep.subr.bf16.mxu0 0
      %916 = vmatpush2.bf16.msra.mxu0 %v771
      %917 = vmatprep.subr.bf16.mxu0 0
      %918 = vmatpush2.bf16.msra.mxu0 %v770
      %919 = vmatprep.subr.bf16.mxu0 0
      %920 = vmatpush2.bf16.msra.mxu0 %v769
      %921 = vmatprep.mubr.bf16.mxu0 %v442
      %922 = vmatmul.mubr.bf16.gmra.mxu0 %v441
      %v923 = vpop.f32.mrf.mxu0
      %v924 = vadd.f32 %v343, %v923
      %v925 = vpop.f32.mrf.mxu0
      %v926 = vpop.f32.mrf.mxu0
      %v927 = vadd.f32 %v343, %v926
      %v928 = vpop.f32.mrf.mxu0
      %929 = vmatprep.mubr.bf16.mxu0 %v450
      %930 = vmatmul.mubr.bf16.gmra.mxu0 %v449
      %v931 = vpop.f32.mrf.mxu0
      %v932 = vadd.f32 %v343, %v931
      %v933 = vpop.f32.mrf.mxu0
      %v934 = vpop.f32.mrf.mxu0
      %v935 = vadd.f32 %v343, %v934
      %v936 = vpop.f32.mrf.mxu0
      %937 = vmatprep.mubr.bf16.mxu0 %v458
      %938 = vmatmul.mubr.bf16.gmra.mxu0 %v457
      %v939 = vpop.f32.mrf.mxu0
      %v940 = vadd.f32 %v343, %v939
      %v941 = vpop.f32.mrf.mxu0
      %v942 = vpop.f32.mrf.mxu0
      %v943 = vadd.f32 %v343, %v942
      %v944 = vpop.f32.mrf.mxu0
      %945 = vmatprep.mubr.bf16.mxu0 %v466
      %946 = vmatmul.mubr.bf16.gmra.mxu0 %v465
      %v947 = vpop.f32.mrf.mxu0
      %v948 = vadd.f32 %v343, %v947
      %v949 = vpop.f32.mrf.mxu0
      %v950 = vpop.f32.mrf.mxu0
      %v951 = vadd.f32 %v343, %v950
      %v952 = vpop.f32.mrf.mxu0
      %953 = vdwg.mxu0
      %954 = vmatprep.subr.bf16.mxu0 0
      %955 = vmatpush1.bf16.msra.mxu0 %v784
      %956 = vmatprep.subr.bf16.mxu0 0
      %957 = vmatpush1.bf16.msra.mxu0 %v783
      %958 = vmatprep.subr.bf16.mxu0 0
      %959 = vmatpush1.bf16.msra.mxu0 %v782
      %960 = vmatprep.subr.bf16.mxu0 0
      %961 = vmatpush1.bf16.msra.mxu0 %v781
      %962 = vmatprep.subr.bf16.mxu0 0
      %963 = vmatpush1.bf16.msra.mxu0 %v780
      %964 = vmatprep.subr.bf16.mxu0 0
      %965 = vmatpush1.bf16.msra.mxu0 %v779
      %966 = vmatprep.subr.bf16.mxu0 0
      %967 = vmatpush1.bf16.msra.mxu0 %v778
      %968 = vmatprep.subr.bf16.mxu0 0
      %969 = vmatpush1.bf16.msra.mxu0 %v777
      %970 = vmatprep.subr.bf16.mxu0 0
      %971 = vmatpush2.bf16.msra.mxu0 %v792
      %972 = vmatprep.subr.bf16.mxu0 0
      %973 = vmatpush2.bf16.msra.mxu0 %v791
      %974 = vmatprep.subr.bf16.mxu0 0
      %975 = vmatpush2.bf16.msra.mxu0 %v790
      %976 = vmatprep.subr.bf16.mxu0 0
      %977 = vmatpush2.bf16.msra.mxu0 %v789
      %978 = vmatprep.subr.bf16.mxu0 0
      %979 = vmatpush2.bf16.msra.mxu0 %v788
      %980 = vmatprep.subr.bf16.mxu0 0
      %981 = vmatpush2.bf16.msra.mxu0 %v787
      %982 = vmatprep.subr.bf16.mxu0 0
      %983 = vmatpush2.bf16.msra.mxu0 %v786
      %984 = vmatprep.subr.bf16.mxu0 0
      %985 = vmatpush2.bf16.msra.mxu0 %v785
      %986 = vmatprep.mubr.bf16.mxu0 %v444
      %987 = vmatmul.mubr.bf16.gmra.mxu0 %v443
      %v988 = vpop.f32.mrf.mxu0
      %v989 = vadd.f32 %v924, %v988
      %v990 = vpop.f32.mrf.mxu0
      %v991 = vpop.f32.mrf.mxu0
      %v992 = vadd.f32 %v927, %v991
      %v993 = vpop.f32.mrf.mxu0
      %994 = vmatprep.mubr.bf16.mxu0 %v452
      %995 = vmatmul.mubr.bf16.gmra.mxu0 %v451
      %v996 = vpop.f32.mrf.mxu0
      %v997 = vadd.f32 %v932, %v996
      %v998 = vpop.f32.mrf.mxu0
      %v999 = vpop.f32.mrf.mxu0
      %v1000 = vadd.f32 %v935, %v999
      %v1001 = vpop.f32.mrf.mxu0
      %1002 = vmatprep.mubr.bf16.mxu0 %v460
      %1003 = vmatmul.mubr.bf16.gmra.mxu0 %v459
      %v1004 = vpop.f32.mrf.mxu0
      %v1005 = vadd.f32 %v940, %v1004
      %v1006 = vpop.f32.mrf.mxu0
      %v1007 = vpop.f32.mrf.mxu0
      %v1008 = vadd.f32 %v943, %v1007
      %v1009 = vpop.f32.mrf.mxu0
      %1010 = vmatprep.mubr.bf16.mxu0 %v468
      %1011 = vmatmul.mubr.bf16.gmra.mxu0 %v467
      %v1012 = vpop.f32.mrf.mxu0
      %v1013 = vadd.f32 %v948, %v1012
      %v1014 = vpop.f32.mrf.mxu0
      %v1015 = vpop.f32.mrf.mxu0
      %v1016 = vadd.f32 %v951, %v1015
      %v1017 = vpop.f32.mrf.mxu0
      %1018 = vdwg.mxu0
      %1019 = vmatprep.subr.bf16.mxu0 0
      %1020 = vmatpush1.bf16.msra.mxu0 %v800
      %1021 = vmatprep.subr.bf16.mxu0 0
      %1022 = vmatpush1.bf16.msra.mxu0 %v799
      %1023 = vmatprep.subr.bf16.mxu0 0
      %1024 = vmatpush1.bf16.msra.mxu0 %v798
      %1025 = vmatprep.subr.bf16.mxu0 0
      %1026 = vmatpush1.bf16.msra.mxu0 %v797
      %1027 = vmatprep.subr.bf16.mxu0 0
      %1028 = vmatpush1.bf16.msra.mxu0 %v796
      %1029 = vmatprep.subr.bf16.mxu0 0
      %1030 = vmatpush1.bf16.msra.mxu0 %v795
      %1031 = vmatprep.subr.bf16.mxu0 0
      %1032 = vmatpush1.bf16.msra.mxu0 %v794
      %1033 = vmatprep.subr.bf16.mxu0 0
      %1034 = vmatpush1.bf16.msra.mxu0 %v793
      %1035 = vmatprep.subr.bf16.mxu0 0
      %1036 = vmatpush2.bf16.msra.mxu0 %v808
      %1037 = vmatprep.subr.bf16.mxu0 0
      %1038 = vmatpush2.bf16.msra.mxu0 %v807
      %1039 = vmatprep.subr.bf16.mxu0 0
      %1040 = vmatpush2.bf16.msra.mxu0 %v806
      %1041 = vmatprep.subr.bf16.mxu0 0
      %1042 = vmatpush2.bf16.msra.mxu0 %v805
      %1043 = vmatprep.subr.bf16.mxu0 0
      %1044 = vmatpush2.bf16.msra.mxu0 %v804
      %1045 = vmatprep.subr.bf16.mxu0 0
      %1046 = vmatpush2.bf16.msra.mxu0 %v803
      %1047 = vmatprep.subr.bf16.mxu0 0
      %1048 = vmatpush2.bf16.msra.mxu0 %v802
      %1049 = vmatprep.subr.bf16.mxu0 0
      %1050 = vmatpush2.bf16.msra.mxu0 %v801
      %1051 = vmatprep.mubr.bf16.mxu0 %v446
      %1052 = vmatmul.mubr.bf16.gmra.mxu0 %v445
      %v1053 = vpop.f32.mrf.mxu0
      %v1054 = vadd.f32 %v989, %v1053
      %v1055 = vpop.f32.mrf.mxu0
      %v1056 = vpop.f32.mrf.mxu0
      %v1057 = vadd.f32 %v992, %v1056
      %v1058 = vpop.f32.mrf.mxu0
      %1059 = vmatprep.mubr.bf16.mxu0 %v454
      %1060 = vmatmul.mubr.bf16.gmra.mxu0 %v453
      %v1061 = vpop.f32.mrf.mxu0
      %v1062 = vadd.f32 %v997, %v1061
      %v1063 = vpop.f32.mrf.mxu0
      %v1064 = vpop.f32.mrf.mxu0
      %v1065 = vadd.f32 %v1000, %v1064
      %v1066 = vpop.f32.mrf.mxu0
      %1067 = vmatprep.mubr.bf16.mxu0 %v462
      %1068 = vmatmul.mubr.bf16.gmra.mxu0 %v461
      %v1069 = vpop.f32.mrf.mxu0
      %v1070 = vadd.f32 %v1005, %v1069
      %v1071 = vpop.f32.mrf.mxu0
      %v1072 = vpop.f32.mrf.mxu0
      %v1073 = vadd.f32 %v1008, %v1072
      %v1074 = vpop.f32.mrf.mxu0
      %1075 = vmatprep.mubr.bf16.mxu0 %v470
      %1076 = vmatmul.mubr.bf16.gmra.mxu0 %v469
      %v1077 = vpop.f32.mrf.mxu0
      %v1078 = vadd.f32 %v1013, %v1077
      %v1079 = vpop.f32.mrf.mxu0
      %v1080 = vpop.f32.mrf.mxu0
      %v1081 = vadd.f32 %v1016, %v1080
      %v1082 = vpop.f32.mrf.mxu0
      %1083 = vdwg.mxu0
      %1084 = vmatprep.subr.bf16.mxu0 0
      %1085 = vmatpush1.bf16.msra.mxu0 %v816
      %1086 = vmatprep.subr.bf16.mxu0 0
      %1087 = vmatpush1.bf16.msra.mxu0 %v815
      %1088 = vmatprep.subr.bf16.mxu0 0
      %1089 = vmatpush1.bf16.msra.mxu0 %v814
      %1090 = vmatprep.subr.bf16.mxu0 0
      %1091 = vmatpush1.bf16.msra.mxu0 %v813
      %1092 = vmatprep.subr.bf16.mxu0 0
      %1093 = vmatpush1.bf16.msra.mxu0 %v812
      %1094 = vmatprep.subr.bf16.mxu0 0
      %1095 = vmatpush1.bf16.msra.mxu0 %v811
      %1096 = vmatprep.subr.bf16.mxu0 0
      %1097 = vmatpush1.bf16.msra.mxu0 %v810
      %1098 = vmatprep.subr.bf16.mxu0 0
      %1099 = vmatpush1.bf16.msra.mxu0 %v809
      %1100 = vmatprep.subr.bf16.mxu0 0
      %1101 = vmatpush2.bf16.msra.mxu0 %v824
      %1102 = vmatprep.subr.bf16.mxu0 0
      %1103 = vmatpush2.bf16.msra.mxu0 %v823
      %1104 = vmatprep.subr.bf16.mxu0 0
      %1105 = vmatpush2.bf16.msra.mxu0 %v822
      %1106 = vmatprep.subr.bf16.mxu0 0
      %1107 = vmatpush2.bf16.msra.mxu0 %v821
      %1108 = vmatprep.subr.bf16.mxu0 0
      %1109 = vmatpush2.bf16.msra.mxu0 %v820
      %1110 = vmatprep.subr.bf16.mxu0 0
      %1111 = vmatpush2.bf16.msra.mxu0 %v819
      %1112 = vmatprep.subr.bf16.mxu0 0
      %1113 = vmatpush2.bf16.msra.mxu0 %v818
      %1114 = vmatprep.subr.bf16.mxu0 0
      %1115 = vmatpush2.bf16.msra.mxu0 %v817
      %1116 = vmatprep.mubr.bf16.mxu0 %v448
      %1117 = vmatmul.mubr.bf16.gmra.mxu0 %v447
      %v1118 = vpop.f32.mrf.mxu0
      %v1119 = vadd.f32 %v1054, %v1118
      %v1120 = vpop.f32.mrf.mxu0
      %v1121 = vpop.f32.mrf.mxu0
      %v1122 = vadd.f32 %v1057, %v1121
      %v1123 = vpop.f32.mrf.mxu0
      %1124 = vmatprep.mubr.bf16.mxu0 %v456
      %1125 = vmatmul.mubr.bf16.gmra.mxu0 %v455
      %v1126 = vpop.f32.mrf.mxu0
      %v1127 = vadd.f32 %v1062, %v1126
      %v1128 = vpop.f32.mrf.mxu0
      %v1129 = vpop.f32.mrf.mxu0
      %v1130 = vadd.f32 %v1065, %v1129
      %v1131 = vpop.f32.mrf.mxu0
      %1132 = vmatprep.mubr.bf16.mxu0 %v464
      %1133 = vmatmul.mubr.bf16.gmra.mxu0 %v463
      %v1134 = vpop.f32.mrf.mxu0
      %v1135 = vadd.f32 %v1070, %v1134
      %v1136 = vpop.f32.mrf.mxu0
      %v1137 = vpop.f32.mrf.mxu0
      %v1138 = vadd.f32 %v1073, %v1137
      %v1139 = vpop.f32.mrf.mxu0
      %1140 = vmatprep.mubr.bf16.mxu0 %v472
      %1141 = vmatmul.mubr.bf16.gmra.mxu0 %v471
      %v1142 = vpop.f32.mrf.mxu0
      %v1143 = vadd.f32 %v1078, %v1142
      %v1144 = vpop.f32.mrf.mxu0
      %v1145 = vpop.f32.mrf.mxu0
      %v1146 = vadd.f32 %v1081, %v1145
      %v1147 = vpop.f32.mrf.mxu0
      %1148 = vdwg.mxu0
      %v1149 = vadd.f32 %v1119, %v1122
      %v1150 = vadd.f32 %v1149, %v1127
      %v1151 = vadd.f32 %v1150, %v1130
      %v1152 = vadd.f32 %v1151, %v1135
      %v1153 = vadd.f32 %v1152, %v1138
      %v1154 = vadd.f32 %v1153, %v1143
      %v1155 = vadd.f32 %v1154, %v1146
      %v1156 = vrot.slane %v1155, 4
      %v1157 = vadd.f32 %v1155, %v1156
      %v1158 = vrot.slane %v1157, 2
      %v1159 = vadd.f32 %v1157, %v1158
      %v1160 = vrot.slane %v1159, 1
      %v1161 = vadd.f32 %v1159, %v1160
      %v1162 = vrcp.pop 64.0
      %v1163 = vmul.f32 %v1161, %v1162
      %v1164 = vsub.f32 %v1119, %v1163
      %v1165 = vsub.f32 %v1122, %v1163
      %v1166 = vsub.f32 %v1127, %v1163
      %v1167 = vsub.f32 %v1130, %v1163
      %v1168 = vsub.f32 %v1135, %v1163
      %v1169 = vsub.f32 %v1138, %v1163
      %v1170 = vsub.f32 %v1143, %v1163
      %v1171 = vsub.f32 %v1146, %v1163
      %v1172 = vmul.f32 %v1164, %v1164
      %v1173 = vmul.f32 %v1165, %v1165
      %v1174 = vmul.f32 %v1166, %v1166
      %v1175 = vmul.f32 %v1167, %v1167
      %v1176 = vmul.f32 %v1168, %v1168
      %v1177 = vmul.f32 %v1169, %v1169
      %v1178 = vmul.f32 %v1170, %v1170
      %v1179 = vmul.f32 %v1171, %v1171
      %v1180 = vadd.f32 %v1172, %v1173
      %v1181 = vadd.f32 %v1180, %v1174
      %v1182 = vadd.f32 %v1181, %v1175
      %v1183 = vadd.f32 %v1182, %v1176
      %v1184 = vadd.f32 %v1183, %v1177
      %v1185 = vadd.f32 %v1184, %v1178
      %v1186 = vadd.f32 %v1185, %v1179
      %v1187 = vrot.slane %v1186, 4
      %v1188 = vadd.f32 %v1186, %v1187
      %v1189 = vrot.slane %v1188, 2
      %v1190 = vadd.f32 %v1188, %v1189
      %v1191 = vrot.slane %v1190, 1
      %v1192 = vadd.f32 %v1190, %v1191
      %v1193 = vmul.f32 %v1192, %v1162
      %v1194 = vadd.f32 %v1193, 1e-05
      %v1195 = vrsqrt.pop %v1194
      %v1196 = vmul.f32 %v1164, %v1195
      %v1197 = vmul.f32 %v1165, %v1195
      %v1198 = vmul.f32 %v1166, %v1195
      %v1199 = vmul.f32 %v1167, %v1195
      %v1200 = vmul.f32 %v1168, %v1195
      %v1201 = vmul.f32 %v1169, %v1195
      %v1202 = vmul.f32 %v1170, %v1195
      %v1203 = vmul.f32 %v1171, %v1195
      %v1204 = vmul.f32 %v1196, 0.2
      %v1205 = vmul.f32 %v1197, 0.2
      %v1206 = vmul.f32 %v1198, 0.2
      %v1207 = vmul.f32 %v1199, 0.2
      %v1208 = vmul.f32 %v1200, 0.2
      %v1209 = vmul.f32 %v1201, 0.2
      %v1210 = vmul.f32 %v1202, 0.2
      %v1211 = vmul.f32 %v1203, 0.2
      %v1212 = vmax.f32 %v1196, %v1204
      %v1213 = vmax.f32 %v1197, %v1205
      %v1214 = vmax.f32 %v1198, %v1206
      %v1215 = vmax.f32 %v1199, %v1207
      %v1216 = vmax.f32 %v1200, %v1208
      %v1217 = vmax.f32 %v1201, %v1209
      %v1218 = vmax.f32 %v1202, %v1210
      %v1219 = vmax.f32 %v1203, %v1211
      %1220 = vst [vmem:[%s175] sm:$0xff] %v1212
      %1221 = vst [vmem:[%s175 + $0x8] sm:$0xff] %v1213
      %1222 = vst [vmem:[%s175 + $0x10] sm:$0xff] %v1214
      %1223 = vst [vmem:[%s175 + $0x18] sm:$0xff] %v1215
      %1224 = vst [vmem:[%s175 + $0x20] sm:$0xff] %v1216
      %1225 = vst [vmem:[%s175 + $0x28] sm:$0xff] %v1217
      %1226 = vst [vmem:[%s175 + $0x30] sm:$0xff] %v1218
      %1227 = vst [vmem:[%s175 + $0x38] sm:$0xff] %v1219
      %s1228 = smul.u32 8, %s14
      %p1229 = scmp.lt.s32.totalorder %s1228, 15
      %s1230 = scalar_select %p1229, %s1228, 15
      %s1231 = smul.addr %s1230, 8
      %s1232 = scalar_lea.vmem %s3, %s1231
      // Predicated region
      $region33: #{discriminator2d_forward.6} parent=31 // pred_check
        %p1233 = pneg %p100
      $region34: #{discriminator2d_forward.6} parent=31 // pred_check_branch
        %1235 = sbr.rel (%p1233) target = $region36
      $region35: #{discriminator2d_forward.6} parent=31 // pred_region
        %s1236 = smul.u32 8, %s14
      $region36: #{discriminator2d_forward.6} parent=31 // pred_fallthru
        _
    $region32: #{discriminator2d_forward.6} parent=5 // pred_fallthru
      _
    %p1237 = scmp.le.s32.totalorder 2, %s9
    // Predicated region
    $region37: #{discriminator2d_forward.6} parent=5 // pred_check
      %p1238 = pneg %p1237
    $region38: #{discriminator2d_forward.6} parent=5 // pred_check_branch
      %1240 = sbr.rel (%p1238) target = $region40
    $region39: #{discriminator2d_forward.6} parent=5 // pred_region
      %s1241 = ssub.s32 %s9, 2
      // Predicated region
      $region41: #{discriminator2d_forward.6} parent=39 // pred_check
        %p1242 = pneg %p106
      $region42: #{discriminator2d_forward.6} parent=39 // pred_check_branch
        %1244 = sbr.rel (%p1242) target = $region44
      $region43: #{discriminator2d_forward.6} parent=39 // pred_region
        %s1245 = smul.u32 8, %s15
        %p1246 = scmp.lt.s32.totalorder %s1245, 15
        %s1247 = scalar_select %p1246, %s1245, 15
        %s1248 = smul.addr %s1247, 8
        %s1249 = scalar_lea.vmem %s3, %s1248
      $region44: #{discriminator2d_forward.6} parent=39 // pred_fallthru
        _
    $region40: #{discriminator2d_forward.6} parent=5 // pred_fallthru
      _
  $region6: #{discriminator2d_forward.6} parent=0 // loop_footer
    %s13 = sadd.s32 1, %s9
  $region7: #{discriminator2d_forward.6} parent=0 // loop_footer_branch
    %8 = sbr.rel target = $region3
  $region8: #{discriminator2d_forward.6} parent=0 // loop_exit
    _

// kernel: discriminator2d_forward.7
$region0: #{discriminator2d_forward.7}
  #allocation0 [shape = 'u32[]', space=smem, size = 0x4, offset = 0x4, fixed_abs, tag = 'smem constant byte address 0x4 - core index']
  #allocation1 [shape = 'u32[144,128]{1,0:T(1,128)}', space=vmem, size = 0x12000, scoped, tag = 'internal scratch']
  %s0 = inlined_call_operand.vmem [shape: bf16[32,2048], index: 0, kind: input, shape index: {}]
  %s1 = inlined_call_operand.vmem [shape: bf16[2048,256], index: 1, kind: input, shape index: {}]
  %s2 = inlined_call_operand.vmem [shape: f32[1,256], index: 2, kind: input, shape index: {}]
  %s3 = inlined_call_operand.vmem [shape: f32[32,256], index: 3, kind: output, shape index: {}]
  %s4 = sld [smem:[#allocation0]]
  $region45: #{discriminator2d_forward.7} parent=0
    _
  %s6 = ssub.s32 1, %s4
  %s7 = scalar_select 0, %s6, %s4
  loop: start=0, step=1, limit=4
  $region2: #{discriminator2d_forward.7} parent=0 // loop_pre_header
    _
  $region3: #{discriminator2d_forward.7} parent=0 // loop_header
    %s9 = sphi 0, %s13
    %p10 = scmp.ge.s32.totalorder %s9, 4
    %s19 = sphi 0, %s21
    %s22 = sphi 0, %s19
    %s23 = sphi 0, %s22
    %s39 = sphi 0, %s23
    %s43 = sphi 0, %s43
    %s45 = sphi 0, %s43
    %s46 = sphi 0, %s45
    %s60 = sphi 0, %s46
    %s64 = sphi 0, %s64
    %s66 = sphi 0, %s64
    %s67 = sphi 0, %s66
    %s81 = sphi 0, %s67
    %s87 = sphi 0, %s89
    %s90 = sphi 0, %s87
    %s91 = sphi 0, %s90
    %s107 = sphi 0, %s91
  $region4: #{discriminator2d_forward.7} parent=0 // loop_header_branch
    %12 = sbr.rel (%p10) target = $region8
  $region5: #{discriminator2d_forward.7} parent=0 // loop_body
    %s14 = ssub.s32 %s9, 1
    %s15 = ssub.s32 %s9, 2
    %s16 = sadd.s32 %s9, 1
    %s17 = ssub.s32 %s9, %s16
    %p18 = scmp.eq.s32.totalorder %s17, 0
    %s20 = sadd.s32 %s19, 1
    %s21 = scalar_select %p18, %s19, %s20
    %p24 = pneg %p18
    %p25 = scmp.eq.s32.totalorder %s9, 1
    %p26 = por %p24, %p25
    %p27 = scmp.ne.s32.totalorder %s19, %s22
    %p28 = scmp.eq.s32.totalorder %s9, 0
    %p29 = por %p27, %p28
    %p30 = scmp.ne.s32.totalorder %s19, %s22
    %p31 = scmp.eq.s32.totalorder %s14, 1
    %p32 = por %p30, %p31
    %p33 = scmp.ne.s32.totalorder %s22, %s23
    %p34 = scmp.eq.s32.totalorder %s14, 0
    %p35 = por %p33, %p34
    %p36 = scmp.ne.s32.totalorder %s22, %s23
    %p37 = scmp.eq.s32.totalorder %s15, 1
    %p38 = por %p36, %p37
    %p40 = scmp.ne.s32.totalorder %s23, %s39
    %p41 = scmp.eq.s32.totalorder %s15, 0
    %p42 = por %p40, %p41
    %s44 = sadd.s32 %s43, 1
    %p47 = scmp.eq.s32.totalorder %s9, 1
    %p48 = scmp.ne.s32.totalorder %s43, %s45
    %p49 = scmp.eq.s32.totalorder %s9, 0
    %p50 = por %p48, %p49
    %p51 = scmp.ne.s32.totalorder %s43, %s45
    %p52 = scmp.eq.s32.totalorder %s14, 1
    %p53 = por %p51, %p52
    %p54 = scmp.ne.s32.totalorder %s45, %s46
    %p55 = scmp.eq.s32.totalorder %s14, 0
    %p56 = por %p54, %p55
    %p57 = scmp.ne.s32.totalorder %s45, %s46
    %p58 = scmp.eq.s32.totalorder %s15, 1
    %p59 = por %p57, %p58
    %p61 = scmp.ne.s32.totalorder %s46, %s60
    %p62 = scmp.eq.s32.totalorder %s15, 0
    %p63 = por %p61, %p62
    %s65 = sadd.s32 %s64, 1
    %p68 = scmp.eq.s32.totalorder %s9, 1
    %p69 = scmp.ne.s32.totalorder %s64, %s66
    %p70 = scmp.eq.s32.totalorder %s9, 0
    %p71 = por %p69, %p70
    %p72 = scmp.ne.s32.totalorder %s64, %s66
    %p73 = scmp.eq.s32.totalorder %s14, 1
    %p74 = por %p72, %p73
    %p75 = scmp.ne.s32.totalorder %s66, %s67
    %p76 = scmp.eq.s32.totalorder %s14, 0
    %p77 = por %p75, %p76
    %p78 = scmp.ne.s32.totalorder %s66, %s67
    %p79 = scmp.eq.s32.totalorder %s15, 1
    %p80 = por %p78, %p79
    %p82 = scmp.ne.s32.totalorder %s67, %s81
    %p83 = scmp.eq.s32.totalorder %s15, 0
    %p84 = por %p82, %p83
    %s85 = ssub.s32 %s9, %s16
    %p86 = scmp.eq.s32.totalorder %s85, 0
    %s88 = sadd.s32 %s87, 1
    %s89 = scalar_select %p86, %s87, %s88
    %p92 = pneg %p86
    %p93 = scmp.eq.s32.totalorder %s9, 1
    %p94 = por %p92, %p93
    %p95 = scmp.ne.s32.totalorder %s87, %s90
    %p96 = scmp.eq.s32.totalorder %s9, 0
    %p97 = por %p95, %p96
    %p98 = scmp.ne.s32.totalorder %s87, %s90
    %p99 = scmp.eq.s32.totalorder %s14, 1
    %p100 = por %p98, %p99
    %p101 = scmp.ne.s32.totalorder %s90, %s91
    %p102 = scmp.eq.s32.totalorder %s14, 0
    %p103 = por %p101, %p102
    %p104 = scmp.ne.s32.totalorder %s90, %s91
    %p105 = scmp.eq.s32.totalorder %s15, 1
    %p106 = por %p104, %p105
    %p108 = scmp.ne.s32.totalorder %s91, %s107
    %p109 = scmp.eq.s32.totalorder %s15, 0
    %p110 = por %p108, %p109
    %p111 = scmp.le.s32.totalorder 1, %s9
    %p112 = scmp.lt.s32.totalorder %s9, 3
    %p113 = pnand %p111, %p112
    %p114 = pneg %p113
    // Predicated region
    $region9: #{discriminator2d_forward.7} parent=5 // pred_check
      _
    $region10: #{discriminator2d_forward.7} parent=5 // pred_check_branch
      %116 = sbr.rel (%p113) target = $region12
    $region11: #{discriminator2d_forward.7} parent=5 // pred_region
      %s117 = ssub.s32 %s9, 1
      // Predicated region
      $region13: #{discriminator2d_forward.7} parent=11 // pred_check
        %p118 = pneg %p56
      $region14: #{discriminator2d_forward.7} parent=11 // pred_check_branch
        %120 = sbr.rel (%p118) target = $region16
      $region15: #{discriminator2d_forward.7} parent=11 // pred_region
        _
      $region16: #{discriminator2d_forward.7} parent=11 // pred_fallthru
        _
      // Predicated region
      $region17: #{discriminator2d_forward.7} parent=11 // pred_check
        %p121 = pneg %p77
      $region18: #{discriminator2d_forward.7} parent=11 // pred_check_branch
        %123 = sbr.rel (%p121) target = $region20
      $region19: #{discriminator2d_forward.7} parent=11 // pred_region
        _
      $region20: #{discriminator2d_forward.7} parent=11 // pred_fallthru
        _
    $region12: #{discriminator2d_forward.7} parent=5 // pred_fallthru
      _
    %p124 = scmp.lt.s32.totalorder %s9, 2
    // Predicated region
    $region21: #{discriminator2d_forward.7} parent=5 // pred_check
      %p125 = pneg %p124
    $region22: #{discriminator2d_forward.7} parent=5 // pred_check_branch
      %127 = sbr.rel (%p125) target = $region24
    $region23: #{discriminator2d_forward.7} parent=5 // pred_region
      // Predicated region
      $region25: #{discriminator2d_forward.7} parent=23 // pred_check
        %p128 = pneg %p29
      $region26: #{discriminator2d_forward.7} parent=23 // pred_check_branch
        %130 = sbr.rel (%p128) target = $region28
      $region27: #{discriminator2d_forward.7} parent=23 // pred_region
        %s131 = smul.u32 2, %s9
        %p132 = scmp.lt.s32.totalorder %s131, 3
        %s133 = scalar_select %p132, %s131, 3
        %s134 = smul.addr %s133, 16
        %s135 = smul.addr %s134, 4
        %s136 = scalar_lea.vmem %s0, %s135
        %s137 = smul.u32 2, %s9
      $region28: #{discriminator2d_forward.7} parent=23 // pred_fallthru
        _
    $region24: #{discriminator2d_forward.7} parent=5 // pred_fallthru
      _
    %p138 = scmp.le.s32.totalorder 1, %s9
    %p139 = scmp.lt.s32.totalorder %s9, 3
    %p140 = pnand %p138, %p139
    %p141 = pneg %p140
    // Predicated region
    $region29: #{discriminator2d_forward.7} parent=5 // pred_check
      _
    $region30: #{discriminator2d_forward.7} parent=5 // pred_check_branch
      %143 = sbr.rel (%p140) target = $region32
    $region31: #{discriminator2d_forward.7} parent=5 // pred_region
      %s144 = ssub.s32 %s9, 1
      %s145 = smul.u32 2, %s14
      %p146 = scmp.lt.s32.totalorder %s145, 3
      %s147 = scalar_select %p146, %s145, 3
      %s148 = smul.addr %s147, 16
      %s149 = smul.addr %s148, 4
      %s150 = scalar_lea.vmem %s0, %s149
      %p151 = pneg %p35
      %p152 = pneg %p32
      %p153 = pneg %p56
      %p154 = pneg %p53
      %p155 = pneg %p77
      %p156 = pneg %p74
      %p157 = pneg %p103
      %p158 = pneg %p100
      %s159 = smul.u32 2, %s14
      %p160 = scmp.lt.s32.totalorder %s159, 3
      %s161 = scalar_select %p160, %s159, 3
      %s162 = smul.addr %s161, 2
      %s163 = smul.addr %s162, 8
      %s164 = scalar_lea.vmem %s3, %s163
      %s165 = smul.u32 2, %s14
      %p166 = scmp.lt.s32.totalorder %s165, 3
      %s167 = scalar_select %p166, %s165, 3
      %s168 = smul.addr %s167, 16
      %s169 = smul.addr %s168, 4
      %s170 = scalar_lea.vmem %s0, %s169
      %s171 = smul.u32 2, %s14
      %s172 = smul.u32 2, %s14
      %p173 = scmp.lt.s32.totalorder %s172, 3
      %s174 = scalar_select %p173, %s172, 3
      %s175 = smul.addr %s174, 2
      %s176 = smul.addr %s175, 8
      %s177 = scalar_lea.vmem %s3, %s176
      %s178 = smul.u32 2, %s14
      %v179 = vld [vmem:[%s170] sm:$0xff]
      %v180 = vld [vmem:[%s170 + $0x8] sm:$0xff]
      %v181 = vld [vmem:[%s170 + $0x10] sm:$0xff]
      %v182 = vld [vmem:[%s170 + $0x18] sm:$0xff]
      %v183 = vld [vmem:[%s170 + $0x20] sm:$0xff]
      %v184 = vld [vmem:[%s170 + $0x28] sm:$0xff]
      %v185 = vld [vmem:[%s170 + $0x30] sm:$0xff]
      %v186 = vld [vmem:[%s170 + $0x38] sm:$0xff]
      %v187 = vld [vmem:[%s170 + $0x40] sm:$0xff]
      %v188 = vld [vmem:[%s170 + $0x48] sm:$0xff]
      %v189 = vld [vmem:[%s170 + $0x50] sm:$0xff]
      %v190 = vld [vmem:[%s170 + $0x58] sm:$0xff]
      %v191 = vld [vmem:[%s170 + $0x60] sm:$0xff]
      %v192 = vld [vmem:[%s170 + $0x68] sm:$0xff]
      %v193 = vld [vmem:[%s170 + $0x70] sm:$0xff]
      %v194 = vld [vmem:[%s170 + $0x78] sm:$0xff]
      %v195 = vld [vmem:[%s1] sm:$0xff]
      %v196 = vld [vmem:[%s1 + $0x8] sm:$0xff]
      %v197 = vld [vmem:[%s1 + $0x10] sm:$0xff]
      %v198 = vld [vmem:[%s1 + $0x18] sm:$0xff]
      %v199 = vld [vmem:[%s1 + $0x20] sm:$0xff]
      %v200 = vld [vmem:[%s1 + $0x28] sm:$0xff]
      %v201 = vld [vmem:[%s1 + $0x30] sm:$0xff]
      %v202 = vld [vmem:[%s1 + $0x38] sm:$0xff]
      %v203 = vld [vmem:[%s1 + $0x40] sm:$0xff]
      %v204 = vld [vmem:[%s1 + $0x48] sm:$0xff]
      %v205 = vld [vmem:[%s1 + $0x50] sm:$0xff]
      %v206 = vld [vmem:[%s1 + $0x58] sm:$0xff]
      %v207 = vld [vmem:[%s1 + $0x60] sm:$0xff]
      %v208 = vld [vmem:[%s1 + $0x68] sm:$0xff]
      %v209 = vld [vmem:[%s1 + $0x70] sm:$0xff]
      %v210 = vld [vmem:[%s1 + $0x78] sm:$0xff]
      %v211 = vld [vmem:[%s1 + $0x80] sm:$0xff]
      %v212 = vld [vmem:[%s1 + $0x88] sm:$0xff]
      %v213 = vld [vmem:[%s1 + $0x90] sm:$0xff]
      %v214 = vld [vmem:[%s1 + $0x98] sm:$0xff]
      %v215 = vld [vmem:[%s1 + $0xa0] sm:$0xff]
      %v216 = vld [vmem:[%s1 + $0xa8] sm:$0xff]
      %v217 = vld [vmem:[%s1 + $0xb0] sm:$0xff]
      %v218 = vld [vmem:[%s1 + $0xb8] sm:$0xff]
      %v219 = vld [vmem:[%s1 + $0xc0] sm:$0xff]
      %v220 = vld [vmem:[%s1 + $0xc8] sm:$0xff]
      %v221 = vld [vmem:[%s1 + $0xd0] sm:$0xff]
      %v222 = vld [vmem:[%s1 + $0xd8] sm:$0xff]
      %v223 = vld [vmem:[%s1 + $0xe0] sm:$0xff]
      %v224 = vld [vmem:[%s1 + $0xe8] sm:$0xff]
      %v225 = vld [vmem:[%s1 + $0xf0] sm:$0xff]
      %v226 = vld [vmem:[%s1 + $0xf8] sm:$0xff]
      %v227 = vld [vmem:[%s1 + $0x100] sm:$0xff]
      %v228 = vld [vmem:[%s1 + $0x108] sm:$0xff]
      %v229 = vld [vmem:[%s1 + $0x110] sm:$0xff]
      %v230 = vld [vmem:[%s1 + $0x118] sm:$0xff]
      %v231 = vld [vmem:[%s1 + $0x120] sm:$0xff]
      %v232 = vld [vmem:[%s1 + $0x128] sm:$0xff]
      %v233 = vld [vmem:[%s1 + $0x130] sm:$0xff]
      %v234 = vld [vmem:[%s1 + $0x138] sm:$0xff]
      %v235 = vld [vmem:[%s1 + $0x140] sm:$0xff]
      %v236 = vld [vmem:[%s1 + $0x148] sm:$0xff]
      %v237 = vld [vmem:[%s1 + $0x150] sm:$0xff]
      %v238 = vld [vmem:[%s1 + $0x158] sm:$0xff]
      %v239 = vld [vmem:[%s1 + $0x160] sm:$0xff]
      %v240 = vld [vmem:[%s1 + $0x168] sm:$0xff]
      %v241 = vld [vmem:[%s1 + $0x170] sm:$0xff]
      %v242 = vld [vmem:[%s1 + $0x178] sm:$0xff]
      %v243 = vld [vmem:[%s1 + $0x180] sm:$0xff]
      %v244 = vld [vmem:[%s1 + $0x188] sm:$0xff]
      %v245 = vld [vmem:[%s1 + $0x190] sm:$0xff]
      %v246 = vld [vmem:[%s1 + $0x198] sm:$0xff]
      %v247 = vld [vmem:[%s1 + $0x1a0] sm:$0xff]
      %v248 = vld [vmem:[%s1 + $0x1a8] sm:$0xff]
      %v249 = vld [vmem:[%s1 + $0x1b0] sm:$0xff]
      %v250 = vld [vmem:[%s1 + $0x1b8] sm:$0xff]
      %v251 = vld [vmem:[%s1 + $0x1c0] sm:$0xff]
      %v252 = vld [vmem:[%s1 + $0x1c8] sm:$0xff]
      %v253 = vld [vmem:[%s1 + $0x1d0] sm:$0xff]
      %v254 = vld [vmem:[%s1 + $0x1d8] sm:$0xff]
      %v255 = vld [vmem:[%s1 + $0x1e0] sm:$0xff]
      %v256 = vld [vmem:[%s1 + $0x1e8] sm:$0xff]
      %v257 = vld [vmem:[%s1 + $0x1f0] sm:$0xff]
      %v258 = vld [vmem:[%s1 + $0x1f8] sm:$0xff]
      %v259 = vld [vmem:[%s1 + $0x200] sm:$0xff]
      %v260 = vld [vmem:[%s1 + $0x208] sm:$0xff]
      %v261 = vld [vmem:[%s1 + $0x210] sm:$0xff]
      %v262 = vld [vmem:[%s1 + $0x218] sm:$0xff]
      %v263 = vld [vmem:[%s1 + $0x220] sm:$0xff]
      %v264 = vld [vmem:[%s1 + $0x228] sm:$0xff]
      %v265 = vld [vmem:[%s1 + $0x230] sm:$0xff]
      %v266 = vld [vmem:[%s1 + $0x238] sm:$0xff]
      %v267 = vld [vmem:[%s1 + $0x240] sm:$0xff]
      %v268 = vld [vmem:[%s1 + $0x248] sm:$0xff]
      %v269 = vld [vmem:[%s1 + $0x250] sm:$0xff]
      %v270 = vld [vmem:[%s1 + $0x258] sm:$0xff]
      %v271 = vld [vmem:[%s1 + $0x260] sm:$0xff]
      %v272 = vld [vmem:[%s1 + $0x268] sm:$0xff]
      %v273 = vld [vmem:[%s1 + $0x270] sm:$0xff]
      %v274 = vld [vmem:[%s1 + $0x278] sm:$0xff]
      %v275 = vld [vmem:[%s1 + $0x280] sm:$0xff]
      %v276 = vld [vmem:[%s1 + $0x288] sm:$0xff]
      %v277 = vld [vmem:[%s1 + $0x290] sm:$0xff]
      %v278 = vld [vmem:[%s1 + $0x298] sm:$0xff]
      %v279 = vld [vmem:[%s1 + $0x2a0] sm:$0xff]
      %v280 = vld [vmem:[%s1 + $0x2a8] sm:$0xff]
      %v281 = vld [vmem:[%s1 + $0x2b0] sm:$0xff]
      %v282 = vld [vmem:[%s1 + $0x2b8] sm:$0xff]
      %v283 = vld [vmem:[%s1 + $0x2c0] sm:$0xff]
      %v284 = vld [vmem:[%s1 + $0x2c8] sm:$0xff]
      %v285 = vld [vmem:[%s1 + $0x2d0] sm:$0xff]
      %v286 = vld [vmem:[%s1 + $0x2d8] sm:$0xff]
      %v287 = vld [vmem:[%s1 + $0x2e0] sm:$0xff]
      %v288 = vld [vmem:[%s1 + $0x2e8] sm:$0xff]
      %v289 = vld [vmem:[%s1 + $0x2f0] sm:$0xff]
      %v290 = vld [vmem:[%s1 + $0x2f8] sm:$0xff]
      %v291 = vld [vmem:[%s1 + $0x300] sm:$0xff]
      %v292 = vld [vmem:[%s1 + $0x308] sm:$0xff]
      %v293 = vld [vmem:[%s1 + $0x310] sm:$0xff]
      %v294 = vld [vmem:[%s1 + $0x318] sm:$0xff]
      %v295 = vld [vmem:[%s1 + $0x320] sm:$0xff]
      %v296 = vld [vmem:[%s1 + $0x328] sm:$0xff]
      %v297 = vld [vmem:[%s1 + $0x330] sm:$0xff]
      %v298 = vld [vmem:[%s1 + $0x338] sm:$0xff]
      %v299 = vld [vmem:[%s1 + $0x340] sm:$0xff]
      %v300 = vld [vmem:[%s1 + $0x348] sm:$0xff]
      %v301 = vld [vmem:[%s1 + $0x350] sm:$0xff]
      %v302 = vld [vmem:[%s1 + $0x358] sm:$0xff]
      %v303 = vld [vmem:[%s1 + $0x360] sm:$0xff]
      %v304 = vld [vmem:[%s1 + $0x368] sm:$0xff]
      %v305 = vld [vmem:[%s1 + $0x370] sm:$0xff]
      %v306 = vld [vmem:[%s1 + $0x378] sm:$0xff]
      %v307 = vld [vmem:[%s1 + $0x380] sm:$0xff]
      %v308 = vld [vmem:[%s1 + $0x388] sm:$0xff]
      %v309 = vld [vmem:[%s1 + $0x390] sm:$0xff]
      %v310 = vld [vmem:[%s1 + $0x398] sm:$0xff]
      %v311 = vld [vmem:[%s1 + $0x3a0] sm:$0xff]
      %v312 = vld [vmem:[%s1 + $0x3a8] sm:$0xff]
      %v313 = vld [vmem:[%s1 + $0x3b0] sm:$0xff]
      %v314 = vld [vmem:[%s1 + $0x3b8] sm:$0xff]
      %v315 = vld [vmem:[%s1 + $0x3c0] sm:$0xff]
      %v316 = vld [vmem:[%s1 + $0x3c8] sm:$0xff]
      %v317 = vld [vmem:[%s1 + $0x3d0] sm:$0xff]
      %v318 = vld [vmem:[%s1 + $0x3d8] sm:$0xff]
      %v319 = vld [vmem:[%s1 + $0x3e0] sm:$0xff]
      %v320 = vld [vmem:[%s1 + $0x3e8] sm:$0xff]
      %v321 = vld [vmem:[%s1 + $0x3f0] sm:$0xff]
      %v322 = vld [vmem:[%s1 + $0x3f8] sm:$0xff]
      %v323 = vld [vmem:[%s1 + $0x400] sm:$0xff]
      %v324 = vld [vmem:[%s1 + $0x408] sm:$0xff]
      %v325 = vld [vmem:[%s1 + $0x410] sm:$0xff]
      %v326 = vld [vmem:[%s1 + $0x418] sm:$0xff]
      %v327 = vld [vmem:[%s1 + $0x420] sm:$0xff]
      %v328 = vld [vmem:[%s1 + $0x428] sm:$0xff]
      %v329 = vld [vmem:[%s1 + $0x430] sm:$0xff]
      %v330 = vld [vmem:[%s1 + $0x438] sm:$0xff]
      %v331 = vld [vmem:[%s1 + $0x440] sm:$0xff]
      %v332 = vld [vmem:[%s1 + $0x448] sm:$0xff]
      %v333 = vld [vmem:[%s1 + $0x450] sm:$0xff]
      %v334 = vld [vmem:[%s1 + $0x458] sm:$0xff]
      %v335 = vld [vmem:[%s1 + $0x460] sm:$0xff]
      %v336 = vld [vmem:[%s1 + $0x468] sm:$0xff]
      %v337 = vld [vmem:[%s1 + $0x470] sm:$0xff]
      %v338 = vld [vmem:[%s1 + $0x478] sm:$0xff]
      %v339 = vld [vmem:[%s1 + $0x480] sm:$0xff]
      %v340 = vld [vmem:[%s1 + $0x488] sm:$0xff]
      %v341 = vld [vmem:[%s1 + $0x490] sm:$0xff]
      %v342 = vld [vmem:[%s1 + $0x498] sm:$0xff]
      %v343 = vld [vmem:[%s1 + $0x4a0] sm:$0xff]
      %v344 = vld [vmem:[%s1 + $0x4a8] sm:$0xff]
      %v345 = vld [vmem:[%s1 + $0x4b0] sm:$0xff]
      %v346 = vld [vmem:[%s1 + $0x4b8] sm:$0xff]
      %v347 = vld [vmem:[%s1 + $0x4c0] sm:$0xff]
      %v348 = vld [vmem:[%s1 + $0x4c8] sm:$0xff]
      %v349 = vld [vmem:[%s1 + $0x4d0] sm:$0xff]
      %v350 = vld [vmem:[%s1 + $0x4d8] sm:$0xff]
      %v351 = vld [vmem:[%s1 + $0x4e0] sm:$0xff]
      %v352 = vld [vmem:[%s1 + $0x4e8] sm:$0xff]
      %v353 = vld [vmem:[%s1 + $0x4f0] sm:$0xff]
      %v354 = vld [vmem:[%s1 + $0x4f8] sm:$0xff]
      %v355 = vld [vmem:[%s1 + $0x500] sm:$0xff]
      %v356 = vld [vmem:[%s1 + $0x508] sm:$0xff]
      %v357 = vld [vmem:[%s1 + $0x510] sm:$0xff]
      %v358 = vld [vmem:[%s1 + $0x518] sm:$0xff]
      %v359 = vld [vmem:[%s1 + $0x520] sm:$0xff]
      %v360 = vld [vmem:[%s1 + $0x528] sm:$0xff]
      %v361 = vld [vmem:[%s1 + $0x530] sm:$0xff]
      %v362 = vld [vmem:[%s1 + $0x538] sm:$0xff]
      %v363 = vld [vmem:[%s1 + $0x540] sm:$0xff]
      %v364 = vld [vmem:[%s1 + $0x548] sm:$0xff]
      %v365 = vld [vmem:[%s1 + $0x550] sm:$0xff]
      %v366 = vld [vmem:[%s1 + $0x558] sm:$0xff]
      %v367 = vld [vmem:[%s1 + $0x560] sm:$0xff]
      %v368 = vld [vmem:[%s1 + $0x568] sm:$0xff]
      %v369 = vld [vmem:[%s1 + $0x570] sm:$0xff]
      %v370 = vld [vmem:[%s1 + $0x578] sm:$0xff]
      %v371 = vld [vmem:[%s1 + $0x580] sm:$0xff]
      %v372 = vld [vmem:[%s1 + $0x588] sm:$0xff]
      %v373 = vld [vmem:[%s1 + $0x590] sm:$0xff]
      %v374 = vld [vmem:[%s1 + $0x598] sm:$0xff]
      %v375 = vld [vmem:[%s1 + $0x5a0] sm:$0xff]
      %v376 = vld [vmem:[%s1 + $0x5a8] sm:$0xff]
      %v377 = vld [vmem:[%s1 + $0x5b0] sm:$0xff]
      %v378 = vld [vmem:[%s1 + $0x5b8] sm:$0xff]
      %v379 = vld [vmem:[%s1 + $0x5c0] sm:$0xff]
      %v380 = vld [vmem:[%s1 + $0x5c8] sm:$0xff]
      %v381 = vld [vmem:[%s1 + $0x5d0] sm:$0xff]
      %v382 = vld [vmem:[%s1 + $0x5d8] sm:$0xff]
      %v383 = vld [vmem:[%s1 + $0x5e0] sm:$0xff]
      %v384 = vld [vmem:[%s1 + $0x5e8] sm:$0xff]
      %v385 = vld [vmem:[%s1 + $0x5f0] sm:$0xff]
      %v386 = vld [vmem:[%s1 + $0x5f8] sm:$0xff]
      %v387 = vld [vmem:[%s1 + $0x600] sm:$0xff]
      %v388 = vld [vmem:[%s1 + $0x608] sm:$0xff]
      %v389 = vld [vmem:[%s1 + $0x610] sm:$0xff]
      %v390 = vld [vmem:[%s1 + $0x618] sm:$0xff]
      %v391 = vld [vmem:[%s1 + $0x620] sm:$0xff]
      %v392 = vld [vmem:[%s1 + $0x628] sm:$0xff]
      %v393 = vld [vmem:[%s1 + $0x630] sm:$0xff]
      %v394 = vld [vmem:[%s1 + $0x638] sm:$0xff]
      %v395 = vld [vmem:[%s1 + $0x640] sm:$0xff]
      %v396 = vld [vmem:[%s1 + $0x648] sm:$0xff]
      %v397 = vld [vmem:[%s1 + $0x650] sm:$0xff]
      %v398 = vld [vmem:[%s1 + $0x658] sm:$0xff]
      %v399 = vld [vmem:[%s1 + $0x660] sm:$0xff]
      %v400 = vld [vmem:[%s1 + $0x668] sm:$0xff]
      %v401 = vld [vmem:[%s1 + $0x670] sm:$0xff]
      %v402 = vld [vmem:[%s1 + $0x678] sm:$0xff]
      %v403 = vld [vmem:[%s1 + $0x680] sm:$0xff]
      %v404 = vld [vmem:[%s1 + $0x688] sm:$0xff]
      %v405 = vld [vmem:[%s1 + $0x690] sm:$0xff]
      %v406 = vld [vmem:[%s1 + $0x698] sm:$0xff]
      %v407 = vld [vmem:[%s1 + $0x6a0] sm:$0xff]
      %v408 = vld [vmem:[%s1 + $0x6a8] sm:$0xff]
      %v409 = vld [vmem:[%s1 + $0x6b0] sm:$0xff]
      %v410 = vld [vmem:[%s1 + $0x6b8] sm:$0xff]
      %v411 = vld [vmem:[%s1 + $0x6c0] sm:$0xff]
      %v412 = vld [vmem:[%s1 + $0x6c8] sm:$0xff]
      %v413 = vld [vmem:[%s1 + $0x6d0] sm:$0xff]
      %v414 = vld [vmem:[%s1 + $0x6d8] sm:$0xff]
      %v415 = vld [vmem:[%s1 + $0x6e0] sm:$0xff]
      %v416 = vld [vmem:[%s1 + $0x6e8] sm:$0xff]
      %v417 = vld [vmem:[%s1 + $0x6f0] sm:$0xff]
      %v418 = vld [vmem:[%s1 + $0x6f8] sm:$0xff]
      %v419 = vld [vmem:[%s1 + $0x700] sm:$0xff]
      %v420 = vld [vmem:[%s1 + $0x708] sm:$0xff]
      %v421 = vld [vmem:[%s1 + $0x710] sm:$0xff]
      %v422 = vld [vmem:[%s1 + $0x718] sm:$0xff]
      %v423 = vld [vmem:[%s1 + $0x720] sm:$0xff]
      %v424 = vld [vmem:[%s1 + $0x728] sm:$0xff]
      %v425 = vld [vmem:[%s1 + $0x730] sm:$0xff]
      %v426 = vld [vmem:[%s1 + $0x738] sm:$0xff]
      %v427 = vld [vmem:[%s1 + $0x740] sm:$0xff]
      %v428 = vld [vmem:[%s1 + $0x748] sm:$0xff]
      %v429 = vld [vmem:[%s1 + $0x750] sm:$0xff]
      %v430 = vld [vmem:[%s1 + $0x758] sm:$0xff]
      %v431 = vld [vmem:[%s1 + $0x760] sm:$0xff]
      %v432 = vld [vmem:[%s1 + $0x768] sm:$0xff]
      %v433 = vld [vmem:[%s1 + $0x770] sm:$0xff]
      %v434 = vld [vmem:[%s1 + $0x778] sm:$0xff]
      %v435 = vld [vmem:[%s1 + $0x780] sm:$0xff]
      %v436 = vld [vmem:[%s1 + $0x788] sm:$0xff]
      %v437 = vld [vmem:[%s1 + $0x790] sm:$0xff]
      %v438 = vld [vmem:[%s1 + $0x798] sm:$0xff]
      %v439 = vld [vmem:[%s1 + $0x7a0] sm:$0xff]
      %v440 = vld [vmem:[%s1 + $0x7a8] sm:$0xff]
      %v441 = vld [vmem:[%s1 + $0x7b0] sm:$0xff]
      %v442 = vld [vmem:[%s1 + $0x7b8] sm:$0xff]
      %v443 = vld [vmem:[%s1 + $0x7c0] sm:$0xff]
      %v444 = vld [vmem:[%s1 + $0x7c8] sm:$0xff]
      %v445 = vld [vmem:[%s1 + $0x7d0] sm:$0xff]
      %v446 = vld [vmem:[%s1 + $0x7d8] sm:$0xff]
      %v447 = vld [vmem:[%s1 + $0x7e0] sm:$0xff]
      %v448 = vld [vmem:[%s1 + $0x7e8] sm:$0xff]
      %v449 = vld [vmem:[%s1 + $0x7f0] sm:$0xff]
      %v450 = vld [vmem:[%s1 + $0x7f8] sm:$0xff]
      %v451 = vld [vmem:[%s2] sm:$0x3]
      %v453 = vlaneseq
      %v454 = vshrl.u32 %v453, 7
      %v455 = vsub.s32 0, %v454
      %v456 = vrot.slane %v451, %v455
      %v457 = vlaneseq
      %v458 = vshrl.u32 %v457, 7
      %v459 = vsub.s32 1, %v458
      %v460 = vrot.slane %v451, %v459
      %v479 = vunpack.c.l.b16 %v179
      %v480 = vunpack.c.h.b16 %v179
      %v481 = vunpack.c.l.b16 %v180
      %v482 = vunpack.c.h.b16 %v180
      %v483 = vunpack.c.l.b16 %v181
      %v484 = vunpack.c.h.b16 %v181
      %v485 = vunpack.c.l.b16 %v182
      %v486 = vunpack.c.h.b16 %v182
      %v487 = vunpack.c.l.b16 %v183
      %v488 = vunpack.c.h.b16 %v183
      %v489 = vunpack.c.l.b16 %v184
      %v490 = vunpack.c.h.b16 %v184
      %v491 = vunpack.c.l.b16 %v185
      %v492 = vunpack.c.h.b16 %v185
      %v493 = vunpack.c.l.b16 %v186
      %v494 = vunpack.c.h.b16 %v186
      %v495 = vunpack.c.l.b16 %v187
      %v496 = vunpack.c.h.b16 %v187
      %v497 = vunpack.c.l.b16 %v188
      %v498 = vunpack.c.h.b16 %v188
      %v499 = vunpack.c.l.b16 %v189
      %v500 = vunpack.c.h.b16 %v189
      %v501 = vunpack.c.l.b16 %v190
      %v502 = vunpack.c.h.b16 %v190
      %v503 = vunpack.c.l.b16 %v191
      %v504 = vunpack.c.h.b16 %v191
      %v505 = vunpack.c.l.b16 %v192
      %v506 = vunpack.c.h.b16 %v192
      %v507 = vunpack.c.l.b16 %v193
      %v508 = vunpack.c.h.b16 %v193
      %v509 = vunpack.c.l.b16 %v194
      %v510 = vunpack.c.h.b16 %v194
      %v511 = vpack.c.b16 %v495, %v479
      %v512 = vpack.c.b16 %v496, %v480
      %v513 = vpack.c.b16 %v497, %v481
      %v514 = vpack.c.b16 %v498, %v482
      %v515 = vpack.c.b16 %v499, %v483
      %v516 = vpack.c.b16 %v500, %v484
      %v517 = vpack.c.b16 %v501, %v485
      %v518 = vpack.c.b16 %v502, %v486
      %v519 = vpack.c.b16 %v503, %v487
      %v520 = vpack.c.b16 %v504, %v488
      %v521 = vpack.c.b16 %v505, %v489
      %v522 = vpack.c.b16 %v506, %v490
      %v523 = vpack.c.b16 %v507, %v491
      %v524 = vpack.c.b16 %v508, %v492
      %v525 = vpack.c.b16 %v509, %v493
      %v526 = vpack.c.b16 %v510, %v494
      %v799 = vunpack.c.l.b16 %v195
      %v800 = vunpack.c.h.b16 %v195
      %v801 = vunpack.c.l.b16 %v196
      %v802 = vunpack.c.h.b16 %v196
      %v803 = vunpack.c.l.b16 %v197
      %v804 = vunpack.c.h.b16 %v197
      %v805 = vunpack.c.l.b16 %v198
      %v806 = vunpack.c.h.b16 %v198
      %v807 = vunpack.c.l.b16 %v199
      %v808 = vunpack.c.h.b16 %v199
      %v809 = vunpack.c.l.b16 %v200
      %v810 = vunpack.c.h.b16 %v200
      %v811 = vunpack.c.l.b16 %v201
      %v812 = vunpack.c.h.b16 %v201
      %v813 = vunpack.c.l.b16 %v202
      %v814 = vunpack.c.h.b16 %v202
      %v815 = vunpack.c.l.b16 %v203
      %v816 = vunpack.c.h.b16 %v203
      %v817 = vunpack.c.l.b16 %v204
      %v818 = vunpack.c.h.b16 %v204
      %v819 = vunpack.c.l.b16 %v205
      %v820 = vunpack.c.h.b16 %v205
      %v821 = vunpack.c.l.b16 %v206
      %v822 = vunpack.c.h.b16 %v206
      %v823 = vunpack.c.l.b16 %v207
      %v824 = vunpack.c.h.b16 %v207
      %v825 = vunpack.c.l.b16 %v208
      %v826 = vunpack.c.h.b16 %v208
      %v827 = vunpack.c.l.b16 %v209
      %v828 = vunpack.c.h.b16 %v209
      %v829 = vunpack.c.l.b16 %v210
      %v830 = vunpack.c.h.b16 %v210
      %v831 = vunpack.c.l.b16 %v211
      %v832 = vunpack.c.h.b16 %v211
      %v833 = vunpack.c.l.b16 %v212
      %v834 = vunpack.c.h.b16 %v212
      %v835 = vunpack.c.l.b16 %v213
      %v836 = vunpack.c.h.b16 %v213
      %v837 = vunpack.c.l.b16 %v214
      %v838 = vunpack.c.h.b16 %v214
      %v839 = vunpack.c.l.b16 %v215
      %v840 = vunpack.c.h.b16 %v215
      %v841 = vunpack.c.l.b16 %v216
      %v842 = vunpack.c.h.b16 %v216
      %v843 = vunpack.c.l.b16 %v217
      %v844 = vunpack.c.h.b16 %v217
      %v845 = vunpack.c.l.b16 %v218
      %v846 = vunpack.c.h.b16 %v218
      %v847 = vunpack.c.l.b16 %v219
      %v848 = vunpack.c.h.b16 %v219
      %v849 = vunpack.c.l.b16 %v220
      %v850 = vunpack.c.h.b16 %v220
      %v851 = vunpack.c.l.b16 %v221
      %v852 = vunpack.c.h.b16 %v221
      %v853 = vunpack.c.l.b16 %v222
      %v854 = vunpack.c.h.b16 %v222
      %v855 = vunpack.c.l.b16 %v223
      %v856 = vunpack.c.h.b16 %v223
      %v857 = vunpack.c.l.b16 %v224
      %v858 = vunpack.c.h.b16 %v224
      %v859 = vunpack.c.l.b16 %v225
      %v860 = vunpack.c.h.b16 %v225
      %v861 = vunpack.c.l.b16 %v226
      %v862 = vunpack.c.h.b16 %v226
      %v863 = vunpack.c.l.b16 %v227
      %v864 = vunpack.c.h.b16 %v227
      %v865 = vunpack.c.l.b16 %v228
      %v866 = vunpack.c.h.b16 %v228
      %v867 = vunpack.c.l.b16 %v229
      %v868 = vunpack.c.h.b16 %v229
      %v869 = vunpack.c.l.b16 %v230
      %v870 = vunpack.c.h.b16 %v230
      %v871 = vunpack.c.l.b16 %v231
      %v872 = vunpack.c.h.b16 %v231
      %v873 = vunpack.c.l.b16 %v232
      %v874 = vunpack.c.h.b16 %v232
      %v875 = vunpack.c.l.b16 %v233
      %v876 = vunpack.c.h.b16 %v233
      %v877 = vunpack.c.l.b16 %v234
      %v878 = vunpack.c.h.b16 %v234
      %v879 = vunpack.c.l.b16 %v235
      %v880 = vunpack.c.h.b16 %v235
      %v881 = vunpack.c.l.b16 %v236
      %v882 = vunpack.c.h.b16 %v236
      %v883 = vunpack.c.l.b16 %v237
      %v884 = vunpack.c.h.b16 %v237
      %v885 = vunpack.c.l.b16 %v238
      %v886 = vunpack.c.h.b16 %v238
      %v887 = vunpack.c.l.b16 %v239
      %v888 = vunpack.c.h.b16 %v239
      %v889 = vunpack.c.l.b16 %v240
      %v890 = vunpack.c.h.b16 %v240
      %v891 = vunpack.c.l.b16 %v241
      %v892 = vunpack.c.h.b16 %v241
      %v893 = vunpack.c.l.b16 %v242
      %v894 = vunpack.c.h.b16 %v242
      %v895 = vunpack.c.l.b16 %v243
      %v896 = vunpack.c.h.b16 %v243
      %v897 = vunpack.c.l.b16 %v244
      %v898 = vunpack.c.h.b16 %v244
      %v899 = vunpack.c.l.b16 %v245
      %v900 = vunpack.c.h.b16 %v245
      %v901 = vunpack.c.l.b16 %v246
      %v902 = vunpack.c.h.b16 %v246
      %v903 = vunpack.c.l.b16 %v247
      %v904 = vunpack.c.h.b16 %v247
      %v905 = vunpack.c.l.b16 %v248
      %v906 = vunpack.c.h.b16 %v248
      %v907 = vunpack.c.l.b16 %v249
      %v908 = vunpack.c.h.b16 %v249
      %v909 = vunpack.c.l.b16 %v250
      %v910 = vunpack.c.h.b16 %v250
      %v911 = vunpack.c.l.b16 %v251
      %v912 = vunpack.c.h.b16 %v251
      %v913 = vunpack.c.l.b16 %v252
      %v914 = vunpack.c.h.b16 %v252
      %v915 = vunpack.c.l.b16 %v253
      %v916 = vunpack.c.h.b16 %v253
      %v917 = vunpack.c.l.b16 %v254
      %v918 = vunpack.c.h.b16 %v254
      %v919 = vunpack.c.l.b16 %v255
      %v920 = vunpack.c.h.b16 %v255
      %v921 = vunpack.c.l.b16 %v256
      %v922 = vunpack.c.h.b16 %v256
      %v923 = vunpack.c.l.b16 %v257
      %v924 = vunpack.c.h.b16 %v257
      %v925 = vunpack.c.l.b16 %v258
      %v926 = vunpack.c.h.b16 %v258
      %v927 = vunpack.c.l.b16 %v259
      %v928 = vunpack.c.h.b16 %v259
      %v929 = vunpack.c.l.b16 %v260
      %v930 = vunpack.c.h.b16 %v260
      %v931 = vunpack.c.l.b16 %v261
      %v932 = vunpack.c.h.b16 %v261
      %v933 = vunpack.c.l.b16 %v262
      %v934 = vunpack.c.h.b16 %v262
      %v935 = vunpack.c.l.b16 %v263
      %v936 = vunpack.c.h.b16 %v263
      %v937 = vunpack.c.l.b16 %v264
      %v938 = vunpack.c.h.b16 %v264
      %v939 = vunpack.c.l.b16 %v265
      %v940 = vunpack.c.h.b16 %v265
      %v941 = vunpack.c.l.b16 %v266
      %v942 = vunpack.c.h.b16 %v266
      %v943 = vunpack.c.l.b16 %v267
      %v944 = vunpack.c.h.b16 %v267
      %v945 = vunpack.c.l.b16 %v268
      %v946 = vunpack.c.h.b16 %v268
      %v947 = vunpack.c.l.b16 %v269
      %v948 = vunpack.c.h.b16 %v269
      %v949 = vunpack.c.l.b16 %v270
      %v950 = vunpack.c.h.b16 %v270
      %v951 = vunpack.c.l.b16 %v271
      %v952 = vunpack.c.h.b16 %v271
      %v953 = vunpack.c.l.b16 %v272
      %v954 = vunpack.c.h.b16 %v272
      %v955 = vunpack.c.l.b16 %v273
      %v956 = vunpack.c.h.b16 %v273
      %v957 = vunpack.c.l.b16 %v274
      %v958 = vunpack.c.h.b16 %v274
      %v959 = vunpack.c.l.b16 %v275
      %v960 = vunpack.c.h.b16 %v275
      %v961 = vunpack.c.l.b16 %v276
      %v962 = vunpack.c.h.b16 %v276
      %v963 = vunpack.c.l.b16 %v277
      %v964 = vunpack.c.h.b16 %v277
      %v965 = vunpack.c.l.b16 %v278
      %v966 = vunpack.c.h.b16 %v278
      %v967 = vunpack.c.l.b16 %v279
      %v968 = vunpack.c.h.b16 %v279
      %v969 = vunpack.c.l.b16 %v280
      %v970 = vunpack.c.h.b16 %v280
      %v971 = vunpack.c.l.b16 %v281
      %v972 = vunpack.c.h.b16 %v281
      %v973 = vunpack.c.l.b16 %v282
      %v974 = vunpack.c.h.b16 %v282
      %v975 = vunpack.c.l.b16 %v283
      %v976 = vunpack.c.h.b16 %v283
      %v977 = vunpack.c.l.b16 %v284
      %v978 = vunpack.c.h.b16 %v284
      %v979 = vunpack.c.l.b16 %v285
      %v980 = vunpack.c.h.b16 %v285
      %v981 = vunpack.c.l.b16 %v286
      %v982 = vunpack.c.h.b16 %v286
      %v983 = vunpack.c.l.b16 %v287
      %v984 = vunpack.c.h.b16 %v287
      %v985 = vunpack.c.l.b16 %v288
      %v986 = vunpack.c.h.b16 %v288
      %v987 = vunpack.c.l.b16 %v289
      %v988 = vunpack.c.h.b16 %v289
      %v989 = vunpack.c.l.b16 %v290
      %v990 = vunpack.c.h.b16 %v290
      %v991 = vunpack.c.l.b16 %v291
      %v992 = vunpack.c.h.b16 %v291
      %v993 = vunpack.c.l.b16 %v292
      %v994 = vunpack.c.h.b16 %v292
      %v995 = vunpack.c.l.b16 %v293
      %v996 = vunpack.c.h.b16 %v293
      %v997 = vunpack.c.l.b16 %v294
      %v998 = vunpack.c.h.b16 %v294
      %v999 = vunpack.c.l.b16 %v295
      %v1000 = vunpack.c.h.b16 %v295
      %v1001 = vunpack.c.l.b16 %v296
      %v1002 = vunpack.c.h.b16 %v296
      %v1003 = vunpack.c.l.b16 %v297
      %v1004 = vunpack.c.h.b16 %v297
      %v1005 = vunpack.c.l.b16 %v298
      %v1006 = vunpack.c.h.b16 %v298
      %v1007 = vunpack.c.l.b16 %v299
      %v1008 = vunpack.c.h.b16 %v299
      %v1009 = vunpack.c.l.b16 %v300
      %v1010 = vunpack.c.h.b16 %v300
      %v1011 = vunpack.c.l.b16 %v301
      %v1012 = vunpack.c.h.b16 %v301
      %v1013 = vunpack.c.l.b16 %v302
      %v1014 = vunpack.c.h.b16 %v302
      %v1015 = vunpack.c.l.b16 %v303
      %v1016 = vunpack.c.h.b16 %v303
      %v1017 = vunpack.c.l.b16 %v304
      %v1018 = vunpack.c.h.b16 %v304
      %v1019 = vunpack.c.l.b16 %v305
      %v1020 = vunpack.c.h.b16 %v305
      %v1021 = vunpack.c.l.b16 %v306
      %v1022 = vunpack.c.h.b16 %v306
      %v1023 = vunpack.c.l.b16 %v307
      %v1024 = vunpack.c.h.b16 %v307
      %v1025 = vunpack.c.l.b16 %v308
      %v1026 = vunpack.c.h.b16 %v308
      %v1027 = vunpack.c.l.b16 %v309
      %v1028 = vunpack.c.h.b16 %v309
      %v1029 = vunpack.c.l.b16 %v310
      %v1030 = vunpack.c.h.b16 %v310
      %v1031 = vunpack.c.l.b16 %v311
      %v1032 = vunpack.c.h.b16 %v311
      %v1033 = vunpack.c.l.b16 %v312
      %v1034 = vunpack.c.h.b16 %v312
      %v1035 = vunpack.c.l.b16 %v313
      %v1036 = vunpack.c.h.b16 %v313
      %v1037 = vunpack.c.l.b16 %v314
      %v1038 = vunpack.c.h.b16 %v314
      %v1039 = vunpack.c.l.b16 %v315
      %v1040 = vunpack.c.h.b16 %v315
      %v1041 = vunpack.c.l.b16 %v316
      %v1042 = vunpack.c.h.b16 %v316
      %v1043 = vunpack.c.l.b16 %v317
      %v1044 = vunpack.c.h.b16 %v317
      %v1045 = vunpack.c.l.b16 %v318
      %v1046 = vunpack.c.h.b16 %v318
      %v1047 = vunpack.c.l.b16 %v319
      %v1048 = vunpack.c.h.b16 %v319
      %v1049 = vunpack.c.l.b16 %v320
      %v1050 = vunpack.c.h.b16 %v320
      %v1051 = vunpack.c.l.b16 %v321
      %v1052 = vunpack.c.h.b16 %v321
      %v1053 = vunpack.c.l.b16 %v322
      %v1054 = vunpack.c.h.b16 %v322
      %v1055 = vunpack.c.l.b16 %v323
      %v1056 = vunpack.c.h.b16 %v323
      %v1057 = vunpack.c.l.b16 %v324
      %v1058 = vunpack.c.h.b16 %v324
      %v1059 = vunpack.c.l.b16 %v325
      %v1060 = vunpack.c.h.b16 %v325
      %v1061 = vunpack.c.l.b16 %v326
      %v1062 = vunpack.c.h.b16 %v326
      %v1063 = vunpack.c.l.b16 %v327
      %v1064 = vunpack.c.h.b16 %v327
      %v1065 = vunpack.c.l.b16 %v328
      %v1066 = vunpack.c.h.b16 %v328
      %v1067 = vunpack.c.l.b16 %v329
      %v1068 = vunpack.c.h.b16 %v329
      %v1069 = vunpack.c.l.b16 %v330
      %v1070 = vunpack.c.h.b16 %v330
      %v1071 = vunpack.c.l.b16 %v331
      %v1072 = vunpack.c.h.b16 %v331
      %v1073 = vunpack.c.l.b16 %v332
      %v1074 = vunpack.c.h.b16 %v332
      %v1075 = vunpack.c.l.b16 %v333
      %v1076 = vunpack.c.h.b16 %v333
      %v1077 = vunpack.c.l.b16 %v334
      %v1078 = vunpack.c.h.b16 %v334
      %v1079 = vunpack.c.l.b16 %v335
      %v1080 = vunpack.c.h.b16 %v335
      %v1081 = vunpack.c.l.b16 %v336
      %v1082 = vunpack.c.h.b16 %v336
      %v1083 = vunpack.c.l.b16 %v337
      %v1084 = vunpack.c.h.b16 %v337
      %v1085 = vunpack.c.l.b16 %v338
      %v1086 = vunpack.c.h.b16 %v338
      %v1087 = vunpack.c.l.b16 %v339
      %v1088 = vunpack.c.h.b16 %v339
      %v1089 = vunpack.c.l.b16 %v340
      %v1090 = vunpack.c.h.b16 %v340
      %v1091 = vunpack.c.l.b16 %v341
      %v1092 = vunpack.c.h.b16 %v341
      %v1093 = vunpack.c.l.b16 %v342
      %v1094 = vunpack.c.h.b16 %v342
      %v1095 = vunpack.c.l.b16 %v343
      %v1096 = vunpack.c.h.b16 %v343
      %v1097 = vunpack.c.l.b16 %v344
      %v1098 = vunpack.c.h.b16 %v344
      %v1099 = vunpack.c.l.b16 %v345
      %v1100 = vunpack.c.h.b16 %v345
      %v1101 = vunpack.c.l.b16 %v346
      %v1102 = vunpack.c.h.b16 %v346
      %v1103 = vunpack.c.l.b16 %v347
      %v1104 = vunpack.c.h.b16 %v347
      %v1105 = vunpack.c.l.b16 %v348
      %v1106 = vunpack.c.h.b16 %v348
      %v1107 = vunpack.c.l.b16 %v349
      %v1108 = vunpack.c.h.b16 %v349
      %v1109 = vunpack.c.l.b16 %v350
      %v1110 = vunpack.c.h.b16 %v350
      %v1111 = vunpack.c.l.b16 %v351
      %v1112 = vunpack.c.h.b16 %v351
      %v1113 = vunpack.c.l.b16 %v352
      %v1114 = vunpack.c.h.b16 %v352
      %v1115 = vunpack.c.l.b16 %v353
      %v1116 = vunpack.c.h.b16 %v353
      %v1117 = vunpack.c.l.b16 %v354
      %v1118 = vunpack.c.h.b16 %v354
      %v1119 = vunpack.c.l.b16 %v355
      %v1120 = vunpack.c.h.b16 %v355
      %v1121 = vunpack.c.l.b16 %v356
      %v1122 = vunpack.c.h.b16 %v356
      %v1123 = vunpack.c.l.b16 %v357
      %v1124 = vunpack.c.h.b16 %v357
      %v1125 = vunpack.c.l.b16 %v358
      %v1126 = vunpack.c.h.b16 %v358
      %v1127 = vunpack.c.l.b16 %v359
      %v1128 = vunpack.c.h.b16 %v359
      %v1129 = vunpack.c.l.b16 %v360
      %v1130 = vunpack.c.h.b16 %v360
      %v1131 = vunpack.c.l.b16 %v361
      %v1132 = vunpack.c.h.b16 %v361
      %v1133 = vunpack.c.l.b16 %v362
      %v1134 = vunpack.c.h.b16 %v362
      %v1135 = vunpack.c.l.b16 %v363
      %v1136 = vunpack.c.h.b16 %v363
      %v1137 = vunpack.c.l.b16 %v364
      %v1138 = vunpack.c.h.b16 %v364
      %v1139 = vunpack.c.l.b16 %v365
      %v1140 = vunpack.c.h.b16 %v365
      %v1141 = vunpack.c.l.b16 %v366
      %v1142 = vunpack.c.h.b16 %v366
      %v1143 = vunpack.c.l.b16 %v367
      %v1144 = vunpack.c.h.b16 %v367
      %v1145 = vunpack.c.l.b16 %v368
      %v1146 = vunpack.c.h.b16 %v368
      %v1147 = vunpack.c.l.b16 %v369
      %v1148 = vunpack.c.h.b16 %v369
      %v1149 = vunpack.c.l.b16 %v370
      %v1150 = vunpack.c.h.b16 %v370
      %v1151 = vunpack.c.l.b16 %v371
      %v1152 = vunpack.c.h.b16 %v371
      %v1153 = vunpack.c.l.b16 %v372
      %v1154 = vunpack.c.h.b16 %v372
      %v1155 = vunpack.c.l.b16 %v373
      %v1156 = vunpack.c.h.b16 %v373
      %v1157 = vunpack.c.l.b16 %v374
      %v1158 = vunpack.c.h.b16 %v374
      %v1159 = vunpack.c.l.b16 %v375
      %v1160 = vunpack.c.h.b16 %v375
      %v1161 = vunpack.c.l.b16 %v376
      %v1162 = vunpack.c.h.b16 %v376
      %v1163 = vunpack.c.l.b16 %v377
      %v1164 = vunpack.c.h.b16 %v377
      %v1165 = vunpack.c.l.b16 %v378
      %v1166 = vunpack.c.h.b16 %v378
      %v1167 = vunpack.c.l.b16 %v379
      %v1168 = vunpack.c.h.b16 %v379
      %v1169 = vunpack.c.l.b16 %v380
      %v1170 = vunpack.c.h.b16 %v380
      %v1171 = vunpack.c.l.b16 %v381
      %v1172 = vunpack.c.h.b16 %v381
      %v1173 = vunpack.c.l.b16 %v382
      %v1174 = vunpack.c.h.b16 %v382
      %v1175 = vunpack.c.l.b16 %v383
      %v1176 = vunpack.c.h.b16 %v383
      %v1177 = vunpack.c.l.b16 %v384
      %v1178 = vunpack.c.h.b16 %v384
      %v1179 = vunpack.c.l.b16 %v385
      %v1180 = vunpack.c.h.b16 %v385
      %v1181 = vunpack.c.l.b16 %v386
      %v1182 = vunpack.c.h.b16 %v386
      %v1183 = vunpack.c.l.b16 %v387
      %v1184 = vunpack.c.h.b16 %v387
      %v1185 = vunpack.c.l.b16 %v388
      %v1186 = vunpack.c.h.b16 %v388
      %v1187 = vunpack.c.l.b16 %v389
      %v1188 = vunpack.c.h.b16 %v389
      %v1189 = vunpack.c.l.b16 %v390
      %v1190 = vunpack.c.h.b16 %v390
      %v1191 = vunpack.c.l.b16 %v391
      %v1192 = vunpack.c.h.b16 %v391
      %v1193 = vunpack.c.l.b16 %v392
      %v1194 = vunpack.c.h.b16 %v392
      %v1195 = vunpack.c.l.b16 %v393
      %v1196 = vunpack.c.h.b16 %v393
      %v1197 = vunpack.c.l.b16 %v394
      %v1198 = vunpack.c.h.b16 %v394
      %v1199 = vunpack.c.l.b16 %v395
      %v1200 = vunpack.c.h.b16 %v395
      %v1201 = vunpack.c.l.b16 %v396
      %v1202 = vunpack.c.h.b16 %v396
      %v1203 = vunpack.c.l.b16 %v397
      %v1204 = vunpack.c.h.b16 %v397
      %v1205 = vunpack.c.l.b16 %v398
      %v1206 = vunpack.c.h.b16 %v398
      %v1207 = vunpack.c.l.b16 %v399
      %v1208 = vunpack.c.h.b16 %v399
      %v1209 = vunpack.c.l.b16 %v400
      %v1210 = vunpack.c.h.b16 %v400
      %v1211 = vunpack.c.l.b16 %v401
      %v1212 = vunpack.c.h.b16 %v401
      %v1213 = vunpack.c.l.b16 %v402
      %v1214 = vunpack.c.h.b16 %v402
      %v1215 = vunpack.c.l.b16 %v403
      %v1216 = vunpack.c.h.b16 %v403
      %v1217 = vunpack.c.l.b16 %v404
      %v1218 = vunpack.c.h.b16 %v404
      %v1219 = vunpack.c.l.b16 %v405
      %v1220 = vunpack.c.h.b16 %v405
      %v1221 = vunpack.c.l.b16 %v406
      %v1222 = vunpack.c.h.b16 %v406
      %v1223 = vunpack.c.l.b16 %v407
      %v1224 = vunpack.c.h.b16 %v407
      %v1225 = vunpack.c.l.b16 %v408
      %v1226 = vunpack.c.h.b16 %v408
      %v1227 = vunpack.c.l.b16 %v409
      %v1228 = vunpack.c.h.b16 %v409
      %v1229 = vunpack.c.l.b16 %v410
      %v1230 = vunpack.c.h.b16 %v410
      %v1231 = vunpack.c.l.b16 %v411
      %v1232 = vunpack.c.h.b16 %v411
      %v1233 = vunpack.c.l.b16 %v412
      %v1234 = vunpack.c.h.b16 %v412
      %v1235 = vunpack.c.l.b16 %v413
      %v1236 = vunpack.c.h.b16 %v413
      %v1237 = vunpack.c.l.b16 %v414
      %v1238 = vunpack.c.h.b16 %v414
      %v1239 = vunpack.c.l.b16 %v415
      %v1240 = vunpack.c.h.b16 %v415
      %v1241 = vunpack.c.l.b16 %v416
      %v1242 = vunpack.c.h.b16 %v416
      %v1243 = vunpack.c.l.b16 %v417
      %v1244 = vunpack.c.h.b16 %v417
      %v1245 = vunpack.c.l.b16 %v418
      %v1246 = vunpack.c.h.b16 %v418
      %v1247 = vunpack.c.l.b16 %v419
      %v1248 = vunpack.c.h.b16 %v419
      %v1249 = vunpack.c.l.b16 %v420
      %v1250 = vunpack.c.h.b16 %v420
      %v1251 = vunpack.c.l.b16 %v421
      %v1252 = vunpack.c.h.b16 %v421
      %v1253 = vunpack.c.l.b16 %v422
      %v1254 = vunpack.c.h.b16 %v422
      %v1255 = vunpack.c.l.b16 %v423
      %v1256 = vunpack.c.h.b16 %v423
      %v1257 = vunpack.c.l.b16 %v424
      %v1258 = vunpack.c.h.b16 %v424
      %v1259 = vunpack.c.l.b16 %v425
      %v1260 = vunpack.c.h.b16 %v425
      %v1261 = vunpack.c.l.b16 %v426
      %v1262 = vunpack.c.h.b16 %v426
      %v1263 = vunpack.c.l.b16 %v427
      %v1264 = vunpack.c.h.b16 %v427
      %v1265 = vunpack.c.l.b16 %v428
      %v1266 = vunpack.c.h.b16 %v428
      %v1267 = vunpack.c.l.b16 %v429
      %v1268 = vunpack.c.h.b16 %v429
      %v1269 = vunpack.c.l.b16 %v430
      %v1270 = vunpack.c.h.b16 %v430
      %v1271 = vunpack.c.l.b16 %v431
      %v1272 = vunpack.c.h.b16 %v431
      %v1273 = vunpack.c.l.b16 %v432
      %v1274 = vunpack.c.h.b16 %v432
      %v1275 = vunpack.c.l.b16 %v433
      %v1276 = vunpack.c.h.b16 %v433
      %v1277 = vunpack.c.l.b16 %v434
      %v1278 = vunpack.c.h.b16 %v434
      %v1279 = vunpack.c.l.b16 %v435
      %v1280 = vunpack.c.h.b16 %v435
      %v1281 = vunpack.c.l.b16 %v436
      %v1282 = vunpack.c.h.b16 %v436
      %v1283 = vunpack.c.l.b16 %v437
      %v1284 = vunpack.c.h.b16 %v437
      %v1285 = vunpack.c.l.b16 %v438
      %v1286 = vunpack.c.h.b16 %v438
      %v1287 = vunpack.c.l.b16 %v439
      %v1288 = vunpack.c.h.b16 %v439
      %v1289 = vunpack.c.l.b16 %v440
      %v1290 = vunpack.c.h.b16 %v440
      %v1291 = vunpack.c.l.b16 %v441
      %v1292 = vunpack.c.h.b16 %v441
      %v1293 = vunpack.c.l.b16 %v442
      %v1294 = vunpack.c.h.b16 %v442
      %v1295 = vunpack.c.l.b16 %v443
      %v1296 = vunpack.c.h.b16 %v443
      %v1297 = vunpack.c.l.b16 %v444
      %v1298 = vunpack.c.h.b16 %v444
      %v1299 = vunpack.c.l.b16 %v445
      %v1300 = vunpack.c.h.b16 %v445
      %v1301 = vunpack.c.l.b16 %v446
      %v1302 = vunpack.c.h.b16 %v446
      %v1303 = vunpack.c.l.b16 %v447
      %v1304 = vunpack.c.h.b16 %v447
      %v1305 = vunpack.c.l.b16 %v448
      %v1306 = vunpack.c.h.b16 %v448
      %v1307 = vunpack.c.l.b16 %v449
      %v1308 = vunpack.c.h.b16 %v449
      %v1309 = vunpack.c.l.b16 %v450
      %v1310 = vunpack.c.h.b16 %v450
      %v1311 = vpack.c.b16 %v801, %v799
      %v1312 = vpack.c.b16 %v802, %v800
      %v1313 = vpack.c.b16 %v805, %v803
      %v1314 = vpack.c.b16 %v806, %v804
      %v1315 = vpack.c.b16 %v809, %v807
      %v1316 = vpack.c.b16 %v810, %v808
      %v1317 = vpack.c.b16 %v813, %v811
      %v1318 = vpack.c.b16 %v814, %v812
      %v1319 = vpack.c.b16 %v817, %v815
      %v1320 = vpack.c.b16 %v818, %v816
      %v1321 = vpack.c.b16 %v821, %v819
      %v1322 = vpack.c.b16 %v822, %v820
      %v1323 = vpack.c.b16 %v825, %v823
      %v1324 = vpack.c.b16 %v826, %v824
      %v1325 = vpack.c.b16 %v829, %v827
      %v1326 = vpack.c.b16 %v830, %v828
      %v1327 = vpack.c.b16 %v833, %v831
      %v1328 = vpack.c.b16 %v834, %v832
      %v1329 = vpack.c.b16 %v837, %v835
      %v1330 = vpack.c.b16 %v838, %v836
      %v1331 = vpack.c.b16 %v841, %v839
      %v1332 = vpack.c.b16 %v842, %v840
      %v1333 = vpack.c.b16 %v845, %v843
      %v1334 = vpack.c.b16 %v846, %v844
      %v1335 = vpack.c.b16 %v849, %v847
      %v1336 = vpack.c.b16 %v850, %v848
      %v1337 = vpack.c.b16 %v853, %v851
      %v1338 = vpack.c.b16 %v854, %v852
      %v1339 = vpack.c.b16 %v857, %v855
      %v1340 = vpack.c.b16 %v858, %v856
      %v1341 = vpack.c.b16 %v861, %v859
      %v1342 = vpack.c.b16 %v862, %v860
      %v1343 = vpack.c.b16 %v865, %v863
      %v1344 = vpack.c.b16 %v866, %v864
      %v1345 = vpack.c.b16 %v869, %v867
      %v1346 = vpack.c.b16 %v870, %v868
      %v1347 = vpack.c.b16 %v873, %v871
      %v1348 = vpack.c.b16 %v874, %v872
      %v1349 = vpack.c.b16 %v877, %v875
      %v1350 = vpack.c.b16 %v878, %v876
      %v1351 = vpack.c.b16 %v881, %v879
      %v1352 = vpack.c.b16 %v882, %v880
      %v1353 = vpack.c.b16 %v885, %v883
      %v1354 = vpack.c.b16 %v886, %v884
      %v1355 = vpack.c.b16 %v889, %v887
      %v1356 = vpack.c.b16 %v890, %v888
      %v1357 = vpack.c.b16 %v893, %v891
      %v1358 = vpack.c.b16 %v894, %v892
      %v1359 = vpack.c.b16 %v897, %v895
      %v1360 = vpack.c.b16 %v898, %v896
      %v1361 = vpack.c.b16 %v901, %v899
      %v1362 = vpack.c.b16 %v902, %v900
      %v1363 = vpack.c.b16 %v905, %v903
      %v1364 = vpack.c.b16 %v906, %v904
      %v1365 = vpack.c.b16 %v909, %v907
      %v1366 = vpack.c.b16 %v910, %v908
      %v1367 = vpack.c.b16 %v913, %v911
      %v1368 = vpack.c.b16 %v914, %v912
      %v1369 = vpack.c.b16 %v917, %v915
      %v1370 = vpack.c.b16 %v918, %v916
      %v1371 = vpack.c.b16 %v921, %v919
      %v1372 = vpack.c.b16 %v922, %v920
      %v1373 = vpack.c.b16 %v925, %v923
      %v1374 = vpack.c.b16 %v926, %v924
      %v1375 = vpack.c.b16 %v929, %v927
      %v1376 = vpack.c.b16 %v930, %v928
      %v1377 = vpack.c.b16 %v933, %v931
      %v1378 = vpack.c.b16 %v934, %v932
      %v1379 = vpack.c.b16 %v937, %v935
      %v1380 = vpack.c.b16 %v938, %v936
      %v1381 = vpack.c.b16 %v941, %v939
      %v1382 = vpack.c.b16 %v942, %v940
      %v1383 = vpack.c.b16 %v945, %v943
      %v1384 = vpack.c.b16 %v946, %v944
      %v1385 = vpack.c.b16 %v949, %v947
      %v1386 = vpack.c.b16 %v950, %v948
      %v1387 = vpack.c.b16 %v953, %v951
      %v1388 = vpack.c.b16 %v954, %v952
      %v1389 = vpack.c.b16 %v957, %v955
      %v1390 = vpack.c.b16 %v958, %v956
      %v1391 = vpack.c.b16 %v961, %v959
      %v1392 = vpack.c.b16 %v962, %v960
      %v1393 = vpack.c.b16 %v965, %v963
      %v1394 = vpack.c.b16 %v966, %v964
      %v1395 = vpack.c.b16 %v969, %v967
      %v1396 = vpack.c.b16 %v970, %v968
      %v1397 = vpack.c.b16 %v973, %v971
      %v1398 = vpack.c.b16 %v974, %v972
      %v1399 = vpack.c.b16 %v977, %v975
      %v1400 = vpack.c.b16 %v978, %v976
      %v1401 = vpack.c.b16 %v981, %v979
      %v1402 = vpack.c.b16 %v982, %v980
      %v1403 = vpack.c.b16 %v985, %v983
      %v1404 = vpack.c.b16 %v986, %v984
      %v1405 = vpack.c.b16 %v989, %v987
      %v1406 = vpack.c.b16 %v990, %v988
      %v1407 = vpack.c.b16 %v993, %v991
      %v1408 = vpack.c.b16 %v994, %v992
      %v1409 = vpack.c.b16 %v997, %v995
      %v1410 = vpack.c.b16 %v998, %v996
      %v1411 = vpack.c.b16 %v1001, %v999
      %v1412 = vpack.c.b16 %v1002, %v1000
      %v1413 = vpack.c.b16 %v1005, %v1003
      %v1414 = vpack.c.b16 %v1006, %v1004
      %v1415 = vpack.c.b16 %v1009, %v1007
      %v1416 = vpack.c.b16 %v1010, %v1008
      %v1417 = vpack.c.b16 %v1013, %v1011
      %v1418 = vpack.c.b16 %v1014, %v1012
      %v1419 = vpack.c.b16 %v1017, %v1015
      %v1420 = vpack.c.b16 %v1018, %v1016
      %v1421 = vpack.c.b16 %v1021, %v1019
      %v1422 = vpack.c.b16 %v1022, %v1020
      %v1423 = vpack.c.b16 %v1025, %v1023
      %v1424 = vpack.c.b16 %v1026, %v1024
      %v1425 = vpack.c.b16 %v1029, %v1027
      %v1426 = vpack.c.b16 %v1030, %v1028
      %v1427 = vpack.c.b16 %v1033, %v1031
      %v1428 = vpack.c.b16 %v1034, %v1032
      %v1429 = vpack.c.b16 %v1037, %v1035
      %v1430 = vpack.c.b16 %v1038, %v1036
      %v1431 = vpack.c.b16 %v1041, %v1039
      %v1432 = vpack.c.b16 %v1042, %v1040
      %v1433 = vpack.c.b16 %v1045, %v1043
      %v1434 = vpack.c.b16 %v1046, %v1044
      %v1435 = vpack.c.b16 %v1049, %v1047
      %v1436 = vpack.c.b16 %v1050, %v1048
      %v1437 = vpack.c.b16 %v1053, %v1051
      %v1438 = vpack.c.b16 %v1054, %v1052
      %v1439 = vpack.c.b16 %v1057, %v1055
      %v1440 = vpack.c.b16 %v1058, %v1056
      %v1441 = vpack.c.b16 %v1061, %v1059
      %v1442 = vpack.c.b16 %v1062, %v1060
      %v1443 = vpack.c.b16 %v1065, %v1063
      %v1444 = vpack.c.b16 %v1066, %v1064
      %v1445 = vpack.c.b16 %v1069, %v1067
      %v1446 = vpack.c.b16 %v1070, %v1068
      %v1447 = vpack.c.b16 %v1073, %v1071
      %v1448 = vpack.c.b16 %v1074, %v1072
      %v1449 = vpack.c.b16 %v1077, %v1075
      %v1450 = vpack.c.b16 %v1078, %v1076
      %v1451 = vpack.c.b16 %v1081, %v1079
      %v1452 = vpack.c.b16 %v1082, %v1080
      %v1453 = vpack.c.b16 %v1085, %v1083
      %v1454 = vpack.c.b16 %v1086, %v1084
      %v1455 = vpack.c.b16 %v1089, %v1087
      %v1456 = vpack.c.b16 %v1090, %v1088
      %v1457 = vpack.c.b16 %v1093, %v1091
      %v1458 = vpack.c.b16 %v1094, %v1092
      %v1459 = vpack.c.b16 %v1097, %v1095
      %v1460 = vpack.c.b16 %v1098, %v1096
      %v1461 = vpack.c.b16 %v1101, %v1099
      %v1462 = vpack.c.b16 %v1102, %v1100
      %v1463 = vpack.c.b16 %v1105, %v1103
      %v1464 = vpack.c.b16 %v1106, %v1104
      %v1465 = vpack.c.b16 %v1109, %v1107
      %v1466 = vpack.c.b16 %v1110, %v1108
      %v1467 = vpack.c.b16 %v1113, %v1111
      %v1468 = vpack.c.b16 %v1114, %v1112
      %v1469 = vpack.c.b16 %v1117, %v1115
      %v1470 = vpack.c.b16 %v1118, %v1116
      %v1471 = vpack.c.b16 %v1121, %v1119
      %v1472 = vpack.c.b16 %v1122, %v1120
      %v1473 = vpack.c.b16 %v1125, %v1123
      %v1474 = vpack.c.b16 %v1126, %v1124
      %v1475 = vpack.c.b16 %v1129, %v1127
      %v1476 = vpack.c.b16 %v1130, %v1128
      %v1477 = vpack.c.b16 %v1133, %v1131
      %v1478 = vpack.c.b16 %v1134, %v1132
      %v1479 = vpack.c.b16 %v1137, %v1135
      %v1480 = vpack.c.b16 %v1138, %v1136
      %v1481 = vpack.c.b16 %v1141, %v1139
      %v1482 = vpack.c.b16 %v1142, %v1140
      %v1483 = vpack.c.b16 %v1145, %v1143
      %v1484 = vpack.c.b16 %v1146, %v1144
      %v1485 = vpack.c.b16 %v1149, %v1147
      %v1486 = vpack.c.b16 %v1150, %v1148
      %v1487 = vpack.c.b16 %v1153, %v1151
      %v1488 = vpack.c.b16 %v1154, %v1152
      %v1489 = vpack.c.b16 %v1157, %v1155
      %v1490 = vpack.c.b16 %v1158, %v1156
      %v1491 = vpack.c.b16 %v1161, %v1159
      %v1492 = vpack.c.b16 %v1162, %v1160
      %v1493 = vpack.c.b16 %v1165, %v1163
      %v1494 = vpack.c.b16 %v1166, %v1164
      %v1495 = vpack.c.b16 %v1169, %v1167
      %v1496 = vpack.c.b16 %v1170, %v1168
      %v1497 = vpack.c.b16 %v1173, %v1171
      %v1498 = vpack.c.b16 %v1174, %v1172
      %v1499 = vpack.c.b16 %v1177, %v1175
      %v1500 = vpack.c.b16 %v1178, %v1176
      %v1501 = vpack.c.b16 %v1181, %v1179
      %v1502 = vpack.c.b16 %v1182, %v1180
      %v1503 = vpack.c.b16 %v1185, %v1183
      %v1504 = vpack.c.b16 %v1186, %v1184
      %v1505 = vpack.c.b16 %v1189, %v1187
      %v1506 = vpack.c.b16 %v1190, %v1188
      %v1507 = vpack.c.b16 %v1193, %v1191
      %v1508 = vpack.c.b16 %v1194, %v1192
      %v1509 = vpack.c.b16 %v1197, %v1195
      %v1510 = vpack.c.b16 %v1198, %v1196
      %v1511 = vpack.c.b16 %v1201, %v1199
      %v1512 = vpack.c.b16 %v1202, %v1200
      %v1513 = vpack.c.b16 %v1205, %v1203
      %v1514 = vpack.c.b16 %v1206, %v1204
      %v1515 = vpack.c.b16 %v1209, %v1207
      %v1516 = vpack.c.b16 %v1210, %v1208
      %v1517 = vpack.c.b16 %v1213, %v1211
      %v1518 = vpack.c.b16 %v1214, %v1212
      %v1519 = vpack.c.b16 %v1217, %v1215
      %v1520 = vpack.c.b16 %v1218, %v1216
      %v1521 = vpack.c.b16 %v1221, %v1219
      %v1522 = vpack.c.b16 %v1222, %v1220
      %v1523 = vpack.c.b16 %v1225, %v1223
      %v1524 = vpack.c.b16 %v1226, %v1224
      %v1525 = vpack.c.b16 %v1229, %v1227
      %v1526 = vpack.c.b16 %v1230, %v1228
      %v1527 = vpack.c.b16 %v1233, %v1231
      %v1528 = vpack.c.b16 %v1234, %v1232
      %v1529 = vpack.c.b16 %v1237, %v1235
      %v1530 = vpack.c.b16 %v1238, %v1236
      %v1531 = vpack.c.b16 %v1241, %v1239
      %v1532 = vpack.c.b16 %v1242, %v1240
      %v1533 = vpack.c.b16 %v1245, %v1243
      %v1534 = vpack.c.b16 %v1246, %v1244
      %v1535 = vpack.c.b16 %v1249, %v1247
      %v1536 = vpack.c.b16 %v1250, %v1248
      %v1537 = vpack.c.b16 %v1253, %v1251
      %v1538 = vpack.c.b16 %v1254, %v1252
      %v1539 = vpack.c.b16 %v1257, %v1255
      %v1540 = vpack.c.b16 %v1258, %v1256
      %v1541 = vpack.c.b16 %v1261, %v1259
      %v1542 = vpack.c.b16 %v1262, %v1260
      %v1543 = vpack.c.b16 %v1265, %v1263
      %v1544 = vpack.c.b16 %v1266, %v1264
      %v1545 = vpack.c.b16 %v1269, %v1267
      %v1546 = vpack.c.b16 %v1270, %v1268
      %v1547 = vpack.c.b16 %v1273, %v1271
      %v1548 = vpack.c.b16 %v1274, %v1272
      %v1549 = vpack.c.b16 %v1277, %v1275
      %v1550 = vpack.c.b16 %v1278, %v1276
      %v1551 = vpack.c.b16 %v1281, %v1279
      %v1552 = vpack.c.b16 %v1282, %v1280
      %v1553 = vpack.c.b16 %v1285, %v1283
      %v1554 = vpack.c.b16 %v1286, %v1284
      %v1555 = vpack.c.b16 %v1289, %v1287
      %v1556 = vpack.c.b16 %v1290, %v1288
      %v1557 = vpack.c.b16 %v1293, %v1291
      %v1558 = vpack.c.b16 %v1294, %v1292
      %v1559 = vpack.c.b16 %v1297, %v1295
      %v1560 = vpack.c.b16 %v1298, %v1296
      %v1561 = vpack.c.b16 %v1301, %v1299
      %v1562 = vpack.c.b16 %v1302, %v1300
      %v1563 = vpack.c.b16 %v1305, %v1303
      %v1564 = vpack.c.b16 %v1306, %v1304
      %v1565 = vpack.c.b16 %v1309, %v1307
      %v1566 = vpack.c.b16 %v1310, %v1308
      %1823 = vmatprep.subr.bf16.mxu0 %v1326
      %1824 = vmatpush1.bf16.msra.mxu0 %v1325
      %1825 = vmatprep.subr.bf16.mxu0 %v1324
      %1826 = vmatpush1.bf16.msra.mxu0 %v1323
      %1827 = vmatprep.subr.bf16.mxu0 %v1322
      %1828 = vmatpush1.bf16.msra.mxu0 %v1321
      %1829 = vmatprep.subr.bf16.mxu0 %v1320
      %1830 = vmatpush1.bf16.msra.mxu0 %v1319
      %1831 = vmatprep.subr.bf16.mxu0 %v1318
      %1832 = vmatpush1.bf16.msra.mxu0 %v1317
      %1833 = vmatprep.subr.bf16.mxu0 %v1316
      %1834 = vmatpush1.bf16.msra.mxu0 %v1315
      %1835 = vmatprep.subr.bf16.mxu0 %v1314
      %1836 = vmatpush1.bf16.msra.mxu0 %v1313
      %1837 = vmatprep.subr.bf16.mxu0 %v1312
      %1838 = vmatpush1.bf16.msra.mxu0 %v1311
      %1839 = vmatprep.subr.bf16.mxu0 %v1342
      %1840 = vmatpush2.bf16.msra.mxu0 %v1341
      %1841 = vmatprep.subr.bf16.mxu0 %v1340
      %1842 = vmatpush2.bf16.msra.mxu0 %v1339
      %1843 = vmatprep.subr.bf16.mxu0 %v1338
      %1844 = vmatpush2.bf16.msra.mxu0 %v1337
      %1845 = vmatprep.subr.bf16.mxu0 %v1336
      %1846 = vmatpush2.bf16.msra.mxu0 %v1335
      %1847 = vmatprep.subr.bf16.mxu0 %v1334
      %1848 = vmatpush2.bf16.msra.mxu0 %v1333
      %1849 = vmatprep.subr.bf16.mxu0 %v1332
      %1850 = vmatpush2.bf16.msra.mxu0 %v1331
      %1851 = vmatprep.subr.bf16.mxu0 %v1330
      %1852 = vmatpush2.bf16.msra.mxu0 %v1329
      %1853 = vmatprep.subr.bf16.mxu0 %v1328
      %1854 = vmatpush2.bf16.msra.mxu0 %v1327
      %1855 = vmatprep.mubr.bf16.mxu0 %v512
      %1856 = vmatmul.mubr.bf16.gmra.mxu0 %v511
      %v1857 = vpop.f32.mrf.mxu0
      %v1858 = vadd.f32 %v456, %v1857
      %v1859 = vpop.f32.mrf.mxu0
      %v1860 = vadd.f32 %v460, %v1859
      %v1861 = vpop.f32.mrf.mxu0
      %v1862 = vadd.f32 %v456, %v1861
      %v1863 = vpop.f32.mrf.mxu0
      %v1864 = vadd.f32 %v460, %v1863
      %1865 = vdwg.mxu0
      %1866 = vmatprep.subr.bf16.mxu0 %v1358
      %1867 = vmatpush1.bf16.msra.mxu0 %v1357
      %1868 = vmatprep.subr.bf16.mxu0 %v1356
      %1869 = vmatpush1.bf16.msra.mxu0 %v1355
      %1870 = vmatprep.subr.bf16.mxu0 %v1354
      %1871 = vmatpush1.bf16.msra.mxu0 %v1353
      %1872 = vmatprep.subr.bf16.mxu0 %v1352
      %1873 = vmatpush1.bf16.msra.mxu0 %v1351
      %1874 = vmatprep.subr.bf16.mxu0 %v1350
      %1875 = vmatpush1.bf16.msra.mxu0 %v1349
      %1876 = vmatprep.subr.bf16.mxu0 %v1348
      %1877 = vmatpush1.bf16.msra.mxu0 %v1347
      %1878 = vmatprep.subr.bf16.mxu0 %v1346
      %1879 = vmatpush1.bf16.msra.mxu0 %v1345
      %1880 = vmatprep.subr.bf16.mxu0 %v1344
      %1881 = vmatpush1.bf16.msra.mxu0 %v1343
      %1882 = vmatprep.subr.bf16.mxu0 %v1374
      %1883 = vmatpush2.bf16.msra.mxu0 %v1373
      %1884 = vmatprep.subr.bf16.mxu0 %v1372
      %1885 = vmatpush2.bf16.msra.mxu0 %v1371
      %1886 = vmatprep.subr.bf16.mxu0 %v1370
      %1887 = vmatpush2.bf16.msra.mxu0 %v1369
      %1888 = vmatprep.subr.bf16.mxu0 %v1368
      %1889 = vmatpush2.bf16.msra.mxu0 %v1367
      %1890 = vmatprep.subr.bf16.mxu0 %v1366
      %1891 = vmatpush2.bf16.msra.mxu0 %v1365
      %1892 = vmatprep.subr.bf16.mxu0 %v1364
      %1893 = vmatpush2.bf16.msra.mxu0 %v1363
      %1894 = vmatprep.subr.bf16.mxu0 %v1362
      %1895 = vmatpush2.bf16.msra.mxu0 %v1361
      %1896 = vmatprep.subr.bf16.mxu0 %v1360
      %1897 = vmatpush2.bf16.msra.mxu0 %v1359
      %1898 = vmatprep.mubr.bf16.mxu0 %v514
      %1899 = vmatmul.mubr.bf16.gmra.mxu0 %v513
      %v1900 = vpop.f32.mrf.mxu0
      %v1901 = vadd.f32 %v1858, %v1900
      %v1902 = vpop.f32.mrf.mxu0
      %v1903 = vadd.f32 %v1860, %v1902
      %v1904 = vpop.f32.mrf.mxu0
      %v1905 = vadd.f32 %v1862, %v1904
      %v1906 = vpop.f32.mrf.mxu0
      %v1907 = vadd.f32 %v1864, %v1906
      %1908 = vdwg.mxu0
      %1909 = vmatprep.subr.bf16.mxu0 %v1390
      %1910 = vmatpush1.bf16.msra.mxu0 %v1389
      %1911 = vmatprep.subr.bf16.mxu0 %v1388
      %1912 = vmatpush1.bf16.msra.mxu0 %v1387
      %1913 = vmatprep.subr.bf16.mxu0 %v1386
      %1914 = vmatpush1.bf16.msra.mxu0 %v1385
      %1915 = vmatprep.subr.bf16.mxu0 %v1384
      %1916 = vmatpush1.bf16.msra.mxu0 %v1383
      %1917 = vmatprep.subr.bf16.mxu0 %v1382
      %1918 = vmatpush1.bf16.msra.mxu0 %v1381
      %1919 = vmatprep.subr.bf16.mxu0 %v1380
      %1920 = vmatpush1.bf16.msra.mxu0 %v1379
      %1921 = vmatprep.subr.bf16.mxu0 %v1378
      %1922 = vmatpush1.bf16.msra.mxu0 %v1377
      %1923 = vmatprep.subr.bf16.mxu0 %v1376
      %1924 = vmatpush1.bf16.msra.mxu0 %v1375
      %1925 = vmatprep.subr.bf16.mxu0 %v1406
      %1926 = vmatpush2.bf16.msra.mxu0 %v1405
      %1927 = vmatprep.subr.bf16.mxu0 %v1404
      %1928 = vmatpush2.bf16.msra.mxu0 %v1403
      %1929 = vmatprep.subr.bf16.mxu0 %v1402
      %1930 = vmatpush2.bf16.msra.mxu0 %v1401
      %1931 = vmatprep.subr.bf16.mxu0 %v1400
      %1932 = vmatpush2.bf16.msra.mxu0 %v1399
      %1933 = vmatprep.subr.bf16.mxu0 %v1398
      %1934 = vmatpush2.bf16.msra.mxu0 %v1397
      %1935 = vmatprep.subr.bf16.mxu0 %v1396
      %1936 = vmatpush2.bf16.msra.mxu0 %v1395
      %1937 = vmatprep.subr.bf16.mxu0 %v1394
      %1938 = vmatpush2.bf16.msra.mxu0 %v1393
      %1939 = vmatprep.subr.bf16.mxu0 %v1392
      %1940 = vmatpush2.bf16.msra.mxu0 %v1391
      %1941 = vmatprep.mubr.bf16.mxu0 %v516
      %1942 = vmatmul.mubr.bf16.gmra.mxu0 %v515
      %v1943 = vpop.f32.mrf.mxu0
      %v1944 = vadd.f32 %v1901, %v1943
      %v1945 = vpop.f32.mrf.mxu0
      %v1946 = vadd.f32 %v1903, %v1945
      %v1947 = vpop.f32.mrf.mxu0
      %v1948 = vadd.f32 %v1905, %v1947
      %v1949 = vpop.f32.mrf.mxu0
      %v1950 = vadd.f32 %v1907, %v1949
      %1951 = vdwg.mxu0
      %1952 = vmatprep.subr.bf16.mxu0 %v1422
      %1953 = vmatpush1.bf16.msra.mxu0 %v1421
      %1954 = vmatprep.subr.bf16.mxu0 %v1420
      %1955 = vmatpush1.bf16.msra.mxu0 %v1419
      %1956 = vmatprep.subr.bf16.mxu0 %v1418
      %1957 = vmatpush1.bf16.msra.mxu0 %v1417
      %1958 = vmatprep.subr.bf16.mxu0 %v1416
      %1959 = vmatpush1.bf16.msra.mxu0 %v1415
      %1960 = vmatprep.subr.bf16.mxu0 %v1414
      %1961 = vmatpush1.bf16.msra.mxu0 %v1413
      %1962 = vmatprep.subr.bf16.mxu0 %v1412
      %1963 = vmatpush1.bf16.msra.mxu0 %v1411
      %1964 = vmatprep.subr.bf16.mxu0 %v1410
      %1965 = vmatpush1.bf16.msra.mxu0 %v1409
      %1966 = vmatprep.subr.bf16.mxu0 %v1408
      %1967 = vmatpush1.bf16.msra.mxu0 %v1407
      %1968 = vmatprep.subr.bf16.mxu0 %v1438
      %1969 = vmatpush2.bf16.msra.mxu0 %v1437
      %1970 = vmatprep.subr.bf16.mxu0 %v1436
      %1971 = vmatpush2.bf16.msra.mxu0 %v1435
      %1972 = vmatprep.subr.bf16.mxu0 %v1434
      %1973 = vmatpush2.bf16.msra.mxu0 %v1433
      %1974 = vmatprep.subr.bf16.mxu0 %v1432
      %1975 = vmatpush2.bf16.msra.mxu0 %v1431
      %1976 = vmatprep.subr.bf16.mxu0 %v1430
      %1977 = vmatpush2.bf16.msra.mxu0 %v1429
      %1978 = vmatprep.subr.bf16.mxu0 %v1428
      %1979 = vmatpush2.bf16.msra.mxu0 %v1427
      %1980 = vmatprep.subr.bf16.mxu0 %v1426
      %1981 = vmatpush2.bf16.msra.mxu0 %v1425
      %1982 = vmatprep.subr.bf16.mxu0 %v1424
      %1983 = vmatpush2.bf16.msra.mxu0 %v1423
      %1984 = vmatprep.mubr.bf16.mxu0 %v518
      %1985 = vmatmul.mubr.bf16.gmra.mxu0 %v517
      %v1986 = vpop.f32.mrf.mxu0
      %v1987 = vadd.f32 %v1944, %v1986
      %v1988 = vpop.f32.mrf.mxu0
      %v1989 = vadd.f32 %v1946, %v1988
      %v1990 = vpop.f32.mrf.mxu0
      %v1991 = vadd.f32 %v1948, %v1990
      %v1992 = vpop.f32.mrf.mxu0
      %v1993 = vadd.f32 %v1950, %v1992
      %1994 = vdwg.mxu0
      %1995 = vmatprep.subr.bf16.mxu0 %v1454
      %1996 = vmatpush1.bf16.msra.mxu0 %v1453
      %1997 = vmatprep.subr.bf16.mxu0 %v1452
      %1998 = vmatpush1.bf16.msra.mxu0 %v1451
      %1999 = vmatprep.subr.bf16.mxu0 %v1450
      %2000 = vmatpush1.bf16.msra.mxu0 %v1449
      %2001 = vmatprep.subr.bf16.mxu0 %v1448
      %2002 = vmatpush1.bf16.msra.mxu0 %v1447
      %2003 = vmatprep.subr.bf16.mxu0 %v1446
      %2004 = vmatpush1.bf16.msra.mxu0 %v1445
      %2005 = vmatprep.subr.bf16.mxu0 %v1444
      %2006 = vmatpush1.bf16.msra.mxu0 %v1443
      %2007 = vmatprep.subr.bf16.mxu0 %v1442
      %2008 = vmatpush1.bf16.msra.mxu0 %v1441
      %2009 = vmatprep.subr.bf16.mxu0 %v1440
      %2010 = vmatpush1.bf16.msra.mxu0 %v1439
      %2011 = vmatprep.subr.bf16.mxu0 %v1470
      %2012 = vmatpush2.bf16.msra.mxu0 %v1469
      %2013 = vmatprep.subr.bf16.mxu0 %v1468
      %2014 = vmatpush2.bf16.msra.mxu0 %v1467
      %2015 = vmatprep.subr.bf16.mxu0 %v1466
      %2016 = vmatpush2.bf16.msra.mxu0 %v1465
      %2017 = vmatprep.subr.bf16.mxu0 %v1464
      %2018 = vmatpush2.bf16.msra.mxu0 %v1463
      %2019 = vmatprep.subr.bf16.mxu0 %v1462
      %2020 = vmatpush2.bf16.msra.mxu0 %v1461
      %2021 = vmatprep.subr.bf16.mxu0 %v1460
      %2022 = vmatpush2.bf16.msra.mxu0 %v1459
      %2023 = vmatprep.subr.bf16.mxu0 %v1458
      %2024 = vmatpush2.bf16.msra.mxu0 %v1457
      %2025 = vmatprep.subr.bf16.mxu0 %v1456
      %2026 = vmatpush2.bf16.msra.mxu0 %v1455
      %2027 = vmatprep.mubr.bf16.mxu0 %v520
      %2028 = vmatmul.mubr.bf16.gmra.mxu0 %v519
      %v2029 = vpop.f32.mrf.mxu0
      %v2030 = vadd.f32 %v1987, %v2029
      %v2031 = vpop.f32.mrf.mxu0
      %v2032 = vadd.f32 %v1989, %v2031
      %v2033 = vpop.f32.mrf.mxu0
      %v2034 = vadd.f32 %v1991, %v2033
      %v2035 = vpop.f32.mrf.mxu0
      %v2036 = vadd.f32 %v1993, %v2035
      %2037 = vdwg.mxu0
      %2038 = vmatprep.subr.bf16.mxu0 %v1486
      %2039 = vmatpush1.bf16.msra.mxu0 %v1485
      %2040 = vmatprep.subr.bf16.mxu0 %v1484
      %2041 = vmatpush1.bf16.msra.mxu0 %v1483
      %2042 = vmatprep.subr.bf16.mxu0 %v1482
      %2043 = vmatpush1.bf16.msra.mxu0 %v1481
      %2044 = vmatprep.subr.bf16.mxu0 %v1480
      %2045 = vmatpush1.bf16.msra.mxu0 %v1479
      %2046 = vmatprep.subr.bf16.mxu0 %v1478
      %2047 = vmatpush1.bf16.msra.mxu0 %v1477
      %2048 = vmatprep.subr.bf16.mxu0 %v1476
      %2049 = vmatpush1.bf16.msra.mxu0 %v1475
      %2050 = vmatprep.subr.bf16.mxu0 %v1474
      %2051 = vmatpush1.bf16.msra.mxu0 %v1473
      %2052 = vmatprep.subr.bf16.mxu0 %v1472
      %2053 = vmatpush1.bf16.msra.mxu0 %v1471
      %2054 = vmatprep.subr.bf16.mxu0 %v1502
      %2055 = vmatpush2.bf16.msra.mxu0 %v1501
      %2056 = vmatprep.subr.bf16.mxu0 %v1500
      %2057 = vmatpush2.bf16.msra.mxu0 %v1499
      %2058 = vmatprep.subr.bf16.mxu0 %v1498
      %2059 = vmatpush2.bf16.msra.mxu0 %v1497
      %2060 = vmatprep.subr.bf16.mxu0 %v1496
      %2061 = vmatpush2.bf16.msra.mxu0 %v1495
      %2062 = vmatprep.subr.bf16.mxu0 %v1494
      %2063 = vmatpush2.bf16.msra.mxu0 %v1493
      %2064 = vmatprep.subr.bf16.mxu0 %v1492
      %2065 = vmatpush2.bf16.msra.mxu0 %v1491
      %2066 = vmatprep.subr.bf16.mxu0 %v1490
      %2067 = vmatpush2.bf16.msra.mxu0 %v1489
      %2068 = vmatprep.subr.bf16.mxu0 %v1488
      %2069 = vmatpush2.bf16.msra.mxu0 %v1487
      %2070 = vmatprep.mubr.bf16.mxu0 %v522
      %2071 = vmatmul.mubr.bf16.gmra.mxu0 %v521
      %v2072 = vpop.f32.mrf.mxu0
      %v2073 = vadd.f32 %v2030, %v2072
      %v2074 = vpop.f32.mrf.mxu0
      %v2075 = vadd.f32 %v2032, %v2074
      %v2076 = vpop.f32.mrf.mxu0
      %v2077 = vadd.f32 %v2034, %v2076
      %v2078 = vpop.f32.mrf.mxu0
      %v2079 = vadd.f32 %v2036, %v2078
      %2080 = vdwg.mxu0
      %2081 = vmatprep.subr.bf16.mxu0 %v1518
      %2082 = vmatpush1.bf16.msra.mxu0 %v1517
      %2083 = vmatprep.subr.bf16.mxu0 %v1516
      %2084 = vmatpush1.bf16.msra.mxu0 %v1515
      %2085 = vmatprep.subr.bf16.mxu0 %v1514
      %2086 = vmatpush1.bf16.msra.mxu0 %v1513
      %2087 = vmatprep.subr.bf16.mxu0 %v1512
      %2088 = vmatpush1.bf16.msra.mxu0 %v1511
      %2089 = vmatprep.subr.bf16.mxu0 %v1510
      %2090 = vmatpush1.bf16.msra.mxu0 %v1509
      %2091 = vmatprep.subr.bf16.mxu0 %v1508
      %2092 = vmatpush1.bf16.msra.mxu0 %v1507
      %2093 = vmatprep.subr.bf16.mxu0 %v1506
      %2094 = vmatpush1.bf16.msra.mxu0 %v1505
      %2095 = vmatprep.subr.bf16.mxu0 %v1504
      %2096 = vmatpush1.bf16.msra.mxu0 %v1503
      %2097 = vmatprep.subr.bf16.mxu0 %v1534
      %2098 = vmatpush2.bf16.msra.mxu0 %v1533
      %2099 = vmatprep.subr.bf16.mxu0 %v1532
      %2100 = vmatpush2.bf16.msra.mxu0 %v1531
      %2101 = vmatprep.subr.bf16.mxu0 %v1530
      %2102 = vmatpush2.bf16.msra.mxu0 %v1529
      %2103 = vmatprep.subr.bf16.mxu0 %v1528
      %2104 = vmatpush2.bf16.msra.mxu0 %v1527
      %2105 = vmatprep.subr.bf16.mxu0 %v1526
      %2106 = vmatpush2.bf16.msra.mxu0 %v1525
      %2107 = vmatprep.subr.bf16.mxu0 %v1524
      %2108 = vmatpush2.bf16.msra.mxu0 %v1523
      %2109 = vmatprep.subr.bf16.mxu0 %v1522
      %2110 = vmatpush2.bf16.msra.mxu0 %v1521
      %2111 = vmatprep.subr.bf16.mxu0 %v1520
      %2112 = vmatpush2.bf16.msra.mxu0 %v1519
      %2113 = vmatprep.mubr.bf16.mxu0 %v524
      %2114 = vmatmul.mubr.bf16.gmra.mxu0 %v523
      %v2115 = vpop.f32.mrf.mxu0
      %v2116 = vadd.f32 %v2073, %v2115
      %v2117 = vpop.f32.mrf.mxu0
      %v2118 = vadd.f32 %v2075, %v2117
      %v2119 = vpop.f32.mrf.mxu0
      %v2120 = vadd.f32 %v2077, %v2119
      %v2121 = vpop.f32.mrf.mxu0
      %v2122 = vadd.f32 %v2079, %v2121
      %2123 = vdwg.mxu0
      %2124 = vmatprep.subr.bf16.mxu0 %v1550
      %2125 = vmatpush1.bf16.msra.mxu0 %v1549
      %2126 = vmatprep.subr.bf16.mxu0 %v1548
      %2127 = vmatpush1.bf16.msra.mxu0 %v1547
      %2128 = vmatprep.subr.bf16.mxu0 %v1546
      %2129 = vmatpush1.bf16.msra.mxu0 %v1545
      %2130 = vmatprep.subr.bf16.mxu0 %v1544
      %2131 = vmatpush1.bf16.msra.mxu0 %v1543
      %2132 = vmatprep.subr.bf16.mxu0 %v1542
      %2133 = vmatpush1.bf16.msra.mxu0 %v1541
      %2134 = vmatprep.subr.bf16.mxu0 %v1540
      %2135 = vmatpush1.bf16.msra.mxu0 %v1539
      %2136 = vmatprep.subr.bf16.mxu0 %v1538
      %2137 = vmatpush1.bf16.msra.mxu0 %v1537
      %2138 = vmatprep.subr.bf16.mxu0 %v1536
      %2139 = vmatpush1.bf16.msra.mxu0 %v1535
      %2140 = vmatprep.subr.bf16.mxu0 %v1566
      %2141 = vmatpush2.bf16.msra.mxu0 %v1565
      %2142 = vmatprep.subr.bf16.mxu0 %v1564
      %2143 = vmatpush2.bf16.msra.mxu0 %v1563
      %2144 = vmatprep.subr.bf16.mxu0 %v1562
      %2145 = vmatpush2.bf16.msra.mxu0 %v1561
      %2146 = vmatprep.subr.bf16.mxu0 %v1560
      %2147 = vmatpush2.bf16.msra.mxu0 %v1559
      %2148 = vmatprep.subr.bf16.mxu0 %v1558
      %2149 = vmatpush2.bf16.msra.mxu0 %v1557
      %2150 = vmatprep.subr.bf16.mxu0 %v1556
      %2151 = vmatpush2.bf16.msra.mxu0 %v1555
      %2152 = vmatprep.subr.bf16.mxu0 %v1554
      %2153 = vmatpush2.bf16.msra.mxu0 %v1553
      %2154 = vmatprep.subr.bf16.mxu0 %v1552
      %2155 = vmatpush2.bf16.msra.mxu0 %v1551
      %2156 = vmatprep.mubr.bf16.mxu0 %v526
      %2157 = vmatmul.mubr.bf16.gmra.mxu0 %v525
      %v2158 = vpop.f32.mrf.mxu0
      %v2159 = vadd.f32 %v2116, %v2158
      %v2160 = vpop.f32.mrf.mxu0
      %v2161 = vadd.f32 %v2118, %v2160
      %v2162 = vpop.f32.mrf.mxu0
      %v2163 = vadd.f32 %v2120, %v2162
      %v2164 = vpop.f32.mrf.mxu0
      %v2165 = vadd.f32 %v2122, %v2164
      %2166 = vdwg.mxu0
      %v2167 = vadd.f32 %v2159, %v2163
      %v2168 = vrot.slane %v2167, 4
      %v2169 = vadd.f32 %v2167, %v2168
      %v2170 = vrot.slane %v2169, 2
      %v2171 = vadd.f32 %v2169, %v2170
      %v2172 = vrot.slane %v2171, 1
      %v2173 = vadd.f32 %v2171, %v2172
      %v2174 = vadd.f32 %v2161, %v2165
      %v2175 = vrot.slane %v2174, 4
      %v2176 = vadd.f32 %v2174, %v2175
      %v2177 = vrot.slane %v2176, 2
      %v2178 = vadd.f32 %v2176, %v2177
      %v2179 = vrot.slane %v2178, 1
      %v2180 = vadd.f32 %v2178, %v2179
      %v2181 = vrcp.pop 16.0
      %v2182 = vmul.f32 %v2173, %v2181
      %v2183 = vmul.f32 %v2180, %v2181
      %v2184 = vsub.f32 %v2159, %v2182
      %v2185 = vsub.f32 %v2161, %v2183
      %v2186 = vsub.f32 %v2163, %v2182
      %v2187 = vsub.f32 %v2165, %v2183
      %v2188 = vmul.f32 %v2184, %v2184
      %v2189 = vmul.f32 %v2185, %v2185
      %v2190 = vmul.f32 %v2186, %v2186
      %v2191 = vmul.f32 %v2187, %v2187
      %v2192 = vadd.f32 %v2188, %v2190
      %v2193 = vrot.slane %v2192, 4
      %v2194 = vadd.f32 %v2192, %v2193
      %v2195 = vrot.slane %v2194, 2
      %v2196 = vadd.f32 %v2194, %v2195
      %v2197 = vrot.slane %v2196, 1
      %v2198 = vadd.f32 %v2196, %v2197
      %v2199 = vadd.f32 %v2189, %v2191
      %v2200 = vrot.slane %v2199, 4
      %v2201 = vadd.f32 %v2199, %v2200
      %v2202 = vrot.slane %v2201, 2
      %v2203 = vadd.f32 %v2201, %v2202
      %v2204 = vrot.slane %v2203, 1
      %v2205 = vadd.f32 %v2203, %v2204
      %v2206 = vmul.f32 %v2198, %v2181
      %v2207 = vmul.f32 %v2205, %v2181
      %v2208 = vadd.f32 %v2206, 1e-05
      %v2209 = vadd.f32 %v2207, 1e-05
      %v2210 = vrsqrt.pop %v2208
      %v2211 = vrsqrt.pop %v2209
      %v2212 = vmul.f32 %v2184, %v2210
      %v2213 = vmul.f32 %v2185, %v2211
      %v2214 = vmul.f32 %v2186, %v2210
      %v2215 = vmul.f32 %v2187, %v2211
      %v2216 = vmul.f32 %v2212, 0.2
      %v2217 = vmul.f32 %v2213, 0.2
      %v2218 = vmul.f32 %v2214, 0.2
      %v2219 = vmul.f32 %v2215, 0.2
      %v2220 = vmax.f32 %v2212, %v2216
      %v2221 = vmax.f32 %v2213, %v2217
      %v2222 = vmax.f32 %v2214, %v2218
      %v2223 = vmax.f32 %v2215, %v2219
      %2224 = vst [vmem:[%s177] sm:$0xff] %v2220
      %2225 = vst [vmem:[%s177 + $0x8] sm:$0xff] %v2221
      %2226 = vst [vmem:[%s177 + $0x10] sm:$0xff] %v2222
      %2227 = vst [vmem:[%s177 + $0x18] sm:$0xff] %v2223
      %s2228 = smul.u32 2, %s14
      %p2229 = scmp.lt.s32.totalorder %s2228, 3
      %s2230 = scalar_select %p2229, %s2228, 3
      %s2231 = smul.addr %s2230, 2
      %s2232 = smul.addr %s2231, 8
      %s2233 = scalar_lea.vmem %s3, %s2232
      // Predicated region
      $region33: #{discriminator2d_forward.7} parent=31 // pred_check
        %p2234 = pneg %p100
      $region34: #{discriminator2d_forward.7} parent=31 // pred_check_branch
        %2236 = sbr.rel (%p2234) target = $region36
      $region35: #{discriminator2d_forward.7} parent=31 // pred_region
        %s2237 = smul.u32 2, %s14
      $region36: #{discriminator2d_forward.7} parent=31 // pred_fallthru
        _
    $region32: #{discriminator2d_forward.7} parent=5 // pred_fallthru
      _
    %p2238 = scmp.le.s32.totalorder 2, %s9
    // Predicated region
    $region37: #{discriminator2d_forward.7} parent=5 // pred_check
      %p2239 = pneg %p2238
    $region38: #{discriminator2d_forward.7} parent=5 // pred_check_branch
      %2241 = sbr.rel (%p2239) target = $region40
    $region39: #{discriminator2d_forward.7} parent=5 // pred_region
      %s2242 = ssub.s32 %s9, 2
      // Predicated region
      $region41: #{discriminator2d_forward.7} parent=39 // pred_check
        %p2243 = pneg %p106
      $region42: #{discriminator2d_forward.7} parent=39 // pred_check_branch
        %2245 = sbr.rel (%p2243) target = $region44
      $region43: #{discriminator2d_forward.7} parent=39 // pred_region
        %s2246 = smul.u32 2, %s15
        %p2247 = scmp.lt.s32.totalorder %s2246, 3
        %s2248 = scalar_select %p2247, %s2246, 3
        %s2249 = smul.addr %s2248, 2
        %s2250 = smul.addr %s2249, 8
        %s2251 = scalar_lea.vmem %s3, %s2250
      $region44: #{discriminator2d_forward.7} parent=39 // pred_fallthru
        _
    $region40: #{discriminator2d_forward.7} parent=5 // pred_fallthru
      _
  $region6: #{discriminator2d_forward.7} parent=0 // loop_footer
    %s13 = sadd.s32 1, %s9
  $region7: #{discriminator2d_forward.7} parent=0 // loop_footer_branch
    %8 = sbr.rel target = $region3
  $region8: #{discriminator2d_forward.7} parent=0 // loop_exit
    _

// kernel: discriminator2d_forward.9
$region0: #{discriminator2d_forward.9}
  #allocation0 [shape = 'u32[]', space=smem, size = 0x4, offset = 0x4, fixed_abs, tag = 'smem constant byte address 0x4 - core index']
  #allocation1 [shape = 'u32[144,128]{1,0:T(1,128)}', space=vmem, size = 0x12000, scoped, tag = 'internal scratch']
  #allocation2 [shape = 'f32[1,1]{1,0:T(1,128)S(1)}', space=vmem, size = 0x200, scoped, tag = 'scoped memory for discriminator2d_forward.9']
  %s0 = inlined_call_operand.vmem [shape: f32[2,4,8192], index: 0, kind: input, shape index: {}]
  %s1 = inlined_call_operand.vmem [shape: f32[1,8192], index: 1, kind: input, shape index: {}]
  %s2 = inlined_call_operand.<no memory space> [shape: f32[1,1], index: 2, kind: input, shape index: {}]
  %s3 = inlined_call_operand.vmem [shape: f32[2,1], index: 3, kind: output, shape index: {}]
  %s4 = sld [smem:[#allocation0]]
  $region22: #{discriminator2d_forward.9} parent=0
    _
  %s6 = ssub.s32 1, %s4
  %s7 = scalar_select 0, %s6, %s4
  %v8 = vstv %s2
  %9 = vst [vmem:[#allocation2] sm:$0x1] %v8
  // Predicated region
  $region2: #{discriminator2d_forward.9} parent=0 // pred_check
    _
  $region3: #{discriminator2d_forward.9} parent=0 // pred_check_branch
    %11 = sbr.rel (0) target = $region5
  $region4: #{discriminator2d_forward.9} parent=0 // pred_region
    _
  $region5: #{discriminator2d_forward.9} parent=0 // pred_fallthru
    _
  // Predicated region
  $region6: #{discriminator2d_forward.9} parent=0 // pred_check
    _
  $region7: #{discriminator2d_forward.9} parent=0 // pred_check_branch
    %13 = sbr.rel (0) target = $region9
  $region8: #{discriminator2d_forward.9} parent=0 // pred_region
    _
  $region9: #{discriminator2d_forward.9} parent=0 // pred_fallthru
    _
  // Predicated region
  $region10: #{discriminator2d_forward.9} parent=0 // pred_check
    _
  $region11: #{discriminator2d_forward.9} parent=0 // pred_check_branch
    %15 = sbr.rel (0) target = $region13
  $region12: #{discriminator2d_forward.9} parent=0 // pred_region
    _
  $region13: #{discriminator2d_forward.9} parent=0 // pred_fallthru
    _
  %v16 = vld [vmem:[%s0] sm:$0xff]
  %v17 = vld [vmem:[%s0 + $0x8] sm:$0xff]
  %v18 = vld [vmem:[%s0 + $0x10] sm:$0xff]
  %v19 = vld [vmem:[%s0 + $0x18] sm:$0xff]
  %v20 = vld [vmem:[%s0 + $0x20] sm:$0xff]
  %v21 = vld [vmem:[%s0 + $0x28] sm:$0xff]
  %v22 = vld [vmem:[%s0 + $0x30] sm:$0xff]
  %v23 = vld [vmem:[%s0 + $0x38] sm:$0xff]
  %v24 = vld [vmem:[%s0 + $0x40] sm:$0xff]
  %v25 = vld [vmem:[%s0 + $0x48] sm:$0xff]
  %v26 = vld [vmem:[%s0 + $0x50] sm:$0xff]
  %v27 = vld [vmem:[%s0 + $0x58] sm:$0xff]
  %v28 = vld [vmem:[%s0 + $0x60] sm:$0xff]
  %v29 = vld [vmem:[%s0 + $0x68] sm:$0xff]
  %v30 = vld [vmem:[%s0 + $0x70] sm:$0xff]
  %v31 = vld [vmem:[%s0 + $0x78] sm:$0xff]
  %v32 = vld [vmem:[%s0 + $0x80] sm:$0xff]
  %v33 = vld [vmem:[%s0 + $0x88] sm:$0xff]
  %v34 = vld [vmem:[%s0 + $0x90] sm:$0xff]
  %v35 = vld [vmem:[%s0 + $0x98] sm:$0xff]
  %v36 = vld [vmem:[%s0 + $0xa0] sm:$0xff]
  %v37 = vld [vmem:[%s0 + $0xa8] sm:$0xff]
  %v38 = vld [vmem:[%s0 + $0xb0] sm:$0xff]
  %v39 = vld [vmem:[%s0 + $0xb8] sm:$0xff]
  %v40 = vld [vmem:[%s0 + $0xc0] sm:$0xff]
  %v41 = vld [vmem:[%s0 + $0xc8] sm:$0xff]
  %v42 = vld [vmem:[%s0 + $0xd0] sm:$0xff]
  %v43 = vld [vmem:[%s0 + $0xd8] sm:$0xff]
  %v44 = vld [vmem:[%s0 + $0xe0] sm:$0xff]
  %v45 = vld [vmem:[%s0 + $0xe8] sm:$0xff]
  %v46 = vld [vmem:[%s0 + $0xf0] sm:$0xff]
  %v47 = vld [vmem:[%s0 + $0xf8] sm:$0xff]
  %v48 = vld [vmem:[%s0 + $0x100] sm:$0xff]
  %v49 = vld [vmem:[%s0 + $0x108] sm:$0xff]
  %v50 = vld [vmem:[%s0 + $0x110] sm:$0xff]
  %v51 = vld [vmem:[%s0 + $0x118] sm:$0xff]
  %v52 = vld [vmem:[%s0 + $0x120] sm:$0xff]
  %v53 = vld [vmem:[%s0 + $0x128] sm:$0xff]
  %v54 = vld [vmem:[%s0 + $0x130] sm:$0xff]
  %v55 = vld [vmem:[%s0 + $0x138] sm:$0xff]
  %v56 = vld [vmem:[%s0 + $0x140] sm:$0xff]
  %v57 = vld [vmem:[%s0 + $0x148] sm:$0xff]
  %v58 = vld [vmem:[%s0 + $0x150] sm:$0xff]
  %v59 = vld [vmem:[%s0 + $0x158] sm:$0xff]
  %v60 = vld [vmem:[%s0 + $0x160] sm:$0xff]
  %v61 = vld [vmem:[%s0 + $0x168] sm:$0xff]
  %v62 = vld [vmem:[%s0 + $0x170] sm:$0xff]
  %v63 = vld [vmem:[%s0 + $0x178] sm:$0xff]
  %v64 = vld [vmem:[%s0 + $0x180] sm:$0xff]
  %v65 = vld [vmem:[%s0 + $0x188] sm:$0xff]
  %v66 = vld [vmem:[%s0 + $0x190] sm:$0xff]
  %v67 = vld [vmem:[%s0 + $0x198] sm:$0xff]
  %v68 = vld [vmem:[%s0 + $0x1a0] sm:$0xff]
  %v69 = vld [vmem:[%s0 + $0x1a8] sm:$0xff]
  %v70 = vld [vmem:[%s0 + $0x1b0] sm:$0xff]
  %v71 = vld [vmem:[%s0 + $0x1b8] sm:$0xff]
  %v72 = vld [vmem:[%s0 + $0x1c0] sm:$0xff]
  %v73 = vld [vmem:[%s0 + $0x1c8] sm:$0xff]
  %v74 = vld [vmem:[%s0 + $0x1d0] sm:$0xff]
  %v75 = vld [vmem:[%s0 + $0x1d8] sm:$0xff]
  %v76 = vld [vmem:[%s0 + $0x1e0] sm:$0xff]
  %v77 = vld [vmem:[%s0 + $0x1e8] sm:$0xff]
  %v78 = vld [vmem:[%s0 + $0x1f0] sm:$0xff]
  %v79 = vld [vmem:[%s0 + $0x1f8] sm:$0xff]
  %v80 = vld [vmem:[%s1] sm:$0xff]
  %v81 = vld [vmem:[%s1 + $0x8] sm:$0xff]
  %v82 = vld [vmem:[%s1 + $0x10] sm:$0xff]
  %v83 = vld [vmem:[%s1 + $0x18] sm:$0xff]
  %v84 = vld [vmem:[%s1 + $0x20] sm:$0xff]
  %v85 = vld [vmem:[%s1 + $0x28] sm:$0xff]
  %v86 = vld [vmem:[%s1 + $0x30] sm:$0xff]
  %v87 = vld [vmem:[%s1 + $0x38] sm:$0xff]
  %v152 = vcombine.high %v16, %v16
  %v153 = vcombine.high %v17, %v17
  %v154 = vcombine.high %v18, %v18
  %v155 = vcombine.high %v19, %v19
  %v156 = vcombine.high %v20, %v20
  %v157 = vcombine.high %v21, %v21
  %v158 = vcombine.high %v22, %v22
  %v159 = vcombine.high %v23, %v23
  %v160 = vcombine.high %v24, %v24
  %v161 = vcombine.high %v25, %v25
  %v162 = vcombine.high %v26, %v26
  %v163 = vcombine.high %v27, %v27
  %v164 = vcombine.high %v28, %v28
  %v165 = vcombine.high %v29, %v29
  %v166 = vcombine.high %v30, %v30
  %v167 = vcombine.high %v31, %v31
  %v168 = vcombine.high %v32, %v32
  %v169 = vcombine.high %v33, %v33
  %v170 = vcombine.high %v34, %v34
  %v171 = vcombine.high %v35, %v35
  %v172 = vcombine.high %v36, %v36
  %v173 = vcombine.high %v37, %v37
  %v174 = vcombine.high %v38, %v38
  %v175 = vcombine.high %v39, %v39
  %v176 = vcombine.high %v40, %v40
  %v177 = vcombine.high %v41, %v41
  %v178 = vcombine.high %v42, %v42
  %v179 = vcombine.high %v43, %v43
  %v180 = vcombine.high %v44, %v44
  %v181 = vcombine.high %v45, %v45
  %v182 = vcombine.high %v46, %v46
  %v183 = vcombine.high %v47, %v47
  %v184 = vcombine.high %v48, %v48
  %v185 = vcombine.high %v49, %v49
  %v186 = vcombine.high %v50, %v50
  %v187 = vcombine.high %v51, %v51
  %v188 = vcombine.high %v52, %v52
  %v189 = vcombine.high %v53, %v53
  %v190 = vcombine.high %v54, %v54
  %v191 = vcombine.high %v55, %v55
  %v192 = vcombine.high %v56, %v56
  %v193 = vcombine.high %v57, %v57
  %v194 = vcombine.high %v58, %v58
  %v195 = vcombine.high %v59, %v59
  %v196 = vcombine.high %v60, %v60
  %v197 = vcombine.high %v61, %v61
  %v198 = vcombine.high %v62, %v62
  %v199 = vcombine.high %v63, %v63
  %v200 = vcombine.high %v64, %v64
  %v201 = vcombine.high %v65, %v65
  %v202 = vcombine.high %v66, %v66
  %v203 = vcombine.high %v67, %v67
  %v204 = vcombine.high %v68, %v68
  %v205 = vcombine.high %v69, %v69
  %v206 = vcombine.high %v70, %v70
  %v207 = vcombine.high %v71, %v71
  %v208 = vcombine.high %v72, %v72
  %v209 = vcombine.high %v73, %v73
  %v210 = vcombine.high %v74, %v74
  %v211 = vcombine.high %v75, %v75
  %v212 = vcombine.high %v76, %v76
  %v213 = vcombine.high %v77, %v77
  %v214 = vcombine.high %v78, %v78
  %v215 = vcombine.high %v79, %v79
  %vm280 = vcmask 1043456
  %v281 = vsel %vm280, %v16, 0.0
  %v282 = vrot.slane %v281, 4
  %v283 = vadd.f32 %v281, %v282
  %v284 = vrot.slane %v283, 2
  %v285 = vadd.f32 %v283, %v284
  %v286 = vrot.slane %v285, 1
  %v287 = vadd.f32 %v285, %v286
  %v288 = vsel %vm280, %v152, 0.0
  %v289 = vrot.slane %v288, 4
  %v290 = vadd.f32 %v288, %v289
  %v291 = vrot.slane %v290, 2
  %v292 = vadd.f32 %v290, %v291
  %v293 = vrot.slane %v292, 1
  %v294 = vadd.f32 %v292, %v293
  %v295 = vsel %vm280, %v17, 0.0
  %v296 = vrot.slane %v295, 4
  %v297 = vadd.f32 %v295, %v296
  %v298 = vrot.slane %v297, 2
  %v299 = vadd.f32 %v297, %v298
  %v300 = vrot.slane %v299, 1
  %v301 = vadd.f32 %v299, %v300
  %v302 = vsel %vm280, %v153, 0.0
  %v303 = vrot.slane %v302, 4
  %v304 = vadd.f32 %v302, %v303
  %v305 = vrot.slane %v304, 2
  %v306 = vadd.f32 %v304, %v305
  %v307 = vrot.slane %v306, 1
  %v308 = vadd.f32 %v306, %v307
  %v309 = vsel %vm280, %v18, 0.0
  %v310 = vrot.slane %v309, 4
  %v311 = vadd.f32 %v309, %v310
  %v312 = vrot.slane %v311, 2
  %v313 = vadd.f32 %v311, %v312
  %v314 = vrot.slane %v313, 1
  %v315 = vadd.f32 %v313, %v314
  %v316 = vsel %vm280, %v154, 0.0
  %v317 = vrot.slane %v316, 4
  %v318 = vadd.f32 %v316, %v317
  %v319 = vrot.slane %v318, 2
  %v320 = vadd.f32 %v318, %v319
  %v321 = vrot.slane %v320, 1
  %v322 = vadd.f32 %v320, %v321
  %v323 = vsel %vm280, %v19, 0.0
  %v324 = vrot.slane %v323, 4
  %v325 = vadd.f32 %v323, %v324
  %v326 = vrot.slane %v325, 2
  %v327 = vadd.f32 %v325, %v326
  %v328 = vrot.slane %v327, 1
  %v329 = vadd.f32 %v327, %v328
  %v330 = vsel %vm280, %v155, 0.0
  %v331 = vrot.slane %v330, 4
  %v332 = vadd.f32 %v330, %v331
  %v333 = vrot.slane %v332, 2
  %v334 = vadd.f32 %v332, %v333
  %v335 = vrot.slane %v334, 1
  %v336 = vadd.f32 %v334, %v335
  %v337 = vsel %vm280, %v20, 0.0
  %v338 = vrot.slane %v337, 4
  %v339 = vadd.f32 %v337, %v338
  %v340 = vrot.slane %v339, 2
  %v341 = vadd.f32 %v339, %v340
  %v342 = vrot.slane %v341, 1
  %v343 = vadd.f32 %v341, %v342
  %v344 = vsel %vm280, %v156, 0.0
  %v345 = vrot.slane %v344, 4
  %v346 = vadd.f32 %v344, %v345
  %v347 = vrot.slane %v346, 2
  %v348 = vadd.f32 %v346, %v347
  %v349 = vrot.slane %v348, 1
  %v350 = vadd.f32 %v348, %v349
  %v351 = vsel %vm280, %v21, 0.0
  %v352 = vrot.slane %v351, 4
  %v353 = vadd.f32 %v351, %v352
  %v354 = vrot.slane %v353, 2
  %v355 = vadd.f32 %v353, %v354
  %v356 = vrot.slane %v355, 1
  %v357 = vadd.f32 %v355, %v356
  %v358 = vsel %vm280, %v157, 0.0
  %v359 = vrot.slane %v358, 4
  %v360 = vadd.f32 %v358, %v359
  %v361 = vrot.slane %v360, 2
  %v362 = vadd.f32 %v360, %v361
  %v363 = vrot.slane %v362, 1
  %v364 = vadd.f32 %v362, %v363
  %v365 = vsel %vm280, %v22, 0.0
  %v366 = vrot.slane %v365, 4
  %v367 = vadd.f32 %v365, %v366
  %v368 = vrot.slane %v367, 2
  %v369 = vadd.f32 %v367, %v368
  %v370 = vrot.slane %v369, 1
  %v371 = vadd.f32 %v369, %v370
  %v372 = vsel %vm280, %v158, 0.0
  %v373 = vrot.slane %v372, 4
  %v374 = vadd.f32 %v372, %v373
  %v375 = vrot.slane %v374, 2
  %v376 = vadd.f32 %v374, %v375
  %v377 = vrot.slane %v376, 1
  %v378 = vadd.f32 %v376, %v377
  %v379 = vsel %vm280, %v23, 0.0
  %v380 = vrot.slane %v379, 4
  %v381 = vadd.f32 %v379, %v380
  %v382 = vrot.slane %v381, 2
  %v383 = vadd.f32 %v381, %v382
  %v384 = vrot.slane %v383, 1
  %v385 = vadd.f32 %v383, %v384
  %v386 = vsel %vm280, %v159, 0.0
  %v387 = vrot.slane %v386, 4
  %v388 = vadd.f32 %v386, %v387
  %v389 = vrot.slane %v388, 2
  %v390 = vadd.f32 %v388, %v389
  %v391 = vrot.slane %v390, 1
  %v392 = vadd.f32 %v390, %v391
  %v393 = vsel %vm280, %v24, 0.0
  %v394 = vrot.slane %v393, 4
  %v395 = vadd.f32 %v393, %v394
  %v396 = vrot.slane %v395, 2
  %v397 = vadd.f32 %v395, %v396
  %v398 = vrot.slane %v397, 1
  %v399 = vadd.f32 %v397, %v398
  %v400 = vsel %vm280, %v160, 0.0
  %v401 = vrot.slane %v400, 4
  %v402 = vadd.f32 %v400, %v401
  %v403 = vrot.slane %v402, 2
  %v404 = vadd.f32 %v402, %v403
  %v405 = vrot.slane %v404, 1
  %v406 = vadd.f32 %v404, %v405
  %v407 = vsel %vm280, %v25, 0.0
  %v408 = vrot.slane %v407, 4
  %v409 = vadd.f32 %v407, %v408
  %v410 = vrot.slane %v409, 2
  %v411 = vadd.f32 %v409, %v410
  %v412 = vrot.slane %v411, 1
  %v413 = vadd.f32 %v411, %v412
  %v414 = vsel %vm280, %v161, 0.0
  %v415 = vrot.slane %v414, 4
  %v416 = vadd.f32 %v414, %v415
  %v417 = vrot.slane %v416, 2
  %v418 = vadd.f32 %v416, %v417
  %v419 = vrot.slane %v418, 1
  %v420 = vadd.f32 %v418, %v419
  %v421 = vsel %vm280, %v26, 0.0
  %v422 = vrot.slane %v421, 4
  %v423 = vadd.f32 %v421, %v422
  %v424 = vrot.slane %v423, 2
  %v425 = vadd.f32 %v423, %v424
  %v426 = vrot.slane %v425, 1
  %v427 = vadd.f32 %v425, %v426
  %v428 = vsel %vm280, %v162, 0.0
  %v429 = vrot.slane %v428, 4
  %v430 = vadd.f32 %v428, %v429
  %v431 = vrot.slane %v430, 2
  %v432 = vadd.f32 %v430, %v431
  %v433 = vrot.slane %v432, 1
  %v434 = vadd.f32 %v432, %v433
  %v435 = vsel %vm280, %v27, 0.0
  %v436 = vrot.slane %v435, 4
  %v437 = vadd.f32 %v435, %v436
  %v438 = vrot.slane %v437, 2
  %v439 = vadd.f32 %v437, %v438
  %v440 = vrot.slane %v439, 1
  %v441 = vadd.f32 %v439, %v440
  %v442 = vsel %vm280, %v163, 0.0
  %v443 = vrot.slane %v442, 4
  %v444 = vadd.f32 %v442, %v443
  %v445 = vrot.slane %v444, 2
  %v446 = vadd.f32 %v444, %v445
  %v447 = vrot.slane %v446, 1
  %v448 = vadd.f32 %v446, %v447
  %v449 = vsel %vm280, %v28, 0.0
  %v450 = vrot.slane %v449, 4
  %v451 = vadd.f32 %v449, %v450
  %v452 = vrot.slane %v451, 2
  %v453 = vadd.f32 %v451, %v452
  %v454 = vrot.slane %v453, 1
  %v455 = vadd.f32 %v453, %v454
  %v456 = vsel %vm280, %v164, 0.0
  %v457 = vrot.slane %v456, 4
  %v458 = vadd.f32 %v456, %v457
  %v459 = vrot.slane %v458, 2
  %v460 = vadd.f32 %v458, %v459
  %v461 = vrot.slane %v460, 1
  %v462 = vadd.f32 %v460, %v461
  %v463 = vsel %vm280, %v29, 0.0
  %v464 = vrot.slane %v463, 4
  %v465 = vadd.f32 %v463, %v464
  %v466 = vrot.slane %v465, 2
  %v467 = vadd.f32 %v465, %v466
  %v468 = vrot.slane %v467, 1
  %v469 = vadd.f32 %v467, %v468
  %v470 = vsel %vm280, %v165, 0.0
  %v471 = vrot.slane %v470, 4
  %v472 = vadd.f32 %v470, %v471
  %v473 = vrot.slane %v472, 2
  %v474 = vadd.f32 %v472, %v473
  %v475 = vrot.slane %v474, 1
  %v476 = vadd.f32 %v474, %v475
  %v477 = vsel %vm280, %v30, 0.0
  %v478 = vrot.slane %v477, 4
  %v479 = vadd.f32 %v477, %v478
  %v480 = vrot.slane %v479, 2
  %v481 = vadd.f32 %v479, %v480
  %v482 = vrot.slane %v481, 1
  %v483 = vadd.f32 %v481, %v482
  %v484 = vsel %vm280, %v166, 0.0
  %v485 = vrot.slane %v484, 4
  %v486 = vadd.f32 %v484, %v485
  %v487 = vrot.slane %v486, 2
  %v488 = vadd.f32 %v486, %v487
  %v489 = vrot.slane %v488, 1
  %v490 = vadd.f32 %v488, %v489
  %v491 = vsel %vm280, %v31, 0.0
  %v492 = vrot.slane %v491, 4
  %v493 = vadd.f32 %v491, %v492
  %v494 = vrot.slane %v493, 2
  %v495 = vadd.f32 %v493, %v494
  %v496 = vrot.slane %v495, 1
  %v497 = vadd.f32 %v495, %v496
  %v498 = vsel %vm280, %v167, 0.0
  %v499 = vrot.slane %v498, 4
  %v500 = vadd.f32 %v498, %v499
  %v501 = vrot.slane %v500, 2
  %v502 = vadd.f32 %v500, %v501
  %v503 = vrot.slane %v502, 1
  %v504 = vadd.f32 %v502, %v503
  %v505 = vsel %vm280, %v32, 0.0
  %v506 = vrot.slane %v505, 4
  %v507 = vadd.f32 %v505, %v506
  %v508 = vrot.slane %v507, 2
  %v509 = vadd.f32 %v507, %v508
  %v510 = vrot.slane %v509, 1
  %v511 = vadd.f32 %v509, %v510
  %v512 = vsel %vm280, %v168, 0.0
  %v513 = vrot.slane %v512, 4
  %v514 = vadd.f32 %v512, %v513
  %v515 = vrot.slane %v514, 2
  %v516 = vadd.f32 %v514, %v515
  %v517 = vrot.slane %v516, 1
  %v518 = vadd.f32 %v516, %v517
  %v519 = vsel %vm280, %v33, 0.0
  %v520 = vrot.slane %v519, 4
  %v521 = vadd.f32 %v519, %v520
  %v522 = vrot.slane %v521, 2
  %v523 = vadd.f32 %v521, %v522
  %v524 = vrot.slane %v523, 1
  %v525 = vadd.f32 %v523, %v524
  %v526 = vsel %vm280, %v169, 0.0
  %v527 = vrot.slane %v526, 4
  %v528 = vadd.f32 %v526, %v527
  %v529 = vrot.slane %v528, 2
  %v530 = vadd.f32 %v528, %v529
  %v531 = vrot.slane %v530, 1
  %v532 = vadd.f32 %v530, %v531
  %v533 = vsel %vm280, %v34, 0.0
  %v534 = vrot.slane %v533, 4
  %v535 = vadd.f32 %v533, %v534
  %v536 = vrot.slane %v535, 2
  %v537 = vadd.f32 %v535, %v536
  %v538 = vrot.slane %v537, 1
  %v539 = vadd.f32 %v537, %v538
  %v540 = vsel %vm280, %v170, 0.0
  %v541 = vrot.slane %v540, 4
  %v542 = vadd.f32 %v540, %v541
  %v543 = vrot.slane %v542, 2
  %v544 = vadd.f32 %v542, %v543
  %v545 = vrot.slane %v544, 1
  %v546 = vadd.f32 %v544, %v545
  %v547 = vsel %vm280, %v35, 0.0
  %v548 = vrot.slane %v547, 4
  %v549 = vadd.f32 %v547, %v548
  %v550 = vrot.slane %v549, 2
  %v551 = vadd.f32 %v549, %v550
  %v552 = vrot.slane %v551, 1
  %v553 = vadd.f32 %v551, %v552
  %v554 = vsel %vm280, %v171, 0.0
  %v555 = vrot.slane %v554, 4
  %v556 = vadd.f32 %v554, %v555
  %v557 = vrot.slane %v556, 2
  %v558 = vadd.f32 %v556, %v557
  %v559 = vrot.slane %v558, 1
  %v560 = vadd.f32 %v558, %v559
  %v561 = vsel %vm280, %v36, 0.0
  %v562 = vrot.slane %v561, 4
  %v563 = vadd.f32 %v561, %v562
  %v564 = vrot.slane %v563, 2
  %v565 = vadd.f32 %v563, %v564
  %v566 = vrot.slane %v565, 1
  %v567 = vadd.f32 %v565, %v566
  %v568 = vsel %vm280, %v172, 0.0
  %v569 = vrot.slane %v568, 4
  %v570 = vadd.f32 %v568, %v569
  %v571 = vrot.slane %v570, 2
  %v572 = vadd.f32 %v570, %v571
  %v573 = vrot.slane %v572, 1
  %v574 = vadd.f32 %v572, %v573
  %v575 = vsel %vm280, %v37, 0.0
  %v576 = vrot.slane %v575, 4
  %v577 = vadd.f32 %v575, %v576
  %v578 = vrot.slane %v577, 2
  %v579 = vadd.f32 %v577, %v578
  %v580 = vrot.slane %v579, 1
  %v581 = vadd.f32 %v579, %v580
  %v582 = vsel %vm280, %v173, 0.0
  %v583 = vrot.slane %v582, 4
  %v584 = vadd.f32 %v582, %v583
  %v585 = vrot.slane %v584, 2
  %v586 = vadd.f32 %v584, %v585
  %v587 = vrot.slane %v586, 1
  %v588 = vadd.f32 %v586, %v587
  %v589 = vsel %vm280, %v38, 0.0
  %v590 = vrot.slane %v589, 4
  %v591 = vadd.f32 %v589, %v590
  %v592 = vrot.slane %v591, 2
  %v593 = vadd.f32 %v591, %v592
  %v594 = vrot.slane %v593, 1
  %v595 = vadd.f32 %v593, %v594
  %v596 = vsel %vm280, %v174, 0.0
  %v597 = vrot.slane %v596, 4
  %v598 = vadd.f32 %v596, %v597
  %v599 = vrot.slane %v598, 2
  %v600 = vadd.f32 %v598, %v599
  %v601 = vrot.slane %v600, 1
  %v602 = vadd.f32 %v600, %v601
  %v603 = vsel %vm280, %v39, 0.0
  %v604 = vrot.slane %v603, 4
  %v605 = vadd.f32 %v603, %v604
  %v606 = vrot.slane %v605, 2
  %v607 = vadd.f32 %v605, %v606
  %v608 = vrot.slane %v607, 1
  %v609 = vadd.f32 %v607, %v608
  %v610 = vsel %vm280, %v175, 0.0
  %v611 = vrot.slane %v610, 4
  %v612 = vadd.f32 %v610, %v611
  %v613 = vrot.slane %v612, 2
  %v614 = vadd.f32 %v612, %v613
  %v615 = vrot.slane %v614, 1
  %v616 = vadd.f32 %v614, %v615
  %v617 = vsel %vm280, %v40, 0.0
  %v618 = vrot.slane %v617, 4
  %v619 = vadd.f32 %v617, %v618
  %v620 = vrot.slane %v619, 2
  %v621 = vadd.f32 %v619, %v620
  %v622 = vrot.slane %v621, 1
  %v623 = vadd.f32 %v621, %v622
  %v624 = vsel %vm280, %v176, 0.0
  %v625 = vrot.slane %v624, 4
  %v626 = vadd.f32 %v624, %v625
  %v627 = vrot.slane %v626, 2
  %v628 = vadd.f32 %v626, %v627
  %v629 = vrot.slane %v628, 1
  %v630 = vadd.f32 %v628, %v629
  %v631 = vsel %vm280, %v41, 0.0
  %v632 = vrot.slane %v631, 4
  %v633 = vadd.f32 %v631, %v632
  %v634 = vrot.slane %v633, 2
  %v635 = vadd.f32 %v633, %v634
  %v636 = vrot.slane %v635, 1
  %v637 = vadd.f32 %v635, %v636
  %v638 = vsel %vm280, %v177, 0.0
  %v639 = vrot.slane %v638, 4
  %v640 = vadd.f32 %v638, %v639
  %v641 = vrot.slane %v640, 2
  %v642 = vadd.f32 %v640, %v641
  %v643 = vrot.slane %v642, 1
  %v644 = vadd.f32 %v642, %v643
  %v645 = vsel %vm280, %v42, 0.0
  %v646 = vrot.slane %v645, 4
  %v647 = vadd.f32 %v645, %v646
  %v648 = vrot.slane %v647, 2
  %v649 = vadd.f32 %v647, %v648
  %v650 = vrot.slane %v649, 1
  %v651 = vadd.f32 %v649, %v650
  %v652 = vsel %vm280, %v178, 0.0
  %v653 = vrot.slane %v652, 4
  %v654 = vadd.f32 %v652, %v653
  %v655 = vrot.slane %v654, 2
  %v656 = vadd.f32 %v654, %v655
  %v657 = vrot.slane %v656, 1
  %v658 = vadd.f32 %v656, %v657
  %v659 = vsel %vm280, %v43, 0.0
  %v660 = vrot.slane %v659, 4
  %v661 = vadd.f32 %v659, %v660
  %v662 = vrot.slane %v661, 2
  %v663 = vadd.f32 %v661, %v662
  %v664 = vrot.slane %v663, 1
  %v665 = vadd.f32 %v663, %v664
  %v666 = vsel %vm280, %v179, 0.0
  %v667 = vrot.slane %v666, 4
  %v668 = vadd.f32 %v666, %v667
  %v669 = vrot.slane %v668, 2
  %v670 = vadd.f32 %v668, %v669
  %v671 = vrot.slane %v670, 1
  %v672 = vadd.f32 %v670, %v671
  %v673 = vsel %vm280, %v44, 0.0
  %v674 = vrot.slane %v673, 4
  %v675 = vadd.f32 %v673, %v674
  %v676 = vrot.slane %v675, 2
  %v677 = vadd.f32 %v675, %v676
  %v678 = vrot.slane %v677, 1
  %v679 = vadd.f32 %v677, %v678
  %v680 = vsel %vm280, %v180, 0.0
  %v681 = vrot.slane %v680, 4
  %v682 = vadd.f32 %v680, %v681
  %v683 = vrot.slane %v682, 2
  %v684 = vadd.f32 %v682, %v683
  %v685 = vrot.slane %v684, 1
  %v686 = vadd.f32 %v684, %v685
  %v687 = vsel %vm280, %v45, 0.0
  %v688 = vrot.slane %v687, 4
  %v689 = vadd.f32 %v687, %v688
  %v690 = vrot.slane %v689, 2
  %v691 = vadd.f32 %v689, %v690
  %v692 = vrot.slane %v691, 1
  %v693 = vadd.f32 %v691, %v692
  %v694 = vsel %vm280, %v181, 0.0
  %v695 = vrot.slane %v694, 4
  %v696 = vadd.f32 %v694, %v695
  %v697 = vrot.slane %v696, 2
  %v698 = vadd.f32 %v696, %v697
  %v699 = vrot.slane %v698, 1
  %v700 = vadd.f32 %v698, %v699
  %v701 = vsel %vm280, %v46, 0.0
  %v702 = vrot.slane %v701, 4
  %v703 = vadd.f32 %v701, %v702
  %v704 = vrot.slane %v703, 2
  %v705 = vadd.f32 %v703, %v704
  %v706 = vrot.slane %v705, 1
  %v707 = vadd.f32 %v705, %v706
  %v708 = vsel %vm280, %v182, 0.0
  %v709 = vrot.slane %v708, 4
  %v710 = vadd.f32 %v708, %v709
  %v711 = vrot.slane %v710, 2
  %v712 = vadd.f32 %v710, %v711
  %v713 = vrot.slane %v712, 1
  %v714 = vadd.f32 %v712, %v713
  %v715 = vsel %vm280, %v47, 0.0
  %v716 = vrot.slane %v715, 4
  %v717 = vadd.f32 %v715, %v716
  %v718 = vrot.slane %v717, 2
  %v719 = vadd.f32 %v717, %v718
  %v720 = vrot.slane %v719, 1
  %v721 = vadd.f32 %v719, %v720
  %v722 = vsel %vm280, %v183, 0.0
  %v723 = vrot.slane %v722, 4
  %v724 = vadd.f32 %v722, %v723
  %v725 = vrot.slane %v724, 2
  %v726 = vadd.f32 %v724, %v725
  %v727 = vrot.slane %v726, 1
  %v728 = vadd.f32 %v726, %v727
  %v729 = vsel %vm280, %v48, 0.0
  %v730 = vrot.slane %v729, 4
  %v731 = vadd.f32 %v729, %v730
  %v732 = vrot.slane %v731, 2
  %v733 = vadd.f32 %v731, %v732
  %v734 = vrot.slane %v733, 1
  %v735 = vadd.f32 %v733, %v734
  %v736 = vsel %vm280, %v184, 0.0
  %v737 = vrot.slane %v736, 4
  %v738 = vadd.f32 %v736, %v737
  %v739 = vrot.slane %v738, 2
  %v740 = vadd.f32 %v738, %v739
  %v741 = vrot.slane %v740, 1
  %v742 = vadd.f32 %v740, %v741
  %v743 = vsel %vm280, %v49, 0.0
  %v744 = vrot.slane %v743, 4
  %v745 = vadd.f32 %v743, %v744
  %v746 = vrot.slane %v745, 2
  %v747 = vadd.f32 %v745, %v746
  %v748 = vrot.slane %v747, 1
  %v749 = vadd.f32 %v747, %v748
  %v750 = vsel %vm280, %v185, 0.0
  %v751 = vrot.slane %v750, 4
  %v752 = vadd.f32 %v750, %v751
  %v753 = vrot.slane %v752, 2
  %v754 = vadd.f32 %v752, %v753
  %v755 = vrot.slane %v754, 1
  %v756 = vadd.f32 %v754, %v755
  %v757 = vsel %vm280, %v50, 0.0
  %v758 = vrot.slane %v757, 4
  %v759 = vadd.f32 %v757, %v758
  %v760 = vrot.slane %v759, 2
  %v761 = vadd.f32 %v759, %v760
  %v762 = vrot.slane %v761, 1
  %v763 = vadd.f32 %v761, %v762
  %v764 = vsel %vm280, %v186, 0.0
  %v765 = vrot.slane %v764, 4
  %v766 = vadd.f32 %v764, %v765
  %v767 = vrot.slane %v766, 2
  %v768 = vadd.f32 %v766, %v767
  %v769 = vrot.slane %v768, 1
  %v770 = vadd.f32 %v768, %v769
  %v771 = vsel %vm280, %v51, 0.0
  %v772 = vrot.slane %v771, 4
  %v773 = vadd.f32 %v771, %v772
  %v774 = vrot.slane %v773, 2
  %v775 = vadd.f32 %v773, %v774
  %v776 = vrot.slane %v775, 1
  %v777 = vadd.f32 %v775, %v776
  %v778 = vsel %vm280, %v187, 0.0
  %v779 = vrot.slane %v778, 4
  %v780 = vadd.f32 %v778, %v779
  %v781 = vrot.slane %v780, 2
  %v782 = vadd.f32 %v780, %v781
  %v783 = vrot.slane %v782, 1
  %v784 = vadd.f32 %v782, %v783
  %v785 = vsel %vm280, %v52, 0.0
  %v786 = vrot.slane %v785, 4
  %v787 = vadd.f32 %v785, %v786
  %v788 = vrot.slane %v787, 2
  %v789 = vadd.f32 %v787, %v788
  %v790 = vrot.slane %v789, 1
  %v791 = vadd.f32 %v789, %v790
  %v792 = vsel %vm280, %v188, 0.0
  %v793 = vrot.slane %v792, 4
  %v794 = vadd.f32 %v792, %v793
  %v795 = vrot.slane %v794, 2
  %v796 = vadd.f32 %v794, %v795
  %v797 = vrot.slane %v796, 1
  %v798 = vadd.f32 %v796, %v797
  %v799 = vsel %vm280, %v53, 0.0
  %v800 = vrot.slane %v799, 4
  %v801 = vadd.f32 %v799, %v800
  %v802 = vrot.slane %v801, 2
  %v803 = vadd.f32 %v801, %v802
  %v804 = vrot.slane %v803, 1
  %v805 = vadd.f32 %v803, %v804
  %v806 = vsel %vm280, %v189, 0.0
  %v807 = vrot.slane %v806, 4
  %v808 = vadd.f32 %v806, %v807
  %v809 = vrot.slane %v808, 2
  %v810 = vadd.f32 %v808, %v809
  %v811 = vrot.slane %v810, 1
  %v812 = vadd.f32 %v810, %v811
  %v813 = vsel %vm280, %v54, 0.0
  %v814 = vrot.slane %v813, 4
  %v815 = vadd.f32 %v813, %v814
  %v816 = vrot.slane %v815, 2
  %v817 = vadd.f32 %v815, %v816
  %v818 = vrot.slane %v817, 1
  %v819 = vadd.f32 %v817, %v818
  %v820 = vsel %vm280, %v190, 0.0
  %v821 = vrot.slane %v820, 4
  %v822 = vadd.f32 %v820, %v821
  %v823 = vrot.slane %v822, 2
  %v824 = vadd.f32 %v822, %v823
  %v825 = vrot.slane %v824, 1
  %v826 = vadd.f32 %v824, %v825
  %v827 = vsel %vm280, %v55, 0.0
  %v828 = vrot.slane %v827, 4
  %v829 = vadd.f32 %v827, %v828
  %v830 = vrot.slane %v829, 2
  %v831 = vadd.f32 %v829, %v830
  %v832 = vrot.slane %v831, 1
  %v833 = vadd.f32 %v831, %v832
  %v834 = vsel %vm280, %v191, 0.0
  %v835 = vrot.slane %v834, 4
  %v836 = vadd.f32 %v834, %v835
  %v837 = vrot.slane %v836, 2
  %v838 = vadd.f32 %v836, %v837
  %v839 = vrot.slane %v838, 1
  %v840 = vadd.f32 %v838, %v839
  %v841 = vsel %vm280, %v56, 0.0
  %v842 = vrot.slane %v841, 4
  %v843 = vadd.f32 %v841, %v842
  %v844 = vrot.slane %v843, 2
  %v845 = vadd.f32 %v843, %v844
  %v846 = vrot.slane %v845, 1
  %v847 = vadd.f32 %v845, %v846
  %v848 = vsel %vm280, %v192, 0.0
  %v849 = vrot.slane %v848, 4
  %v850 = vadd.f32 %v848, %v849
  %v851 = vrot.slane %v850, 2
  %v852 = vadd.f32 %v850, %v851
  %v853 = vrot.slane %v852, 1
  %v854 = vadd.f32 %v852, %v853
  %v855 = vsel %vm280, %v57, 0.0
  %v856 = vrot.slane %v855, 4
  %v857 = vadd.f32 %v855, %v856
  %v858 = vrot.slane %v857, 2
  %v859 = vadd.f32 %v857, %v858
  %v860 = vrot.slane %v859, 1
  %v861 = vadd.f32 %v859, %v860
  %v862 = vsel %vm280, %v193, 0.0
  %v863 = vrot.slane %v862, 4
  %v864 = vadd.f32 %v862, %v863
  %v865 = vrot.slane %v864, 2
  %v866 = vadd.f32 %v864, %v865
  %v867 = vrot.slane %v866, 1
  %v868 = vadd.f32 %v866, %v867
  %v869 = vsel %vm280, %v58, 0.0
  %v870 = vrot.slane %v869, 4
  %v871 = vadd.f32 %v869, %v870
  %v872 = vrot.slane %v871, 2
  %v873 = vadd.f32 %v871, %v872
  %v874 = vrot.slane %v873, 1
  %v875 = vadd.f32 %v873, %v874
  %v876 = vsel %vm280, %v194, 0.0
  %v877 = vrot.slane %v876, 4
  %v878 = vadd.f32 %v876, %v877
  %v879 = vrot.slane %v878, 2
  %v880 = vadd.f32 %v878, %v879
  %v881 = vrot.slane %v880, 1
  %v882 = vadd.f32 %v880, %v881
  %v883 = vsel %vm280, %v59, 0.0
  %v884 = vrot.slane %v883, 4
  %v885 = vadd.f32 %v883, %v884
  %v886 = vrot.slane %v885, 2
  %v887 = vadd.f32 %v885, %v886
  %v888 = vrot.slane %v887, 1
  %v889 = vadd.f32 %v887, %v888
  %v890 = vsel %vm280, %v195, 0.0
  %v891 = vrot.slane %v890, 4
  %v892 = vadd.f32 %v890, %v891
  %v893 = vrot.slane %v892, 2
  %v894 = vadd.f32 %v892, %v893
  %v895 = vrot.slane %v894, 1
  %v896 = vadd.f32 %v894, %v895
  %v897 = vsel %vm280, %v60, 0.0
  %v898 = vrot.slane %v897, 4
  %v899 = vadd.f32 %v897, %v898
  %v900 = vrot.slane %v899, 2
  %v901 = vadd.f32 %v899, %v900
  %v902 = vrot.slane %v901, 1
  %v903 = vadd.f32 %v901, %v902
  %v904 = vsel %vm280, %v196, 0.0
  %v905 = vrot.slane %v904, 4
  %v906 = vadd.f32 %v904, %v905
  %v907 = vrot.slane %v906, 2
  %v908 = vadd.f32 %v906, %v907
  %v909 = vrot.slane %v908, 1
  %v910 = vadd.f32 %v908, %v909
  %v911 = vsel %vm280, %v61, 0.0
  %v912 = vrot.slane %v911, 4
  %v913 = vadd.f32 %v911, %v912
  %v914 = vrot.slane %v913, 2
  %v915 = vadd.f32 %v913, %v914
  %v916 = vrot.slane %v915, 1
  %v917 = vadd.f32 %v915, %v916
  %v918 = vsel %vm280, %v197, 0.0
  %v919 = vrot.slane %v918, 4
  %v920 = vadd.f32 %v918, %v919
  %v921 = vrot.slane %v920, 2
  %v922 = vadd.f32 %v920, %v921
  %v923 = vrot.slane %v922, 1
  %v924 = vadd.f32 %v922, %v923
  %v925 = vsel %vm280, %v62, 0.0
  %v926 = vrot.slane %v925, 4
  %v927 = vadd.f32 %v925, %v926
  %v928 = vrot.slane %v927, 2
  %v929 = vadd.f32 %v927, %v928
  %v930 = vrot.slane %v929, 1
  %v931 = vadd.f32 %v929, %v930
  %v932 = vsel %vm280, %v198, 0.0
  %v933 = vrot.slane %v932, 4
  %v934 = vadd.f32 %v932, %v933
  %v935 = vrot.slane %v934, 2
  %v936 = vadd.f32 %v934, %v935
  %v937 = vrot.slane %v936, 1
  %v938 = vadd.f32 %v936, %v937
  %v939 = vsel %vm280, %v63, 0.0
  %v940 = vrot.slane %v939, 4
  %v941 = vadd.f32 %v939, %v940
  %v942 = vrot.slane %v941, 2
  %v943 = vadd.f32 %v941, %v942
  %v944 = vrot.slane %v943, 1
  %v945 = vadd.f32 %v943, %v944
  %v946 = vsel %vm280, %v199, 0.0
  %v947 = vrot.slane %v946, 4
  %v948 = vadd.f32 %v946, %v947
  %v949 = vrot.slane %v948, 2
  %v950 = vadd.f32 %v948, %v949
  %v951 = vrot.slane %v950, 1
  %v952 = vadd.f32 %v950, %v951
  %v953 = vsel %vm280, %v64, 0.0
  %v954 = vrot.slane %v953, 4
  %v955 = vadd.f32 %v953, %v954
  %v956 = vrot.slane %v955, 2
  %v957 = vadd.f32 %v955, %v956
  %v958 = vrot.slane %v957, 1
  %v959 = vadd.f32 %v957, %v958
  %v960 = vsel %vm280, %v200, 0.0
  %v961 = vrot.slane %v960, 4
  %v962 = vadd.f32 %v960, %v961
  %v963 = vrot.slane %v962, 2
  %v964 = vadd.f32 %v962, %v963
  %v965 = vrot.slane %v964, 1
  %v966 = vadd.f32 %v964, %v965
  %v967 = vsel %vm280, %v65, 0.0
  %v968 = vrot.slane %v967, 4
  %v969 = vadd.f32 %v967, %v968
  %v970 = vrot.slane %v969, 2
  %v971 = vadd.f32 %v969, %v970
  %v972 = vrot.slane %v971, 1
  %v973 = vadd.f32 %v971, %v972
  %v974 = vsel %vm280, %v201, 0.0
  %v975 = vrot.slane %v974, 4
  %v976 = vadd.f32 %v974, %v975
  %v977 = vrot.slane %v976, 2
  %v978 = vadd.f32 %v976, %v977
  %v979 = vrot.slane %v978, 1
  %v980 = vadd.f32 %v978, %v979
  %v981 = vsel %vm280, %v66, 0.0
  %v982 = vrot.slane %v981, 4
  %v983 = vadd.f32 %v981, %v982
  %v984 = vrot.slane %v983, 2
  %v985 = vadd.f32 %v983, %v984
  %v986 = vrot.slane %v985, 1
  %v987 = vadd.f32 %v985, %v986
  %v988 = vsel %vm280, %v202, 0.0
  %v989 = vrot.slane %v988, 4
  %v990 = vadd.f32 %v988, %v989
  %v991 = vrot.slane %v990, 2
  %v992 = vadd.f32 %v990, %v991
  %v993 = vrot.slane %v992, 1
  %v994 = vadd.f32 %v992, %v993
  %v995 = vsel %vm280, %v67, 0.0
  %v996 = vrot.slane %v995, 4
  %v997 = vadd.f32 %v995, %v996
  %v998 = vrot.slane %v997, 2
  %v999 = vadd.f32 %v997, %v998
  %v1000 = vrot.slane %v999, 1
  %v1001 = vadd.f32 %v999, %v1000
  %v1002 = vsel %vm280, %v203, 0.0
  %v1003 = vrot.slane %v1002, 4
  %v1004 = vadd.f32 %v1002, %v1003
  %v1005 = vrot.slane %v1004, 2
  %v1006 = vadd.f32 %v1004, %v1005
  %v1007 = vrot.slane %v1006, 1
  %v1008 = vadd.f32 %v1006, %v1007
  %v1009 = vsel %vm280, %v68, 0.0
  %v1010 = vrot.slane %v1009, 4
  %v1011 = vadd.f32 %v1009, %v1010
  %v1012 = vrot.slane %v1011, 2
  %v1013 = vadd.f32 %v1011, %v1012
  %v1014 = vrot.slane %v1013, 1
  %v1015 = vadd.f32 %v1013, %v1014
  %v1016 = vsel %vm280, %v204, 0.0
  %v1017 = vrot.slane %v1016, 4
  %v1018 = vadd.f32 %v1016, %v1017
  %v1019 = vrot.slane %v1018, 2
  %v1020 = vadd.f32 %v1018, %v1019
  %v1021 = vrot.slane %v1020, 1
  %v1022 = vadd.f32 %v1020, %v1021
  %v1023 = vsel %vm280, %v69, 0.0
  %v1024 = vrot.slane %v1023, 4
  %v1025 = vadd.f32 %v1023, %v1024
  %v1026 = vrot.slane %v1025, 2
  %v1027 = vadd.f32 %v1025, %v1026
  %v1028 = vrot.slane %v1027, 1
  %v1029 = vadd.f32 %v1027, %v1028
  %v1030 = vsel %vm280, %v205, 0.0
  %v1031 = vrot.slane %v1030, 4
  %v1032 = vadd.f32 %v1030, %v1031
  %v1033 = vrot.slane %v1032, 2
  %v1034 = vadd.f32 %v1032, %v1033
  %v1035 = vrot.slane %v1034, 1
  %v1036 = vadd.f32 %v1034, %v1035
  %v1037 = vsel %vm280, %v70, 0.0
  %v1038 = vrot.slane %v1037, 4
  %v1039 = vadd.f32 %v1037, %v1038
  %v1040 = vrot.slane %v1039, 2
  %v1041 = vadd.f32 %v1039, %v1040
  %v1042 = vrot.slane %v1041, 1
  %v1043 = vadd.f32 %v1041, %v1042
  %v1044 = vsel %vm280, %v206, 0.0
  %v1045 = vrot.slane %v1044, 4
  %v1046 = vadd.f32 %v1044, %v1045
  %v1047 = vrot.slane %v1046, 2
  %v1048 = vadd.f32 %v1046, %v1047
  %v1049 = vrot.slane %v1048, 1
  %v1050 = vadd.f32 %v1048, %v1049
  %v1051 = vsel %vm280, %v71, 0.0
  %v1052 = vrot.slane %v1051, 4
  %v1053 = vadd.f32 %v1051, %v1052
  %v1054 = vrot.slane %v1053, 2
  %v1055 = vadd.f32 %v1053, %v1054
  %v1056 = vrot.slane %v1055, 1
  %v1057 = vadd.f32 %v1055, %v1056
  %v1058 = vsel %vm280, %v207, 0.0
  %v1059 = vrot.slane %v1058, 4
  %v1060 = vadd.f32 %v1058, %v1059
  %v1061 = vrot.slane %v1060, 2
  %v1062 = vadd.f32 %v1060, %v1061
  %v1063 = vrot.slane %v1062, 1
  %v1064 = vadd.f32 %v1062, %v1063
  %v1065 = vsel %vm280, %v72, 0.0
  %v1066 = vrot.slane %v1065, 4
  %v1067 = vadd.f32 %v1065, %v1066
  %v1068 = vrot.slane %v1067, 2
  %v1069 = vadd.f32 %v1067, %v1068
  %v1070 = vrot.slane %v1069, 1
  %v1071 = vadd.f32 %v1069, %v1070
  %v1072 = vsel %vm280, %v208, 0.0
  %v1073 = vrot.slane %v1072, 4
  %v1074 = vadd.f32 %v1072, %v1073
  %v1075 = vrot.slane %v1074, 2
  %v1076 = vadd.f32 %v1074, %v1075
  %v1077 = vrot.slane %v1076, 1
  %v1078 = vadd.f32 %v1076, %v1077
  %v1079 = vsel %vm280, %v73, 0.0
  %v1080 = vrot.slane %v1079, 4
  %v1081 = vadd.f32 %v1079, %v1080
  %v1082 = vrot.slane %v1081, 2
  %v1083 = vadd.f32 %v1081, %v1082
  %v1084 = vrot.slane %v1083, 1
  %v1085 = vadd.f32 %v1083, %v1084
  %v1086 = vsel %vm280, %v209, 0.0
  %v1087 = vrot.slane %v1086, 4
  %v1088 = vadd.f32 %v1086, %v1087
  %v1089 = vrot.slane %v1088, 2
  %v1090 = vadd.f32 %v1088, %v1089
  %v1091 = vrot.slane %v1090, 1
  %v1092 = vadd.f32 %v1090, %v1091
  %v1093 = vsel %vm280, %v74, 0.0
  %v1094 = vrot.slane %v1093, 4
  %v1095 = vadd.f32 %v1093, %v1094
  %v1096 = vrot.slane %v1095, 2
  %v1097 = vadd.f32 %v1095, %v1096
  %v1098 = vrot.slane %v1097, 1
  %v1099 = vadd.f32 %v1097, %v1098
  %v1100 = vsel %vm280, %v210, 0.0
  %v1101 = vrot.slane %v1100, 4
  %v1102 = vadd.f32 %v1100, %v1101
  %v1103 = vrot.slane %v1102, 2
  %v1104 = vadd.f32 %v1102, %v1103
  %v1105 = vrot.slane %v1104, 1
  %v1106 = vadd.f32 %v1104, %v1105
  %v1107 = vsel %vm280, %v75, 0.0
  %v1108 = vrot.slane %v1107, 4
  %v1109 = vadd.f32 %v1107, %v1108
  %v1110 = vrot.slane %v1109, 2
  %v1111 = vadd.f32 %v1109, %v1110
  %v1112 = vrot.slane %v1111, 1
  %v1113 = vadd.f32 %v1111, %v1112
  %v1114 = vsel %vm280, %v211, 0.0
  %v1115 = vrot.slane %v1114, 4
  %v1116 = vadd.f32 %v1114, %v1115
  %v1117 = vrot.slane %v1116, 2
  %v1118 = vadd.f32 %v1116, %v1117
  %v1119 = vrot.slane %v1118, 1
  %v1120 = vadd.f32 %v1118, %v1119
  %v1121 = vsel %vm280, %v76, 0.0
  %v1122 = vrot.slane %v1121, 4
  %v1123 = vadd.f32 %v1121, %v1122
  %v1124 = vrot.slane %v1123, 2
  %v1125 = vadd.f32 %v1123, %v1124
  %v1126 = vrot.slane %v1125, 1
  %v1127 = vadd.f32 %v1125, %v1126
  %v1128 = vsel %vm280, %v212, 0.0
  %v1129 = vrot.slane %v1128, 4
  %v1130 = vadd.f32 %v1128, %v1129
  %v1131 = vrot.slane %v1130, 2
  %v1132 = vadd.f32 %v1130, %v1131
  %v1133 = vrot.slane %v1132, 1
  %v1134 = vadd.f32 %v1132, %v1133
  %v1135 = vsel %vm280, %v77, 0.0
  %v1136 = vrot.slane %v1135, 4
  %v1137 = vadd.f32 %v1135, %v1136
  %v1138 = vrot.slane %v1137, 2
  %v1139 = vadd.f32 %v1137, %v1138
  %v1140 = vrot.slane %v1139, 1
  %v1141 = vadd.f32 %v1139, %v1140
  %v1142 = vsel %vm280, %v213, 0.0
  %v1143 = vrot.slane %v1142, 4
  %v1144 = vadd.f32 %v1142, %v1143
  %v1145 = vrot.slane %v1144, 2
  %v1146 = vadd.f32 %v1144, %v1145
  %v1147 = vrot.slane %v1146, 1
  %v1148 = vadd.f32 %v1146, %v1147
  %v1149 = vsel %vm280, %v78, 0.0
  %v1150 = vrot.slane %v1149, 4
  %v1151 = vadd.f32 %v1149, %v1150
  %v1152 = vrot.slane %v1151, 2
  %v1153 = vadd.f32 %v1151, %v1152
  %v1154 = vrot.slane %v1153, 1
  %v1155 = vadd.f32 %v1153, %v1154
  %v1156 = vsel %vm280, %v214, 0.0
  %v1157 = vrot.slane %v1156, 4
  %v1158 = vadd.f32 %v1156, %v1157
  %v1159 = vrot.slane %v1158, 2
  %v1160 = vadd.f32 %v1158, %v1159
  %v1161 = vrot.slane %v1160, 1
  %v1162 = vadd.f32 %v1160, %v1161
  %v1163 = vsel %vm280, %v79, 0.0
  %v1164 = vrot.slane %v1163, 4
  %v1165 = vadd.f32 %v1163, %v1164
  %v1166 = vrot.slane %v1165, 2
  %v1167 = vadd.f32 %v1165, %v1166
  %v1168 = vrot.slane %v1167, 1
  %v1169 = vadd.f32 %v1167, %v1168
  %v1170 = vsel %vm280, %v215, 0.0
  %v1171 = vrot.slane %v1170, 4
  %v1172 = vadd.f32 %v1170, %v1171
  %v1173 = vrot.slane %v1172, 2
  %v1174 = vadd.f32 %v1172, %v1173
  %v1175 = vrot.slane %v1174, 1
  %v1176 = vadd.f32 %v1174, %v1175
  %v1177 = vrcp.pop 4.0
  %v1178 = vmul.f32 %v287, %v1177
  %v1179 = vmul.f32 %v294, %v1177
  %v1180 = vmul.f32 %v301, %v1177
  %v1181 = vmul.f32 %v308, %v1177
  %v1182 = vmul.f32 %v315, %v1177
  %v1183 = vmul.f32 %v322, %v1177
  %v1184 = vmul.f32 %v329, %v1177
  %v1185 = vmul.f32 %v336, %v1177
  %v1186 = vmul.f32 %v343, %v1177
  %v1187 = vmul.f32 %v350, %v1177
  %v1188 = vmul.f32 %v357, %v1177
  %v1189 = vmul.f32 %v364, %v1177
  %v1190 = vmul.f32 %v371, %v1177
  %v1191 = vmul.f32 %v378, %v1177
  %v1192 = vmul.f32 %v385, %v1177
  %v1193 = vmul.f32 %v392, %v1177
  %v1194 = vmul.f32 %v399, %v1177
  %v1195 = vmul.f32 %v406, %v1177
  %v1196 = vmul.f32 %v413, %v1177
  %v1197 = vmul.f32 %v420, %v1177
  %v1198 = vmul.f32 %v427, %v1177
  %v1199 = vmul.f32 %v434, %v1177
  %v1200 = vmul.f32 %v441, %v1177
  %v1201 = vmul.f32 %v448, %v1177
  %v1202 = vmul.f32 %v455, %v1177
  %v1203 = vmul.f32 %v462, %v1177
  %v1204 = vmul.f32 %v469, %v1177
  %v1205 = vmul.f32 %v476, %v1177
  %v1206 = vmul.f32 %v483, %v1177
  %v1207 = vmul.f32 %v490, %v1177
  %v1208 = vmul.f32 %v497, %v1177
  %v1209 = vmul.f32 %v504, %v1177
  %v1210 = vmul.f32 %v511, %v1177
  %v1211 = vmul.f32 %v518, %v1177
  %v1212 = vmul.f32 %v525, %v1177
  %v1213 = vmul.f32 %v532, %v1177
  %v1214 = vmul.f32 %v539, %v1177
  %v1215 = vmul.f32 %v546, %v1177
  %v1216 = vmul.f32 %v553, %v1177
  %v1217 = vmul.f32 %v560, %v1177
  %v1218 = vmul.f32 %v567, %v1177
  %v1219 = vmul.f32 %v574, %v1177
  %v1220 = vmul.f32 %v581, %v1177
  %v1221 = vmul.f32 %v588, %v1177
  %v1222 = vmul.f32 %v595, %v1177
  %v1223 = vmul.f32 %v602, %v1177
  %v1224 = vmul.f32 %v609, %v1177
  %v1225 = vmul.f32 %v616, %v1177
  %v1226 = vmul.f32 %v623, %v1177
  %v1227 = vmul.f32 %v630, %v1177
  %v1228 = vmul.f32 %v637, %v1177
  %v1229 = vmul.f32 %v644, %v1177
  %v1230 = vmul.f32 %v651, %v1177
  %v1231 = vmul.f32 %v658, %v1177
  %v1232 = vmul.f32 %v665, %v1177
  %v1233 = vmul.f32 %v672, %v1177
  %v1234 = vmul.f32 %v679, %v1177
  %v1235 = vmul.f32 %v686, %v1177
  %v1236 = vmul.f32 %v693, %v1177
  %v1237 = vmul.f32 %v700, %v1177
  %v1238 = vmul.f32 %v707, %v1177
  %v1239 = vmul.f32 %v714, %v1177
  %v1240 = vmul.f32 %v721, %v1177
  %v1241 = vmul.f32 %v728, %v1177
  %v1242 = vmul.f32 %v735, %v1177
  %v1243 = vmul.f32 %v742, %v1177
  %v1244 = vmul.f32 %v749, %v1177
  %v1245 = vmul.f32 %v756, %v1177
  %v1246 = vmul.f32 %v763, %v1177
  %v1247 = vmul.f32 %v770, %v1177
  %v1248 = vmul.f32 %v777, %v1177
  %v1249 = vmul.f32 %v784, %v1177
  %v1250 = vmul.f32 %v791, %v1177
  %v1251 = vmul.f32 %v798, %v1177
  %v1252 = vmul.f32 %v805, %v1177
  %v1253 = vmul.f32 %v812, %v1177
  %v1254 = vmul.f32 %v819, %v1177
  %v1255 = vmul.f32 %v826, %v1177
  %v1256 = vmul.f32 %v833, %v1177
  %v1257 = vmul.f32 %v840, %v1177
  %v1258 = vmul.f32 %v847, %v1177
  %v1259 = vmul.f32 %v854, %v1177
  %v1260 = vmul.f32 %v861, %v1177
  %v1261 = vmul.f32 %v868, %v1177
  %v1262 = vmul.f32 %v875, %v1177
  %v1263 = vmul.f32 %v882, %v1177
  %v1264 = vmul.f32 %v889, %v1177
  %v1265 = vmul.f32 %v896, %v1177
  %v1266 = vmul.f32 %v903, %v1177
  %v1267 = vmul.f32 %v910, %v1177
  %v1268 = vmul.f32 %v917, %v1177
  %v1269 = vmul.f32 %v924, %v1177
  %v1270 = vmul.f32 %v931, %v1177
  %v1271 = vmul.f32 %v938, %v1177
  %v1272 = vmul.f32 %v945, %v1177
  %v1273 = vmul.f32 %v952, %v1177
  %v1274 = vmul.f32 %v959, %v1177
  %v1275 = vmul.f32 %v966, %v1177
  %v1276 = vmul.f32 %v973, %v1177
  %v1277 = vmul.f32 %v980, %v1177
  %v1278 = vmul.f32 %v987, %v1177
  %v1279 = vmul.f32 %v994, %v1177
  %v1280 = vmul.f32 %v1001, %v1177
  %v1281 = vmul.f32 %v1008, %v1177
  %v1282 = vmul.f32 %v1015, %v1177
  %v1283 = vmul.f32 %v1022, %v1177
  %v1284 = vmul.f32 %v1029, %v1177
  %v1285 = vmul.f32 %v1036, %v1177
  %v1286 = vmul.f32 %v1043, %v1177
  %v1287 = vmul.f32 %v1050, %v1177
  %v1288 = vmul.f32 %v1057, %v1177
  %v1289 = vmul.f32 %v1064, %v1177
  %v1290 = vmul.f32 %v1071, %v1177
  %v1291 = vmul.f32 %v1078, %v1177
  %v1292 = vmul.f32 %v1085, %v1177
  %v1293 = vmul.f32 %v1092, %v1177
  %v1294 = vmul.f32 %v1099, %v1177
  %v1295 = vmul.f32 %v1106, %v1177
  %v1296 = vmul.f32 %v1113, %v1177
  %v1297 = vmul.f32 %v1120, %v1177
  %v1298 = vmul.f32 %v1127, %v1177
  %v1299 = vmul.f32 %v1134, %v1177
  %v1300 = vmul.f32 %v1141, %v1177
  %v1301 = vmul.f32 %v1148, %v1177
  %v1302 = vmul.f32 %v1155, %v1177
  %v1303 = vmul.f32 %v1162, %v1177
  %v1304 = vmul.f32 %v1169, %v1177
  %v1305 = vmul.f32 %v1176, %v1177
  %v1314 = vlaneseq
  %v1315 = vshrl.u32 %v1314, 7
  %v1316 = vsub.s32 0, %v1315
  %v1317 = vrot.slane %v80, %v1316
  %v1318 = vlaneseq
  %v1319 = vshrl.u32 %v1318, 7
  %v1320 = vsub.s32 1, %v1319
  %v1321 = vrot.slane %v80, %v1320
  %v1322 = vlaneseq
  %v1323 = vshrl.u32 %v1322, 7
  %v1324 = vsub.s32 2, %v1323
  %v1325 = vrot.slane %v80, %v1324
  %v1326 = vlaneseq
  %v1327 = vshrl.u32 %v1326, 7
  %v1328 = vsub.s32 3, %v1327
  %v1329 = vrot.slane %v80, %v1328
  %v1330 = vlaneseq
  %v1331 = vshrl.u32 %v1330, 7
  %v1332 = vsub.s32 4, %v1331
  %v1333 = vrot.slane %v80, %v1332
  %v1334 = vlaneseq
  %v1335 = vshrl.u32 %v1334, 7
  %v1336 = vsub.s32 5, %v1335
  %v1337 = vrot.slane %v80, %v1336
  %v1338 = vlaneseq
  %v1339 = vshrl.u32 %v1338, 7
  %v1340 = vsub.s32 6, %v1339
  %v1341 = vrot.slane %v80, %v1340
  %v1342 = vlaneseq
  %v1343 = vshrl.u32 %v1342, 7
  %v1344 = vsub.s32 7, %v1343
  %v1345 = vrot.slane %v80, %v1344
  %v1346 = vlaneseq
  %v1347 = vshrl.u32 %v1346, 7
  %v1348 = vsub.s32 0, %v1347
  %v1349 = vrot.slane %v81, %v1348
  %v1350 = vlaneseq
  %v1351 = vshrl.u32 %v1350, 7
  %v1352 = vsub.s32 1, %v1351
  %v1353 = vrot.slane %v81, %v1352
  %v1354 = vlaneseq
  %v1355 = vshrl.u32 %v1354, 7
  %v1356 = vsub.s32 2, %v1355
  %v1357 = vrot.slane %v81, %v1356
  %v1358 = vlaneseq
  %v1359 = vshrl.u32 %v1358, 7
  %v1360 = vsub.s32 3, %v1359
  %v1361 = vrot.slane %v81, %v1360
  %v1362 = vlaneseq
  %v1363 = vshrl.u32 %v1362, 7
  %v1364 = vsub.s32 4, %v1363
  %v1365 = vrot.slane %v81, %v1364
  %v1366 = vlaneseq
  %v1367 = vshrl.u32 %v1366, 7
  %v1368 = vsub.s32 5, %v1367
  %v1369 = vrot.slane %v81, %v1368
  %v1370 = vlaneseq
  %v1371 = vshrl.u32 %v1370, 7
  %v1372 = vsub.s32 6, %v1371
  %v1373 = vrot.slane %v81, %v1372
  %v1374 = vlaneseq
  %v1375 = vshrl.u32 %v1374, 7
  %v1376 = vsub.s32 7, %v1375
  %v1377 = vrot.slane %v81, %v1376
  %v1378 = vlaneseq
  %v1379 = vshrl.u32 %v1378, 7
  %v1380 = vsub.s32 0, %v1379
  %v1381 = vrot.slane %v82, %v1380
  %v1382 = vlaneseq
  %v1383 = vshrl.u32 %v1382, 7
  %v1384 = vsub.s32 1, %v1383
  %v1385 = vrot.slane %v82, %v1384
  %v1386 = vlaneseq
  %v1387 = vshrl.u32 %v1386, 7
  %v1388 = vsub.s32 2, %v1387
  %v1389 = vrot.slane %v82, %v1388
  %v1390 = vlaneseq
  %v1391 = vshrl.u32 %v1390, 7
  %v1392 = vsub.s32 3, %v1391
  %v1393 = vrot.slane %v82, %v1392
  %v1394 = vlaneseq
  %v1395 = vshrl.u32 %v1394, 7
  %v1396 = vsub.s32 4, %v1395
  %v1397 = vrot.slane %v82, %v1396
  %v1398 = vlaneseq
  %v1399 = vshrl.u32 %v1398, 7
  %v1400 = vsub.s32 5, %v1399
  %v1401 = vrot.slane %v82, %v1400
  %v1402 = vlaneseq
  %v1403 = vshrl.u32 %v1402, 7
  %v1404 = vsub.s32 6, %v1403
  %v1405 = vrot.slane %v82, %v1404
  %v1406 = vlaneseq
  %v1407 = vshrl.u32 %v1406, 7
  %v1408 = vsub.s32 7, %v1407
  %v1409 = vrot.slane %v82, %v1408
  %v1410 = vlaneseq
  %v1411 = vshrl.u32 %v1410, 7
  %v1412 = vsub.s32 0, %v1411
  %v1413 = vrot.slane %v83, %v1412
  %v1414 = vlaneseq
  %v1415 = vshrl.u32 %v1414, 7
  %v1416 = vsub.s32 1, %v1415
  %v1417 = vrot.slane %v83, %v1416
  %v1418 = vlaneseq
  %v1419 = vshrl.u32 %v1418, 7
  %v1420 = vsub.s32 2, %v1419
  %v1421 = vrot.slane %v83, %v1420
  %v1422 = vlaneseq
  %v1423 = vshrl.u32 %v1422, 7
  %v1424 = vsub.s32 3, %v1423
  %v1425 = vrot.slane %v83, %v1424
  %v1426 = vlaneseq
  %v1427 = vshrl.u32 %v1426, 7
  %v1428 = vsub.s32 4, %v1427
  %v1429 = vrot.slane %v83, %v1428
  %v1430 = vlaneseq
  %v1431 = vshrl.u32 %v1430, 7
  %v1432 = vsub.s32 5, %v1431
  %v1433 = vrot.slane %v83, %v1432
  %v1434 = vlaneseq
  %v1435 = vshrl.u32 %v1434, 7
  %v1436 = vsub.s32 6, %v1435
  %v1437 = vrot.slane %v83, %v1436
  %v1438 = vlaneseq
  %v1439 = vshrl.u32 %v1438, 7
  %v1440 = vsub.s32 7, %v1439
  %v1441 = vrot.slane %v83, %v1440
  %v1442 = vlaneseq
  %v1443 = vshrl.u32 %v1442, 7
  %v1444 = vsub.s32 0, %v1443
  %v1445 = vrot.slane %v84, %v1444
  %v1446 = vlaneseq
  %v1447 = vshrl.u32 %v1446, 7
  %v1448 = vsub.s32 1, %v1447
  %v1449 = vrot.slane %v84, %v1448
  %v1450 = vlaneseq
  %v1451 = vshrl.u32 %v1450, 7
  %v1452 = vsub.s32 2, %v1451
  %v1453 = vrot.slane %v84, %v1452
  %v1454 = vlaneseq
  %v1455 = vshrl.u32 %v1454, 7
  %v1456 = vsub.s32 3, %v1455
  %v1457 = vrot.slane %v84, %v1456
  %v1458 = vlaneseq
  %v1459 = vshrl.u32 %v1458, 7
  %v1460 = vsub.s32 4, %v1459
  %v1461 = vrot.slane %v84, %v1460
  %v1462 = vlaneseq
  %v1463 = vshrl.u32 %v1462, 7
  %v1464 = vsub.s32 5, %v1463
  %v1465 = vrot.slane %v84, %v1464
  %v1466 = vlaneseq
  %v1467 = vshrl.u32 %v1466, 7
  %v1468 = vsub.s32 6, %v1467
  %v1469 = vrot.slane %v84, %v1468
  %v1470 = vlaneseq
  %v1471 = vshrl.u32 %v1470, 7
  %v1472 = vsub.s32 7, %v1471
  %v1473 = vrot.slane %v84, %v1472
  %v1474 = vlaneseq
  %v1475 = vshrl.u32 %v1474, 7
  %v1476 = vsub.s32 0, %v1475
  %v1477 = vrot.slane %v85, %v1476
  %v1478 = vlaneseq
  %v1479 = vshrl.u32 %v1478, 7
  %v1480 = vsub.s32 1, %v1479
  %v1481 = vrot.slane %v85, %v1480
  %v1482 = vlaneseq
  %v1483 = vshrl.u32 %v1482, 7
  %v1484 = vsub.s32 2, %v1483
  %v1485 = vrot.slane %v85, %v1484
  %v1486 = vlaneseq
  %v1487 = vshrl.u32 %v1486, 7
  %v1488 = vsub.s32 3, %v1487
  %v1489 = vrot.slane %v85, %v1488
  %v1490 = vlaneseq
  %v1491 = vshrl.u32 %v1490, 7
  %v1492 = vsub.s32 4, %v1491
  %v1493 = vrot.slane %v85, %v1492
  %v1494 = vlaneseq
  %v1495 = vshrl.u32 %v1494, 7
  %v1496 = vsub.s32 5, %v1495
  %v1497 = vrot.slane %v85, %v1496
  %v1498 = vlaneseq
  %v1499 = vshrl.u32 %v1498, 7
  %v1500 = vsub.s32 6, %v1499
  %v1501 = vrot.slane %v85, %v1500
  %v1502 = vlaneseq
  %v1503 = vshrl.u32 %v1502, 7
  %v1504 = vsub.s32 7, %v1503
  %v1505 = vrot.slane %v85, %v1504
  %v1506 = vlaneseq
  %v1507 = vshrl.u32 %v1506, 7
  %v1508 = vsub.s32 0, %v1507
  %v1509 = vrot.slane %v86, %v1508
  %v1510 = vlaneseq
  %v1511 = vshrl.u32 %v1510, 7
  %v1512 = vsub.s32 1, %v1511
  %v1513 = vrot.slane %v86, %v1512
  %v1514 = vlaneseq
  %v1515 = vshrl.u32 %v1514, 7
  %v1516 = vsub.s32 2, %v1515
  %v1517 = vrot.slane %v86, %v1516
  %v1518 = vlaneseq
  %v1519 = vshrl.u32 %v1518, 7
  %v1520 = vsub.s32 3, %v1519
  %v1521 = vrot.slane %v86, %v1520
  %v1522 = vlaneseq
  %v1523 = vshrl.u32 %v1522, 7
  %v1524 = vsub.s32 4, %v1523
  %v1525 = vrot.slane %v86, %v1524
  %v1526 = vlaneseq
  %v1527 = vshrl.u32 %v1526, 7
  %v1528 = vsub.s32 5, %v1527
  %v1529 = vrot.slane %v86, %v1528
  %v1530 = vlaneseq
  %v1531 = vshrl.u32 %v1530, 7
  %v1532 = vsub.s32 6, %v1531
  %v1533 = vrot.slane %v86, %v1532
  %v1534 = vlaneseq
  %v1535 = vshrl.u32 %v1534, 7
  %v1536 = vsub.s32 7, %v1535
  %v1537 = vrot.slane %v86, %v1536
  %v1538 = vlaneseq
  %v1539 = vshrl.u32 %v1538, 7
  %v1540 = vsub.s32 0, %v1539
  %v1541 = vrot.slane %v87, %v1540
  %v1542 = vlaneseq
  %v1543 = vshrl.u32 %v1542, 7
  %v1544 = vsub.s32 1, %v1543
  %v1545 = vrot.slane %v87, %v1544
  %v1546 = vlaneseq
  %v1547 = vshrl.u32 %v1546, 7
  %v1548 = vsub.s32 2, %v1547
  %v1549 = vrot.slane %v87, %v1548
  %v1550 = vlaneseq
  %v1551 = vshrl.u32 %v1550, 7
  %v1552 = vsub.s32 3, %v1551
  %v1553 = vrot.slane %v87, %v1552
  %v1554 = vlaneseq
  %v1555 = vshrl.u32 %v1554, 7
  %v1556 = vsub.s32 4, %v1555
  %v1557 = vrot.slane %v87, %v1556
  %v1558 = vlaneseq
  %v1559 = vshrl.u32 %v1558, 7
  %v1560 = vsub.s32 5, %v1559
  %v1561 = vrot.slane %v87, %v1560
  %v1562 = vlaneseq
  %v1563 = vshrl.u32 %v1562, 7
  %v1564 = vsub.s32 6, %v1563
  %v1565 = vrot.slane %v87, %v1564
  %v1566 = vlaneseq
  %v1567 = vshrl.u32 %v1566, 7
  %v1568 = vsub.s32 7, %v1567
  %v1569 = vrot.slane %v87, %v1568
  %v1634 = vmul.f32 %v1178, %v1317
  %v1635 = vmul.f32 %v1179, %v1321
  %v1636 = vmul.f32 %v1180, %v1325
  %v1637 = vmul.f32 %v1181, %v1329
  %v1638 = vmul.f32 %v1182, %v1333
  %v1639 = vmul.f32 %v1183, %v1337
  %v1640 = vmul.f32 %v1184, %v1341
  %v1641 = vmul.f32 %v1185, %v1345
  %v1642 = vmul.f32 %v1186, %v1349
  %v1643 = vmul.f32 %v1187, %v1353
  %v1644 = vmul.f32 %v1188, %v1357
  %v1645 = vmul.f32 %v1189, %v1361
  %v1646 = vmul.f32 %v1190, %v1365
  %v1647 = vmul.f32 %v1191, %v1369
  %v1648 = vmul.f32 %v1192, %v1373
  %v1649 = vmul.f32 %v1193, %v1377
  %v1650 = vmul.f32 %v1194, %v1381
  %v1651 = vmul.f32 %v1195, %v1385
  %v1652 = vmul.f32 %v1196, %v1389
  %v1653 = vmul.f32 %v1197, %v1393
  %v1654 = vmul.f32 %v1198, %v1397
  %v1655 = vmul.f32 %v1199, %v1401
  %v1656 = vmul.f32 %v1200, %v1405
  %v1657 = vmul.f32 %v1201, %v1409
  %v1658 = vmul.f32 %v1202, %v1413
  %v1659 = vmul.f32 %v1203, %v1417
  %v1660 = vmul.f32 %v1204, %v1421
  %v1661 = vmul.f32 %v1205, %v1425
  %v1662 = vmul.f32 %v1206, %v1429
  %v1663 = vmul.f32 %v1207, %v1433
  %v1664 = vmul.f32 %v1208, %v1437
  %v1665 = vmul.f32 %v1209, %v1441
  %v1666 = vmul.f32 %v1210, %v1445
  %v1667 = vmul.f32 %v1211, %v1449
  %v1668 = vmul.f32 %v1212, %v1453
  %v1669 = vmul.f32 %v1213, %v1457
  %v1670 = vmul.f32 %v1214, %v1461
  %v1671 = vmul.f32 %v1215, %v1465
  %v1672 = vmul.f32 %v1216, %v1469
  %v1673 = vmul.f32 %v1217, %v1473
  %v1674 = vmul.f32 %v1218, %v1477
  %v1675 = vmul.f32 %v1219, %v1481
  %v1676 = vmul.f32 %v1220, %v1485
  %v1677 = vmul.f32 %v1221, %v1489
  %v1678 = vmul.f32 %v1222, %v1493
  %v1679 = vmul.f32 %v1223, %v1497
  %v1680 = vmul.f32 %v1224, %v1501
  %v1681 = vmul.f32 %v1225, %v1505
  %v1682 = vmul.f32 %v1226, %v1509
  %v1683 = vmul.f32 %v1227, %v1513
  %v1684 = vmul.f32 %v1228, %v1517
  %v1685 = vmul.f32 %v1229, %v1521
  %v1686 = vmul.f32 %v1230, %v1525
  %v1687 = vmul.f32 %v1231, %v1529
  %v1688 = vmul.f32 %v1232, %v1533
  %v1689 = vmul.f32 %v1233, %v1537
  %v1690 = vmul.f32 %v1234, %v1541
  %v1691 = vmul.f32 %v1235, %v1545
  %v1692 = vmul.f32 %v1236, %v1549
  %v1693 = vmul.f32 %v1237, %v1553
  %v1694 = vmul.f32 %v1238, %v1557
  %v1695 = vmul.f32 %v1239, %v1561
  %v1696 = vmul.f32 %v1240, %v1565
  %v1697 = vmul.f32 %v1241, %v1569
  %v1698 = vmul.f32 %v1242, %v1317
  %v1699 = vmul.f32 %v1243, %v1321
  %v1700 = vmul.f32 %v1244, %v1325
  %v1701 = vmul.f32 %v1245, %v1329
  %v1702 = vmul.f32 %v1246, %v1333
  %v1703 = vmul.f32 %v1247, %v1337
  %v1704 = vmul.f32 %v1248, %v1341
  %v1705 = vmul.f32 %v1249, %v1345
  %v1706 = vmul.f32 %v1250, %v1349
  %v1707 = vmul.f32 %v1251, %v1353
  %v1708 = vmul.f32 %v1252, %v1357
  %v1709 = vmul.f32 %v1253, %v1361
  %v1710 = vmul.f32 %v1254, %v1365
  %v1711 = vmul.f32 %v1255, %v1369
  %v1712 = vmul.f32 %v1256, %v1373
  %v1713 = vmul.f32 %v1257, %v1377
  %v1714 = vmul.f32 %v1258, %v1381
  %v1715 = vmul.f32 %v1259, %v1385
  %v1716 = vmul.f32 %v1260, %v1389
  %v1717 = vmul.f32 %v1261, %v1393
  %v1718 = vmul.f32 %v1262, %v1397
  %v1719 = vmul.f32 %v1263, %v1401
  %v1720 = vmul.f32 %v1264, %v1405
  %v1721 = vmul.f32 %v1265, %v1409
  %v1722 = vmul.f32 %v1266, %v1413
  %v1723 = vmul.f32 %v1267, %v1417
  %v1724 = vmul.f32 %v1268, %v1421
  %v1725 = vmul.f32 %v1269, %v1425
  %v1726 = vmul.f32 %v1270, %v1429
  %v1727 = vmul.f32 %v1271, %v1433
  %v1728 = vmul.f32 %v1272, %v1437
  %v1729 = vmul.f32 %v1273, %v1441
  %v1730 = vmul.f32 %v1274, %v1445
  %v1731 = vmul.f32 %v1275, %v1449
  %v1732 = vmul.f32 %v1276, %v1453
  %v1733 = vmul.f32 %v1277, %v1457
  %v1734 = vmul.f32 %v1278, %v1461
  %v1735 = vmul.f32 %v1279, %v1465
  %v1736 = vmul.f32 %v1280, %v1469
  %v1737 = vmul.f32 %v1281, %v1473
  %v1738 = vmul.f32 %v1282, %v1477
  %v1739 = vmul.f32 %v1283, %v1481
  %v1740 = vmul.f32 %v1284, %v1485
  %v1741 = vmul.f32 %v1285, %v1489
  %v1742 = vmul.f32 %v1286, %v1493
  %v1743 = vmul.f32 %v1287, %v1497
  %v1744 = vmul.f32 %v1288, %v1501
  %v1745 = vmul.f32 %v1289, %v1505
  %v1746 = vmul.f32 %v1290, %v1509
  %v1747 = vmul.f32 %v1291, %v1513
  %v1748 = vmul.f32 %v1292, %v1517
  %v1749 = vmul.f32 %v1293, %v1521
  %v1750 = vmul.f32 %v1294, %v1525
  %v1751 = vmul.f32 %v1295, %v1529
  %v1752 = vmul.f32 %v1296, %v1533
  %v1753 = vmul.f32 %v1297, %v1537
  %v1754 = vmul.f32 %v1298, %v1541
  %v1755 = vmul.f32 %v1299, %v1545
  %v1756 = vmul.f32 %v1300, %v1549
  %v1757 = vmul.f32 %v1301, %v1553
  %v1758 = vmul.f32 %v1302, %v1557
  %v1759 = vmul.f32 %v1303, %v1561
  %v1760 = vmul.f32 %v1304, %v1565
  %v1761 = vmul.f32 %v1305, %v1569
  %v1890 = vrot.slane %v1698, 7
  %vm1891 = vcmask 1041409
  %v1892 = vsel %vm1891, %v1890, %v1634
  %v1893 = vrot.slane %v1699, 7
  %v1894 = vsel %vm1891, %v1893, %v1635
  %v1895 = vrot.slane %v1700, 7
  %v1896 = vsel %vm1891, %v1895, %v1636
  %v1897 = vrot.slane %v1701, 7
  %v1898 = vsel %vm1891, %v1897, %v1637
  %v1899 = vrot.slane %v1702, 7
  %v1900 = vsel %vm1891, %v1899, %v1638
  %v1901 = vrot.slane %v1703, 7
  %v1902 = vsel %vm1891, %v1901, %v1639
  %v1903 = vrot.slane %v1704, 7
  %v1904 = vsel %vm1891, %v1903, %v1640
  %v1905 = vrot.slane %v1705, 7
  %v1906 = vsel %vm1891, %v1905, %v1641
  %v1907 = vrot.slane %v1706, 7
  %v1908 = vsel %vm1891, %v1907, %v1642
  %v1909 = vrot.slane %v1707, 7
  %v1910 = vsel %vm1891, %v1909, %v1643
  %v1911 = vrot.slane %v1708, 7
  %v1912 = vsel %vm1891, %v1911, %v1644
  %v1913 = vrot.slane %v1709, 7
  %v1914 = vsel %vm1891, %v1913, %v1645
  %v1915 = vrot.slane %v1710, 7
  %v1916 = vsel %vm1891, %v1915, %v1646
  %v1917 = vrot.slane %v1711, 7
  %v1918 = vsel %vm1891, %v1917, %v1647
  %v1919 = vrot.slane %v1712, 7
  %v1920 = vsel %vm1891, %v1919, %v1648
  %v1921 = vrot.slane %v1713, 7
  %v1922 = vsel %vm1891, %v1921, %v1649
  %v1923 = vrot.slane %v1714, 7
  %v1924 = vsel %vm1891, %v1923, %v1650
  %v1925 = vrot.slane %v1715, 7
  %v1926 = vsel %vm1891, %v1925, %v1651
  %v1927 = vrot.slane %v1716, 7
  %v1928 = vsel %vm1891, %v1927, %v1652
  %v1929 = vrot.slane %v1717, 7
  %v1930 = vsel %vm1891, %v1929, %v1653
  %v1931 = vrot.slane %v1718, 7
  %v1932 = vsel %vm1891, %v1931, %v1654
  %v1933 = vrot.slane %v1719, 7
  %v1934 = vsel %vm1891, %v1933, %v1655
  %v1935 = vrot.slane %v1720, 7
  %v1936 = vsel %vm1891, %v1935, %v1656
  %v1937 = vrot.slane %v1721, 7
  %v1938 = vsel %vm1891, %v1937, %v1657
  %v1939 = vrot.slane %v1722, 7
  %v1940 = vsel %vm1891, %v1939, %v1658
  %v1941 = vrot.slane %v1723, 7
  %v1942 = vsel %vm1891, %v1941, %v1659
  %v1943 = vrot.slane %v1724, 7
  %v1944 = vsel %vm1891, %v1943, %v1660
  %v1945 = vrot.slane %v1725, 7
  %v1946 = vsel %vm1891, %v1945, %v1661
  %v1947 = vrot.slane %v1726, 7
  %v1948 = vsel %vm1891, %v1947, %v1662
  %v1949 = vrot.slane %v1727, 7
  %v1950 = vsel %vm1891, %v1949, %v1663
  %v1951 = vrot.slane %v1728, 7
  %v1952 = vsel %vm1891, %v1951, %v1664
  %v1953 = vrot.slane %v1729, 7
  %v1954 = vsel %vm1891, %v1953, %v1665
  %v1955 = vrot.slane %v1730, 7
  %v1956 = vsel %vm1891, %v1955, %v1666
  %v1957 = vrot.slane %v1731, 7
  %v1958 = vsel %vm1891, %v1957, %v1667
  %v1959 = vrot.slane %v1732, 7
  %v1960 = vsel %vm1891, %v1959, %v1668
  %v1961 = vrot.slane %v1733, 7
  %v1962 = vsel %vm1891, %v1961, %v1669
  %v1963 = vrot.slane %v1734, 7
  %v1964 = vsel %vm1891, %v1963, %v1670
  %v1965 = vrot.slane %v1735, 7
  %v1966 = vsel %vm1891, %v1965, %v1671
  %v1967 = vrot.slane %v1736, 7
  %v1968 = vsel %vm1891, %v1967, %v1672
  %v1969 = vrot.slane %v1737, 7
  %v1970 = vsel %vm1891, %v1969, %v1673
  %v1971 = vrot.slane %v1738, 7
  %v1972 = vsel %vm1891, %v1971, %v1674
  %v1973 = vrot.slane %v1739, 7
  %v1974 = vsel %vm1891, %v1973, %v1675
  %v1975 = vrot.slane %v1740, 7
  %v1976 = vsel %vm1891, %v1975, %v1676
  %v1977 = vrot.slane %v1741, 7
  %v1978 = vsel %vm1891, %v1977, %v1677
  %v1979 = vrot.slane %v1742, 7
  %v1980 = vsel %vm1891, %v1979, %v1678
  %v1981 = vrot.slane %v1743, 7
  %v1982 = vsel %vm1891, %v1981, %v1679
  %v1983 = vrot.slane %v1744, 7
  %v1984 = vsel %vm1891, %v1983, %v1680
  %v1985 = vrot.slane %v1745, 7
  %v1986 = vsel %vm1891, %v1985, %v1681
  %v1987 = vrot.slane %v1746, 7
  %v1988 = vsel %vm1891, %v1987, %v1682
  %v1989 = vrot.slane %v1747, 7
  %v1990 = vsel %vm1891, %v1989, %v1683
  %v1991 = vrot.slane %v1748, 7
  %v1992 = vsel %vm1891, %v1991, %v1684
  %v1993 = vrot.slane %v1749, 7
  %v1994 = vsel %vm1891, %v1993, %v1685
  %v1995 = vrot.slane %v1750, 7
  %v1996 = vsel %vm1891, %v1995, %v1686
  %v1997 = vrot.slane %v1751, 7
  %v1998 = vsel %vm1891, %v1997, %v1687
  %v1999 = vrot.slane %v1752, 7
  %v2000 = vsel %vm1891, %v1999, %v1688
  %v2001 = vrot.slane %v1753, 7
  %v2002 = vsel %vm1891, %v2001, %v1689
  %v2003 = vrot.slane %v1754, 7
  %v2004 = vsel %vm1891, %v2003, %v1690
  %v2005 = vrot.slane %v1755, 7
  %v2006 = vsel %vm1891, %v2005, %v1691
  %v2007 = vrot.slane %v1756, 7
  %v2008 = vsel %vm1891, %v2007, %v1692
  %v2009 = vrot.slane %v1757, 7
  %v2010 = vsel %vm1891, %v2009, %v1693
  %v2011 = vrot.slane %v1758, 7
  %v2012 = vsel %vm1891, %v2011, %v1694
  %v2013 = vrot.slane %v1759, 7
  %v2014 = vsel %vm1891, %v2013, %v1695
  %v2015 = vrot.slane %v1760, 7
  %v2016 = vsel %vm1891, %v2015, %v1696
  %v2017 = vrot.slane %v1761, 7
  %v2018 = vsel %vm1891, %v2017, %v1697
  %vm2083 = vcmask 1041408
  %v2084 = vsel %vm2083, %v1892, 0.0
  %v2085 = vsel %vm2083, %v1894, 0.0
  %v2086 = vadd.f32 %v2084, %v2085
  %v2087 = vsel %vm2083, %v1896, 0.0
  %v2088 = vadd.f32 %v2086, %v2087
  %v2089 = vsel %vm2083, %v1898, 0.0
  %v2090 = vadd.f32 %v2088, %v2089
  %v2091 = vsel %vm2083, %v1900, 0.0
  %v2092 = vadd.f32 %v2090, %v2091
  %v2093 = vsel %vm2083, %v1902, 0.0
  %v2094 = vadd.f32 %v2092, %v2093
  %v2095 = vsel %vm2083, %v1904, 0.0
  %v2096 = vadd.f32 %v2094, %v2095
  %v2097 = vsel %vm2083, %v1906, 0.0
  %v2098 = vadd.f32 %v2096, %v2097
  %v2099 = vsel %vm2083, %v1908, 0.0
  %v2100 = vadd.f32 %v2098, %v2099
  %v2101 = vsel %vm2083, %v1910, 0.0
  %v2102 = vadd.f32 %v2100, %v2101
  %v2103 = vsel %vm2083, %v1912, 0.0
  %v2104 = vadd.f32 %v2102, %v2103
  %v2105 = vsel %vm2083, %v1914, 0.0
  %v2106 = vadd.f32 %v2104, %v2105
  %v2107 = vsel %vm2083, %v1916, 0.0
  %v2108 = vadd.f32 %v2106, %v2107
  %v2109 = vsel %vm2083, %v1918, 0.0
  %v2110 = vadd.f32 %v2108, %v2109
  %v2111 = vsel %vm2083, %v1920, 0.0
  %v2112 = vadd.f32 %v2110, %v2111
  %v2113 = vsel %vm2083, %v1922, 0.0
  %v2114 = vadd.f32 %v2112, %v2113
  %v2115 = vsel %vm2083, %v1924, 0.0
  %v2116 = vadd.f32 %v2114, %v2115
  %v2117 = vsel %vm2083, %v1926, 0.0
  %v2118 = vadd.f32 %v2116, %v2117
  %v2119 = vsel %vm2083, %v1928, 0.0
  %v2120 = vadd.f32 %v2118, %v2119
  %v2121 = vsel %vm2083, %v1930, 0.0
  %v2122 = vadd.f32 %v2120, %v2121
  %v2123 = vsel %vm2083, %v1932, 0.0
  %v2124 = vadd.f32 %v2122, %v2123
  %v2125 = vsel %vm2083, %v1934, 0.0
  %v2126 = vadd.f32 %v2124, %v2125
  %v2127 = vsel %vm2083, %v1936, 0.0
  %v2128 = vadd.f32 %v2126, %v2127
  %v2129 = vsel %vm2083, %v1938, 0.0
  %v2130 = vadd.f32 %v2128, %v2129
  %v2131 = vsel %vm2083, %v1940, 0.0
  %v2132 = vadd.f32 %v2130, %v2131
  %v2133 = vsel %vm2083, %v1942, 0.0
  %v2134 = vadd.f32 %v2132, %v2133
  %v2135 = vsel %vm2083, %v1944, 0.0
  %v2136 = vadd.f32 %v2134, %v2135
  %v2137 = vsel %vm2083, %v1946, 0.0
  %v2138 = vadd.f32 %v2136, %v2137
  %v2139 = vsel %vm2083, %v1948, 0.0
  %v2140 = vadd.f32 %v2138, %v2139
  %v2141 = vsel %vm2083, %v1950, 0.0
  %v2142 = vadd.f32 %v2140, %v2141
  %v2143 = vsel %vm2083, %v1952, 0.0
  %v2144 = vadd.f32 %v2142, %v2143
  %v2145 = vsel %vm2083, %v1954, 0.0
  %v2146 = vadd.f32 %v2144, %v2145
  %v2147 = vsel %vm2083, %v1956, 0.0
  %v2148 = vadd.f32 %v2146, %v2147
  %v2149 = vsel %vm2083, %v1958, 0.0
  %v2150 = vadd.f32 %v2148, %v2149
  %v2151 = vsel %vm2083, %v1960, 0.0
  %v2152 = vadd.f32 %v2150, %v2151
  %v2153 = vsel %vm2083, %v1962, 0.0
  %v2154 = vadd.f32 %v2152, %v2153
  %v2155 = vsel %vm2083, %v1964, 0.0
  %v2156 = vadd.f32 %v2154, %v2155
  %v2157 = vsel %vm2083, %v1966, 0.0
  %v2158 = vadd.f32 %v2156, %v2157
  %v2159 = vsel %vm2083, %v1968, 0.0
  %v2160 = vadd.f32 %v2158, %v2159
  %v2161 = vsel %vm2083, %v1970, 0.0
  %v2162 = vadd.f32 %v2160, %v2161
  %v2163 = vsel %vm2083, %v1972, 0.0
  %v2164 = vadd.f32 %v2162, %v2163
  %v2165 = vsel %vm2083, %v1974, 0.0
  %v2166 = vadd.f32 %v2164, %v2165
  %v2167 = vsel %vm2083, %v1976, 0.0
  %v2168 = vadd.f32 %v2166, %v2167
  %v2169 = vsel %vm2083, %v1978, 0.0
  %v2170 = vadd.f32 %v2168, %v2169
  %v2171 = vsel %vm2083, %v1980, 0.0
  %v2172 = vadd.f32 %v2170, %v2171
  %v2173 = vsel %vm2083, %v1982, 0.0
  %v2174 = vadd.f32 %v2172, %v2173
  %v2175 = vsel %vm2083, %v1984, 0.0
  %v2176 = vadd.f32 %v2174, %v2175
  %v2177 = vsel %vm2083, %v1986, 0.0
  %v2178 = vadd.f32 %v2176, %v2177
  %v2179 = vsel %vm2083, %v1988, 0.0
  %v2180 = vadd.f32 %v2178, %v2179
  %v2181 = vsel %vm2083, %v1990, 0.0
  %v2182 = vadd.f32 %v2180, %v2181
  %v2183 = vsel %vm2083, %v1992, 0.0
  %v2184 = vadd.f32 %v2182, %v2183
  %v2185 = vsel %vm2083, %v1994, 0.0
  %v2186 = vadd.f32 %v2184, %v2185
  %v2187 = vsel %vm2083, %v1996, 0.0
  %v2188 = vadd.f32 %v2186, %v2187
  %v2189 = vsel %vm2083, %v1998, 0.0
  %v2190 = vadd.f32 %v2188, %v2189
  %v2191 = vsel %vm2083, %v2000, 0.0
  %v2192 = vadd.f32 %v2190, %v2191
  %v2193 = vsel %vm2083, %v2002, 0.0
  %v2194 = vadd.f32 %v2192, %v2193
  %v2195 = vsel %vm2083, %v2004, 0.0
  %v2196 = vadd.f32 %v2194, %v2195
  %v2197 = vsel %vm2083, %v2006, 0.0
  %v2198 = vadd.f32 %v2196, %v2197
  %v2199 = vsel %vm2083, %v2008, 0.0
  %v2200 = vadd.f32 %v2198, %v2199
  %v2201 = vsel %vm2083, %v2010, 0.0
  %v2202 = vadd.f32 %v2200, %v2201
  %v2203 = vsel %vm2083, %v2012, 0.0
  %v2204 = vadd.f32 %v2202, %v2203
  %v2205 = vsel %vm2083, %v2014, 0.0
  %v2206 = vadd.f32 %v2204, %v2205
  %v2207 = vsel %vm2083, %v2016, 0.0
  %v2208 = vadd.f32 %v2206, %v2207
  %v2209 = vsel %vm2083, %v2018, 0.0
  %v2210 = vadd.f32 %v2208, %v2209
  %2211 = vadd.xlane.f32.xlu0 %v2210
  %v2212 = vpop.xlane.xlu0 %2211
  %v2213 = vld [vmem:[#allocation2] sm:$0x1]
  %v2215 = vlaneseq
  %v2216 = vshrl.u32 %v2215, 7
  %v2217 = vsub.s32 0, %v2216
  %v2218 = vrot.slane %v2213, %v2217
  %v2220 = vadd.f32 %v2212, %v2218
  %vm2221 = vcmask 1024
  %2222 = vst.msk [vmem:[%s3] sm:$0x3] %vm2221, %v2220
  // Predicated region
  $region14: #{discriminator2d_forward.9} parent=0 // pred_check
    _
  $region15: #{discriminator2d_forward.9} parent=0 // pred_check_branch
    %2224 = sbr.rel (0) target = $region17
  $region16: #{discriminator2d_forward.9} parent=0 // pred_region
    _
  $region17: #{discriminator2d_forward.9} parent=0 // pred_fallthru
    _
  // Predicated region
  $region18: #{discriminator2d_forward.9} parent=0 // pred_check
    _
  $region19: #{discriminator2d_forward.9} parent=0 // pred_check_branch
    %2226 = sbr.rel (0) target = $region21
  $region20: #{discriminator2d_forward.9} parent=0 // pred_region
    _
  $region21: #{discriminator2d_forward.9} parent=0 // pred_fallthru
    _

// kernel: discriminator2d_forward.8
$region0: #{discriminator2d_forward.8}
  #allocation0 [shape = 'u32[]', space=smem, size = 0x4, offset = 0x4, fixed_abs, tag = 'smem constant byte address 0x4 - core index']
  #allocation1 [shape = 'u32[144,128]{1,0:T(1,128)}', space=vmem, size = 0x12000, scoped, tag = 'internal scratch']
  %s0 = inlined_call_operand.vmem [shape: bf16[32,4096], index: 0, kind: input, shape index: {}]
  %s1 = inlined_call_operand.vmem [shape: bf16[4096,512], index: 1, kind: input, shape index: {}]
  %s2 = inlined_call_operand.vmem [shape: f32[1,512], index: 2, kind: input, shape index: {}]
  %s3 = inlined_call_operand.vmem [shape: f32[32,512], index: 3, kind: output, shape index: {}]
  %s4 = sld [smem:[#allocation0]]
  $region45: #{discriminator2d_forward.8} parent=0
    _
  %s6 = ssub.s32 1, %s4
  %s7 = scalar_select 0, %s6, %s4
  loop: start=0, step=1, limit=4
  $region2: #{discriminator2d_forward.8} parent=0 // loop_pre_header
    _
  $region3: #{discriminator2d_forward.8} parent=0 // loop_header
    %s9 = sphi 0, %s13
    %p10 = scmp.ge.s32.totalorder %s9, 4
    %s19 = sphi 0, %s21
    %s22 = sphi 0, %s19
    %s23 = sphi 0, %s22
    %s39 = sphi 0, %s23
    %s43 = sphi 0, %s43
    %s45 = sphi 0, %s43
    %s46 = sphi 0, %s45
    %s60 = sphi 0, %s46
    %s64 = sphi 0, %s64
    %s66 = sphi 0, %s64
    %s67 = sphi 0, %s66
    %s81 = sphi 0, %s67
    %s87 = sphi 0, %s89
    %s90 = sphi 0, %s87
    %s91 = sphi 0, %s90
    %s107 = sphi 0, %s91
  $region4: #{discriminator2d_forward.8} parent=0 // loop_header_branch
    %12 = sbr.rel (%p10) target = $region8
  $region5: #{discriminator2d_forward.8} parent=0 // loop_body
    %s14 = ssub.s32 %s9, 1
    %s15 = ssub.s32 %s9, 2
    %s16 = sadd.s32 %s9, 1
    %s17 = ssub.s32 %s9, %s16
    %p18 = scmp.eq.s32.totalorder %s17, 0
    %s20 = sadd.s32 %s19, 1
    %s21 = scalar_select %p18, %s19, %s20
    %p24 = pneg %p18
    %p25 = scmp.eq.s32.totalorder %s9, 1
    %p26 = por %p24, %p25
    %p27 = scmp.ne.s32.totalorder %s19, %s22
    %p28 = scmp.eq.s32.totalorder %s9, 0
    %p29 = por %p27, %p28
    %p30 = scmp.ne.s32.totalorder %s19, %s22
    %p31 = scmp.eq.s32.totalorder %s14, 1
    %p32 = por %p30, %p31
    %p33 = scmp.ne.s32.totalorder %s22, %s23
    %p34 = scmp.eq.s32.totalorder %s14, 0
    %p35 = por %p33, %p34
    %p36 = scmp.ne.s32.totalorder %s22, %s23
    %p37 = scmp.eq.s32.totalorder %s15, 1
    %p38 = por %p36, %p37
    %p40 = scmp.ne.s32.totalorder %s23, %s39
    %p41 = scmp.eq.s32.totalorder %s15, 0
    %p42 = por %p40, %p41
    %s44 = sadd.s32 %s43, 1
    %p47 = scmp.eq.s32.totalorder %s9, 1
    %p48 = scmp.ne.s32.totalorder %s43, %s45
    %p49 = scmp.eq.s32.totalorder %s9, 0
    %p50 = por %p48, %p49
    %p51 = scmp.ne.s32.totalorder %s43, %s45
    %p52 = scmp.eq.s32.totalorder %s14, 1
    %p53 = por %p51, %p52
    %p54 = scmp.ne.s32.totalorder %s45, %s46
    %p55 = scmp.eq.s32.totalorder %s14, 0
    %p56 = por %p54, %p55
    %p57 = scmp.ne.s32.totalorder %s45, %s46
    %p58 = scmp.eq.s32.totalorder %s15, 1
    %p59 = por %p57, %p58
    %p61 = scmp.ne.s32.totalorder %s46, %s60
    %p62 = scmp.eq.s32.totalorder %s15, 0
    %p63 = por %p61, %p62
    %s65 = sadd.s32 %s64, 1
    %p68 = scmp.eq.s32.totalorder %s9, 1
    %p69 = scmp.ne.s32.totalorder %s64, %s66
    %p70 = scmp.eq.s32.totalorder %s9, 0
    %p71 = por %p69, %p70
    %p72 = scmp.ne.s32.totalorder %s64, %s66
    %p73 = scmp.eq.s32.totalorder %s14, 1
    %p74 = por %p72, %p73
    %p75 = scmp.ne.s32.totalorder %s66, %s67
    %p76 = scmp.eq.s32.totalorder %s14, 0
    %p77 = por %p75, %p76
    %p78 = scmp.ne.s32.totalorder %s66, %s67
    %p79 = scmp.eq.s32.totalorder %s15, 1
    %p80 = por %p78, %p79
    %p82 = scmp.ne.s32.totalorder %s67, %s81
    %p83 = scmp.eq.s32.totalorder %s15, 0
    %p84 = por %p82, %p83
    %s85 = ssub.s32 %s9, %s16
    %p86 = scmp.eq.s32.totalorder %s85, 0
    %s88 = sadd.s32 %s87, 1
    %s89 = scalar_select %p86, %s87, %s88
    %p92 = pneg %p86
    %p93 = scmp.eq.s32.totalorder %s9, 1
    %p94 = por %p92, %p93
    %p95 = scmp.ne.s32.totalorder %s87, %s90
    %p96 = scmp.eq.s32.totalorder %s9, 0
    %p97 = por %p95, %p96
    %p98 = scmp.ne.s32.totalorder %s87, %s90
    %p99 = scmp.eq.s32.totalorder %s14, 1
    %p100 = por %p98, %p99
    %p101 = scmp.ne.s32.totalorder %s90, %s91
    %p102 = scmp.eq.s32.totalorder %s14, 0
    %p103 = por %p101, %p102
    %p104 = scmp.ne.s32.totalorder %s90, %s91
    %p105 = scmp.eq.s32.totalorder %s15, 1
    %p106 = por %p104, %p105
    %p108 = scmp.ne.s32.totalorder %s91, %s107
    %p109 = scmp.eq.s32.totalorder %s15, 0
    %p110 = por %p108, %p109
    %p111 = scmp.le.s32.totalorder 1, %s9
    %p112 = scmp.lt.s32.totalorder %s9, 3
    %p113 = pnand %p111, %p112
    %p114 = pneg %p113
    // Predicated region
    $region9: #{discriminator2d_forward.8} parent=5 // pred_check
      _
    $region10: #{discriminator2d_forward.8} parent=5 // pred_check_branch
      %116 = sbr.rel (%p113) target = $region12
    $region11: #{discriminator2d_forward.8} parent=5 // pred_region
      %s117 = ssub.s32 %s9, 1
      // Predicated region
      $region13: #{discriminator2d_forward.8} parent=11 // pred_check
        %p118 = pneg %p56
      $region14: #{discriminator2d_forward.8} parent=11 // pred_check_branch
        %120 = sbr.rel (%p118) target = $region16
      $region15: #{discriminator2d_forward.8} parent=11 // pred_region
        _
      $region16: #{discriminator2d_forward.8} parent=11 // pred_fallthru
        _
      // Predicated region
      $region17: #{discriminator2d_forward.8} parent=11 // pred_check
        %p121 = pneg %p77
      $region18: #{discriminator2d_forward.8} parent=11 // pred_check_branch
        %123 = sbr.rel (%p121) target = $region20
      $region19: #{discriminator2d_forward.8} parent=11 // pred_region
        _
      $region20: #{discriminator2d_forward.8} parent=11 // pred_fallthru
        _
    $region12: #{discriminator2d_forward.8} parent=5 // pred_fallthru
      _
    %p124 = scmp.lt.s32.totalorder %s9, 2
    // Predicated region
    $region21: #{discriminator2d_forward.8} parent=5 // pred_check
      %p125 = pneg %p124
    $region22: #{discriminator2d_forward.8} parent=5 // pred_check_branch
      %127 = sbr.rel (%p125) target = $region24
    $region23: #{discriminator2d_forward.8} parent=5 // pred_region
      // Predicated region
      $region25: #{discriminator2d_forward.8} parent=23 // pred_check
        %p128 = pneg %p29
      $region26: #{discriminator2d_forward.8} parent=23 // pred_check_branch
        %130 = sbr.rel (%p128) target = $region28
      $region27: #{discriminator2d_forward.8} parent=23 // pred_region
        %s131 = smul.u32 2, %s9
        %p132 = scmp.lt.s32.totalorder %s131, 3
        %s133 = scalar_select %p132, %s131, 3
        %s134 = smul.addr %s133, 32
        %s135 = smul.addr %s134, 4
        %s136 = scalar_lea.vmem %s0, %s135
        %s137 = smul.u32 2, %s9
      $region28: #{discriminator2d_forward.8} parent=23 // pred_fallthru
        _
    $region24: #{discriminator2d_forward.8} parent=5 // pred_fallthru
      _
    %p138 = scmp.le.s32.totalorder 1, %s9
    %p139 = scmp.lt.s32.totalorder %s9, 3
    %p140 = pnand %p138, %p139
    %p141 = pneg %p140
    // Predicated region
    $region29: #{discriminator2d_forward.8} parent=5 // pred_check
      _
    $region30: #{discriminator2d_forward.8} parent=5 // pred_check_branch
      %143 = sbr.rel (%p140) target = $region32
    $region31: #{discriminator2d_forward.8} parent=5 // pred_region
      %s144 = ssub.s32 %s9, 1
      %s145 = smul.u32 2, %s14
      %p146 = scmp.lt.s32.totalorder %s145, 3
      %s147 = scalar_select %p146, %s145, 3
      %s148 = smul.addr %s147, 32
      %s149 = smul.addr %s148, 4
      %s150 = scalar_lea.vmem %s0, %s149
      %p151 = pneg %p35
      %p152 = pneg %p32
      %p153 = pneg %p56
      %p154 = pneg %p53
      %p155 = pneg %p77
      %p156 = pneg %p74
      %p157 = pneg %p103
      %p158 = pneg %p100
      %s159 = smul.u32 2, %s14
      %p160 = scmp.lt.s32.totalorder %s159, 3
      %s161 = scalar_select %p160, %s159, 3
      %s162 = smul.addr %s161, 4
      %s163 = smul.addr %s162, 8
      %s164 = scalar_lea.vmem %s3, %s163
      %s165 = smul.u32 2, %s14
      %p166 = scmp.lt.s32.totalorder %s165, 3
      %s167 = scalar_select %p166, %s165, 3
      %s168 = smul.addr %s167, 32
      %s169 = smul.addr %s168, 4
      %s170 = scalar_lea.vmem %s0, %s169
      %s171 = smul.u32 2, %s14
      %s172 = smul.u32 2, %s14
      %p173 = scmp.lt.s32.totalorder %s172, 3
      %s174 = scalar_select %p173, %s172, 3
      %s175 = smul.addr %s174, 4
      %s176 = smul.addr %s175, 8
      %s177 = scalar_lea.vmem %s3, %s176
      %s178 = smul.u32 2, %s14
      %v179 = vld [vmem:[%s170] sm:$0xff]
      %v180 = vld [vmem:[%s170 + $0x8] sm:$0xff]
      %v181 = vld [vmem:[%s170 + $0x10] sm:$0xff]
      %v182 = vld [vmem:[%s170 + $0x18] sm:$0xff]
      %v183 = vld [vmem:[%s170 + $0x20] sm:$0xff]
      %v184 = vld [vmem:[%s170 + $0x28] sm:$0xff]
      %v185 = vld [vmem:[%s170 + $0x30] sm:$0xff]
      %v186 = vld [vmem:[%s170 + $0x38] sm:$0xff]
      %v187 = vld [vmem:[%s170 + $0x40] sm:$0xff]
      %v188 = vld [vmem:[%s170 + $0x48] sm:$0xff]
      %v189 = vld [vmem:[%s170 + $0x50] sm:$0xff]
      %v190 = vld [vmem:[%s170 + $0x58] sm:$0xff]
      %v191 = vld [vmem:[%s170 + $0x60] sm:$0xff]
      %v192 = vld [vmem:[%s170 + $0x68] sm:$0xff]
      %v193 = vld [vmem:[%s170 + $0x70] sm:$0xff]
      %v194 = vld [vmem:[%s170 + $0x78] sm:$0xff]
      %v195 = vld [vmem:[%s170 + $0x80] sm:$0xff]
      %v196 = vld [vmem:[%s170 + $0x88] sm:$0xff]
      %v197 = vld [vmem:[%s170 + $0x90] sm:$0xff]
      %v198 = vld [vmem:[%s170 + $0x98] sm:$0xff]
      %v199 = vld [vmem:[%s170 + $0xa0] sm:$0xff]
      %v200 = vld [vmem:[%s170 + $0xa8] sm:$0xff]
      %v201 = vld [vmem:[%s170 + $0xb0] sm:$0xff]
      %v202 = vld [vmem:[%s170 + $0xb8] sm:$0xff]
      %v203 = vld [vmem:[%s170 + $0xc0] sm:$0xff]
      %v204 = vld [vmem:[%s170 + $0xc8] sm:$0xff]
      %v205 = vld [vmem:[%s170 + $0xd0] sm:$0xff]
      %v206 = vld [vmem:[%s170 + $0xd8] sm:$0xff]
      %v207 = vld [vmem:[%s170 + $0xe0] sm:$0xff]
      %v208 = vld [vmem:[%s170 + $0xe8] sm:$0xff]
      %v209 = vld [vmem:[%s170 + $0xf0] sm:$0xff]
      %v210 = vld [vmem:[%s170 + $0xf8] sm:$0xff]
      %v211 = vld [vmem:[%s1] sm:$0xff]
      %v212 = vld [vmem:[%s1 + $0x8] sm:$0xff]
      %v213 = vld [vmem:[%s1 + $0x10] sm:$0xff]
      %v214 = vld [vmem:[%s1 + $0x18] sm:$0xff]
      %v215 = vld [vmem:[%s1 + $0x20] sm:$0xff]
      %v216 = vld [vmem:[%s1 + $0x28] sm:$0xff]
      %v217 = vld [vmem:[%s1 + $0x30] sm:$0xff]
      %v218 = vld [vmem:[%s1 + $0x38] sm:$0xff]
      %v219 = vld [vmem:[%s1 + $0x40] sm:$0xff]
      %v220 = vld [vmem:[%s1 + $0x48] sm:$0xff]
      %v221 = vld [vmem:[%s1 + $0x50] sm:$0xff]
      %v222 = vld [vmem:[%s1 + $0x58] sm:$0xff]
      %v223 = vld [vmem:[%s1 + $0x60] sm:$0xff]
      %v224 = vld [vmem:[%s1 + $0x68] sm:$0xff]
      %v225 = vld [vmem:[%s1 + $0x70] sm:$0xff]
      %v226 = vld [vmem:[%s1 + $0x78] sm:$0xff]
      %v227 = vld [vmem:[%s1 + $0x80] sm:$0xff]
      %v228 = vld [vmem:[%s1 + $0x88] sm:$0xff]
      %v229 = vld [vmem:[%s1 + $0x90] sm:$0xff]
      %v230 = vld [vmem:[%s1 + $0x98] sm:$0xff]
      %v231 = vld [vmem:[%s1 + $0xa0] sm:$0xff]
      %v232 = vld [vmem:[%s1 + $0xa8] sm:$0xff]
      %v233 = vld [vmem:[%s1 + $0xb0] sm:$0xff]
      %v234 = vld [vmem:[%s1 + $0xb8] sm:$0xff]
      %v235 = vld [vmem:[%s1 + $0xc0] sm:$0xff]
      %v236 = vld [vmem:[%s1 + $0xc8] sm:$0xff]
      %v237 = vld [vmem:[%s1 + $0xd0] sm:$0xff]
      %v238 = vld [vmem:[%s1 + $0xd8] sm:$0xff]
      %v239 = vld [vmem:[%s1 + $0xe0] sm:$0xff]
      %v240 = vld [vmem:[%s1 + $0xe8] sm:$0xff]
      %v241 = vld [vmem:[%s1 + $0xf0] sm:$0xff]
      %v242 = vld [vmem:[%s1 + $0xf8] sm:$0xff]
      %v243 = vld [vmem:[%s1 + $0x100] sm:$0xff]
      %v244 = vld [vmem:[%s1 + $0x108] sm:$0xff]
      %v245 = vld [vmem:[%s1 + $0x110] sm:$0xff]
      %v246 = vld [vmem:[%s1 + $0x118] sm:$0xff]
      %v247 = vld [vmem:[%s1 + $0x120] sm:$0xff]
      %v248 = vld [vmem:[%s1 + $0x128] sm:$0xff]
      %v249 = vld [vmem:[%s1 + $0x130] sm:$0xff]
      %v250 = vld [vmem:[%s1 + $0x138] sm:$0xff]
      %v251 = vld [vmem:[%s1 + $0x140] sm:$0xff]
      %v252 = vld [vmem:[%s1 + $0x148] sm:$0xff]
      %v253 = vld [vmem:[%s1 + $0x150] sm:$0xff]
      %v254 = vld [vmem:[%s1 + $0x158] sm:$0xff]
      %v255 = vld [vmem:[%s1 + $0x160] sm:$0xff]
      %v256 = vld [vmem:[%s1 + $0x168] sm:$0xff]
      %v257 = vld [vmem:[%s1 + $0x170] sm:$0xff]
      %v258 = vld [vmem:[%s1 + $0x178] sm:$0xff]
      %v259 = vld [vmem:[%s1 + $0x180] sm:$0xff]
      %v260 = vld [vmem:[%s1 + $0x188] sm:$0xff]
      %v261 = vld [vmem:[%s1 + $0x190] sm:$0xff]
      %v262 = vld [vmem:[%s1 + $0x198] sm:$0xff]
      %v263 = vld [vmem:[%s1 + $0x1a0] sm:$0xff]
      %v264 = vld [vmem:[%s1 + $0x1a8] sm:$0xff]
      %v265 = vld [vmem:[%s1 + $0x1b0] sm:$0xff]
      %v266 = vld [vmem:[%s1 + $0x1b8] sm:$0xff]
      %v267 = vld [vmem:[%s1 + $0x1c0] sm:$0xff]
      %v268 = vld [vmem:[%s1 + $0x1c8] sm:$0xff]
      %v269 = vld [vmem:[%s1 + $0x1d0] sm:$0xff]
      %v270 = vld [vmem:[%s1 + $0x1d8] sm:$0xff]
      %v271 = vld [vmem:[%s1 + $0x1e0] sm:$0xff]
      %v272 = vld [vmem:[%s1 + $0x1e8] sm:$0xff]
      %v273 = vld [vmem:[%s1 + $0x1f0] sm:$0xff]
      %v274 = vld [vmem:[%s1 + $0x1f8] sm:$0xff]
      %v275 = vld [vmem:[%s1 + $0x200] sm:$0xff]
      %v276 = vld [vmem:[%s1 + $0x208] sm:$0xff]
      %v277 = vld [vmem:[%s1 + $0x210] sm:$0xff]
      %v278 = vld [vmem:[%s1 + $0x218] sm:$0xff]
      %v279 = vld [vmem:[%s1 + $0x220] sm:$0xff]
      %v280 = vld [vmem:[%s1 + $0x228] sm:$0xff]
      %v281 = vld [vmem:[%s1 + $0x230] sm:$0xff]
      %v282 = vld [vmem:[%s1 + $0x238] sm:$0xff]
      %v283 = vld [vmem:[%s1 + $0x240] sm:$0xff]
      %v284 = vld [vmem:[%s1 + $0x248] sm:$0xff]
      %v285 = vld [vmem:[%s1 + $0x250] sm:$0xff]
      %v286 = vld [vmem:[%s1 + $0x258] sm:$0xff]
      %v287 = vld [vmem:[%s1 + $0x260] sm:$0xff]
      %v288 = vld [vmem:[%s1 + $0x268] sm:$0xff]
      %v289 = vld [vmem:[%s1 + $0x270] sm:$0xff]
      %v290 = vld [vmem:[%s1 + $0x278] sm:$0xff]
      %v291 = vld [vmem:[%s1 + $0x280] sm:$0xff]
      %v292 = vld [vmem:[%s1 + $0x288] sm:$0xff]
      %v293 = vld [vmem:[%s1 + $0x290] sm:$0xff]
      %v294 = vld [vmem:[%s1 + $0x298] sm:$0xff]
      %v295 = vld [vmem:[%s1 + $0x2a0] sm:$0xff]
      %v296 = vld [vmem:[%s1 + $0x2a8] sm:$0xff]
      %v297 = vld [vmem:[%s1 + $0x2b0] sm:$0xff]
      %v298 = vld [vmem:[%s1 + $0x2b8] sm:$0xff]
      %v299 = vld [vmem:[%s1 + $0x2c0] sm:$0xff]
      %v300 = vld [vmem:[%s1 + $0x2c8] sm:$0xff]
      %v301 = vld [vmem:[%s1 + $0x2d0] sm:$0xff]
      %v302 = vld [vmem:[%s1 + $0x2d8] sm:$0xff]
      %v303 = vld [vmem:[%s1 + $0x2e0] sm:$0xff]
      %v304 = vld [vmem:[%s1 + $0x2e8] sm:$0xff]
      %v305 = vld [vmem:[%s1 + $0x2f0] sm:$0xff]
      %v306 = vld [vmem:[%s1 + $0x2f8] sm:$0xff]
      %v307 = vld [vmem:[%s1 + $0x300] sm:$0xff]
      %v308 = vld [vmem:[%s1 + $0x308] sm:$0xff]
      %v309 = vld [vmem:[%s1 + $0x310] sm:$0xff]
      %v310 = vld [vmem:[%s1 + $0x318] sm:$0xff]
      %v311 = vld [vmem:[%s1 + $0x320] sm:$0xff]
      %v312 = vld [vmem:[%s1 + $0x328] sm:$0xff]
      %v313 = vld [vmem:[%s1 + $0x330] sm:$0xff]
      %v314 = vld [vmem:[%s1 + $0x338] sm:$0xff]
      %v315 = vld [vmem:[%s1 + $0x340] sm:$0xff]
      %v316 = vld [vmem:[%s1 + $0x348] sm:$0xff]
      %v317 = vld [vmem:[%s1 + $0x350] sm:$0xff]
      %v318 = vld [vmem:[%s1 + $0x358] sm:$0xff]
      %v319 = vld [vmem:[%s1 + $0x360] sm:$0xff]
      %v320 = vld [vmem:[%s1 + $0x368] sm:$0xff]
      %v321 = vld [vmem:[%s1 + $0x370] sm:$0xff]
      %v322 = vld [vmem:[%s1 + $0x378] sm:$0xff]
      %v323 = vld [vmem:[%s1 + $0x380] sm:$0xff]
      %v324 = vld [vmem:[%s1 + $0x388] sm:$0xff]
      %v325 = vld [vmem:[%s1 + $0x390] sm:$0xff]
      %v326 = vld [vmem:[%s1 + $0x398] sm:$0xff]
      %v327 = vld [vmem:[%s1 + $0x3a0] sm:$0xff]
      %v328 = vld [vmem:[%s1 + $0x3a8] sm:$0xff]
      %v329 = vld [vmem:[%s1 + $0x3b0] sm:$0xff]
      %v330 = vld [vmem:[%s1 + $0x3b8] sm:$0xff]
      %v331 = vld [vmem:[%s1 + $0x3c0] sm:$0xff]
      %v332 = vld [vmem:[%s1 + $0x3c8] sm:$0xff]
      %v333 = vld [vmem:[%s1 + $0x3d0] sm:$0xff]
      %v334 = vld [vmem:[%s1 + $0x3d8] sm:$0xff]
      %v335 = vld [vmem:[%s1 + $0x3e0] sm:$0xff]
      %v336 = vld [vmem:[%s1 + $0x3e8] sm:$0xff]
      %v337 = vld [vmem:[%s1 + $0x3f0] sm:$0xff]
      %v338 = vld [vmem:[%s1 + $0x3f8] sm:$0xff]
      %v339 = vld [vmem:[%s1 + $0x400] sm:$0xff]
      %v340 = vld [vmem:[%s1 + $0x408] sm:$0xff]
      %v341 = vld [vmem:[%s1 + $0x410] sm:$0xff]
      %v342 = vld [vmem:[%s1 + $0x418] sm:$0xff]
      %v343 = vld [vmem:[%s1 + $0x420] sm:$0xff]
      %v344 = vld [vmem:[%s1 + $0x428] sm:$0xff]
      %v345 = vld [vmem:[%s1 + $0x430] sm:$0xff]
      %v346 = vld [vmem:[%s1 + $0x438] sm:$0xff]
      %v347 = vld [vmem:[%s1 + $0x440] sm:$0xff]
      %v348 = vld [vmem:[%s1 + $0x448] sm:$0xff]
      %v349 = vld [vmem:[%s1 + $0x450] sm:$0xff]
      %v350 = vld [vmem:[%s1 + $0x458] sm:$0xff]
      %v351 = vld [vmem:[%s1 + $0x460] sm:$0xff]
      %v352 = vld [vmem:[%s1 + $0x468] sm:$0xff]
      %v353 = vld [vmem:[%s1 + $0x470] sm:$0xff]
      %v354 = vld [vmem:[%s1 + $0x478] sm:$0xff]
      %v355 = vld [vmem:[%s1 + $0x480] sm:$0xff]
      %v356 = vld [vmem:[%s1 + $0x488] sm:$0xff]
      %v357 = vld [vmem:[%s1 + $0x490] sm:$0xff]
      %v358 = vld [vmem:[%s1 + $0x498] sm:$0xff]
      %v359 = vld [vmem:[%s1 + $0x4a0] sm:$0xff]
      %v360 = vld [vmem:[%s1 + $0x4a8] sm:$0xff]
      %v361 = vld [vmem:[%s1 + $0x4b0] sm:$0xff]
      %v362 = vld [vmem:[%s1 + $0x4b8] sm:$0xff]
      %v363 = vld [vmem:[%s1 + $0x4c0] sm:$0xff]
      %v364 = vld [vmem:[%s1 + $0x4c8] sm:$0xff]
      %v365 = vld [vmem:[%s1 + $0x4d0] sm:$0xff]
      %v366 = vld [vmem:[%s1 + $0x4d8] sm:$0xff]
      %v367 = vld [vmem:[%s1 + $0x4e0] sm:$0xff]
      %v368 = vld [vmem:[%s1 + $0x4e8] sm:$0xff]
      %v369 = vld [vmem:[%s1 + $0x4f0] sm:$0xff]
      %v370 = vld [vmem:[%s1 + $0x4f8] sm:$0xff]
      %v371 = vld [vmem:[%s1 + $0x500] sm:$0xff]
      %v372 = vld [vmem:[%s1 + $0x508] sm:$0xff]
      %v373 = vld [vmem:[%s1 + $0x510] sm:$0xff]
      %v374 = vld [vmem:[%s1 + $0x518] sm:$0xff]
      %v375 = vld [vmem:[%s1 + $0x520] sm:$0xff]
      %v376 = vld [vmem:[%s1 + $0x528] sm:$0xff]
      %v377 = vld [vmem:[%s1 + $0x530] sm:$0xff]
      %v378 = vld [vmem:[%s1 + $0x538] sm:$0xff]
      %v379 = vld [vmem:[%s1 + $0x540] sm:$0xff]
      %v380 = vld [vmem:[%s1 + $0x548] sm:$0xff]
      %v381 = vld [vmem:[%s1 + $0x550] sm:$0xff]
      %v382 = vld [vmem:[%s1 + $0x558] sm:$0xff]
      %v383 = vld [vmem:[%s1 + $0x560] sm:$0xff]
      %v384 = vld [vmem:[%s1 + $0x568] sm:$0xff]
      %v385 = vld [vmem:[%s1 + $0x570] sm:$0xff]
      %v386 = vld [vmem:[%s1 + $0x578] sm:$0xff]
      %v387 = vld [vmem:[%s1 + $0x580] sm:$0xff]
      %v388 = vld [vmem:[%s1 + $0x588] sm:$0xff]
      %v389 = vld [vmem:[%s1 + $0x590] sm:$0xff]
      %v390 = vld [vmem:[%s1 + $0x598] sm:$0xff]
      %v391 = vld [vmem:[%s1 + $0x5a0] sm:$0xff]
      %v392 = vld [vmem:[%s1 + $0x5a8] sm:$0xff]
      %v393 = vld [vmem:[%s1 + $0x5b0] sm:$0xff]
      %v394 = vld [vmem:[%s1 + $0x5b8] sm:$0xff]
      %v395 = vld [vmem:[%s1 + $0x5c0] sm:$0xff]
      %v396 = vld [vmem:[%s1 + $0x5c8] sm:$0xff]
      %v397 = vld [vmem:[%s1 + $0x5d0] sm:$0xff]
      %v398 = vld [vmem:[%s1 + $0x5d8] sm:$0xff]
      %v399 = vld [vmem:[%s1 + $0x5e0] sm:$0xff]
      %v400 = vld [vmem:[%s1 + $0x5e8] sm:$0xff]
      %v401 = vld [vmem:[%s1 + $0x5f0] sm:$0xff]
      %v402 = vld [vmem:[%s1 + $0x5f8] sm:$0xff]
      %v403 = vld [vmem:[%s1 + $0x600] sm:$0xff]
      %v404 = vld [vmem:[%s1 + $0x608] sm:$0xff]
      %v405 = vld [vmem:[%s1 + $0x610] sm:$0xff]
      %v406 = vld [vmem:[%s1 + $0x618] sm:$0xff]
      %v407 = vld [vmem:[%s1 + $0x620] sm:$0xff]
      %v408 = vld [vmem:[%s1 + $0x628] sm:$0xff]
      %v409 = vld [vmem:[%s1 + $0x630] sm:$0xff]
      %v410 = vld [vmem:[%s1 + $0x638] sm:$0xff]
      %v411 = vld [vmem:[%s1 + $0x640] sm:$0xff]
      %v412 = vld [vmem:[%s1 + $0x648] sm:$0xff]
      %v413 = vld [vmem:[%s1 + $0x650] sm:$0xff]
      %v414 = vld [vmem:[%s1 + $0x658] sm:$0xff]
      %v415 = vld [vmem:[%s1 + $0x660] sm:$0xff]
      %v416 = vld [vmem:[%s1 + $0x668] sm:$0xff]
      %v417 = vld [vmem:[%s1 + $0x670] sm:$0xff]
      %v418 = vld [vmem:[%s1 + $0x678] sm:$0xff]
      %v419 = vld [vmem:[%s1 + $0x680] sm:$0xff]
      %v420 = vld [vmem:[%s1 + $0x688] sm:$0xff]
      %v421 = vld [vmem:[%s1 + $0x690] sm:$0xff]
      %v422 = vld [vmem:[%s1 + $0x698] sm:$0xff]
      %v423 = vld [vmem:[%s1 + $0x6a0] sm:$0xff]
      %v424 = vld [vmem:[%s1 + $0x6a8] sm:$0xff]
      %v425 = vld [vmem:[%s1 + $0x6b0] sm:$0xff]
      %v426 = vld [vmem:[%s1 + $0x6b8] sm:$0xff]
      %v427 = vld [vmem:[%s1 + $0x6c0] sm:$0xff]
      %v428 = vld [vmem:[%s1 + $0x6c8] sm:$0xff]
      %v429 = vld [vmem:[%s1 + $0x6d0] sm:$0xff]
      %v430 = vld [vmem:[%s1 + $0x6d8] sm:$0xff]
      %v431 = vld [vmem:[%s1 + $0x6e0] sm:$0xff]
      %v432 = vld [vmem:[%s1 + $0x6e8] sm:$0xff]
      %v433 = vld [vmem:[%s1 + $0x6f0] sm:$0xff]
      %v434 = vld [vmem:[%s1 + $0x6f8] sm:$0xff]
      %v435 = vld [vmem:[%s1 + $0x700] sm:$0xff]
      %v436 = vld [vmem:[%s1 + $0x708] sm:$0xff]
      %v437 = vld [vmem:[%s1 + $0x710] sm:$0xff]
      %v438 = vld [vmem:[%s1 + $0x718] sm:$0xff]
      %v439 = vld [vmem:[%s1 + $0x720] sm:$0xff]
      %v440 = vld [vmem:[%s1 + $0x728] sm:$0xff]
      %v441 = vld [vmem:[%s1 + $0x730] sm:$0xff]
      %v442 = vld [vmem:[%s1 + $0x738] sm:$0xff]
      %v443 = vld [vmem:[%s1 + $0x740] sm:$0xff]
      %v444 = vld [vmem:[%s1 + $0x748] sm:$0xff]
      %v445 = vld [vmem:[%s1 + $0x750] sm:$0xff]
      %v446 = vld [vmem:[%s1 + $0x758] sm:$0xff]
      %v447 = vld [vmem:[%s1 + $0x760] sm:$0xff]
      %v448 = vld [vmem:[%s1 + $0x768] sm:$0xff]
      %v449 = vld [vmem:[%s1 + $0x770] sm:$0xff]
      %v450 = vld [vmem:[%s1 + $0x778] sm:$0xff]
      %v451 = vld [vmem:[%s1 + $0x780] sm:$0xff]
      %v452 = vld [vmem:[%s1 + $0x788] sm:$0xff]
      %v453 = vld [vmem:[%s1 + $0x790] sm:$0xff]
      %v454 = vld [vmem:[%s1 + $0x798] sm:$0xff]
      %v455 = vld [vmem:[%s1 + $0x7a0] sm:$0xff]
      %v456 = vld [vmem:[%s1 + $0x7a8] sm:$0xff]
      %v457 = vld [vmem:[%s1 + $0x7b0] sm:$0xff]
      %v458 = vld [vmem:[%s1 + $0x7b8] sm:$0xff]
      %v459 = vld [vmem:[%s1 + $0x7c0] sm:$0xff]
      %v460 = vld [vmem:[%s1 + $0x7c8] sm:$0xff]
      %v461 = vld [vmem:[%s1 + $0x7d0] sm:$0xff]
      %v462 = vld [vmem:[%s1 + $0x7d8] sm:$0xff]
      %v463 = vld [vmem:[%s1 + $0x7e0] sm:$0xff]
      %v464 = vld [vmem:[%s1 + $0x7e8] sm:$0xff]
      %v465 = vld [vmem:[%s1 + $0x7f0] sm:$0xff]
      %v466 = vld [vmem:[%s1 + $0x7f8] sm:$0xff]
      %v467 = vld [vmem:[%s1 + $0x800] sm:$0xff]
      %v468 = vld [vmem:[%s1 + $0x808] sm:$0xff]
      %v469 = vld [vmem:[%s1 + $0x810] sm:$0xff]
      %v470 = vld [vmem:[%s1 + $0x818] sm:$0xff]
      %v471 = vld [vmem:[%s1 + $0x820] sm:$0xff]
      %v472 = vld [vmem:[%s1 + $0x828] sm:$0xff]
      %v473 = vld [vmem:[%s1 + $0x830] sm:$0xff]
      %v474 = vld [vmem:[%s1 + $0x838] sm:$0xff]
      %v475 = vld [vmem:[%s1 + $0x840] sm:$0xff]
      %v476 = vld [vmem:[%s1 + $0x848] sm:$0xff]
      %v477 = vld [vmem:[%s1 + $0x850] sm:$0xff]
      %v478 = vld [vmem:[%s1 + $0x858] sm:$0xff]
      %v479 = vld [vmem:[%s1 + $0x860] sm:$0xff]
      %v480 = vld [vmem:[%s1 + $0x868] sm:$0xff]
      %v481 = vld [vmem:[%s1 + $0x870] sm:$0xff]
      %v482 = vld [vmem:[%s1 + $0x878] sm:$0xff]
      %v483 = vld [vmem:[%s1 + $0x880] sm:$0xff]
      %v484 = vld [vmem:[%s1 + $0x888] sm:$0xff]
      %v485 = vld [vmem:[%s1 + $0x890] sm:$0xff]
      %v486 = vld [vmem:[%s1 + $0x898] sm:$0xff]
      %v487 = vld [vmem:[%s1 + $0x8a0] sm:$0xff]
      %v488 = vld [vmem:[%s1 + $0x8a8] sm:$0xff]
      %v489 = vld [vmem:[%s1 + $0x8b0] sm:$0xff]
      %v490 = vld [vmem:[%s1 + $0x8b8] sm:$0xff]
      %v491 = vld [vmem:[%s1 + $0x8c0] sm:$0xff]
      %v492 = vld [vmem:[%s1 + $0x8c8] sm:$0xff]
      %v493 = vld [vmem:[%s1 + $0x8d0] sm:$0xff]
      %v494 = vld [vmem:[%s1 + $0x8d8] sm:$0xff]
      %v495 = vld [vmem:[%s1 + $0x8e0] sm:$0xff]
      %v496 = vld [vmem:[%s1 + $0x8e8] sm:$0xff]
      %v497 = vld [vmem:[%s1 + $0x8f0] sm:$0xff]
      %v498 = vld [vmem:[%s1 + $0x8f8] sm:$0xff]
      %v499 = vld [vmem:[%s1 + $0x900] sm:$0xff]
      %v500 = vld [vmem:[%s1 + $0x908] sm:$0xff]
      %v501 = vld [vmem:[%s1 + $0x910] sm:$0xff]
      %v502 = vld [vmem:[%s1 + $0x918] sm:$0xff]
      %v503 = vld [vmem:[%s1 + $0x920] sm:$0xff]
      %v504 = vld [vmem:[%s1 + $0x928] sm:$0xff]
      %v505 = vld [vmem:[%s1 + $0x930] sm:$0xff]
      %v506 = vld [vmem:[%s1 + $0x938] sm:$0xff]
      %v507 = vld [vmem:[%s1 + $0x940] sm:$0xff]
      %v508 = vld [vmem:[%s1 + $0x948] sm:$0xff]
      %v509 = vld [vmem:[%s1 + $0x950] sm:$0xff]
      %v510 = vld [vmem:[%s1 + $0x958] sm:$0xff]
      %v511 = vld [vmem:[%s1 + $0x960] sm:$0xff]
      %v512 = vld [vmem:[%s1 + $0x968] sm:$0xff]
      %v513 = vld [vmem:[%s1 + $0x970] sm:$0xff]
      %v514 = vld [vmem:[%s1 + $0x978] sm:$0xff]
      %v515 = vld [vmem:[%s1 + $0x980] sm:$0xff]
      %v516 = vld [vmem:[%s1 + $0x988] sm:$0xff]
      %v517 = vld [vmem:[%s1 + $0x990] sm:$0xff]
      %v518 = vld [vmem:[%s1 + $0x998] sm:$0xff]
      %v519 = vld [vmem:[%s1 + $0x9a0] sm:$0xff]
      %v520 = vld [vmem:[%s1 + $0x9a8] sm:$0xff]
      %v521 = vld [vmem:[%s1 + $0x9b0] sm:$0xff]
      %v522 = vld [vmem:[%s1 + $0x9b8] sm:$0xff]
      %v523 = vld [vmem:[%s1 + $0x9c0] sm:$0xff]
      %v524 = vld [vmem:[%s1 + $0x9c8] sm:$0xff]
      %v525 = vld [vmem:[%s1 + $0x9d0] sm:$0xff]
      %v526 = vld [vmem:[%s1 + $0x9d8] sm:$0xff]
      %v527 = vld [vmem:[%s1 + $0x9e0] sm:$0xff]
      %v528 = vld [vmem:[%s1 + $0x9e8] sm:$0xff]
      %v529 = vld [vmem:[%s1 + $0x9f0] sm:$0xff]
      %v530 = vld [vmem:[%s1 + $0x9f8] sm:$0xff]
      %v531 = vld [vmem:[%s1 + $0xa00] sm:$0xff]
      %v532 = vld [vmem:[%s1 + $0xa08] sm:$0xff]
      %v533 = vld [vmem:[%s1 + $0xa10] sm:$0xff]
      %v534 = vld [vmem:[%s1 + $0xa18] sm:$0xff]
      %v535 = vld [vmem:[%s1 + $0xa20] sm:$0xff]
      %v536 = vld [vmem:[%s1 + $0xa28] sm:$0xff]
      %v537 = vld [vmem:[%s1 + $0xa30] sm:$0xff]
      %v538 = vld [vmem:[%s1 + $0xa38] sm:$0xff]
      %v539 = vld [vmem:[%s1 + $0xa40] sm:$0xff]
      %v540 = vld [vmem:[%s1 + $0xa48] sm:$0xff]
      %v541 = vld [vmem:[%s1 + $0xa50] sm:$0xff]
      %v542 = vld [vmem:[%s1 + $0xa58] sm:$0xff]
      %v543 = vld [vmem:[%s1 + $0xa60] sm:$0xff]
      %v544 = vld [vmem:[%s1 + $0xa68] sm:$0xff]
      %v545 = vld [vmem:[%s1 + $0xa70] sm:$0xff]
      %v546 = vld [vmem:[%s1 + $0xa78] sm:$0xff]
      %v547 = vld [vmem:[%s1 + $0xa80] sm:$0xff]
      %v548 = vld [vmem:[%s1 + $0xa88] sm:$0xff]
      %v549 = vld [vmem:[%s1 + $0xa90] sm:$0xff]
      %v550 = vld [vmem:[%s1 + $0xa98] sm:$0xff]
      %v551 = vld [vmem:[%s1 + $0xaa0] sm:$0xff]
      %v552 = vld [vmem:[%s1 + $0xaa8] sm:$0xff]
      %v553 = vld [vmem:[%s1 + $0xab0] sm:$0xff]
      %v554 = vld [vmem:[%s1 + $0xab8] sm:$0xff]
      %v555 = vld [vmem:[%s1 + $0xac0] sm:$0xff]
      %v556 = vld [vmem:[%s1 + $0xac8] sm:$0xff]
      %v557 = vld [vmem:[%s1 + $0xad0] sm:$0xff]
      %v558 = vld [vmem:[%s1 + $0xad8] sm:$0xff]
      %v559 = vld [vmem:[%s1 + $0xae0] sm:$0xff]
      %v560 = vld [vmem:[%s1 + $0xae8] sm:$0xff]
      %v561 = vld [vmem:[%s1 + $0xaf0] sm:$0xff]
      %v562 = vld [vmem:[%s1 + $0xaf8] sm:$0xff]
      %v563 = vld [vmem:[%s1 + $0xb00] sm:$0xff]
      %v564 = vld [vmem:[%s1 + $0xb08] sm:$0xff]
      %v565 = vld [vmem:[%s1 + $0xb10] sm:$0xff]
      %v566 = vld [vmem:[%s1 + $0xb18] sm:$0xff]
      %v567 = vld [vmem:[%s1 + $0xb20] sm:$0xff]
      %v568 = vld [vmem:[%s1 + $0xb28] sm:$0xff]
      %v569 = vld [vmem:[%s1 + $0xb30] sm:$0xff]
      %v570 = vld [vmem:[%s1 + $0xb38] sm:$0xff]
      %v571 = vld [vmem:[%s1 + $0xb40] sm:$0xff]
      %v572 = vld [vmem:[%s1 + $0xb48] sm:$0xff]
      %v573 = vld [vmem:[%s1 + $0xb50] sm:$0xff]
      %v574 = vld [vmem:[%s1 + $0xb58] sm:$0xff]
      %v575 = vld [vmem:[%s1 + $0xb60] sm:$0xff]
      %v576 = vld [vmem:[%s1 + $0xb68] sm:$0xff]
      %v577 = vld [vmem:[%s1 + $0xb70] sm:$0xff]
      %v578 = vld [vmem:[%s1 + $0xb78] sm:$0xff]
      %v579 = vld [vmem:[%s1 + $0xb80] sm:$0xff]
      %v580 = vld [vmem:[%s1 + $0xb88] sm:$0xff]
      %v581 = vld [vmem:[%s1 + $0xb90] sm:$0xff]
      %v582 = vld [vmem:[%s1 + $0xb98] sm:$0xff]
      %v583 = vld [vmem:[%s1 + $0xba0] sm:$0xff]
      %v584 = vld [vmem:[%s1 + $0xba8] sm:$0xff]
      %v585 = vld [vmem:[%s1 + $0xbb0] sm:$0xff]
      %v586 = vld [vmem:[%s1 + $0xbb8] sm:$0xff]
      %v587 = vld [vmem:[%s1 + $0xbc0] sm:$0xff]
      %v588 = vld [vmem:[%s1 + $0xbc8] sm:$0xff]
      %v589 = vld [vmem:[%s1 + $0xbd0] sm:$0xff]
      %v590 = vld [vmem:[%s1 + $0xbd8] sm:$0xff]
      %v591 = vld [vmem:[%s1 + $0xbe0] sm:$0xff]
      %v592 = vld [vmem:[%s1 + $0xbe8] sm:$0xff]
      %v593 = vld [vmem:[%s1 + $0xbf0] sm:$0xff]
      %v594 = vld [vmem:[%s1 + $0xbf8] sm:$0xff]
      %v595 = vld [vmem:[%s1 + $0xc00] sm:$0xff]
      %v596 = vld [vmem:[%s1 + $0xc08] sm:$0xff]
      %v597 = vld [vmem:[%s1 + $0xc10] sm:$0xff]
      %v598 = vld [vmem:[%s1 + $0xc18] sm:$0xff]
      %v599 = vld [vmem:[%s1 + $0xc20] sm:$0xff]
      %v600 = vld [vmem:[%s1 + $0xc28] sm:$0xff]
      %v601 = vld [vmem:[%s1 + $0xc30] sm:$0xff]
      %v602 = vld [vmem:[%s1 + $0xc38] sm:$0xff]
      %v603 = vld [vmem:[%s1 + $0xc40] sm:$0xff]
      %v604 = vld [vmem:[%s1 + $0xc48] sm:$0xff]
      %v605 = vld [vmem:[%s1 + $0xc50] sm:$0xff]
      %v606 = vld [vmem:[%s1 + $0xc58] sm:$0xff]
      %v607 = vld [vmem:[%s1 + $0xc60] sm:$0xff]
      %v608 = vld [vmem:[%s1 + $0xc68] sm:$0xff]
      %v609 = vld [vmem:[%s1 + $0xc70] sm:$0xff]
      %v610 = vld [vmem:[%s1 + $0xc78] sm:$0xff]
      %v611 = vld [vmem:[%s1 + $0xc80] sm:$0xff]
      %v612 = vld [vmem:[%s1 + $0xc88] sm:$0xff]
      %v613 = vld [vmem:[%s1 + $0xc90] sm:$0xff]
      %v614 = vld [vmem:[%s1 + $0xc98] sm:$0xff]
      %v615 = vld [vmem:[%s1 + $0xca0] sm:$0xff]
      %v616 = vld [vmem:[%s1 + $0xca8] sm:$0xff]
      %v617 = vld [vmem:[%s1 + $0xcb0] sm:$0xff]
      %v618 = vld [vmem:[%s1 + $0xcb8] sm:$0xff]
      %v619 = vld [vmem:[%s1 + $0xcc0] sm:$0xff]
      %v620 = vld [vmem:[%s1 + $0xcc8] sm:$0xff]
      %v621 = vld [vmem:[%s1 + $0xcd0] sm:$0xff]
      %v622 = vld [vmem:[%s1 + $0xcd8] sm:$0xff]
      %v623 = vld [vmem:[%s1 + $0xce0] sm:$0xff]
      %v624 = vld [vmem:[%s1 + $0xce8] sm:$0xff]
      %v625 = vld [vmem:[%s1 + $0xcf0] sm:$0xff]
      %v626 = vld [vmem:[%s1 + $0xcf8] sm:$0xff]
      %v627 = vld [vmem:[%s1 + $0xd00] sm:$0xff]
      %v628 = vld [vmem:[%s1 + $0xd08] sm:$0xff]
      %v629 = vld [vmem:[%s1 + $0xd10] sm:$0xff]
      %v630 = vld [vmem:[%s1 + $0xd18] sm:$0xff]
      %v631 = vld [vmem:[%s1 + $0xd20] sm:$0xff]
      %v632 = vld [vmem:[%s1 + $0xd28] sm:$0xff]
      %v633 = vld [vmem:[%s1 + $0xd30] sm:$0xff]
      %v634 = vld [vmem:[%s1 + $0xd38] sm:$0xff]
      %v635 = vld [vmem:[%s1 + $0xd40] sm:$0xff]
      %v636 = vld [vmem:[%s1 + $0xd48] sm:$0xff]
      %v637 = vld [vmem:[%s1 + $0xd50] sm:$0xff]
      %v638 = vld [vmem:[%s1 + $0xd58] sm:$0xff]
      %v639 = vld [vmem:[%s1 + $0xd60] sm:$0xff]
      %v640 = vld [vmem:[%s1 + $0xd68] sm:$0xff]
      %v641 = vld [vmem:[%s1 + $0xd70] sm:$0xff]
      %v642 = vld [vmem:[%s1 + $0xd78] sm:$0xff]
      %v643 = vld [vmem:[%s1 + $0xd80] sm:$0xff]
      %v644 = vld [vmem:[%s1 + $0xd88] sm:$0xff]
      %v645 = vld [vmem:[%s1 + $0xd90] sm:$0xff]
      %v646 = vld [vmem:[%s1 + $0xd98] sm:$0xff]
      %v647 = vld [vmem:[%s1 + $0xda0] sm:$0xff]
      %v648 = vld [vmem:[%s1 + $0xda8] sm:$0xff]
      %v649 = vld [vmem:[%s1 + $0xdb0] sm:$0xff]
      %v650 = vld [vmem:[%s1 + $0xdb8] sm:$0xff]
      %v651 = vld [vmem:[%s1 + $0xdc0] sm:$0xff]
      %v652 = vld [vmem:[%s1 + $0xdc8] sm:$0xff]
      %v653 = vld [vmem:[%s1 + $0xdd0] sm:$0xff]
      %v654 = vld [vmem:[%s1 + $0xdd8] sm:$0xff]
      %v655 = vld [vmem:[%s1 + $0xde0] sm:$0xff]
      %v656 = vld [vmem:[%s1 + $0xde8] sm:$0xff]
      %v657 = vld [vmem:[%s1 + $0xdf0] sm:$0xff]
      %v658 = vld [vmem:[%s1 + $0xdf8] sm:$0xff]
      %v659 = vld [vmem:[%s1 + $0xe00] sm:$0xff]
      %v660 = vld [vmem:[%s1 + $0xe08] sm:$0xff]
      %v661 = vld [vmem:[%s1 + $0xe10] sm:$0xff]
      %v662 = vld [vmem:[%s1 + $0xe18] sm:$0xff]
      %v663 = vld [vmem:[%s1 + $0xe20] sm:$0xff]
      %v664 = vld [vmem:[%s1 + $0xe28] sm:$0xff]
      %v665 = vld [vmem:[%s1 + $0xe30] sm:$0xff]
      %v666 = vld [vmem:[%s1 + $0xe38] sm:$0xff]
      %v667 = vld [vmem:[%s1 + $0xe40] sm:$0xff]
      %v668 = vld [vmem:[%s1 + $0xe48] sm:$0xff]
      %v669 = vld [vmem:[%s1 + $0xe50] sm:$0xff]
      %v670 = vld [vmem:[%s1 + $0xe58] sm:$0xff]
      %v671 = vld [vmem:[%s1 + $0xe60] sm:$0xff]
      %v672 = vld [vmem:[%s1 + $0xe68] sm:$0xff]
      %v673 = vld [vmem:[%s1 + $0xe70] sm:$0xff]
      %v674 = vld [vmem:[%s1 + $0xe78] sm:$0xff]
      %v675 = vld [vmem:[%s1 + $0xe80] sm:$0xff]
      %v676 = vld [vmem:[%s1 + $0xe88] sm:$0xff]
      %v677 = vld [vmem:[%s1 + $0xe90] sm:$0xff]
      %v678 = vld [vmem:[%s1 + $0xe98] sm:$0xff]
      %v679 = vld [vmem:[%s1 + $0xea0] sm:$0xff]
      %v680 = vld [vmem:[%s1 + $0xea8] sm:$0xff]
      %v681 = vld [vmem:[%s1 + $0xeb0] sm:$0xff]
      %v682 = vld [vmem:[%s1 + $0xeb8] sm:$0xff]
      %v683 = vld [vmem:[%s1 + $0xec0] sm:$0xff]
      %v684 = vld [vmem:[%s1 + $0xec8] sm:$0xff]
      %v685 = vld [vmem:[%s1 + $0xed0] sm:$0xff]
      %v686 = vld [vmem:[%s1 + $0xed8] sm:$0xff]
      %v687 = vld [vmem:[%s1 + $0xee0] sm:$0xff]
      %v688 = vld [vmem:[%s1 + $0xee8] sm:$0xff]
      %v689 = vld [vmem:[%s1 + $0xef0] sm:$0xff]
      %v690 = vld [vmem:[%s1 + $0xef8] sm:$0xff]
      %v691 = vld [vmem:[%s1 + $0xf00] sm:$0xff]
      %v692 = vld [vmem:[%s1 + $0xf08] sm:$0xff]
      %v693 = vld [vmem:[%s1 + $0xf10] sm:$0xff]
      %v694 = vld [vmem:[%s1 + $0xf18] sm:$0xff]
      %v695 = vld [vmem:[%s1 + $0xf20] sm:$0xff]
      %v696 = vld [vmem:[%s1 + $0xf28] sm:$0xff]
      %v697 = vld [vmem:[%s1 + $0xf30] sm:$0xff]
      %v698 = vld [vmem:[%s1 + $0xf38] sm:$0xff]
      %v699 = vld [vmem:[%s1 + $0xf40] sm:$0xff]
      %v700 = vld [vmem:[%s1 + $0xf48] sm:$0xff]
      %v701 = vld [vmem:[%s1 + $0xf50] sm:$0xff]
      %v702 = vld [vmem:[%s1 + $0xf58] sm:$0xff]
      %v703 = vld [vmem:[%s1 + $0xf60] sm:$0xff]
      %v704 = vld [vmem:[%s1 + $0xf68] sm:$0xff]
      %v705 = vld [vmem:[%s1 + $0xf70] sm:$0xff]
      %v706 = vld [vmem:[%s1 + $0xf78] sm:$0xff]
      %v707 = vld [vmem:[%s1 + $0xf80] sm:$0xff]
      %v708 = vld [vmem:[%s1 + $0xf88] sm:$0xff]
      %v709 = vld [vmem:[%s1 + $0xf90] sm:$0xff]
      %v710 = vld [vmem:[%s1 + $0xf98] sm:$0xff]
      %v711 = vld [vmem:[%s1 + $0xfa0] sm:$0xff]
      %v712 = vld [vmem:[%s1 + $0xfa8] sm:$0xff]
      %v713 = vld [vmem:[%s1 + $0xfb0] sm:$0xff]
      %v714 = vld [vmem:[%s1 + $0xfb8] sm:$0xff]
      %v715 = vld [vmem:[%s1 + $0xfc0] sm:$0xff]
      %v716 = vld [vmem:[%s1 + $0xfc8] sm:$0xff]
      %v717 = vld [vmem:[%s1 + $0xfd0] sm:$0xff]
      %v718 = vld [vmem:[%s1 + $0xfd8] sm:$0xff]
      %v719 = vld [vmem:[%s1 + $0xfe0] sm:$0xff]
      %v720 = vld [vmem:[%s1 + $0xfe8] sm:$0xff]
      %v721 = vld [vmem:[%s1 + $0xff0] sm:$0xff]
      %v722 = vld [vmem:[%s1 + $0xff8] sm:$0xff]
      %v723 = vld [vmem:[%s1 + $0x1000] sm:$0xff]
      %v724 = vld [vmem:[%s1 + $0x1008] sm:$0xff]
      %v725 = vld [vmem:[%s1 + $0x1010] sm:$0xff]
      %v726 = vld [vmem:[%s1 + $0x1018] sm:$0xff]
      %v727 = vld [vmem:[%s1 + $0x1020] sm:$0xff]
      %v728 = vld [vmem:[%s1 + $0x1028] sm:$0xff]
      %v729 = vld [vmem:[%s1 + $0x1030] sm:$0xff]
      %v730 = vld [vmem:[%s1 + $0x1038] sm:$0xff]
      %v731 = vld [vmem:[%s1 + $0x1040] sm:$0xff]
      %v732 = vld [vmem:[%s1 + $0x1048] sm:$0xff]
      %v733 = vld [vmem:[%s1 + $0x1050] sm:$0xff]
      %v734 = vld [vmem:[%s1 + $0x1058] sm:$0xff]
      %v735 = vld [vmem:[%s1 + $0x1060] sm:$0xff]
      %v736 = vld [vmem:[%s1 + $0x1068] sm:$0xff]
      %v737 = vld [vmem:[%s1 + $0x1070] sm:$0xff]
      %v738 = vld [vmem:[%s1 + $0x1078] sm:$0xff]
      %v739 = vld [vmem:[%s1 + $0x1080] sm:$0xff]
      %v740 = vld [vmem:[%s1 + $0x1088] sm:$0xff]
      %v741 = vld [vmem:[%s1 + $0x1090] sm:$0xff]
      %v742 = vld [vmem:[%s1 + $0x1098] sm:$0xff]
      %v743 = vld [vmem:[%s1 + $0x10a0] sm:$0xff]
      %v744 = vld [vmem:[%s1 + $0x10a8] sm:$0xff]
      %v745 = vld [vmem:[%s1 + $0x10b0] sm:$0xff]
      %v746 = vld [vmem:[%s1 + $0x10b8] sm:$0xff]
      %v747 = vld [vmem:[%s1 + $0x10c0] sm:$0xff]
      %v748 = vld [vmem:[%s1 + $0x10c8] sm:$0xff]
      %v749 = vld [vmem:[%s1 + $0x10d0] sm:$0xff]
      %v750 = vld [vmem:[%s1 + $0x10d8] sm:$0xff]
      %v751 = vld [vmem:[%s1 + $0x10e0] sm:$0xff]
      %v752 = vld [vmem:[%s1 + $0x10e8] sm:$0xff]
      %v753 = vld [vmem:[%s1 + $0x10f0] sm:$0xff]
      %v754 = vld [vmem:[%s1 + $0x10f8] sm:$0xff]
      %v755 = vld [vmem:[%s1 + $0x1100] sm:$0xff]
      %v756 = vld [vmem:[%s1 + $0x1108] sm:$0xff]
      %v757 = vld [vmem:[%s1 + $0x1110] sm:$0xff]
      %v758 = vld [vmem:[%s1 + $0x1118] sm:$0xff]
      %v759 = vld [vmem:[%s1 + $0x1120] sm:$0xff]
      %v760 = vld [vmem:[%s1 + $0x1128] sm:$0xff]
      %v761 = vld [vmem:[%s1 + $0x1130] sm:$0xff]
      %v762 = vld [vmem:[%s1 + $0x1138] sm:$0xff]
      %v763 = vld [vmem:[%s1 + $0x1140] sm:$0xff]
      %v764 = vld [vmem:[%s1 + $0x1148] sm:$0xff]
      %v765 = vld [vmem:[%s1 + $0x1150] sm:$0xff]
      %v766 = vld [vmem:[%s1 + $0x1158] sm:$0xff]
      %v767 = vld [vmem:[%s1 + $0x1160] sm:$0xff]
      %v768 = vld [vmem:[%s1 + $0x1168] sm:$0xff]
      %v769 = vld [vmem:[%s1 + $0x1170] sm:$0xff]
      %v770 = vld [vmem:[%s1 + $0x1178] sm:$0xff]
      %v771 = vld [vmem:[%s1 + $0x1180] sm:$0xff]
      %v772 = vld [vmem:[%s1 + $0x1188] sm:$0xff]
      %v773 = vld [vmem:[%s1 + $0x1190] sm:$0xff]
      %v774 = vld [vmem:[%s1 + $0x1198] sm:$0xff]
      %v775 = vld [vmem:[%s1 + $0x11a0] sm:$0xff]
      %v776 = vld [vmem:[%s1 + $0x11a8] sm:$0xff]
      %v777 = vld [vmem:[%s1 + $0x11b0] sm:$0xff]
      %v778 = vld [vmem:[%s1 + $0x11b8] sm:$0xff]
      %v779 = vld [vmem:[%s1 + $0x11c0] sm:$0xff]
      %v780 = vld [vmem:[%s1 + $0x11c8] sm:$0xff]
      %v781 = vld [vmem:[%s1 + $0x11d0] sm:$0xff]
      %v782 = vld [vmem:[%s1 + $0x11d8] sm:$0xff]
      %v783 = vld [vmem:[%s1 + $0x11e0] sm:$0xff]
      %v784 = vld [vmem:[%s1 + $0x11e8] sm:$0xff]
      %v785 = vld [vmem:[%s1 + $0x11f0] sm:$0xff]
      %v786 = vld [vmem:[%s1 + $0x11f8] sm:$0xff]
      %v787 = vld [vmem:[%s1 + $0x1200] sm:$0xff]
      %v788 = vld [vmem:[%s1 + $0x1208] sm:$0xff]
      %v789 = vld [vmem:[%s1 + $0x1210] sm:$0xff]
      %v790 = vld [vmem:[%s1 + $0x1218] sm:$0xff]
      %v791 = vld [vmem:[%s1 + $0x1220] sm:$0xff]
      %v792 = vld [vmem:[%s1 + $0x1228] sm:$0xff]
      %v793 = vld [vmem:[%s1 + $0x1230] sm:$0xff]
      %v794 = vld [vmem:[%s1 + $0x1238] sm:$0xff]
      %v795 = vld [vmem:[%s1 + $0x1240] sm:$0xff]
      %v796 = vld [vmem:[%s1 + $0x1248] sm:$0xff]
      %v797 = vld [vmem:[%s1 + $0x1250] sm:$0xff]
      %v798 = vld [vmem:[%s1 + $0x1258] sm:$0xff]
      %v799 = vld [vmem:[%s1 + $0x1260] sm:$0xff]
      %v800 = vld [vmem:[%s1 + $0x1268] sm:$0xff]
      %v801 = vld [vmem:[%s1 + $0x1270] sm:$0xff]
      %v802 = vld [vmem:[%s1 + $0x1278] sm:$0xff]
      %v803 = vld [vmem:[%s1 + $0x1280] sm:$0xff]
      %v804 = vld [vmem:[%s1 + $0x1288] sm:$0xff]
      %v805 = vld [vmem:[%s1 + $0x1290] sm:$0xff]
      %v806 = vld [vmem:[%s1 + $0x1298] sm:$0xff]
      %v807 = vld [vmem:[%s1 + $0x12a0] sm:$0xff]
      %v808 = vld [vmem:[%s1 + $0x12a8] sm:$0xff]
      %v809 = vld [vmem:[%s1 + $0x12b0] sm:$0xff]
      %v810 = vld [vmem:[%s1 + $0x12b8] sm:$0xff]
      %v811 = vld [vmem:[%s1 + $0x12c0] sm:$0xff]
      %v812 = vld [vmem:[%s1 + $0x12c8] sm:$0xff]
      %v813 = vld [vmem:[%s1 + $0x12d0] sm:$0xff]
      %v814 = vld [vmem:[%s1 + $0x12d8] sm:$0xff]
      %v815 = vld [vmem:[%s1 + $0x12e0] sm:$0xff]
      %v816 = vld [vmem:[%s1 + $0x12e8] sm:$0xff]
      %v817 = vld [vmem:[%s1 + $0x12f0] sm:$0xff]
      %v818 = vld [vmem:[%s1 + $0x12f8] sm:$0xff]
      %v819 = vld [vmem:[%s1 + $0x1300] sm:$0xff]
      %v820 = vld [vmem:[%s1 + $0x1308] sm:$0xff]
      %v821 = vld [vmem:[%s1 + $0x1310] sm:$0xff]
      %v822 = vld [vmem:[%s1 + $0x1318] sm:$0xff]
      %v823 = vld [vmem:[%s1 + $0x1320] sm:$0xff]
      %v824 = vld [vmem:[%s1 + $0x1328] sm:$0xff]
      %v825 = vld [vmem:[%s1 + $0x1330] sm:$0xff]
      %v826 = vld [vmem:[%s1 + $0x1338] sm:$0xff]
      %v827 = vld [vmem:[%s1 + $0x1340] sm:$0xff]
      %v828 = vld [vmem:[%s1 + $0x1348] sm:$0xff]
      %v829 = vld [vmem:[%s1 + $0x1350] sm:$0xff]
      %v830 = vld [vmem:[%s1 + $0x1358] sm:$0xff]
      %v831 = vld [vmem:[%s1 + $0x1360] sm:$0xff]
      %v832 = vld [vmem:[%s1 + $0x1368] sm:$0xff]
      %v833 = vld [vmem:[%s1 + $0x1370] sm:$0xff]
      %v834 = vld [vmem:[%s1 + $0x1378] sm:$0xff]
      %v835 = vld [vmem:[%s1 + $0x1380] sm:$0xff]
      %v836 = vld [vmem:[%s1 + $0x1388] sm:$0xff]
      %v837 = vld [vmem:[%s1 + $0x1390] sm:$0xff]
      %v838 = vld [vmem:[%s1 + $0x1398] sm:$0xff]
      %v839 = vld [vmem:[%s1 + $0x13a0] sm:$0xff]
      %v840 = vld [vmem:[%s1 + $0x13a8] sm:$0xff]
      %v841 = vld [vmem:[%s1 + $0x13b0] sm:$0xff]
      %v842 = vld [vmem:[%s1 + $0x13b8] sm:$0xff]
      %v843 = vld [vmem:[%s1 + $0x13c0] sm:$0xff]
      %v844 = vld [vmem:[%s1 + $0x13c8] sm:$0xff]
      %v845 = vld [vmem:[%s1 + $0x13d0] sm:$0xff]
      %v846 = vld [vmem:[%s1 + $0x13d8] sm:$0xff]
      %v847 = vld [vmem:[%s1 + $0x13e0] sm:$0xff]
      %v848 = vld [vmem:[%s1 + $0x13e8] sm:$0xff]
      %v849 = vld [vmem:[%s1 + $0x13f0] sm:$0xff]
      %v850 = vld [vmem:[%s1 + $0x13f8] sm:$0xff]
      %v851 = vld [vmem:[%s1 + $0x1400] sm:$0xff]
      %v852 = vld [vmem:[%s1 + $0x1408] sm:$0xff]
      %v853 = vld [vmem:[%s1 + $0x1410] sm:$0xff]
      %v854 = vld [vmem:[%s1 + $0x1418] sm:$0xff]
      %v855 = vld [vmem:[%s1 + $0x1420] sm:$0xff]
      %v856 = vld [vmem:[%s1 + $0x1428] sm:$0xff]
      %v857 = vld [vmem:[%s1 + $0x1430] sm:$0xff]
      %v858 = vld [vmem:[%s1 + $0x1438] sm:$0xff]
      %v859 = vld [vmem:[%s1 + $0x1440] sm:$0xff]
      %v860 = vld [vmem:[%s1 + $0x1448] sm:$0xff]
      %v861 = vld [vmem:[%s1 + $0x1450] sm:$0xff]
      %v862 = vld [vmem:[%s1 + $0x1458] sm:$0xff]
      %v863 = vld [vmem:[%s1 + $0x1460] sm:$0xff]
      %v864 = vld [vmem:[%s1 + $0x1468] sm:$0xff]
      %v865 = vld [vmem:[%s1 + $0x1470] sm:$0xff]
      %v866 = vld [vmem:[%s1 + $0x1478] sm:$0xff]
      %v867 = vld [vmem:[%s1 + $0x1480] sm:$0xff]
      %v868 = vld [vmem:[%s1 + $0x1488] sm:$0xff]
      %v869 = vld [vmem:[%s1 + $0x1490] sm:$0xff]
      %v870 = vld [vmem:[%s1 + $0x1498] sm:$0xff]
      %v871 = vld [vmem:[%s1 + $0x14a0] sm:$0xff]
      %v872 = vld [vmem:[%s1 + $0x14a8] sm:$0xff]
      %v873 = vld [vmem:[%s1 + $0x14b0] sm:$0xff]
      %v874 = vld [vmem:[%s1 + $0x14b8] sm:$0xff]
      %v875 = vld [vmem:[%s1 + $0x14c0] sm:$0xff]
      %v876 = vld [vmem:[%s1 + $0x14c8] sm:$0xff]
      %v877 = vld [vmem:[%s1 + $0x14d0] sm:$0xff]
      %v878 = vld [vmem:[%s1 + $0x14d8] sm:$0xff]
      %v879 = vld [vmem:[%s1 + $0x14e0] sm:$0xff]
      %v880 = vld [vmem:[%s1 + $0x14e8] sm:$0xff]
      %v881 = vld [vmem:[%s1 + $0x14f0] sm:$0xff]
      %v882 = vld [vmem:[%s1 + $0x14f8] sm:$0xff]
      %v883 = vld [vmem:[%s1 + $0x1500] sm:$0xff]
      %v884 = vld [vmem:[%s1 + $0x1508] sm:$0xff]
      %v885 = vld [vmem:[%s1 + $0x1510] sm:$0xff]
      %v886 = vld [vmem:[%s1 + $0x1518] sm:$0xff]
      %v887 = vld [vmem:[%s1 + $0x1520] sm:$0xff]
      %v888 = vld [vmem:[%s1 + $0x1528] sm:$0xff]
      %v889 = vld [vmem:[%s1 + $0x1530] sm:$0xff]
      %v890 = vld [vmem:[%s1 + $0x1538] sm:$0xff]
      %v891 = vld [vmem:[%s1 + $0x1540] sm:$0xff]
      %v892 = vld [vmem:[%s1 + $0x1548] sm:$0xff]
      %v893 = vld [vmem:[%s1 + $0x1550] sm:$0xff]
      %v894 = vld [vmem:[%s1 + $0x1558] sm:$0xff]
      %v895 = vld [vmem:[%s1 + $0x1560] sm:$0xff]
      %v896 = vld [vmem:[%s1 + $0x1568] sm:$0xff]
      %v897 = vld [vmem:[%s1 + $0x1570] sm:$0xff]
      %v898 = vld [vmem:[%s1 + $0x1578] sm:$0xff]
      %v899 = vld [vmem:[%s1 + $0x1580] sm:$0xff]
      %v900 = vld [vmem:[%s1 + $0x1588] sm:$0xff]
      %v901 = vld [vmem:[%s1 + $0x1590] sm:$0xff]
      %v902 = vld [vmem:[%s1 + $0x1598] sm:$0xff]
      %v903 = vld [vmem:[%s1 + $0x15a0] sm:$0xff]
      %v904 = vld [vmem:[%s1 + $0x15a8] sm:$0xff]
      %v905 = vld [vmem:[%s1 + $0x15b0] sm:$0xff]
      %v906 = vld [vmem:[%s1 + $0x15b8] sm:$0xff]
      %v907 = vld [vmem:[%s1 + $0x15c0] sm:$0xff]
      %v908 = vld [vmem:[%s1 + $0x15c8] sm:$0xff]
      %v909 = vld [vmem:[%s1 + $0x15d0] sm:$0xff]
      %v910 = vld [vmem:[%s1 + $0x15d8] sm:$0xff]
      %v911 = vld [vmem:[%s1 + $0x15e0] sm:$0xff]
      %v912 = vld [vmem:[%s1 + $0x15e8] sm:$0xff]
      %v913 = vld [vmem:[%s1 + $0x15f0] sm:$0xff]
      %v914 = vld [vmem:[%s1 + $0x15f8] sm:$0xff]
      %v915 = vld [vmem:[%s1 + $0x1600] sm:$0xff]
      %v916 = vld [vmem:[%s1 + $0x1608] sm:$0xff]
      %v917 = vld [vmem:[%s1 + $0x1610] sm:$0xff]
      %v918 = vld [vmem:[%s1 + $0x1618] sm:$0xff]
      %v919 = vld [vmem:[%s1 + $0x1620] sm:$0xff]
      %v920 = vld [vmem:[%s1 + $0x1628] sm:$0xff]
      %v921 = vld [vmem:[%s1 + $0x1630] sm:$0xff]
      %v922 = vld [vmem:[%s1 + $0x1638] sm:$0xff]
      %v923 = vld [vmem:[%s1 + $0x1640] sm:$0xff]
      %v924 = vld [vmem:[%s1 + $0x1648] sm:$0xff]
      %v925 = vld [vmem:[%s1 + $0x1650] sm:$0xff]
      %v926 = vld [vmem:[%s1 + $0x1658] sm:$0xff]
      %v927 = vld [vmem:[%s1 + $0x1660] sm:$0xff]
      %v928 = vld [vmem:[%s1 + $0x1668] sm:$0xff]
      %v929 = vld [vmem:[%s1 + $0x1670] sm:$0xff]
      %v930 = vld [vmem:[%s1 + $0x1678] sm:$0xff]
      %v931 = vld [vmem:[%s1 + $0x1680] sm:$0xff]
      %v932 = vld [vmem:[%s1 + $0x1688] sm:$0xff]
      %v933 = vld [vmem:[%s1 + $0x1690] sm:$0xff]
      %v934 = vld [vmem:[%s1 + $0x1698] sm:$0xff]
      %v935 = vld [vmem:[%s1 + $0x16a0] sm:$0xff]
      %v936 = vld [vmem:[%s1 + $0x16a8] sm:$0xff]
      %v937 = vld [vmem:[%s1 + $0x16b0] sm:$0xff]
      %v938 = vld [vmem:[%s1 + $0x16b8] sm:$0xff]
      %v939 = vld [vmem:[%s1 + $0x16c0] sm:$0xff]
      %v940 = vld [vmem:[%s1 + $0x16c8] sm:$0xff]
      %v941 = vld [vmem:[%s1 + $0x16d0] sm:$0xff]
      %v942 = vld [vmem:[%s1 + $0x16d8] sm:$0xff]
      %v943 = vld [vmem:[%s1 + $0x16e0] sm:$0xff]
      %v944 = vld [vmem:[%s1 + $0x16e8] sm:$0xff]
      %v945 = vld [vmem:[%s1 + $0x16f0] sm:$0xff]
      %v946 = vld [vmem:[%s1 + $0x16f8] sm:$0xff]
      %v947 = vld [vmem:[%s1 + $0x1700] sm:$0xff]
      %v948 = vld [vmem:[%s1 + $0x1708] sm:$0xff]
      %v949 = vld [vmem:[%s1 + $0x1710] sm:$0xff]
      %v950 = vld [vmem:[%s1 + $0x1718] sm:$0xff]
      %v951 = vld [vmem:[%s1 + $0x1720] sm:$0xff]
      %v952 = vld [vmem:[%s1 + $0x1728] sm:$0xff]
      %v953 = vld [vmem:[%s1 + $0x1730] sm:$0xff]
      %v954 = vld [vmem:[%s1 + $0x1738] sm:$0xff]
      %v955 = vld [vmem:[%s1 + $0x1740] sm:$0xff]
      %v956 = vld [vmem:[%s1 + $0x1748] sm:$0xff]
      %v957 = vld [vmem:[%s1 + $0x1750] sm:$0xff]
      %v958 = vld [vmem:[%s1 + $0x1758] sm:$0xff]
      %v959 = vld [vmem:[%s1 + $0x1760] sm:$0xff]
      %v960 = vld [vmem:[%s1 + $0x1768] sm:$0xff]
      %v961 = vld [vmem:[%s1 + $0x1770] sm:$0xff]
      %v962 = vld [vmem:[%s1 + $0x1778] sm:$0xff]
      %v963 = vld [vmem:[%s1 + $0x1780] sm:$0xff]
      %v964 = vld [vmem:[%s1 + $0x1788] sm:$0xff]
      %v965 = vld [vmem:[%s1 + $0x1790] sm:$0xff]
      %v966 = vld [vmem:[%s1 + $0x1798] sm:$0xff]
      %v967 = vld [vmem:[%s1 + $0x17a0] sm:$0xff]
      %v968 = vld [vmem:[%s1 + $0x17a8] sm:$0xff]
      %v969 = vld [vmem:[%s1 + $0x17b0] sm:$0xff]
      %v970 = vld [vmem:[%s1 + $0x17b8] sm:$0xff]
      %v971 = vld [vmem:[%s1 + $0x17c0] sm:$0xff]
      %v972 = vld [vmem:[%s1 + $0x17c8] sm:$0xff]
      %v973 = vld [vmem:[%s1 + $0x17d0] sm:$0xff]
      %v974 = vld [vmem:[%s1 + $0x17d8] sm:$0xff]
      %v975 = vld [vmem:[%s1 + $0x17e0] sm:$0xff]
      %v976 = vld [vmem:[%s1 + $0x17e8] sm:$0xff]
      %v977 = vld [vmem:[%s1 + $0x17f0] sm:$0xff]
      %v978 = vld [vmem:[%s1 + $0x17f8] sm:$0xff]
      %v979 = vld [vmem:[%s1 + $0x1800] sm:$0xff]
      %v980 = vld [vmem:[%s1 + $0x1808] sm:$0xff]
      %v981 = vld [vmem:[%s1 + $0x1810] sm:$0xff]
      %v982 = vld [vmem:[%s1 + $0x1818] sm:$0xff]
      %v983 = vld [vmem:[%s1 + $0x1820] sm:$0xff]
      %v984 = vld [vmem:[%s1 + $0x1828] sm:$0xff]
      %v985 = vld [vmem:[%s1 + $0x1830] sm:$0xff]
      %v986 = vld [vmem:[%s1 + $0x1838] sm:$0xff]
      %v987 = vld [vmem:[%s1 + $0x1840] sm:$0xff]
      %v988 = vld [vmem:[%s1 + $0x1848] sm:$0xff]
      %v989 = vld [vmem:[%s1 + $0x1850] sm:$0xff]
      %v990 = vld [vmem:[%s1 + $0x1858] sm:$0xff]
      %v991 = vld [vmem:[%s1 + $0x1860] sm:$0xff]
      %v992 = vld [vmem:[%s1 + $0x1868] sm:$0xff]
      %v993 = vld [vmem:[%s1 + $0x1870] sm:$0xff]
      %v994 = vld [vmem:[%s1 + $0x1878] sm:$0xff]
      %v995 = vld [vmem:[%s1 + $0x1880] sm:$0xff]
      %v996 = vld [vmem:[%s1 + $0x1888] sm:$0xff]
      %v997 = vld [vmem:[%s1 + $0x1890] sm:$0xff]
      %v998 = vld [vmem:[%s1 + $0x1898] sm:$0xff]
      %v999 = vld [vmem:[%s1 + $0x18a0] sm:$0xff]
      %v1000 = vld [vmem:[%s1 + $0x18a8] sm:$0xff]
      %v1001 = vld [vmem:[%s1 + $0x18b0] sm:$0xff]
      %v1002 = vld [vmem:[%s1 + $0x18b8] sm:$0xff]
      %v1003 = vld [vmem:[%s1 + $0x18c0] sm:$0xff]
      %v1004 = vld [vmem:[%s1 + $0x18c8] sm:$0xff]
      %v1005 = vld [vmem:[%s1 + $0x18d0] sm:$0xff]
      %v1006 = vld [vmem:[%s1 + $0x18d8] sm:$0xff]
      %v1007 = vld [vmem:[%s1 + $0x18e0] sm:$0xff]
      %v1008 = vld [vmem:[%s1 + $0x18e8] sm:$0xff]
      %v1009 = vld [vmem:[%s1 + $0x18f0] sm:$0xff]
      %v1010 = vld [vmem:[%s1 + $0x18f8] sm:$0xff]
      %v1011 = vld [vmem:[%s1 + $0x1900] sm:$0xff]
      %v1012 = vld [vmem:[%s1 + $0x1908] sm:$0xff]
      %v1013 = vld [vmem:[%s1 + $0x1910] sm:$0xff]
      %v1014 = vld [vmem:[%s1 + $0x1918] sm:$0xff]
      %v1015 = vld [vmem:[%s1 + $0x1920] sm:$0xff]
      %v1016 = vld [vmem:[%s1 + $0x1928] sm:$0xff]
      %v1017 = vld [vmem:[%s1 + $0x1930] sm:$0xff]
      %v1018 = vld [vmem:[%s1 + $0x1938] sm:$0xff]
      %v1019 = vld [vmem:[%s1 + $0x1940] sm:$0xff]
      %v1020 = vld [vmem:[%s1 + $0x1948] sm:$0xff]
      %v1021 = vld [vmem:[%s1 + $0x1950] sm:$0xff]
      %v1022 = vld [vmem:[%s1 + $0x1958] sm:$0xff]
      %v1023 = vld [vmem:[%s1 + $0x1960] sm:$0xff]
      %v1024 = vld [vmem:[%s1 + $0x1968] sm:$0xff]
      %v1025 = vld [vmem:[%s1 + $0x1970] sm:$0xff]
      %v1026 = vld [vmem:[%s1 + $0x1978] sm:$0xff]
      %v1027 = vld [vmem:[%s1 + $0x1980] sm:$0xff]
      %v1028 = vld [vmem:[%s1 + $0x1988] sm:$0xff]
      %v1029 = vld [vmem:[%s1 + $0x1990] sm:$0xff]
      %v1030 = vld [vmem:[%s1 + $0x1998] sm:$0xff]
      %v1031 = vld [vmem:[%s1 + $0x19a0] sm:$0xff]
      %v1032 = vld [vmem:[%s1 + $0x19a8] sm:$0xff]
      %v1033 = vld [vmem:[%s1 + $0x19b0] sm:$0xff]
      %v1034 = vld [vmem:[%s1 + $0x19b8] sm:$0xff]
      %v1035 = vld [vmem:[%s1 + $0x19c0] sm:$0xff]
      %v1036 = vld [vmem:[%s1 + $0x19c8] sm:$0xff]
      %v1037 = vld [vmem:[%s1 + $0x19d0] sm:$0xff]
      %v1038 = vld [vmem:[%s1 + $0x19d8] sm:$0xff]
      %v1039 = vld [vmem:[%s1 + $0x19e0] sm:$0xff]
      %v1040 = vld [vmem:[%s1 + $0x19e8] sm:$0xff]
      %v1041 = vld [vmem:[%s1 + $0x19f0] sm:$0xff]
      %v1042 = vld [vmem:[%s1 + $0x19f8] sm:$0xff]
      %v1043 = vld [vmem:[%s1 + $0x1a00] sm:$0xff]
      %v1044 = vld [vmem:[%s1 + $0x1a08] sm:$0xff]
      %v1045 = vld [vmem:[%s1 + $0x1a10] sm:$0xff]
      %v1046 = vld [vmem:[%s1 + $0x1a18] sm:$0xff]
      %v1047 = vld [vmem:[%s1 + $0x1a20] sm:$0xff]
      %v1048 = vld [vmem:[%s1 + $0x1a28] sm:$0xff]
      %v1049 = vld [vmem:[%s1 + $0x1a30] sm:$0xff]
      %v1050 = vld [vmem:[%s1 + $0x1a38] sm:$0xff]
      %v1051 = vld [vmem:[%s1 + $0x1a40] sm:$0xff]
      %v1052 = vld [vmem:[%s1 + $0x1a48] sm:$0xff]
      %v1053 = vld [vmem:[%s1 + $0x1a50] sm:$0xff]
      %v1054 = vld [vmem:[%s1 + $0x1a58] sm:$0xff]
      %v1055 = vld [vmem:[%s1 + $0x1a60] sm:$0xff]
      %v1056 = vld [vmem:[%s1 + $0x1a68] sm:$0xff]
      %v1057 = vld [vmem:[%s1 + $0x1a70] sm:$0xff]
      %v1058 = vld [vmem:[%s1 + $0x1a78] sm:$0xff]
      %v1059 = vld [vmem:[%s1 + $0x1a80] sm:$0xff]
      %v1060 = vld [vmem:[%s1 + $0x1a88] sm:$0xff]
      %v1061 = vld [vmem:[%s1 + $0x1a90] sm:$0xff]
      %v1062 = vld [vmem:[%s1 + $0x1a98] sm:$0xff]
      %v1063 = vld [vmem:[%s1 + $0x1aa0] sm:$0xff]
      %v1064 = vld [vmem:[%s1 + $0x1aa8] sm:$0xff]
      %v1065 = vld [vmem:[%s1 + $0x1ab0] sm:$0xff]
      %v1066 = vld [vmem:[%s1 + $0x1ab8] sm:$0xff]
      %v1067 = vld [vmem:[%s1 + $0x1ac0] sm:$0xff]
      %v1068 = vld [vmem:[%s1 + $0x1ac8] sm:$0xff]
      %v1069 = vld [vmem:[%s1 + $0x1ad0] sm:$0xff]
      %v1070 = vld [vmem:[%s1 + $0x1ad8] sm:$0xff]
      %v1071 = vld [vmem:[%s1 + $0x1ae0] sm:$0xff]
      %v1072 = vld [vmem:[%s1 + $0x1ae8] sm:$0xff]
      %v1073 = vld [vmem:[%s1 + $0x1af0] sm:$0xff]
      %v1074 = vld [vmem:[%s1 + $0x1af8] sm:$0xff]
      %v1075 = vld [vmem:[%s1 + $0x1b00] sm:$0xff]
      %v1076 = vld [vmem:[%s1 + $0x1b08] sm:$0xff]
      %v1077 = vld [vmem:[%s1 + $0x1b10] sm:$0xff]
      %v1078 = vld [vmem:[%s1 + $0x1b18] sm:$0xff]
      %v1079 = vld [vmem:[%s1 + $0x1b20] sm:$0xff]
      %v1080 = vld [vmem:[%s1 + $0x1b28] sm:$0xff]
      %v1081 = vld [vmem:[%s1 + $0x1b30] sm:$0xff]
      %v1082 = vld [vmem:[%s1 + $0x1b38] sm:$0xff]
      %v1083 = vld [vmem:[%s1 + $0x1b40] sm:$0xff]
      %v1084 = vld [vmem:[%s1 + $0x1b48] sm:$0xff]
      %v1085 = vld [vmem:[%s1 + $0x1b50] sm:$0xff]
      %v1086 = vld [vmem:[%s1 + $0x1b58] sm:$0xff]
      %v1087 = vld [vmem:[%s1 + $0x1b60] sm:$0xff]
      %v1088 = vld [vmem:[%s1 + $0x1b68] sm:$0xff]
      %v1089 = vld [vmem:[%s1 + $0x1b70] sm:$0xff]
      %v1090 = vld [vmem:[%s1 + $0x1b78] sm:$0xff]
      %v1091 = vld [vmem:[%s1 + $0x1b80] sm:$0xff]
      %v1092 = vld [vmem:[%s1 + $0x1b88] sm:$0xff]
      %v1093 = vld [vmem:[%s1 + $0x1b90] sm:$0xff]
      %v1094 = vld [vmem:[%s1 + $0x1b98] sm:$0xff]
      %v1095 = vld [vmem:[%s1 + $0x1ba0] sm:$0xff]
      %v1096 = vld [vmem:[%s1 + $0x1ba8] sm:$0xff]
      %v1097 = vld [vmem:[%s1 + $0x1bb0] sm:$0xff]
      %v1098 = vld [vmem:[%s1 + $0x1bb8] sm:$0xff]
      %v1099 = vld [vmem:[%s1 + $0x1bc0] sm:$0xff]
      %v1100 = vld [vmem:[%s1 + $0x1bc8] sm:$0xff]
      %v1101 = vld [vmem:[%s1 + $0x1bd0] sm:$0xff]
      %v1102 = vld [vmem:[%s1 + $0x1bd8] sm:$0xff]
      %v1103 = vld [vmem:[%s1 + $0x1be0] sm:$0xff]
      %v1104 = vld [vmem:[%s1 + $0x1be8] sm:$0xff]
      %v1105 = vld [vmem:[%s1 + $0x1bf0] sm:$0xff]
      %v1106 = vld [vmem:[%s1 + $0x1bf8] sm:$0xff]
      %v1107 = vld [vmem:[%s1 + $0x1c00] sm:$0xff]
      %v1108 = vld [vmem:[%s1 + $0x1c08] sm:$0xff]
      %v1109 = vld [vmem:[%s1 + $0x1c10] sm:$0xff]
      %v1110 = vld [vmem:[%s1 + $0x1c18] sm:$0xff]
      %v1111 = vld [vmem:[%s1 + $0x1c20] sm:$0xff]
      %v1112 = vld [vmem:[%s1 + $0x1c28] sm:$0xff]
      %v1113 = vld [vmem:[%s1 + $0x1c30] sm:$0xff]
      %v1114 = vld [vmem:[%s1 + $0x1c38] sm:$0xff]
      %v1115 = vld [vmem:[%s1 + $0x1c40] sm:$0xff]
      %v1116 = vld [vmem:[%s1 + $0x1c48] sm:$0xff]
      %v1117 = vld [vmem:[%s1 + $0x1c50] sm:$0xff]
      %v1118 = vld [vmem:[%s1 + $0x1c58] sm:$0xff]
      %v1119 = vld [vmem:[%s1 + $0x1c60] sm:$0xff]
      %v1120 = vld [vmem:[%s1 + $0x1c68] sm:$0xff]
      %v1121 = vld [vmem:[%s1 + $0x1c70] sm:$0xff]
      %v1122 = vld [vmem:[%s1 + $0x1c78] sm:$0xff]
      %v1123 = vld [vmem:[%s1 + $0x1c80] sm:$0xff]
      %v1124 = vld [vmem:[%s1 + $0x1c88] sm:$0xff]
      %v1125 = vld [vmem:[%s1 + $0x1c90] sm:$0xff]
      %v1126 = vld [vmem:[%s1 + $0x1c98] sm:$0xff]
      %v1127 = vld [vmem:[%s1 + $0x1ca0] sm:$0xff]
      %v1128 = vld [vmem:[%s1 + $0x1ca8] sm:$0xff]
      %v1129 = vld [vmem:[%s1 + $0x1cb0] sm:$0xff]
      %v1130 = vld [vmem:[%s1 + $0x1cb8] sm:$0xff]
      %v1131 = vld [vmem:[%s1 + $0x1cc0] sm:$0xff]
      %v1132 = vld [vmem:[%s1 + $0x1cc8] sm:$0xff]
      %v1133 = vld [vmem:[%s1 + $0x1cd0] sm:$0xff]
      %v1134 = vld [vmem:[%s1 + $0x1cd8] sm:$0xff]
      %v1135 = vld [vmem:[%s1 + $0x1ce0] sm:$0xff]
      %v1136 = vld [vmem:[%s1 + $0x1ce8] sm:$0xff]
      %v1137 = vld [vmem:[%s1 + $0x1cf0] sm:$0xff]
      %v1138 = vld [vmem:[%s1 + $0x1cf8] sm:$0xff]
      %v1139 = vld [vmem:[%s1 + $0x1d00] sm:$0xff]
      %v1140 = vld [vmem:[%s1 + $0x1d08] sm:$0xff]
      %v1141 = vld [vmem:[%s1 + $0x1d10] sm:$0xff]
      %v1142 = vld [vmem:[%s1 + $0x1d18] sm:$0xff]
      %v1143 = vld [vmem:[%s1 + $0x1d20] sm:$0xff]
      %v1144 = vld [vmem:[%s1 + $0x1d28] sm:$0xff]
      %v1145 = vld [vmem:[%s1 + $0x1d30] sm:$0xff]
      %v1146 = vld [vmem:[%s1 + $0x1d38] sm:$0xff]
      %v1147 = vld [vmem:[%s1 + $0x1d40] sm:$0xff]
      %v1148 = vld [vmem:[%s1 + $0x1d48] sm:$0xff]
      %v1149 = vld [vmem:[%s1 + $0x1d50] sm:$0xff]
      %v1150 = vld [vmem:[%s1 + $0x1d58] sm:$0xff]
      %v1151 = vld [vmem:[%s1 + $0x1d60] sm:$0xff]
      %v1152 = vld [vmem:[%s1 + $0x1d68] sm:$0xff]
      %v1153 = vld [vmem:[%s1 + $0x1d70] sm:$0xff]
      %v1154 = vld [vmem:[%s1 + $0x1d78] sm:$0xff]
      %v1155 = vld [vmem:[%s1 + $0x1d80] sm:$0xff]
      %v1156 = vld [vmem:[%s1 + $0x1d88] sm:$0xff]
      %v1157 = vld [vmem:[%s1 + $0x1d90] sm:$0xff]
      %v1158 = vld [vmem:[%s1 + $0x1d98] sm:$0xff]
      %v1159 = vld [vmem:[%s1 + $0x1da0] sm:$0xff]
      %v1160 = vld [vmem:[%s1 + $0x1da8] sm:$0xff]
      %v1161 = vld [vmem:[%s1 + $0x1db0] sm:$0xff]
      %v1162 = vld [vmem:[%s1 + $0x1db8] sm:$0xff]
      %v1163 = vld [vmem:[%s1 + $0x1dc0] sm:$0xff]
      %v1164 = vld [vmem:[%s1 + $0x1dc8] sm:$0xff]
      %v1165 = vld [vmem:[%s1 + $0x1dd0] sm:$0xff]
      %v1166 = vld [vmem:[%s1 + $0x1dd8] sm:$0xff]
      %v1167 = vld [vmem:[%s1 + $0x1de0] sm:$0xff]
      %v1168 = vld [vmem:[%s1 + $0x1de8] sm:$0xff]
      %v1169 = vld [vmem:[%s1 + $0x1df0] sm:$0xff]
      %v1170 = vld [vmem:[%s1 + $0x1df8] sm:$0xff]
      %v1171 = vld [vmem:[%s1 + $0x1e00] sm:$0xff]
      %v1172 = vld [vmem:[%s1 + $0x1e08] sm:$0xff]
      %v1173 = vld [vmem:[%s1 + $0x1e10] sm:$0xff]
      %v1174 = vld [vmem:[%s1 + $0x1e18] sm:$0xff]
      %v1175 = vld [vmem:[%s1 + $0x1e20] sm:$0xff]
      %v1176 = vld [vmem:[%s1 + $0x1e28] sm:$0xff]
      %v1177 = vld [vmem:[%s1 + $0x1e30] sm:$0xff]
      %v1178 = vld [vmem:[%s1 + $0x1e38] sm:$0xff]
      %v1179 = vld [vmem:[%s1 + $0x1e40] sm:$0xff]
      %v1180 = vld [vmem:[%s1 + $0x1e48] sm:$0xff]
      %v1181 = vld [vmem:[%s1 + $0x1e50] sm:$0xff]
      %v1182 = vld [vmem:[%s1 + $0x1e58] sm:$0xff]
      %v1183 = vld [vmem:[%s1 + $0x1e60] sm:$0xff]
      %v1184 = vld [vmem:[%s1 + $0x1e68] sm:$0xff]
      %v1185 = vld [vmem:[%s1 + $0x1e70] sm:$0xff]
      %v1186 = vld [vmem:[%s1 + $0x1e78] sm:$0xff]
      %v1187 = vld [vmem:[%s1 + $0x1e80] sm:$0xff]
      %v1188 = vld [vmem:[%s1 + $0x1e88] sm:$0xff]
      %v1189 = vld [vmem:[%s1 + $0x1e90] sm:$0xff]
      %v1190 = vld [vmem:[%s1 + $0x1e98] sm:$0xff]
      %v1191 = vld [vmem:[%s1 + $0x1ea0] sm:$0xff]
      %v1192 = vld [vmem:[%s1 + $0x1ea8] sm:$0xff]
      %v1193 = vld [vmem:[%s1 + $0x1eb0] sm:$0xff]
      %v1194 = vld [vmem:[%s1 + $0x1eb8] sm:$0xff]
      %v1195 = vld [vmem:[%s1 + $0x1ec0] sm:$0xff]
      %v1196 = vld [vmem:[%s1 + $0x1ec8] sm:$0xff]
      %v1197 = vld [vmem:[%s1 + $0x1ed0] sm:$0xff]
      %v1198 = vld [vmem:[%s1 + $0x1ed8] sm:$0xff]
      %v1199 = vld [vmem:[%s1 + $0x1ee0] sm:$0xff]
      %v1200 = vld [vmem:[%s1 + $0x1ee8] sm:$0xff]
      %v1201 = vld [vmem:[%s1 + $0x1ef0] sm:$0xff]
      %v1202 = vld [vmem:[%s1 + $0x1ef8] sm:$0xff]
      %v1203 = vld [vmem:[%s1 + $0x1f00] sm:$0xff]
      %v1204 = vld [vmem:[%s1 + $0x1f08] sm:$0xff]
      %v1205 = vld [vmem:[%s1 + $0x1f10] sm:$0xff]
      %v1206 = vld [vmem:[%s1 + $0x1f18] sm:$0xff]
      %v1207 = vld [vmem:[%s1 + $0x1f20] sm:$0xff]
      %v1208 = vld [vmem:[%s1 + $0x1f28] sm:$0xff]
      %v1209 = vld [vmem:[%s1 + $0x1f30] sm:$0xff]
      %v1210 = vld [vmem:[%s1 + $0x1f38] sm:$0xff]
      %v1211 = vld [vmem:[%s1 + $0x1f40] sm:$0xff]
      %v1212 = vld [vmem:[%s1 + $0x1f48] sm:$0xff]
      %v1213 = vld [vmem:[%s1 + $0x1f50] sm:$0xff]
      %v1214 = vld [vmem:[%s1 + $0x1f58] sm:$0xff]
      %v1215 = vld [vmem:[%s1 + $0x1f60] sm:$0xff]
      %v1216 = vld [vmem:[%s1 + $0x1f68] sm:$0xff]
      %v1217 = vld [vmem:[%s1 + $0x1f70] sm:$0xff]
      %v1218 = vld [vmem:[%s1 + $0x1f78] sm:$0xff]
      %v1219 = vld [vmem:[%s1 + $0x1f80] sm:$0xff]
      %v1220 = vld [vmem:[%s1 + $0x1f88] sm:$0xff]
      %v1221 = vld [vmem:[%s1 + $0x1f90] sm:$0xff]
      %v1222 = vld [vmem:[%s1 + $0x1f98] sm:$0xff]
      %v1223 = vld [vmem:[%s1 + $0x1fa0] sm:$0xff]
      %v1224 = vld [vmem:[%s1 + $0x1fa8] sm:$0xff]
      %v1225 = vld [vmem:[%s1 + $0x1fb0] sm:$0xff]
      %v1226 = vld [vmem:[%s1 + $0x1fb8] sm:$0xff]
      %v1227 = vld [vmem:[%s1 + $0x1fc0] sm:$0xff]
      %v1228 = vld [vmem:[%s1 + $0x1fc8] sm:$0xff]
      %v1229 = vld [vmem:[%s1 + $0x1fd0] sm:$0xff]
      %v1230 = vld [vmem:[%s1 + $0x1fd8] sm:$0xff]
      %v1231 = vld [vmem:[%s1 + $0x1fe0] sm:$0xff]
      %v1232 = vld [vmem:[%s1 + $0x1fe8] sm:$0xff]
      %v1233 = vld [vmem:[%s1 + $0x1ff0] sm:$0xff]
      %v1234 = vld [vmem:[%s1 + $0x1ff8] sm:$0xff]
      %v1235 = vld [vmem:[%s2] sm:$0xf]
      %v1237 = vlaneseq
      %v1238 = vshrl.u32 %v1237, 7
      %v1239 = vsub.s32 0, %v1238
      %v1240 = vrot.slane %v1235, %v1239
      %v1241 = vlaneseq
      %v1242 = vshrl.u32 %v1241, 7
      %v1243 = vsub.s32 1, %v1242
      %v1244 = vrot.slane %v1235, %v1243
      %v1245 = vlaneseq
      %v1246 = vshrl.u32 %v1245, 7
      %v1247 = vsub.s32 2, %v1246
      %v1248 = vrot.slane %v1235, %v1247
      %v1249 = vlaneseq
      %v1250 = vshrl.u32 %v1249, 7
      %v1251 = vsub.s32 3, %v1250
      %v1252 = vrot.slane %v1235, %v1251
      %v1289 = vunpack.c.l.b16 %v179
      %v1290 = vunpack.c.h.b16 %v179
      %v1291 = vunpack.c.l.b16 %v180
      %v1292 = vunpack.c.h.b16 %v180
      %v1293 = vunpack.c.l.b16 %v181
      %v1294 = vunpack.c.h.b16 %v181
      %v1295 = vunpack.c.l.b16 %v182
      %v1296 = vunpack.c.h.b16 %v182
      %v1297 = vunpack.c.l.b16 %v183
      %v1298 = vunpack.c.h.b16 %v183
      %v1299 = vunpack.c.l.b16 %v184
      %v1300 = vunpack.c.h.b16 %v184
      %v1301 = vunpack.c.l.b16 %v185
      %v1302 = vunpack.c.h.b16 %v185
      %v1303 = vunpack.c.l.b16 %v186
      %v1304 = vunpack.c.h.b16 %v186
      %v1305 = vunpack.c.l.b16 %v187
      %v1306 = vunpack.c.h.b16 %v187
      %v1307 = vunpack.c.l.b16 %v188
      %v1308 = vunpack.c.h.b16 %v188
      %v1309 = vunpack.c.l.b16 %v189
      %v1310 = vunpack.c.h.b16 %v189
      %v1311 = vunpack.c.l.b16 %v190
      %v1312 = vunpack.c.h.b16 %v190
      %v1313 = vunpack.c.l.b16 %v191
      %v1314 = vunpack.c.h.b16 %v191
      %v1315 = vunpack.c.l.b16 %v192
      %v1316 = vunpack.c.h.b16 %v192
      %v1317 = vunpack.c.l.b16 %v193
      %v1318 = vunpack.c.h.b16 %v193
      %v1319 = vunpack.c.l.b16 %v194
      %v1320 = vunpack.c.h.b16 %v194
      %v1321 = vunpack.c.l.b16 %v195
      %v1322 = vunpack.c.h.b16 %v195
      %v1323 = vunpack.c.l.b16 %v196
      %v1324 = vunpack.c.h.b16 %v196
      %v1325 = vunpack.c.l.b16 %v197
      %v1326 = vunpack.c.h.b16 %v197
      %v1327 = vunpack.c.l.b16 %v198
      %v1328 = vunpack.c.h.b16 %v198
      %v1329 = vunpack.c.l.b16 %v199
      %v1330 = vunpack.c.h.b16 %v199
      %v1331 = vunpack.c.l.b16 %v200
      %v1332 = vunpack.c.h.b16 %v200
      %v1333 = vunpack.c.l.b16 %v201
      %v1334 = vunpack.c.h.b16 %v201
      %v1335 = vunpack.c.l.b16 %v202
      %v1336 = vunpack.c.h.b16 %v202
      %v1337 = vunpack.c.l.b16 %v203
      %v1338 = vunpack.c.h.b16 %v203
      %v1339 = vunpack.c.l.b16 %v204
      %v1340 = vunpack.c.h.b16 %v204
      %v1341 = vunpack.c.l.b16 %v205
      %v1342 = vunpack.c.h.b16 %v205
      %v1343 = vunpack.c.l.b16 %v206
      %v1344 = vunpack.c.h.b16 %v206
      %v1345 = vunpack.c.l.b16 %v207
      %v1346 = vunpack.c.h.b16 %v207
      %v1347 = vunpack.c.l.b16 %v208
      %v1348 = vunpack.c.h.b16 %v208
      %v1349 = vunpack.c.l.b16 %v209
      %v1350 = vunpack.c.h.b16 %v209
      %v1351 = vunpack.c.l.b16 %v210
      %v1352 = vunpack.c.h.b16 %v210
      %v1353 = vpack.c.b16 %v1321, %v1289
      %v1354 = vpack.c.b16 %v1322, %v1290
      %v1355 = vpack.c.b16 %v1323, %v1291
      %v1356 = vpack.c.b16 %v1324, %v1292
      %v1357 = vpack.c.b16 %v1325, %v1293
      %v1358 = vpack.c.b16 %v1326, %v1294
      %v1359 = vpack.c.b16 %v1327, %v1295
      %v1360 = vpack.c.b16 %v1328, %v1296
      %v1361 = vpack.c.b16 %v1329, %v1297
      %v1362 = vpack.c.b16 %v1330, %v1298
      %v1363 = vpack.c.b16 %v1331, %v1299
      %v1364 = vpack.c.b16 %v1332, %v1300
      %v1365 = vpack.c.b16 %v1333, %v1301
      %v1366 = vpack.c.b16 %v1334, %v1302
      %v1367 = vpack.c.b16 %v1335, %v1303
      %v1368 = vpack.c.b16 %v1336, %v1304
      %v1369 = vpack.c.b16 %v1337, %v1305
      %v1370 = vpack.c.b16 %v1338, %v1306
      %v1371 = vpack.c.b16 %v1339, %v1307
      %v1372 = vpack.c.b16 %v1340, %v1308
      %v1373 = vpack.c.b16 %v1341, %v1309
      %v1374 = vpack.c.b16 %v1342, %v1310
      %v1375 = vpack.c.b16 %v1343, %v1311
      %v1376 = vpack.c.b16 %v1344, %v1312
      %v1377 = vpack.c.b16 %v1345, %v1313
      %v1378 = vpack.c.b16 %v1346, %v1314
      %v1379 = vpack.c.b16 %v1347, %v1315
      %v1380 = vpack.c.b16 %v1348, %v1316
      %v1381 = vpack.c.b16 %v1349, %v1317
      %v1382 = vpack.c.b16 %v1350, %v1318
      %v1383 = vpack.c.b16 %v1351, %v1319
      %v1384 = vpack.c.b16 %v1352, %v1320
      %v2441 = vunpack.c.l.b16 %v211
      %v2442 = vunpack.c.h.b16 %v211
      %v2443 = vunpack.c.l.b16 %v212
      %v2444 = vunpack.c.h.b16 %v212
      %v2445 = vunpack.c.l.b16 %v213
      %v2446 = vunpack.c.h.b16 %v213
      %v2447 = vunpack.c.l.b16 %v214
      %v2448 = vunpack.c.h.b16 %v214
      %v2449 = vunpack.c.l.b16 %v215
      %v2450 = vunpack.c.h.b16 %v215
      %v2451 = vunpack.c.l.b16 %v216
      %v2452 = vunpack.c.h.b16 %v216
      %v2453 = vunpack.c.l.b16 %v217
      %v2454 = vunpack.c.h.b16 %v217
      %v2455 = vunpack.c.l.b16 %v218
      %v2456 = vunpack.c.h.b16 %v218
      %v2457 = vunpack.c.l.b16 %v219
      %v2458 = vunpack.c.h.b16 %v219
      %v2459 = vunpack.c.l.b16 %v220
      %v2460 = vunpack.c.h.b16 %v220
      %v2461 = vunpack.c.l.b16 %v221
      %v2462 = vunpack.c.h.b16 %v221
      %v2463 = vunpack.c.l.b16 %v222
      %v2464 = vunpack.c.h.b16 %v222
      %v2465 = vunpack.c.l.b16 %v223
      %v2466 = vunpack.c.h.b16 %v223
      %v2467 = vunpack.c.l.b16 %v224
      %v2468 = vunpack.c.h.b16 %v224
      %v2469 = vunpack.c.l.b16 %v225
      %v2470 = vunpack.c.h.b16 %v225
      %v2471 = vunpack.c.l.b16 %v226
      %v2472 = vunpack.c.h.b16 %v226
      %v2473 = vunpack.c.l.b16 %v227
      %v2474 = vunpack.c.h.b16 %v227
      %v2475 = vunpack.c.l.b16 %v228
      %v2476 = vunpack.c.h.b16 %v228
      %v2477 = vunpack.c.l.b16 %v229
      %v2478 = vunpack.c.h.b16 %v229
      %v2479 = vunpack.c.l.b16 %v230
      %v2480 = vunpack.c.h.b16 %v230
      %v2481 = vunpack.c.l.b16 %v231
      %v2482 = vunpack.c.h.b16 %v231
      %v2483 = vunpack.c.l.b16 %v232
      %v2484 = vunpack.c.h.b16 %v232
      %v2485 = vunpack.c.l.b16 %v233
      %v2486 = vunpack.c.h.b16 %v233
      %v2487 = vunpack.c.l.b16 %v234
      %v2488 = vunpack.c.h.b16 %v234
      %v2489 = vunpack.c.l.b16 %v235
      %v2490 = vunpack.c.h.b16 %v235
      %v2491 = vunpack.c.l.b16 %v236
      %v2492 = vunpack.c.h.b16 %v236
      %v2493 = vunpack.c.l.b16 %v237
      %v2494 = vunpack.c.h.b16 %v237
      %v2495 = vunpack.c.l.b16 %v238
      %v2496 = vunpack.c.h.b16 %v238
      %v2497 = vunpack.c.l.b16 %v239
      %v2498 = vunpack.c.h.b16 %v239
      %v2499 = vunpack.c.l.b16 %v240
      %v2500 = vunpack.c.h.b16 %v240
      %v2501 = vunpack.c.l.b16 %v241
      %v2502 = vunpack.c.h.b16 %v241
      %v2503 = vunpack.c.l.b16 %v242
      %v2504 = vunpack.c.h.b16 %v242
      %v2505 = vunpack.c.l.b16 %v243
      %v2506 = vunpack.c.h.b16 %v243
      %v2507 = vunpack.c.l.b16 %v244
      %v2508 = vunpack.c.h.b16 %v244
      %v2509 = vunpack.c.l.b16 %v245
      %v2510 = vunpack.c.h.b16 %v245
      %v2511 = vunpack.c.l.b16 %v246
      %v2512 = vunpack.c.h.b16 %v246
      %v2513 = vunpack.c.l.b16 %v247
      %v2514 = vunpack.c.h.b16 %v247
      %v2515 = vunpack.c.l.b16 %v248
      %v2516 = vunpack.c.h.b16 %v248
      %v2517 = vunpack.c.l.b16 %v249
      %v2518 = vunpack.c.h.b16 %v249
      %v2519 = vunpack.c.l.b16 %v250
      %v2520 = vunpack.c.h.b16 %v250
      %v2521 = vunpack.c.l.b16 %v251
      %v2522 = vunpack.c.h.b16 %v251
      %v2523 = vunpack.c.l.b16 %v252
      %v2524 = vunpack.c.h.b16 %v252
      %v2525 = vunpack.c.l.b16 %v253
      %v2526 = vunpack.c.h.b16 %v253
      %v2527 = vunpack.c.l.b16 %v254
      %v2528 = vunpack.c.h.b16 %v254
      %v2529 = vunpack.c.l.b16 %v255
      %v2530 = vunpack.c.h.b16 %v255
      %v2531 = vunpack.c.l.b16 %v256
      %v2532 = vunpack.c.h.b16 %v256
      %v2533 = vunpack.c.l.b16 %v257
      %v2534 = vunpack.c.h.b16 %v257
      %v2535 = vunpack.c.l.b16 %v258
      %v2536 = vunpack.c.h.b16 %v258
      %v2537 = vunpack.c.l.b16 %v259
      %v2538 = vunpack.c.h.b16 %v259
      %v2539 = vunpack.c.l.b16 %v260
      %v2540 = vunpack.c.h.b16 %v260
      %v2541 = vunpack.c.l.b16 %v261
      %v2542 = vunpack.c.h.b16 %v261
      %v2543 = vunpack.c.l.b16 %v262
      %v2544 = vunpack.c.h.b16 %v262
      %v2545 = vunpack.c.l.b16 %v263
      %v2546 = vunpack.c.h.b16 %v263
      %v2547 = vunpack.c.l.b16 %v264
      %v2548 = vunpack.c.h.b16 %v264
      %v2549 = vunpack.c.l.b16 %v265
      %v2550 = vunpack.c.h.b16 %v265
      %v2551 = vunpack.c.l.b16 %v266
      %v2552 = vunpack.c.h.b16 %v266
      %v2553 = vunpack.c.l.b16 %v267
      %v2554 = vunpack.c.h.b16 %v267
      %v2555 = vunpack.c.l.b16 %v268
      %v2556 = vunpack.c.h.b16 %v268
      %v2557 = vunpack.c.l.b16 %v269
      %v2558 = vunpack.c.h.b16 %v269
      %v2559 = vunpack.c.l.b16 %v270
      %v2560 = vunpack.c.h.b16 %v270
      %v2561 = vunpack.c.l.b16 %v271
      %v2562 = vunpack.c.h.b16 %v271
      %v2563 = vunpack.c.l.b16 %v272
      %v2564 = vunpack.c.h.b16 %v272
      %v2565 = vunpack.c.l.b16 %v273
      %v2566 = vunpack.c.h.b16 %v273
      %v2567 = vunpack.c.l.b16 %v274
      %v2568 = vunpack.c.h.b16 %v274
      %v2569 = vunpack.c.l.b16 %v275
      %v2570 = vunpack.c.h.b16 %v275
      %v2571 = vunpack.c.l.b16 %v276
      %v2572 = vunpack.c.h.b16 %v276
      %v2573 = vunpack.c.l.b16 %v277
      %v2574 = vunpack.c.h.b16 %v277
      %v2575 = vunpack.c.l.b16 %v278
      %v2576 = vunpack.c.h.b16 %v278
      %v2577 = vunpack.c.l.b16 %v279
      %v2578 = vunpack.c.h.b16 %v279
      %v2579 = vunpack.c.l.b16 %v280
      %v2580 = vunpack.c.h.b16 %v280
      %v2581 = vunpack.c.l.b16 %v281
      %v2582 = vunpack.c.h.b16 %v281
      %v2583 = vunpack.c.l.b16 %v282
      %v2584 = vunpack.c.h.b16 %v282
      %v2585 = vunpack.c.l.b16 %v283
      %v2586 = vunpack.c.h.b16 %v283
      %v2587 = vunpack.c.l.b16 %v284
      %v2588 = vunpack.c.h.b16 %v284
      %v2589 = vunpack.c.l.b16 %v285
      %v2590 = vunpack.c.h.b16 %v285
      %v2591 = vunpack.c.l.b16 %v286
      %v2592 = vunpack.c.h.b16 %v286
      %v2593 = vunpack.c.l.b16 %v287
      %v2594 = vunpack.c.h.b16 %v287
      %v2595 = vunpack.c.l.b16 %v288
      %v2596 = vunpack.c.h.b16 %v288
      %v2597 = vunpack.c.l.b16 %v289
      %v2598 = vunpack.c.h.b16 %v289
      %v2599 = vunpack.c.l.b16 %v290
      %v2600 = vunpack.c.h.b16 %v290
      %v2601 = vunpack.c.l.b16 %v291
      %v2602 = vunpack.c.h.b16 %v291
      %v2603 = vunpack.c.l.b16 %v292
      %v2604 = vunpack.c.h.b16 %v292
      %v2605 = vunpack.c.l.b16 %v293
      %v2606 = vunpack.c.h.b16 %v293
      %v2607 = vunpack.c.l.b16 %v294
      %v2608 = vunpack.c.h.b16 %v294
      %v2609 = vunpack.c.l.b16 %v295
      %v2610 = vunpack.c.h.b16 %v295
      %v2611 = vunpack.c.l.b16 %v296
      %v2612 = vunpack.c.h.b16 %v296
      %v2613 = vunpack.c.l.b16 %v297
      %v2614 = vunpack.c.h.b16 %v297
      %v2615 = vunpack.c.l.b16 %v298
      %v2616 = vunpack.c.h.b16 %v298
      %v2617 = vunpack.c.l.b16 %v299
      %v2618 = vunpack.c.h.b16 %v299
      %v2619 = vunpack.c.l.b16 %v300
      %v2620 = vunpack.c.h.b16 %v300
      %v2621 = vunpack.c.l.b16 %v301
      %v2622 = vunpack.c.h.b16 %v301
      %v2623 = vunpack.c.l.b16 %v302
      %v2624 = vunpack.c.h.b16 %v302
      %v2625 = vunpack.c.l.b16 %v303
      %v2626 = vunpack.c.h.b16 %v303
      %v2627 = vunpack.c.l.b16 %v304
      %v2628 = vunpack.c.h.b16 %v304
      %v2629 = vunpack.c.l.b16 %v305
      %v2630 = vunpack.c.h.b16 %v305
      %v2631 = vunpack.c.l.b16 %v306
      %v2632 = vunpack.c.h.b16 %v306
      %v2633 = vunpack.c.l.b16 %v307
      %v2634 = vunpack.c.h.b16 %v307
      %v2635 = vunpack.c.l.b16 %v308
      %v2636 = vunpack.c.h.b16 %v308
      %v2637 = vunpack.c.l.b16 %v309
      %v2638 = vunpack.c.h.b16 %v309
      %v2639 = vunpack.c.l.b16 %v310
      %v2640 = vunpack.c.h.b16 %v310
      %v2641 = vunpack.c.l.b16 %v311
      %v2642 = vunpack.c.h.b16 %v311
      %v2643 = vunpack.c.l.b16 %v312
      %v2644 = vunpack.c.h.b16 %v312
      %v2645 = vunpack.c.l.b16 %v313
      %v2646 = vunpack.c.h.b16 %v313
      %v2647 = vunpack.c.l.b16 %v314
      %v2648 = vunpack.c.h.b16 %v314
      %v2649 = vunpack.c.l.b16 %v315
      %v2650 = vunpack.c.h.b16 %v315
      %v2651 = vunpack.c.l.b16 %v316
      %v2652 = vunpack.c.h.b16 %v316
      %v2653 = vunpack.c.l.b16 %v317
      %v2654 = vunpack.c.h.b16 %v317
      %v2655 = vunpack.c.l.b16 %v318
      %v2656 = vunpack.c.h.b16 %v318
      %v2657 = vunpack.c.l.b16 %v319
      %v2658 = vunpack.c.h.b16 %v319
      %v2659 = vunpack.c.l.b16 %v320
      %v2660 = vunpack.c.h.b16 %v320
      %v2661 = vunpack.c.l.b16 %v321
      %v2662 = vunpack.c.h.b16 %v321
      %v2663 = vunpack.c.l.b16 %v322
      %v2664 = vunpack.c.h.b16 %v322
      %v2665 = vunpack.c.l.b16 %v323
      %v2666 = vunpack.c.h.b16 %v323
      %v2667 = vunpack.c.l.b16 %v324
      %v2668 = vunpack.c.h.b16 %v324
      %v2669 = vunpack.c.l.b16 %v325
      %v2670 = vunpack.c.h.b16 %v325
      %v2671 = vunpack.c.l.b16 %v326
      %v2672 = vunpack.c.h.b16 %v326
      %v2673 = vunpack.c.l.b16 %v327
      %v2674 = vunpack.c.h.b16 %v327
      %v2675 = vunpack.c.l.b16 %v328
      %v2676 = vunpack.c.h.b16 %v328
      %v2677 = vunpack.c.l.b16 %v329
      %v2678 = vunpack.c.h.b16 %v329
      %v2679 = vunpack.c.l.b16 %v330
      %v2680 = vunpack.c.h.b16 %v330
      %v2681 = vunpack.c.l.b16 %v331
      %v2682 = vunpack.c.h.b16 %v331
      %v2683 = vunpack.c.l.b16 %v332
      %v2684 = vunpack.c.h.b16 %v332
      %v2685 = vunpack.c.l.b16 %v333
      %v2686 = vunpack.c.h.b16 %v333
      %v2687 = vunpack.c.l.b16 %v334
      %v2688 = vunpack.c.h.b16 %v334
      %v2689 = vunpack.c.l.b16 %v335
      %v2690 = vunpack.c.h.b16 %v335
      %v2691 = vunpack.c.l.b16 %v336
      %v2692 = vunpack.c.h.b16 %v336
      %v2693 = vunpack.c.l.b16 %v337
      %v2694 = vunpack.c.h.b16 %v337
      %v2695 = vunpack.c.l.b16 %v338
      %v2696 = vunpack.c.h.b16 %v338
      %v2697 = vunpack.c.l.b16 %v339
      %v2698 = vunpack.c.h.b16 %v339
      %v2699 = vunpack.c.l.b16 %v340
      %v2700 = vunpack.c.h.b16 %v340
      %v2701 = vunpack.c.l.b16 %v341
      %v2702 = vunpack.c.h.b16 %v341
      %v2703 = vunpack.c.l.b16 %v342
      %v2704 = vunpack.c.h.b16 %v342
      %v2705 = vunpack.c.l.b16 %v343
      %v2706 = vunpack.c.h.b16 %v343
      %v2707 = vunpack.c.l.b16 %v344
      %v2708 = vunpack.c.h.b16 %v344
      %v2709 = vunpack.c.l.b16 %v345
      %v2710 = vunpack.c.h.b16 %v345
      %v2711 = vunpack.c.l.b16 %v346
      %v2712 = vunpack.c.h.b16 %v346
      %v2713 = vunpack.c.l.b16 %v347
      %v2714 = vunpack.c.h.b16 %v347
      %v2715 = vunpack.c.l.b16 %v348
      %v2716 = vunpack.c.h.b16 %v348
      %v2717 = vunpack.c.l.b16 %v349
      %v2718 = vunpack.c.h.b16 %v349
      %v2719 = vunpack.c.l.b16 %v350
      %v2720 = vunpack.c.h.b16 %v350
      %v2721 = vunpack.c.l.b16 %v351
      %v2722 = vunpack.c.h.b16 %v351
      %v2723 = vunpack.c.l.b16 %v352
      %v2724 = vunpack.c.h.b16 %v352
      %v2725 = vunpack.c.l.b16 %v353
      %v2726 = vunpack.c.h.b16 %v353
      %v2727 = vunpack.c.l.b16 %v354
      %v2728 = vunpack.c.h.b16 %v354
      %v2729 = vunpack.c.l.b16 %v355
      %v2730 = vunpack.c.h.b16 %v355
      %v2731 = vunpack.c.l.b16 %v356
      %v2732 = vunpack.c.h.b16 %v356
      %v2733 = vunpack.c.l.b16 %v357
      %v2734 = vunpack.c.h.b16 %v357
      %v2735 = vunpack.c.l.b16 %v358
      %v2736 = vunpack.c.h.b16 %v358
      %v2737 = vunpack.c.l.b16 %v359
      %v2738 = vunpack.c.h.b16 %v359
      %v2739 = vunpack.c.l.b16 %v360
      %v2740 = vunpack.c.h.b16 %v360
      %v2741 = vunpack.c.l.b16 %v361
      %v2742 = vunpack.c.h.b16 %v361
      %v2743 = vunpack.c.l.b16 %v362
      %v2744 = vunpack.c.h.b16 %v362
      %v2745 = vunpack.c.l.b16 %v363
      %v2746 = vunpack.c.h.b16 %v363
      %v2747 = vunpack.c.l.b16 %v364
      %v2748 = vunpack.c.h.b16 %v364
      %v2749 = vunpack.c.l.b16 %v365
      %v2750 = vunpack.c.h.b16 %v365
      %v2751 = vunpack.c.l.b16 %v366
      %v2752 = vunpack.c.h.b16 %v366
      %v2753 = vunpack.c.l.b16 %v367
      %v2754 = vunpack.c.h.b16 %v367
      %v2755 = vunpack.c.l.b16 %v368
      %v2756 = vunpack.c.h.b16 %v368
      %v2757 = vunpack.c.l.b16 %v369
      %v2758 = vunpack.c.h.b16 %v369
      %v2759 = vunpack.c.l.b16 %v370
      %v2760 = vunpack.c.h.b16 %v370
      %v2761 = vunpack.c.l.b16 %v371
      %v2762 = vunpack.c.h.b16 %v371
      %v2763 = vunpack.c.l.b16 %v372
      %v2764 = vunpack.c.h.b16 %v372
      %v2765 = vunpack.c.l.b16 %v373
      %v2766 = vunpack.c.h.b16 %v373
      %v2767 = vunpack.c.l.b16 %v374
      %v2768 = vunpack.c.h.b16 %v374
      %v2769 = vunpack.c.l.b16 %v375
      %v2770 = vunpack.c.h.b16 %v375
      %v2771 = vunpack.c.l.b16 %v376
      %v2772 = vunpack.c.h.b16 %v376
      %v2773 = vunpack.c.l.b16 %v377
      %v2774 = vunpack.c.h.b16 %v377
      %v2775 = vunpack.c.l.b16 %v378
      %v2776 = vunpack.c.h.b16 %v378
      %v2777 = vunpack.c.l.b16 %v379
      %v2778 = vunpack.c.h.b16 %v379
      %v2779 = vunpack.c.l.b16 %v380
      %v2780 = vunpack.c.h.b16 %v380
      %v2781 = vunpack.c.l.b16 %v381
      %v2782 = vunpack.c.h.b16 %v381
      %v2783 = vunpack.c.l.b16 %v382
      %v2784 = vunpack.c.h.b16 %v382
      %v2785 = vunpack.c.l.b16 %v383
      %v2786 = vunpack.c.h.b16 %v383
      %v2787 = vunpack.c.l.b16 %v384
      %v2788 = vunpack.c.h.b16 %v384
      %v2789 = vunpack.c.l.b16 %v385
      %v2790 = vunpack.c.h.b16 %v385
      %v2791 = vunpack.c.l.b16 %v386
      %v2792 = vunpack.c.h.b16 %v386
      %v2793 = vunpack.c.l.b16 %v387
      %v2794 = vunpack.c.h.b16 %v387
      %v2795 = vunpack.c.l.b16 %v388
      %v2796 = vunpack.c.h.b16 %v388
      %v2797 = vunpack.c.l.b16 %v389
      %v2798 = vunpack.c.h.b16 %v389
      %v2799 = vunpack.c.l.b16 %v390
      %v2800 = vunpack.c.h.b16 %v390
      %v2801 = vunpack.c.l.b16 %v391
      %v2802 = vunpack.c.h.b16 %v391
      %v2803 = vunpack.c.l.b16 %v392
      %v2804 = vunpack.c.h.b16 %v392
      %v2805 = vunpack.c.l.b16 %v393
      %v2806 = vunpack.c.h.b16 %v393
      %v2807 = vunpack.c.l.b16 %v394
      %v2808 = vunpack.c.h.b16 %v394
      %v2809 = vunpack.c.l.b16 %v395
      %v2810 = vunpack.c.h.b16 %v395
      %v2811 = vunpack.c.l.b16 %v396
      %v2812 = vunpack.c.h.b16 %v396
      %v2813 = vunpack.c.l.b16 %v397
      %v2814 = vunpack.c.h.b16 %v397
      %v2815 = vunpack.c.l.b16 %v398
      %v2816 = vunpack.c.h.b16 %v398
      %v2817 = vunpack.c.l.b16 %v399
      %v2818 = vunpack.c.h.b16 %v399
      %v2819 = vunpack.c.l.b16 %v400
      %v2820 = vunpack.c.h.b16 %v400
      %v2821 = vunpack.c.l.b16 %v401
      %v2822 = vunpack.c.h.b16 %v401
      %v2823 = vunpack.c.l.b16 %v402
      %v2824 = vunpack.c.h.b16 %v402
      %v2825 = vunpack.c.l.b16 %v403
      %v2826 = vunpack.c.h.b16 %v403
      %v2827 = vunpack.c.l.b16 %v404
      %v2828 = vunpack.c.h.b16 %v404
      %v2829 = vunpack.c.l.b16 %v405
      %v2830 = vunpack.c.h.b16 %v405
      %v2831 = vunpack.c.l.b16 %v406
      %v2832 = vunpack.c.h.b16 %v406
      %v2833 = vunpack.c.l.b16 %v407
      %v2834 = vunpack.c.h.b16 %v407
      %v2835 = vunpack.c.l.b16 %v408
      %v2836 = vunpack.c.h.b16 %v408
      %v2837 = vunpack.c.l.b16 %v409
      %v2838 = vunpack.c.h.b16 %v409
      %v2839 = vunpack.c.l.b16 %v410
      %v2840 = vunpack.c.h.b16 %v410
      %v2841 = vunpack.c.l.b16 %v411
      %v2842 = vunpack.c.h.b16 %v411
      %v2843 = vunpack.c.l.b16 %v412
      %v2844 = vunpack.c.h.b16 %v412
      %v2845 = vunpack.c.l.b16 %v413
      %v2846 = vunpack.c.h.b16 %v413
      %v2847 = vunpack.c.l.b16 %v414
      %v2848 = vunpack.c.h.b16 %v414
      %v2849 = vunpack.c.l.b16 %v415
      %v2850 = vunpack.c.h.b16 %v415
      %v2851 = vunpack.c.l.b16 %v416
      %v2852 = vunpack.c.h.b16 %v416
      %v2853 = vunpack.c.l.b16 %v417
      %v2854 = vunpack.c.h.b16 %v417
      %v2855 = vunpack.c.l.b16 %v418
      %v2856 = vunpack.c.h.b16 %v418
      %v2857 = vunpack.c.l.b16 %v419
      %v2858 = vunpack.c.h.b16 %v419
      %v2859 = vunpack.c.l.b16 %v420
      %v2860 = vunpack.c.h.b16 %v420
      %v2861 = vunpack.c.l.b16 %v421
      %v2862 = vunpack.c.h.b16 %v421
      %v2863 = vunpack.c.l.b16 %v422
      %v2864 = vunpack.c.h.b16 %v422
      %v2865 = vunpack.c.l.b16 %v423
      %v2866 = vunpack.c.h.b16 %v423
      %v2867 = vunpack.c.l.b16 %v424
      %v2868 = vunpack.c.h.b16 %v424
      %v2869 = vunpack.c.l.b16 %v425
      %v2870 = vunpack.c.h.b16 %v425
      %v2871 = vunpack.c.l.b16 %v426
      %v2872 = vunpack.c.h.b16 %v426
      %v2873 = vunpack.c.l.b16 %v427
      %v2874 = vunpack.c.h.b16 %v427
      %v2875 = vunpack.c.l.b16 %v428
      %v2876 = vunpack.c.h.b16 %v428
      %v2877 = vunpack.c.l.b16 %v429
      %v2878 = vunpack.c.h.b16 %v429
      %v2879 = vunpack.c.l.b16 %v430
      %v2880 = vunpack.c.h.b16 %v430
      %v2881 = vunpack.c.l.b16 %v431
      %v2882 = vunpack.c.h.b16 %v431
      %v2883 = vunpack.c.l.b16 %v432
      %v2884 = vunpack.c.h.b16 %v432
      %v2885 = vunpack.c.l.b16 %v433
      %v2886 = vunpack.c.h.b16 %v433
      %v2887 = vunpack.c.l.b16 %v434
      %v2888 = vunpack.c.h.b16 %v434
      %v2889 = vunpack.c.l.b16 %v435
      %v2890 = vunpack.c.h.b16 %v435
      %v2891 = vunpack.c.l.b16 %v436
      %v2892 = vunpack.c.h.b16 %v436
      %v2893 = vunpack.c.l.b16 %v437
      %v2894 = vunpack.c.h.b16 %v437
      %v2895 = vunpack.c.l.b16 %v438
      %v2896 = vunpack.c.h.b16 %v438
      %v2897 = vunpack.c.l.b16 %v439
      %v2898 = vunpack.c.h.b16 %v439
      %v2899 = vunpack.c.l.b16 %v440
      %v2900 = vunpack.c.h.b16 %v440
      %v2901 = vunpack.c.l.b16 %v441
      %v2902 = vunpack.c.h.b16 %v441
      %v2903 = vunpack.c.l.b16 %v442
      %v2904 = vunpack.c.h.b16 %v442
      %v2905 = vunpack.c.l.b16 %v443
      %v2906 = vunpack.c.h.b16 %v443
      %v2907 = vunpack.c.l.b16 %v444
      %v2908 = vunpack.c.h.b16 %v444
      %v2909 = vunpack.c.l.b16 %v445
      %v2910 = vunpack.c.h.b16 %v445
      %v2911 = vunpack.c.l.b16 %v446
      %v2912 = vunpack.c.h.b16 %v446
      %v2913 = vunpack.c.l.b16 %v447
      %v2914 = vunpack.c.h.b16 %v447
      %v2915 = vunpack.c.l.b16 %v448
      %v2916 = vunpack.c.h.b16 %v448
      %v2917 = vunpack.c.l.b16 %v449
      %v2918 = vunpack.c.h.b16 %v449
      %v2919 = vunpack.c.l.b16 %v450
      %v2920 = vunpack.c.h.b16 %v450
      %v2921 = vunpack.c.l.b16 %v451
      %v2922 = vunpack.c.h.b16 %v451
      %v2923 = vunpack.c.l.b16 %v452
      %v2924 = vunpack.c.h.b16 %v452
      %v2925 = vunpack.c.l.b16 %v453
      %v2926 = vunpack.c.h.b16 %v453
      %v2927 = vunpack.c.l.b16 %v454
      %v2928 = vunpack.c.h.b16 %v454
      %v2929 = vunpack.c.l.b16 %v455
      %v2930 = vunpack.c.h.b16 %v455
      %v2931 = vunpack.c.l.b16 %v456
      %v2932 = vunpack.c.h.b16 %v456
      %v2933 = vunpack.c.l.b16 %v457
      %v2934 = vunpack.c.h.b16 %v457
      %v2935 = vunpack.c.l.b16 %v458
      %v2936 = vunpack.c.h.b16 %v458
      %v2937 = vunpack.c.l.b16 %v459
      %v2938 = vunpack.c.h.b16 %v459
      %v2939 = vunpack.c.l.b16 %v460
      %v2940 = vunpack.c.h.b16 %v460
      %v2941 = vunpack.c.l.b16 %v461
      %v2942 = vunpack.c.h.b16 %v461
      %v2943 = vunpack.c.l.b16 %v462
      %v2944 = vunpack.c.h.b16 %v462
      %v2945 = vunpack.c.l.b16 %v463
      %v2946 = vunpack.c.h.b16 %v463
      %v2947 = vunpack.c.l.b16 %v464
      %v2948 = vunpack.c.h.b16 %v464
      %v2949 = vunpack.c.l.b16 %v465
      %v2950 = vunpack.c.h.b16 %v465
      %v2951 = vunpack.c.l.b16 %v466
      %v2952 = vunpack.c.h.b16 %v466
      %v2953 = vunpack.c.l.b16 %v467
      %v2954 = vunpack.c.h.b16 %v467
      %v2955 = vunpack.c.l.b16 %v468
      %v2956 = vunpack.c.h.b16 %v468
      %v2957 = vunpack.c.l.b16 %v469
      %v2958 = vunpack.c.h.b16 %v469
      %v2959 = vunpack.c.l.b16 %v470
      %v2960 = vunpack.c.h.b16 %v470
      %v2961 = vunpack.c.l.b16 %v471
      %v2962 = vunpack.c.h.b16 %v471
      %v2963 = vunpack.c.l.b16 %v472
      %v2964 = vunpack.c.h.b16 %v472
      %v2965 = vunpack.c.l.b16 %v473
      %v2966 = vunpack.c.h.b16 %v473
      %v2967 = vunpack.c.l.b16 %v474
      %v2968 = vunpack.c.h.b16 %v474
      %v2969 = vunpack.c.l.b16 %v475
      %v2970 = vunpack.c.h.b16 %v475
      %v2971 = vunpack.c.l.b16 %v476
      %v2972 = vunpack.c.h.b16 %v476
      %v2973 = vunpack.c.l.b16 %v477
      %v2974 = vunpack.c.h.b16 %v477
      %v2975 = vunpack.c.l.b16 %v478
      %v2976 = vunpack.c.h.b16 %v478
      %v2977 = vunpack.c.l.b16 %v479
      %v2978 = vunpack.c.h.b16 %v479
      %v2979 = vunpack.c.l.b16 %v480
      %v2980 = vunpack.c.h.b16 %v480
      %v2981 = vunpack.c.l.b16 %v481
      %v2982 = vunpack.c.h.b16 %v481
      %v2983 = vunpack.c.l.b16 %v482
      %v2984 = vunpack.c.h.b16 %v482
      %v2985 = vunpack.c.l.b16 %v483
      %v2986 = vunpack.c.h.b16 %v483
      %v2987 = vunpack.c.l.b16 %v484
      %v2988 = vunpack.c.h.b16 %v484
      %v2989 = vunpack.c.l.b16 %v485
      %v2990 = vunpack.c.h.b16 %v485
      %v2991 = vunpack.c.l.b16 %v486
      %v2992 = vunpack.c.h.b16 %v486
      %v2993 = vunpack.c.l.b16 %v487
      %v2994 = vunpack.c.h.b16 %v487
      %v2995 = vunpack.c.l.b16 %v488
      %v2996 = vunpack.c.h.b16 %v488
      %v2997 = vunpack.c.l.b16 %v489
      %v2998 = vunpack.c.h.b16 %v489
      %v2999 = vunpack.c.l.b16 %v490
      %v3000 = vunpack.c.h.b16 %v490
      %v3001 = vunpack.c.l.b16 %v491
      %v3002 = vunpack.c.h.b16 %v491
      %v3003 = vunpack.c.l.b16 %v492
      %v3004 = vunpack.c.h.b16 %v492
      %v3005 = vunpack.c.l.b16 %v493
      %v3006 = vunpack.c.h.b16 %v493
      %v3007 = vunpack.c.l.b16 %v494
      %v3008 = vunpack.c.h.b16 %v494
      %v3009 = vunpack.c.l.b16 %v495
      %v3010 = vunpack.c.h.b16 %v495
      %v3011 = vunpack.c.l.b16 %v496
      %v3012 = vunpack.c.h.b16 %v496
      %v3013 = vunpack.c.l.b16 %v497
      %v3014 = vunpack.c.h.b16 %v497
      %v3015 = vunpack.c.l.b16 %v498
      %v3016 = vunpack.c.h.b16 %v498
      %v3017 = vunpack.c.l.b16 %v499
      %v3018 = vunpack.c.h.b16 %v499
      %v3019 = vunpack.c.l.b16 %v500
      %v3020 = vunpack.c.h.b16 %v500
      %v3021 = vunpack.c.l.b16 %v501
      %v3022 = vunpack.c.h.b16 %v501
      %v3023 = vunpack.c.l.b16 %v502
      %v3024 = vunpack.c.h.b16 %v502
      %v3025 = vunpack.c.l.b16 %v503
      %v3026 = vunpack.c.h.b16 %v503
      %v3027 = vunpack.c.l.b16 %v504
      %v3028 = vunpack.c.h.b16 %v504
      %v3029 = vunpack.c.l.b16 %v505
      %v3030 = vunpack.c.h.b16 %v505
      %v3031 = vunpack.c.l.b16 %v506
      %v3032 = vunpack.c.h.b16 %v506
      %v3033 = vunpack.c.l.b16 %v507
      %v3034 = vunpack.c.h.b16 %v507
      %v3035 = vunpack.c.l.b16 %v508
      %v3036 = vunpack.c.h.b16 %v508
      %v3037 = vunpack.c.l.b16 %v509
      %v3038 = vunpack.c.h.b16 %v509
      %v3039 = vunpack.c.l.b16 %v510
      %v3040 = vunpack.c.h.b16 %v510
      %v3041 = vunpack.c.l.b16 %v511
      %v3042 = vunpack.c.h.b16 %v511
      %v3043 = vunpack.c.l.b16 %v512
      %v3044 = vunpack.c.h.b16 %v512
      %v3045 = vunpack.c.l.b16 %v513
      %v3046 = vunpack.c.h.b16 %v513
      %v3047 = vunpack.c.l.b16 %v514
      %v3048 = vunpack.c.h.b16 %v514
      %v3049 = vunpack.c.l.b16 %v515
      %v3050 = vunpack.c.h.b16 %v515
      %v3051 = vunpack.c.l.b16 %v516
      %v3052 = vunpack.c.h.b16 %v516
      %v3053 = vunpack.c.l.b16 %v517
      %v3054 = vunpack.c.h.b16 %v517
      %v3055 = vunpack.c.l.b16 %v518
      %v3056 = vunpack.c.h.b16 %v518
      %v3057 = vunpack.c.l.b16 %v519
      %v3058 = vunpack.c.h.b16 %v519
      %v3059 = vunpack.c.l.b16 %v520
      %v3060 = vunpack.c.h.b16 %v520
      %v3061 = vunpack.c.l.b16 %v521
      %v3062 = vunpack.c.h.b16 %v521
      %v3063 = vunpack.c.l.b16 %v522
      %v3064 = vunpack.c.h.b16 %v522
      %v3065 = vunpack.c.l.b16 %v523
      %v3066 = vunpack.c.h.b16 %v523
      %v3067 = vunpack.c.l.b16 %v524
      %v3068 = vunpack.c.h.b16 %v524
      %v3069 = vunpack.c.l.b16 %v525
      %v3070 = vunpack.c.h.b16 %v525
      %v3071 = vunpack.c.l.b16 %v526
      %v3072 = vunpack.c.h.b16 %v526
      %v3073 = vunpack.c.l.b16 %v527
      %v3074 = vunpack.c.h.b16 %v527
      %v3075 = vunpack.c.l.b16 %v528
      %v3076 = vunpack.c.h.b16 %v528
      %v3077 = vunpack.c.l.b16 %v529
      %v3078 = vunpack.c.h.b16 %v529
      %v3079 = vunpack.c.l.b16 %v530
      %v3080 = vunpack.c.h.b16 %v530
      %v3081 = vunpack.c.l.b16 %v531
      %v3082 = vunpack.c.h.b16 %v531
      %v3083 = vunpack.c.l.b16 %v532
      %v3084 = vunpack.c.h.b16 %v532
      %v3085 = vunpack.c.l.b16 %v533
      %v3086 = vunpack.c.h.b16 %v533
      %v3087 = vunpack.c.l.b16 %v534
      %v3088 = vunpack.c.h.b16 %v534
      %v3089 = vunpack.c.l.b16 %v535
      %v3090 = vunpack.c.h.b16 %v535
      %v3091 = vunpack.c.l.b16 %v536
      %v3092 = vunpack.c.h.b16 %v536
      %v3093 = vunpack.c.l.b16 %v537
      %v3094 = vunpack.c.h.b16 %v537
      %v3095 = vunpack.c.l.b16 %v538
      %v3096 = vunpack.c.h.b16 %v538
      %v3097 = vunpack.c.l.b16 %v539
      %v3098 = vunpack.c.h.b16 %v539
      %v3099 = vunpack.c.l.b16 %v540
      %v3100 = vunpack.c.h.b16 %v540
      %v3101 = vunpack.c.l.b16 %v541
      %v3102 = vunpack.c.h.b16 %v541
      %v3103 = vunpack.c.l.b16 %v542
      %v3104 = vunpack.c.h.b16 %v542
      %v3105 = vunpack.c.l.b16 %v543
      %v3106 = vunpack.c.h.b16 %v543
      %v3107 = vunpack.c.l.b16 %v544
      %v3108 = vunpack.c.h.b16 %v544
      %v3109 = vunpack.c.l.b16 %v545
      %v3110 = vunpack.c.h.b16 %v545
      %v3111 = vunpack.c.l.b16 %v546
      %v3112 = vunpack.c.h.b16 %v546
      %v3113 = vunpack.c.l.b16 %v547
      %v3114 = vunpack.c.h.b16 %v547
      %v3115 = vunpack.c.l.b16 %v548
      %v3116 = vunpack.c.h.b16 %v548
      %v3117 = vunpack.c.l.b16 %v549
      %v3118 = vunpack.c.h.b16 %v549
      %v3119 = vunpack.c.l.b16 %v550
      %v3120 = vunpack.c.h.b16 %v550
      %v3121 = vunpack.c.l.b16 %v551
      %v3122 = vunpack.c.h.b16 %v551
      %v3123 = vunpack.c.l.b16 %v552
      %v3124 = vunpack.c.h.b16 %v552
      %v3125 = vunpack.c.l.b16 %v553
      %v3126 = vunpack.c.h.b16 %v553
      %v3127 = vunpack.c.l.b16 %v554
      %v3128 = vunpack.c.h.b16 %v554
      %v3129 = vunpack.c.l.b16 %v555
      %v3130 = vunpack.c.h.b16 %v555
      %v3131 = vunpack.c.l.b16 %v556
      %v3132 = vunpack.c.h.b16 %v556
      %v3133 = vunpack.c.l.b16 %v557
      %v3134 = vunpack.c.h.b16 %v557
      %v3135 = vunpack.c.l.b16 %v558
      %v3136 = vunpack.c.h.b16 %v558
      %v3137 = vunpack.c.l.b16 %v559
      %v3138 = vunpack.c.h.b16 %v559
      %v3139 = vunpack.c.l.b16 %v560
      %v3140 = vunpack.c.h.b16 %v560
      %v3141 = vunpack.c.l.b16 %v561
      %v3142 = vunpack.c.h.b16 %v561
      %v3143 = vunpack.c.l.b16 %v562
      %v3144 = vunpack.c.h.b16 %v562
      %v3145 = vunpack.c.l.b16 %v563
      %v3146 = vunpack.c.h.b16 %v563
      %v3147 = vunpack.c.l.b16 %v564
      %v3148 = vunpack.c.h.b16 %v564
      %v3149 = vunpack.c.l.b16 %v565
      %v3150 = vunpack.c.h.b16 %v565
      %v3151 = vunpack.c.l.b16 %v566
      %v3152 = vunpack.c.h.b16 %v566
      %v3153 = vunpack.c.l.b16 %v567
      %v3154 = vunpack.c.h.b16 %v567
      %v3155 = vunpack.c.l.b16 %v568
      %v3156 = vunpack.c.h.b16 %v568
      %v3157 = vunpack.c.l.b16 %v569
      %v3158 = vunpack.c.h.b16 %v569
      %v3159 = vunpack.c.l.b16 %v570
      %v3160 = vunpack.c.h.b16 %v570
      %v3161 = vunpack.c.l.b16 %v571
      %v3162 = vunpack.c.h.b16 %v571
      %v3163 = vunpack.c.l.b16 %v572
      %v3164 = vunpack.c.h.b16 %v572
      %v3165 = vunpack.c.l.b16 %v573
      %v3166 = vunpack.c.h.b16 %v573
      %v3167 = vunpack.c.l.b16 %v574
      %v3168 = vunpack.c.h.b16 %v574
      %v3169 = vunpack.c.l.b16 %v575
      %v3170 = vunpack.c.h.b16 %v575
      %v3171 = vunpack.c.l.b16 %v576
      %v3172 = vunpack.c.h.b16 %v576
      %v3173 = vunpack.c.l.b16 %v577
      %v3174 = vunpack.c.h.b16 %v577
      %v3175 = vunpack.c.l.b16 %v578
      %v3176 = vunpack.c.h.b16 %v578
      %v3177 = vunpack.c.l.b16 %v579
      %v3178 = vunpack.c.h.b16 %v579
      %v3179 = vunpack.c.l.b16 %v580
      %v3180 = vunpack.c.h.b16 %v580
      %v3181 = vunpack.c.l.b16 %v581
      %v3182 = vunpack.c.h.b16 %v581
      %v3183 = vunpack.c.l.b16 %v582
      %v3184 = vunpack.c.h.b16 %v582
      %v3185 = vunpack.c.l.b16 %v583
      %v3186 = vunpack.c.h.b16 %v583
      %v3187 = vunpack.c.l.b16 %v584
      %v3188 = vunpack.c.h.b16 %v584
      %v3189 = vunpack.c.l.b16 %v585
      %v3190 = vunpack.c.h.b16 %v585
      %v3191 = vunpack.c.l.b16 %v586
      %v3192 = vunpack.c.h.b16 %v586
      %v3193 = vunpack.c.l.b16 %v587
      %v3194 = vunpack.c.h.b16 %v587
      %v3195 = vunpack.c.l.b16 %v588
      %v3196 = vunpack.c.h.b16 %v588
      %v3197 = vunpack.c.l.b16 %v589
      %v3198 = vunpack.c.h.b16 %v589
      %v3199 = vunpack.c.l.b16 %v590
      %v3200 = vunpack.c.h.b16 %v590
      %v3201 = vunpack.c.l.b16 %v591
      %v3202 = vunpack.c.h.b16 %v591
      %v3203 = vunpack.c.l.b16 %v592
      %v3204 = vunpack.c.h.b16 %v592
      %v3205 = vunpack.c.l.b16 %v593
      %v3206 = vunpack.c.h.b16 %v593
      %v3207 = vunpack.c.l.b16 %v594
      %v3208 = vunpack.c.h.b16 %v594
      %v3209 = vunpack.c.l.b16 %v595
      %v3210 = vunpack.c.h.b16 %v595
      %v3211 = vunpack.c.l.b16 %v596
      %v3212 = vunpack.c.h.b16 %v596
      %v3213 = vunpack.c.l.b16 %v597
      %v3214 = vunpack.c.h.b16 %v597
      %v3215 = vunpack.c.l.b16 %v598
      %v3216 = vunpack.c.h.b16 %v598
      %v3217 = vunpack.c.l.b16 %v599
      %v3218 = vunpack.c.h.b16 %v599
      %v3219 = vunpack.c.l.b16 %v600
      %v3220 = vunpack.c.h.b16 %v600
      %v3221 = vunpack.c.l.b16 %v601
      %v3222 = vunpack.c.h.b16 %v601
      %v3223 = vunpack.c.l.b16 %v602
      %v3224 = vunpack.c.h.b16 %v602
      %v3225 = vunpack.c.l.b16 %v603
      %v3226 = vunpack.c.h.b16 %v603
      %v3227 = vunpack.c.l.b16 %v604
      %v3228 = vunpack.c.h.b16 %v604
      %v3229 = vunpack.c.l.b16 %v605
      %v3230 = vunpack.c.h.b16 %v605
      %v3231 = vunpack.c.l.b16 %v606
      %v3232 = vunpack.c.h.b16 %v606
      %v3233 = vunpack.c.l.b16 %v607
      %v3234 = vunpack.c.h.b16 %v607
      %v3235 = vunpack.c.l.b16 %v608
      %v3236 = vunpack.c.h.b16 %v608
      %v3237 = vunpack.c.l.b16 %v609
      %v3238 = vunpack.c.h.b16 %v609
      %v3239 = vunpack.c.l.b16 %v610
      %v3240 = vunpack.c.h.b16 %v610
      %v3241 = vunpack.c.l.b16 %v611
      %v3242 = vunpack.c.h.b16 %v611
      %v3243 = vunpack.c.l.b16 %v612
      %v3244 = vunpack.c.h.b16 %v612
      %v3245 = vunpack.c.l.b16 %v613
      %v3246 = vunpack.c.h.b16 %v613
      %v3247 = vunpack.c.l.b16 %v614
      %v3248 = vunpack.c.h.b16 %v614
      %v3249 = vunpack.c.l.b16 %v615
      %v3250 = vunpack.c.h.b16 %v615
      %v3251 = vunpack.c.l.b16 %v616
      %v3252 = vunpack.c.h.b16 %v616
      %v3253 = vunpack.c.l.b16 %v617
      %v3254 = vunpack.c.h.b16 %v617
      %v3255 = vunpack.c.l.b16 %v618
      %v3256 = vunpack.c.h.b16 %v618
      %v3257 = vunpack.c.l.b16 %v619
      %v3258 = vunpack.c.h.b16 %v619
      %v3259 = vunpack.c.l.b16 %v620
      %v3260 = vunpack.c.h.b16 %v620
      %v3261 = vunpack.c.l.b16 %v621
      %v3262 = vunpack.c.h.b16 %v621
      %v3263 = vunpack.c.l.b16 %v622
      %v3264 = vunpack.c.h.b16 %v622
      %v3265 = vunpack.c.l.b16 %v623
      %v3266 = vunpack.c.h.b16 %v623
      %v3267 = vunpack.c.l.b16 %v624
      %v3268 = vunpack.c.h.b16 %v624
      %v3269 = vunpack.c.l.b16 %v625
      %v3270 = vunpack.c.h.b16 %v625
      %v3271 = vunpack.c.l.b16 %v626
      %v3272 = vunpack.c.h.b16 %v626
      %v3273 = vunpack.c.l.b16 %v627
      %v3274 = vunpack.c.h.b16 %v627
      %v3275 = vunpack.c.l.b16 %v628
      %v3276 = vunpack.c.h.b16 %v628
      %v3277 = vunpack.c.l.b16 %v629
      %v3278 = vunpack.c.h.b16 %v629
      %v3279 = vunpack.c.l.b16 %v630
      %v3280 = vunpack.c.h.b16 %v630
      %v3281 = vunpack.c.l.b16 %v631
      %v3282 = vunpack.c.h.b16 %v631
      %v3283 = vunpack.c.l.b16 %v632
      %v3284 = vunpack.c.h.b16 %v632
      %v3285 = vunpack.c.l.b16 %v633
      %v3286 = vunpack.c.h.b16 %v633
      %v3287 = vunpack.c.l.b16 %v634
      %v3288 = vunpack.c.h.b16 %v634
      %v3289 = vunpack.c.l.b16 %v635
      %v3290 = vunpack.c.h.b16 %v635
      %v3291 = vunpack.c.l.b16 %v636
      %v3292 = vunpack.c.h.b16 %v636
      %v3293 = vunpack.c.l.b16 %v637
      %v3294 = vunpack.c.h.b16 %v637
      %v3295 = vunpack.c.l.b16 %v638
      %v3296 = vunpack.c.h.b16 %v638
      %v3297 = vunpack.c.l.b16 %v639
      %v3298 = vunpack.c.h.b16 %v639
      %v3299 = vunpack.c.l.b16 %v640
      %v3300 = vunpack.c.h.b16 %v640
      %v3301 = vunpack.c.l.b16 %v641
      %v3302 = vunpack.c.h.b16 %v641
      %v3303 = vunpack.c.l.b16 %v642
      %v3304 = vunpack.c.h.b16 %v642
      %v3305 = vunpack.c.l.b16 %v643
      %v3306 = vunpack.c.h.b16 %v643
      %v3307 = vunpack.c.l.b16 %v644
      %v3308 = vunpack.c.h.b16 %v644
      %v3309 = vunpack.c.l.b16 %v645
      %v3310 = vunpack.c.h.b16 %v645
      %v3311 = vunpack.c.l.b16 %v646
      %v3312 = vunpack.c.h.b16 %v646
      %v3313 = vunpack.c.l.b16 %v647
      %v3314 = vunpack.c.h.b16 %v647
      %v3315 = vunpack.c.l.b16 %v648
      %v3316 = vunpack.c.h.b16 %v648
      %v3317 = vunpack.c.l.b16 %v649
      %v3318 = vunpack.c.h.b16 %v649
      %v3319 = vunpack.c.l.b16 %v650
      %v3320 = vunpack.c.h.b16 %v650
      %v3321 = vunpack.c.l.b16 %v651
      %v3322 = vunpack.c.h.b16 %v651
      %v3323 = vunpack.c.l.b16 %v652
      %v3324 = vunpack.c.h.b16 %v652
      %v3325 = vunpack.c.l.b16 %v653
      %v3326 = vunpack.c.h.b16 %v653
      %v3327 = vunpack.c.l.b16 %v654
      %v3328 = vunpack.c.h.b16 %v654
      %v3329 = vunpack.c.l.b16 %v655
      %v3330 = vunpack.c.h.b16 %v655
      %v3331 = vunpack.c.l.b16 %v656
      %v3332 = vunpack.c.h.b16 %v656
      %v3333 = vunpack.c.l.b16 %v657
      %v3334 = vunpack.c.h.b16 %v657
      %v3335 = vunpack.c.l.b16 %v658
      %v3336 = vunpack.c.h.b16 %v658
      %v3337 = vunpack.c.l.b16 %v659
      %v3338 = vunpack.c.h.b16 %v659
      %v3339 = vunpack.c.l.b16 %v660
      %v3340 = vunpack.c.h.b16 %v660
      %v3341 = vunpack.c.l.b16 %v661
      %v3342 = vunpack.c.h.b16 %v661
      %v3343 = vunpack.c.l.b16 %v662
      %v3344 = vunpack.c.h.b16 %v662
      %v3345 = vunpack.c.l.b16 %v663
      %v3346 = vunpack.c.h.b16 %v663
      %v3347 = vunpack.c.l.b16 %v664
      %v3348 = vunpack.c.h.b16 %v664
      %v3349 = vunpack.c.l.b16 %v665
      %v3350 = vunpack.c.h.b16 %v665
      %v3351 = vunpack.c.l.b16 %v666
      %v3352 = vunpack.c.h.b16 %v666
      %v3353 = vunpack.c.l.b16 %v667
      %v3354 = vunpack.c.h.b16 %v667
      %v3355 = vunpack.c.l.b16 %v668
      %v3356 = vunpack.c.h.b16 %v668
      %v3357 = vunpack.c.l.b16 %v669
      %v3358 = vunpack.c.h.b16 %v669
      %v3359 = vunpack.c.l.b16 %v670
      %v3360 = vunpack.c.h.b16 %v670
      %v3361 = vunpack.c.l.b16 %v671
      %v3362 = vunpack.c.h.b16 %v671
      %v3363 = vunpack.c.l.b16 %v672
      %v3364 = vunpack.c.h.b16 %v672
      %v3365 = vunpack.c.l.b16 %v673
      %v3366 = vunpack.c.h.b16 %v673
      %v3367 = vunpack.c.l.b16 %v674
      %v3368 = vunpack.c.h.b16 %v674
      %v3369 = vunpack.c.l.b16 %v675
      %v3370 = vunpack.c.h.b16 %v675
      %v3371 = vunpack.c.l.b16 %v676
      %v3372 = vunpack.c.h.b16 %v676
      %v3373 = vunpack.c.l.b16 %v677
      %v3374 = vunpack.c.h.b16 %v677
      %v3375 = vunpack.c.l.b16 %v678
      %v3376 = vunpack.c.h.b16 %v678
      %v3377 = vunpack.c.l.b16 %v679
      %v3378 = vunpack.c.h.b16 %v679
      %v3379 = vunpack.c.l.b16 %v680
      %v3380 = vunpack.c.h.b16 %v680
      %v3381 = vunpack.c.l.b16 %v681
      %v3382 = vunpack.c.h.b16 %v681
      %v3383 = vunpack.c.l.b16 %v682
      %v3384 = vunpack.c.h.b16 %v682
      %v3385 = vunpack.c.l.b16 %v683
      %v3386 = vunpack.c.h.b16 %v683
      %v3387 = vunpack.c.l.b16 %v684
      %v3388 = vunpack.c.h.b16 %v684
      %v3389 = vunpack.c.l.b16 %v685
      %v3390 = vunpack.c.h.b16 %v685
      %v3391 = vunpack.c.l.b16 %v686
      %v3392 = vunpack.c.h.b16 %v686
      %v3393 = vunpack.c.l.b16 %v687
      %v3394 = vunpack.c.h.b16 %v687
      %v3395 = vunpack.c.l.b16 %v688
      %v3396 = vunpack.c.h.b16 %v688
      %v3397 = vunpack.c.l.b16 %v689
      %v3398 = vunpack.c.h.b16 %v689
      %v3399 = vunpack.c.l.b16 %v690
      %v3400 = vunpack.c.h.b16 %v690
      %v3401 = vunpack.c.l.b16 %v691
      %v3402 = vunpack.c.h.b16 %v691
      %v3403 = vunpack.c.l.b16 %v692
      %v3404 = vunpack.c.h.b16 %v692
      %v3405 = vunpack.c.l.b16 %v693
      %v3406 = vunpack.c.h.b16 %v693
      %v3407 = vunpack.c.l.b16 %v694
      %v3408 = vunpack.c.h.b16 %v694
      %v3409 = vunpack.c.l.b16 %v695
      %v3410 = vunpack.c.h.b16 %v695
      %v3411 = vunpack.c.l.b16 %v696
      %v3412 = vunpack.c.h.b16 %v696
      %v3413 = vunpack.c.l.b16 %v697
      %v3414 = vunpack.c.h.b16 %v697
      %v3415 = vunpack.c.l.b16 %v698
      %v3416 = vunpack.c.h.b16 %v698
      %v3417 = vunpack.c.l.b16 %v699
      %v3418 = vunpack.c.h.b16 %v699
      %v3419 = vunpack.c.l.b16 %v700
      %v3420 = vunpack.c.h.b16 %v700
      %v3421 = vunpack.c.l.b16 %v701
      %v3422 = vunpack.c.h.b16 %v701
      %v3423 = vunpack.c.l.b16 %v702
      %v3424 = vunpack.c.h.b16 %v702
      %v3425 = vunpack.c.l.b16 %v703
      %v3426 = vunpack.c.h.b16 %v703
      %v3427 = vunpack.c.l.b16 %v704
      %v3428 = vunpack.c.h.b16 %v704
      %v3429 = vunpack.c.l.b16 %v705
      %v3430 = vunpack.c.h.b16 %v705
      %v3431 = vunpack.c.l.b16 %v706
      %v3432 = vunpack.c.h.b16 %v706
      %v3433 = vunpack.c.l.b16 %v707
      %v3434 = vunpack.c.h.b16 %v707
      %v3435 = vunpack.c.l.b16 %v708
      %v3436 = vunpack.c.h.b16 %v708
      %v3437 = vunpack.c.l.b16 %v709
      %v3438 = vunpack.c.h.b16 %v709
      %v3439 = vunpack.c.l.b16 %v710
      %v3440 = vunpack.c.h.b16 %v710
      %v3441 = vunpack.c.l.b16 %v711
      %v3442 = vunpack.c.h.b16 %v711
      %v3443 = vunpack.c.l.b16 %v712
      %v3444 = vunpack.c.h.b16 %v712
      %v3445 = vunpack.c.l.b16 %v713
      %v3446 = vunpack.c.h.b16 %v713
      %v3447 = vunpack.c.l.b16 %v714
      %v3448 = vunpack.c.h.b16 %v714
      %v3449 = vunpack.c.l.b16 %v715
      %v3450 = vunpack.c.h.b16 %v715
      %v3451 = vunpack.c.l.b16 %v716
      %v3452 = vunpack.c.h.b16 %v716
      %v3453 = vunpack.c.l.b16 %v717
      %v3454 = vunpack.c.h.b16 %v717
      %v3455 = vunpack.c.l.b16 %v718
      %v3456 = vunpack.c.h.b16 %v718
      %v3457 = vunpack.c.l.b16 %v719
      %v3458 = vunpack.c.h.b16 %v719
      %v3459 = vunpack.c.l.b16 %v720
      %v3460 = vunpack.c.h.b16 %v720
      %v3461 = vunpack.c.l.b16 %v721
      %v3462 = vunpack.c.h.b16 %v721
      %v3463 = vunpack.c.l.b16 %v722
      %v3464 = vunpack.c.h.b16 %v722
      %v3465 = vunpack.c.l.b16 %v723
      %v3466 = vunpack.c.h.b16 %v723
      %v3467 = vunpack.c.l.b16 %v724
      %v3468 = vunpack.c.h.b16 %v724
      %v3469 = vunpack.c.l.b16 %v725
      %v3470 = vunpack.c.h.b16 %v725
      %v3471 = vunpack.c.l.b16 %v726
      %v3472 = vunpack.c.h.b16 %v726
      %v3473 = vunpack.c.l.b16 %v727
      %v3474 = vunpack.c.h.b16 %v727
      %v3475 = vunpack.c.l.b16 %v728
      %v3476 = vunpack.c.h.b16 %v728
      %v3477 = vunpack.c.l.b16 %v729
      %v3478 = vunpack.c.h.b16 %v729
      %v3479 = vunpack.c.l.b16 %v730
      %v3480 = vunpack.c.h.b16 %v730
      %v3481 = vunpack.c.l.b16 %v731
      %v3482 = vunpack.c.h.b16 %v731
      %v3483 = vunpack.c.l.b16 %v732
      %v3484 = vunpack.c.h.b16 %v732
      %v3485 = vunpack.c.l.b16 %v733
      %v3486 = vunpack.c.h.b16 %v733
      %v3487 = vunpack.c.l.b16 %v734
      %v3488 = vunpack.c.h.b16 %v734
      %v3489 = vunpack.c.l.b16 %v735
      %v3490 = vunpack.c.h.b16 %v735
      %v3491 = vunpack.c.l.b16 %v736
      %v3492 = vunpack.c.h.b16 %v736
      %v3493 = vunpack.c.l.b16 %v737
      %v3494 = vunpack.c.h.b16 %v737
      %v3495 = vunpack.c.l.b16 %v738
      %v3496 = vunpack.c.h.b16 %v738
      %v3497 = vunpack.c.l.b16 %v739
      %v3498 = vunpack.c.h.b16 %v739
      %v3499 = vunpack.c.l.b16 %v740
      %v3500 = vunpack.c.h.b16 %v740
      %v3501 = vunpack.c.l.b16 %v741
      %v3502 = vunpack.c.h.b16 %v741
      %v3503 = vunpack.c.l.b16 %v742
      %v3504 = vunpack.c.h.b16 %v742
      %v3505 = vunpack.c.l.b16 %v743
      %v3506 = vunpack.c.h.b16 %v743
      %v3507 = vunpack.c.l.b16 %v744
      %v3508 = vunpack.c.h.b16 %v744
      %v3509 = vunpack.c.l.b16 %v745
      %v3510 = vunpack.c.h.b16 %v745
      %v3511 = vunpack.c.l.b16 %v746
      %v3512 = vunpack.c.h.b16 %v746
      %v3513 = vunpack.c.l.b16 %v747
      %v3514 = vunpack.c.h.b16 %v747
      %v3515 = vunpack.c.l.b16 %v748
      %v3516 = vunpack.c.h.b16 %v748
      %v3517 = vunpack.c.l.b16 %v749
      %v3518 = vunpack.c.h.b16 %v749
      %v3519 = vunpack.c.l.b16 %v750
      %v3520 = vunpack.c.h.b16 %v750
      %v3521 = vunpack.c.l.b16 %v751
      %v3522 = vunpack.c.h.b16 %v751
      %v3523 = vunpack.c.l.b16 %v752
      %v3524 = vunpack.c.h.b16 %v752
      %v3525 = vunpack.c.l.b16 %v753
      %v3526 = vunpack.c.h.b16 %v753
      %v3527 = vunpack.c.l.b16 %v754
      %v3528 = vunpack.c.h.b16 %v754
      %v3529 = vunpack.c.l.b16 %v755
      %v3530 = vunpack.c.h.b16 %v755
      %v3531 = vunpack.c.l.b16 %v756
      %v3532 = vunpack.c.h.b16 %v756
      %v3533 = vunpack.c.l.b16 %v757
      %v3534 = vunpack.c.h.b16 %v757
      %v3535 = vunpack.c.l.b16 %v758
      %v3536 = vunpack.c.h.b16 %v758
      %v3537 = vunpack.c.l.b16 %v759
      %v3538 = vunpack.c.h.b16 %v759
      %v3539 = vunpack.c.l.b16 %v760
      %v3540 = vunpack.c.h.b16 %v760
      %v3541 = vunpack.c.l.b16 %v761
      %v3542 = vunpack.c.h.b16 %v761
      %v3543 = vunpack.c.l.b16 %v762
      %v3544 = vunpack.c.h.b16 %v762
      %v3545 = vunpack.c.l.b16 %v763
      %v3546 = vunpack.c.h.b16 %v763
      %v3547 = vunpack.c.l.b16 %v764
      %v3548 = vunpack.c.h.b16 %v764
      %v3549 = vunpack.c.l.b16 %v765
      %v3550 = vunpack.c.h.b16 %v765
      %v3551 = vunpack.c.l.b16 %v766
      %v3552 = vunpack.c.h.b16 %v766
      %v3553 = vunpack.c.l.b16 %v767
      %v3554 = vunpack.c.h.b16 %v767
      %v3555 = vunpack.c.l.b16 %v768
      %v3556 = vunpack.c.h.b16 %v768
      %v3557 = vunpack.c.l.b16 %v769
      %v3558 = vunpack.c.h.b16 %v769
      %v3559 = vunpack.c.l.b16 %v770
      %v3560 = vunpack.c.h.b16 %v770
      %v3561 = vunpack.c.l.b16 %v771
      %v3562 = vunpack.c.h.b16 %v771
      %v3563 = vunpack.c.l.b16 %v772
      %v3564 = vunpack.c.h.b16 %v772
      %v3565 = vunpack.c.l.b16 %v773
      %v3566 = vunpack.c.h.b16 %v773
      %v3567 = vunpack.c.l.b16 %v774
      %v3568 = vunpack.c.h.b16 %v774
      %v3569 = vunpack.c.l.b16 %v775
      %v3570 = vunpack.c.h.b16 %v775
      %v3571 = vunpack.c.l.b16 %v776
      %v3572 = vunpack.c.h.b16 %v776
      %v3573 = vunpack.c.l.b16 %v777
      %v3574 = vunpack.c.h.b16 %v777
      %v3575 = vunpack.c.l.b16 %v778
      %v3576 = vunpack.c.h.b16 %v778
      %v3577 = vunpack.c.l.b16 %v779
      %v3578 = vunpack.c.h.b16 %v779
      %v3579 = vunpack.c.l.b16 %v780
      %v3580 = vunpack.c.h.b16 %v780
      %v3581 = vunpack.c.l.b16 %v781
      %v3582 = vunpack.c.h.b16 %v781
      %v3583 = vunpack.c.l.b16 %v782
      %v3584 = vunpack.c.h.b16 %v782
      %v3585 = vunpack.c.l.b16 %v783
      %v3586 = vunpack.c.h.b16 %v783
      %v3587 = vunpack.c.l.b16 %v784
      %v3588 = vunpack.c.h.b16 %v784
      %v3589 = vunpack.c.l.b16 %v785
      %v3590 = vunpack.c.h.b16 %v785
      %v3591 = vunpack.c.l.b16 %v786
      %v3592 = vunpack.c.h.b16 %v786
      %v3593 = vunpack.c.l.b16 %v787
      %v3594 = vunpack.c.h.b16 %v787
      %v3595 = vunpack.c.l.b16 %v788
      %v3596 = vunpack.c.h.b16 %v788
      %v3597 = vunpack.c.l.b16 %v789
      %v3598 = vunpack.c.h.b16 %v789
      %v3599 = vunpack.c.l.b16 %v790
      %v3600 = vunpack.c.h.b16 %v790
      %v3601 = vunpack.c.l.b16 %v791
      %v3602 = vunpack.c.h.b16 %v791
      %v3603 = vunpack.c.l.b16 %v792
      %v3604 = vunpack.c.h.b16 %v792
      %v3605 = vunpack.c.l.b16 %v793
      %v3606 = vunpack.c.h.b16 %v793
      %v3607 = vunpack.c.l.b16 %v794
      %v3608 = vunpack.c.h.b16 %v794
      %v3609 = vunpack.c.l.b16 %v795
      %v3610 = vunpack.c.h.b16 %v795
      %v3611 = vunpack.c.l.b16 %v796
      %v3612 = vunpack.c.h.b16 %v796
      %v3613 = vunpack.c.l.b16 %v797
      %v3614 = vunpack.c.h.b16 %v797
      %v3615 = vunpack.c.l.b16 %v798
      %v3616 = vunpack.c.h.b16 %v798
      %v3617 = vunpack.c.l.b16 %v799
      %v3618 = vunpack.c.h.b16 %v799
      %v3619 = vunpack.c.l.b16 %v800
      %v3620 = vunpack.c.h.b16 %v800
      %v3621 = vunpack.c.l.b16 %v801
      %v3622 = vunpack.c.h.b16 %v801
      %v3623 = vunpack.c.l.b16 %v802
      %v3624 = vunpack.c.h.b16 %v802
      %v3625 = vunpack.c.l.b16 %v803
      %v3626 = vunpack.c.h.b16 %v803
      %v3627 = vunpack.c.l.b16 %v804
      %v3628 = vunpack.c.h.b16 %v804
      %v3629 = vunpack.c.l.b16 %v805
      %v3630 = vunpack.c.h.b16 %v805
      %v3631 = vunpack.c.l.b16 %v806
      %v3632 = vunpack.c.h.b16 %v806
      %v3633 = vunpack.c.l.b16 %v807
      %v3634 = vunpack.c.h.b16 %v807
      %v3635 = vunpack.c.l.b16 %v808
      %v3636 = vunpack.c.h.b16 %v808
      %v3637 = vunpack.c.l.b16 %v809
      %v3638 = vunpack.c.h.b16 %v809
      %v3639 = vunpack.c.l.b16 %v810
      %v3640 = vunpack.c.h.b16 %v810
      %v3641 = vunpack.c.l.b16 %v811
      %v3642 = vunpack.c.h.b16 %v811
      %v3643 = vunpack.c.l.b16 %v812
      %v3644 = vunpack.c.h.b16 %v812
      %v3645 = vunpack.c.l.b16 %v813
      %v3646 = vunpack.c.h.b16 %v813
      %v3647 = vunpack.c.l.b16 %v814
      %v3648 = vunpack.c.h.b16 %v814
      %v3649 = vunpack.c.l.b16 %v815
      %v3650 = vunpack.c.h.b16 %v815
      %v3651 = vunpack.c.l.b16 %v816
      %v3652 = vunpack.c.h.b16 %v816
      %v3653 = vunpack.c.l.b16 %v817
      %v3654 = vunpack.c.h.b16 %v817
      %v3655 = vunpack.c.l.b16 %v818
      %v3656 = vunpack.c.h.b16 %v818
      %v3657 = vunpack.c.l.b16 %v819
      %v3658 = vunpack.c.h.b16 %v819
      %v3659 = vunpack.c.l.b16 %v820
      %v3660 = vunpack.c.h.b16 %v820
      %v3661 = vunpack.c.l.b16 %v821
      %v3662 = vunpack.c.h.b16 %v821
      %v3663 = vunpack.c.l.b16 %v822
      %v3664 = vunpack.c.h.b16 %v822
      %v3665 = vunpack.c.l.b16 %v823
      %v3666 = vunpack.c.h.b16 %v823
      %v3667 = vunpack.c.l.b16 %v824
      %v3668 = vunpack.c.h.b16 %v824
      %v3669 = vunpack.c.l.b16 %v825
      %v3670 = vunpack.c.h.b16 %v825
      %v3671 = vunpack.c.l.b16 %v826
      %v3672 = vunpack.c.h.b16 %v826
      %v3673 = vunpack.c.l.b16 %v827
      %v3674 = vunpack.c.h.b16 %v827
      %v3675 = vunpack.c.l.b16 %v828
      %v3676 = vunpack.c.h.b16 %v828
      %v3677 = vunpack.c.l.b16 %v829
      %v3678 = vunpack.c.h.b16 %v829
      %v3679 = vunpack.c.l.b16 %v830
      %v3680 = vunpack.c.h.b16 %v830
      %v3681 = vunpack.c.l.b16 %v831
      %v3682 = vunpack.c.h.b16 %v831
      %v3683 = vunpack.c.l.b16 %v832
      %v3684 = vunpack.c.h.b16 %v832
      %v3685 = vunpack.c.l.b16 %v833
      %v3686 = vunpack.c.h.b16 %v833
      %v3687 = vunpack.c.l.b16 %v834
      %v3688 = vunpack.c.h.b16 %v834
      %v3689 = vunpack.c.l.b16 %v835
      %v3690 = vunpack.c.h.b16 %v835
      %v3691 = vunpack.c.l.b16 %v836
      %v3692 = vunpack.c.h.b16 %v836
      %v3693 = vunpack.c.l.b16 %v837
      %v3694 = vunpack.c.h.b16 %v837
      %v3695 = vunpack.c.l.b16 %v838
      %v3696 = vunpack.c.h.b16 %v838
      %v3697 = vunpack.c.l.b16 %v839
      %v3698 = vunpack.c.h.b16 %v839
      %v3699 = vunpack.c.l.b16 %v840
      %v3700 = vunpack.c.h.b16 %v840
      %v3701 = vunpack.c.l.b16 %v841
      %v3702 = vunpack.c.h.b16 %v841
      %v3703 = vunpack.c.l.b16 %v842
      %v3704 = vunpack.c.h.b16 %v842
      %v3705 = vunpack.c.l.b16 %v843
      %v3706 = vunpack.c.h.b16 %v843
      %v3707 = vunpack.c.l.b16 %v844
      %v3708 = vunpack.c.h.b16 %v844
      %v3709 = vunpack.c.l.b16 %v845
      %v3710 = vunpack.c.h.b16 %v845
      %v3711 = vunpack.c.l.b16 %v846
      %v3712 = vunpack.c.h.b16 %v846
      %v3713 = vunpack.c.l.b16 %v847
      %v3714 = vunpack.c.h.b16 %v847
      %v3715 = vunpack.c.l.b16 %v848
      %v3716 = vunpack.c.h.b16 %v848
      %v3717 = vunpack.c.l.b16 %v849
      %v3718 = vunpack.c.h.b16 %v849
      %v3719 = vunpack.c.l.b16 %v850
      %v3720 = vunpack.c.h.b16 %v850
      %v3721 = vunpack.c.l.b16 %v851
      %v3722 = vunpack.c.h.b16 %v851
      %v3723 = vunpack.c.l.b16 %v852
      %v3724 = vunpack.c.h.b16 %v852
      %v3725 = vunpack.c.l.b16 %v853
      %v3726 = vunpack.c.h.b16 %v853
      %v3727 = vunpack.c.l.b16 %v854
      %v3728 = vunpack.c.h.b16 %v854
      %v3729 = vunpack.c.l.b16 %v855
      %v3730 = vunpack.c.h.b16 %v855
      %v3731 = vunpack.c.l.b16 %v856
      %v3732 = vunpack.c.h.b16 %v856
      %v3733 = vunpack.c.l.b16 %v857
      %v3734 = vunpack.c.h.b16 %v857
      %v3735 = vunpack.c.l.b16 %v858
      %v3736 = vunpack.c.h.b16 %v858
      %v3737 = vunpack.c.l.b16 %v859
      %v3738 = vunpack.c.h.b16 %v859
      %v3739 = vunpack.c.l.b16 %v860
      %v3740 = vunpack.c.h.b16 %v860
      %v3741 = vunpack.c.l.b16 %v861
      %v3742 = vunpack.c.h.b16 %v861
      %v3743 = vunpack.c.l.b16 %v862
      %v3744 = vunpack.c.h.b16 %v862
      %v3745 = vunpack.c.l.b16 %v863
      %v3746 = vunpack.c.h.b16 %v863
      %v3747 = vunpack.c.l.b16 %v864
      %v3748 = vunpack.c.h.b16 %v864
      %v3749 = vunpack.c.l.b16 %v865
      %v3750 = vunpack.c.h.b16 %v865
      %v3751 = vunpack.c.l.b16 %v866
      %v3752 = vunpack.c.h.b16 %v866
      %v3753 = vunpack.c.l.b16 %v867
      %v3754 = vunpack.c.h.b16 %v867
      %v3755 = vunpack.c.l.b16 %v868
      %v3756 = vunpack.c.h.b16 %v868
      %v3757 = vunpack.c.l.b16 %v869
      %v3758 = vunpack.c.h.b16 %v869
      %v3759 = vunpack.c.l.b16 %v870
      %v3760 = vunpack.c.h.b16 %v870
      %v3761 = vunpack.c.l.b16 %v871
      %v3762 = vunpack.c.h.b16 %v871
      %v3763 = vunpack.c.l.b16 %v872
      %v3764 = vunpack.c.h.b16 %v872
      %v3765 = vunpack.c.l.b16 %v873
      %v3766 = vunpack.c.h.b16 %v873
      %v3767 = vunpack.c.l.b16 %v874
      %v3768 = vunpack.c.h.b16 %v874
      %v3769 = vunpack.c.l.b16 %v875
      %v3770 = vunpack.c.h.b16 %v875
      %v3771 = vunpack.c.l.b16 %v876
      %v3772 = vunpack.c.h.b16 %v876
      %v3773 = vunpack.c.l.b16 %v877
      %v3774 = vunpack.c.h.b16 %v877
      %v3775 = vunpack.c.l.b16 %v878
      %v3776 = vunpack.c.h.b16 %v878
      %v3777 = vunpack.c.l.b16 %v879
      %v3778 = vunpack.c.h.b16 %v879
      %v3779 = vunpack.c.l.b16 %v880
      %v3780 = vunpack.c.h.b16 %v880
      %v3781 = vunpack.c.l.b16 %v881
      %v3782 = vunpack.c.h.b16 %v881
      %v3783 = vunpack.c.l.b16 %v882
      %v3784 = vunpack.c.h.b16 %v882
      %v3785 = vunpack.c.l.b16 %v883
      %v3786 = vunpack.c.h.b16 %v883
      %v3787 = vunpack.c.l.b16 %v884
      %v3788 = vunpack.c.h.b16 %v884
      %v3789 = vunpack.c.l.b16 %v885
      %v3790 = vunpack.c.h.b16 %v885
      %v3791 = vunpack.c.l.b16 %v886
      %v3792 = vunpack.c.h.b16 %v886
      %v3793 = vunpack.c.l.b16 %v887
      %v3794 = vunpack.c.h.b16 %v887
      %v3795 = vunpack.c.l.b16 %v888
      %v3796 = vunpack.c.h.b16 %v888
      %v3797 = vunpack.c.l.b16 %v889
      %v3798 = vunpack.c.h.b16 %v889
      %v3799 = vunpack.c.l.b16 %v890
      %v3800 = vunpack.c.h.b16 %v890
      %v3801 = vunpack.c.l.b16 %v891
      %v3802 = vunpack.c.h.b16 %v891
      %v3803 = vunpack.c.l.b16 %v892
      %v3804 = vunpack.c.h.b16 %v892
      %v3805 = vunpack.c.l.b16 %v893
      %v3806 = vunpack.c.h.b16 %v893
      %v3807 = vunpack.c.l.b16 %v894
      %v3808 = vunpack.c.h.b16 %v894
      %v3809 = vunpack.c.l.b16 %v895
      %v3810 = vunpack.c.h.b16 %v895
      %v3811 = vunpack.c.l.b16 %v896
      %v3812 = vunpack.c.h.b16 %v896
      %v3813 = vunpack.c.l.b16 %v897
      %v3814 = vunpack.c.h.b16 %v897
      %v3815 = vunpack.c.l.b16 %v898
      %v3816 = vunpack.c.h.b16 %v898
      %v3817 = vunpack.c.l.b16 %v899
      %v3818 = vunpack.c.h.b16 %v899
      %v3819 = vunpack.c.l.b16 %v900
      %v3820 = vunpack.c.h.b16 %v900
      %v3821 = vunpack.c.l.b16 %v901
      %v3822 = vunpack.c.h.b16 %v901
      %v3823 = vunpack.c.l.b16 %v902
      %v3824 = vunpack.c.h.b16 %v902
      %v3825 = vunpack.c.l.b16 %v903
      %v3826 = vunpack.c.h.b16 %v903
      %v3827 = vunpack.c.l.b16 %v904
      %v3828 = vunpack.c.h.b16 %v904
      %v3829 = vunpack.c.l.b16 %v905
      %v3830 = vunpack.c.h.b16 %v905
      %v3831 = vunpack.c.l.b16 %v906
      %v3832 = vunpack.c.h.b16 %v906
      %v3833 = vunpack.c.l.b16 %v907
      %v3834 = vunpack.c.h.b16 %v907
      %v3835 = vunpack.c.l.b16 %v908
      %v3836 = vunpack.c.h.b16 %v908
      %v3837 = vunpack.c.l.b16 %v909
      %v3838 = vunpack.c.h.b16 %v909
      %v3839 = vunpack.c.l.b16 %v910
      %v3840 = vunpack.c.h.b16 %v910
      %v3841 = vunpack.c.l.b16 %v911
      %v3842 = vunpack.c.h.b16 %v911
      %v3843 = vunpack.c.l.b16 %v912
      %v3844 = vunpack.c.h.b16 %v912
      %v3845 = vunpack.c.l.b16 %v913
      %v3846 = vunpack.c.h.b16 %v913
      %v3847 = vunpack.c.l.b16 %v914
      %v3848 = vunpack.c.h.b16 %v914
      %v3849 = vunpack.c.l.b16 %v915
      %v3850 = vunpack.c.h.b16 %v915
      %v3851 = vunpack.c.l.b16 %v916
      %v3852 = vunpack.c.h.b16 %v916
      %v3853 = vunpack.c.l.b16 %v917
      %v3854 = vunpack.c.h.b16 %v917
      %v3855 = vunpack.c.l.b16 %v918
      %v3856 = vunpack.c.h.b16 %v918
      %v3857 = vunpack.c.l.b16 %v919
      %v3858 = vunpack.c.h.b16 %v919
      %v3859 = vunpack.c.l.b16 %v920
      %v3860 = vunpack.c.h.b16 %v920
      %v3861 = vunpack.c.l.b16 %v921
      %v3862 = vunpack.c.h.b16 %v921
      %v3863 = vunpack.c.l.b16 %v922
      %v3864 = vunpack.c.h.b16 %v922
      %v3865 = vunpack.c.l.b16 %v923
      %v3866 = vunpack.c.h.b16 %v923
      %v3867 = vunpack.c.l.b16 %v924
      %v3868 = vunpack.c.h.b16 %v924
      %v3869 = vunpack.c.l.b16 %v925
      %v3870 = vunpack.c.h.b16 %v925
      %v3871 = vunpack.c.l.b16 %v926
      %v3872 = vunpack.c.h.b16 %v926
      %v3873 = vunpack.c.l.b16 %v927
      %v3874 = vunpack.c.h.b16 %v927
      %v3875 = vunpack.c.l.b16 %v928
      %v3876 = vunpack.c.h.b16 %v928
      %v3877 = vunpack.c.l.b16 %v929
      %v3878 = vunpack.c.h.b16 %v929
      %v3879 = vunpack.c.l.b16 %v930
      %v3880 = vunpack.c.h.b16 %v930
      %v3881 = vunpack.c.l.b16 %v931
      %v3882 = vunpack.c.h.b16 %v931
      %v3883 = vunpack.c.l.b16 %v932
      %v3884 = vunpack.c.h.b16 %v932
      %v3885 = vunpack.c.l.b16 %v933
      %v3886 = vunpack.c.h.b16 %v933
      %v3887 = vunpack.c.l.b16 %v934
      %v3888 = vunpack.c.h.b16 %v934
      %v3889 = vunpack.c.l.b16 %v935
      %v3890 = vunpack.c.h.b16 %v935
      %v3891 = vunpack.c.l.b16 %v936
      %v3892 = vunpack.c.h.b16 %v936
      %v3893 = vunpack.c.l.b16 %v937
      %v3894 = vunpack.c.h.b16 %v937
      %v3895 = vunpack.c.l.b16 %v938
      %v3896 = vunpack.c.h.b16 %v938
      %v3897 = vunpack.c.l.b16 %v939
      %v3898 = vunpack.c.h.b16 %v939
      %v3899 = vunpack.c.l.b16 %v940
      %v3900 = vunpack.c.h.b16 %v940
      %v3901 = vunpack.c.l.b16 %v941
      %v3902 = vunpack.c.h.b16 %v941
      %v3903 = vunpack.c.l.b16 %v942
      %v3904 = vunpack.c.h.b16 %v942
      %v3905 = vunpack.c.l.b16 %v943
      %v3906 = vunpack.c.h.b16 %v943
      %v3907 = vunpack.c.l.b16 %v944
      %v3908 = vunpack.c.h.b16 %v944
      %v3909 = vunpack.c.l.b16 %v945
      %v3910 = vunpack.c.h.b16 %v945
      %v3911 = vunpack.c.l.b16 %v946
      %v3912 = vunpack.c.h.b16 %v946
      %v3913 = vunpack.c.l.b16 %v947
      %v3914 = vunpack.c.h.b16 %v947
      %v3915 = vunpack.c.l.b16 %v948
      %v3916 = vunpack.c.h.b16 %v948
      %v3917 = vunpack.c.l.b16 %v949
      %v3918 = vunpack.c.h.b16 %v949
      %v3919 = vunpack.c.l.b16 %v950
      %v3920 = vunpack.c.h.b16 %v950
      %v3921 = vunpack.c.l.b16 %v951
      %v3922 = vunpack.c.h.b16 %v951
      %v3923 = vunpack.c.l.b16 %v952
      %v3924 = vunpack.c.h.b16 %v952
      %v3925 = vunpack.c.l.b16 %v953
      %v3926 = vunpack.c.h.b16 %v953
      %v3927 = vunpack.c.l.b16 %v954
      %v3928 = vunpack.c.h.b16 %v954
      %v3929 = vunpack.c.l.b16 %v955
      %v3930 = vunpack.c.h.b16 %v955
      %v3931 = vunpack.c.l.b16 %v956
      %v3932 = vunpack.c.h.b16 %v956
      %v3933 = vunpack.c.l.b16 %v957
      %v3934 = vunpack.c.h.b16 %v957
      %v3935 = vunpack.c.l.b16 %v958
      %v3936 = vunpack.c.h.b16 %v958
      %v3937 = vunpack.c.l.b16 %v959
      %v3938 = vunpack.c.h.b16 %v959
      %v3939 = vunpack.c.l.b16 %v960
      %v3940 = vunpack.c.h.b16 %v960
      %v3941 = vunpack.c.l.b16 %v961
      %v3942 = vunpack.c.h.b16 %v961
      %v3943 = vunpack.c.l.b16 %v962
      %v3944 = vunpack.c.h.b16 %v962
      %v3945 = vunpack.c.l.b16 %v963
      %v3946 = vunpack.c.h.b16 %v963
      %v3947 = vunpack.c.l.b16 %v964
      %v3948 = vunpack.c.h.b16 %v964
      %v3949 = vunpack.c.l.b16 %v965
      %v3950 = vunpack.c.h.b16 %v965
      %v3951 = vunpack.c.l.b16 %v966
      %v3952 = vunpack.c.h.b16 %v966
      %v3953 = vunpack.c.l.b16 %v967
      %v3954 = vunpack.c.h.b16 %v967
      %v3955 = vunpack.c.l.b16 %v968
      %v3956 = vunpack.c.h.b16 %v968
      %v3957 = vunpack.c.l.b16 %v969
      %v3958 = vunpack.c.h.b16 %v969
      %v3959 = vunpack.c.l.b16 %v970
      %v3960 = vunpack.c.h.b16 %v970
      %v3961 = vunpack.c.l.b16 %v971
      %v3962 = vunpack.c.h.b16 %v971
      %v3963 = vunpack.c.l.b16 %v972
      %v3964 = vunpack.c.h.b16 %v972
      %v3965 = vunpack.c.l.b16 %v973
      %v3966 = vunpack.c.h.b16 %v973
      %v3967 = vunpack.c.l.b16 %v974
      %v3968 = vunpack.c.h.b16 %v974
      %v3969 = vunpack.c.l.b16 %v975
      %v3970 = vunpack.c.h.b16 %v975
      %v3971 = vunpack.c.l.b16 %v976
      %v3972 = vunpack.c.h.b16 %v976
      %v3973 = vunpack.c.l.b16 %v977
      %v3974 = vunpack.c.h.b16 %v977
      %v3975 = vunpack.c.l.b16 %v978
      %v3976 = vunpack.c.h.b16 %v978
      %v3977 = vunpack.c.l.b16 %v979
      %v3978 = vunpack.c.h.b16 %v979
      %v3979 = vunpack.c.l.b16 %v980
      %v3980 = vunpack.c.h.b16 %v980
      %v3981 = vunpack.c.l.b16 %v981
      %v3982 = vunpack.c.h.b16 %v981
      %v3983 = vunpack.c.l.b16 %v982
      %v3984 = vunpack.c.h.b16 %v982
      %v3985 = vunpack.c.l.b16 %v983
      %v3986 = vunpack.c.h.b16 %v983
      %v3987 = vunpack.c.l.b16 %v984
      %v3988 = vunpack.c.h.b16 %v984
      %v3989 = vunpack.c.l.b16 %v985
      %v3990 = vunpack.c.h.b16 %v985
      %v3991 = vunpack.c.l.b16 %v986
      %v3992 = vunpack.c.h.b16 %v986
      %v3993 = vunpack.c.l.b16 %v987
      %v3994 = vunpack.c.h.b16 %v987
      %v3995 = vunpack.c.l.b16 %v988
      %v3996 = vunpack.c.h.b16 %v988
      %v3997 = vunpack.c.l.b16 %v989
      %v3998 = vunpack.c.h.b16 %v989
      %v3999 = vunpack.c.l.b16 %v990
      %v4000 = vunpack.c.h.b16 %v990
      %v4001 = vunpack.c.l.b16 %v991
      %v4002 = vunpack.c.h.b16 %v991
      %v4003 = vunpack.c.l.b16 %v992
      %v4004 = vunpack.c.h.b16 %v992
      %v4005 = vunpack.c.l.b16 %v993
      %v4006 = vunpack.c.h.b16 %v993
      %v4007 = vunpack.c.l.b16 %v994
      %v4008 = vunpack.c.h.b16 %v994
      %v4009 = vunpack.c.l.b16 %v995
      %v4010 = vunpack.c.h.b16 %v995
      %v4011 = vunpack.c.l.b16 %v996
      %v4012 = vunpack.c.h.b16 %v996
      %v4013 = vunpack.c.l.b16 %v997
      %v4014 = vunpack.c.h.b16 %v997
      %v4015 = vunpack.c.l.b16 %v998
      %v4016 = vunpack.c.h.b16 %v998
      %v4017 = vunpack.c.l.b16 %v999
      %v4018 = vunpack.c.h.b16 %v999
      %v4019 = vunpack.c.l.b16 %v1000
      %v4020 = vunpack.c.h.b16 %v1000
      %v4021 = vunpack.c.l.b16 %v1001
      %v4022 = vunpack.c.h.b16 %v1001
      %v4023 = vunpack.c.l.b16 %v1002
      %v4024 = vunpack.c.h.b16 %v1002
      %v4025 = vunpack.c.l.b16 %v1003
      %v4026 = vunpack.c.h.b16 %v1003
      %v4027 = vunpack.c.l.b16 %v1004
      %v4028 = vunpack.c.h.b16 %v1004
      %v4029 = vunpack.c.l.b16 %v1005
      %v4030 = vunpack.c.h.b16 %v1005
      %v4031 = vunpack.c.l.b16 %v1006
      %v4032 = vunpack.c.h.b16 %v1006
      %v4033 = vunpack.c.l.b16 %v1007
      %v4034 = vunpack.c.h.b16 %v1007
      %v4035 = vunpack.c.l.b16 %v1008
      %v4036 = vunpack.c.h.b16 %v1008
      %v4037 = vunpack.c.l.b16 %v1009
      %v4038 = vunpack.c.h.b16 %v1009
      %v4039 = vunpack.c.l.b16 %v1010
      %v4040 = vunpack.c.h.b16 %v1010
      %v4041 = vunpack.c.l.b16 %v1011
      %v4042 = vunpack.c.h.b16 %v1011
      %v4043 = vunpack.c.l.b16 %v1012
      %v4044 = vunpack.c.h.b16 %v1012
      %v4045 = vunpack.c.l.b16 %v1013
      %v4046 = vunpack.c.h.b16 %v1013
      %v4047 = vunpack.c.l.b16 %v1014
      %v4048 = vunpack.c.h.b16 %v1014
      %v4049 = vunpack.c.l.b16 %v1015
      %v4050 = vunpack.c.h.b16 %v1015
      %v4051 = vunpack.c.l.b16 %v1016
      %v4052 = vunpack.c.h.b16 %v1016
      %v4053 = vunpack.c.l.b16 %v1017
      %v4054 = vunpack.c.h.b16 %v1017
      %v4055 = vunpack.c.l.b16 %v1018
      %v4056 = vunpack.c.h.b16 %v1018
      %v4057 = vunpack.c.l.b16 %v1019
      %v4058 = vunpack.c.h.b16 %v1019
      %v4059 = vunpack.c.l.b16 %v1020
      %v4060 = vunpack.c.h.b16 %v1020
      %v4061 = vunpack.c.l.b16 %v1021
      %v4062 = vunpack.c.h.b16 %v1021
      %v4063 = vunpack.c.l.b16 %v1022
      %v4064 = vunpack.c.h.b16 %v1022
      %v4065 = vunpack.c.l.b16 %v1023
      %v4066 = vunpack.c.h.b16 %v1023
      %v4067 = vunpack.c.l.b16 %v1024
      %v4068 = vunpack.c.h.b16 %v1024
      %v4069 = vunpack.c.l.b16 %v1025
      %v4070 = vunpack.c.h.b16 %v1025
      %v4071 = vunpack.c.l.b16 %v1026
      %v4072 = vunpack.c.h.b16 %v1026
      %v4073 = vunpack.c.l.b16 %v1027
      %v4074 = vunpack.c.h.b16 %v1027
      %v4075 = vunpack.c.l.b16 %v1028
      %v4076 = vunpack.c.h.b16 %v1028
      %v4077 = vunpack.c.l.b16 %v1029
      %v4078 = vunpack.c.h.b16 %v1029
      %v4079 = vunpack.c.l.b16 %v1030
      %v4080 = vunpack.c.h.b16 %v1030
      %v4081 = vunpack.c.l.b16 %v1031
      %v4082 = vunpack.c.h.b16 %v1031
      %v4083 = vunpack.c.l.b16 %v1032
      %v4084 = vunpack.c.h.b16 %v1032
      %v4085 = vunpack.c.l.b16 %v1033
      %v4086 = vunpack.c.h.b16 %v1033
      %v4087 = vunpack.c.l.b16 %v1034
      %v4088 = vunpack.c.h.b16 %v1034
      %v4089 = vunpack.c.l.b16 %v1035
      %v4090 = vunpack.c.h.b16 %v1035
      %v4091 = vunpack.c.l.b16 %v1036
      %v4092 = vunpack.c.h.b16 %v1036
      %v4093 = vunpack.c.l.b16 %v1037
      %v4094 = vunpack.c.h.b16 %v1037
      %v4095 = vunpack.c.l.b16 %v1038
      %v4096 = vunpack.c.h.b16 %v1038
      %v4097 = vunpack.c.l.b16 %v1039
      %v4098 = vunpack.c.h.b16 %v1039
      %v4099 = vunpack.c.l.b16 %v1040
      %v4100 = vunpack.c.h.b16 %v1040
      %v4101 = vunpack.c.l.b16 %v1041
      %v4102 = vunpack.c.h.b16 %v1041
      %v4103 = vunpack.c.l.b16 %v1042
      %v4104 = vunpack.c.h.b16 %v1042
      %v4105 = vunpack.c.l.b16 %v1043
      %v4106 = vunpack.c.h.b16 %v1043
      %v4107 = vunpack.c.l.b16 %v1044
      %v4108 = vunpack.c.h.b16 %v1044
      %v4109 = vunpack.c.l.b16 %v1045
      %v4110 = vunpack.c.h.b16 %v1045
      %v4111 = vunpack.c.l.b16 %v1046
      %v4112 = vunpack.c.h.b16 %v1046
      %v4113 = vunpack.c.l.b16 %v1047
      %v4114 = vunpack.c.h.b16 %v1047
      %v4115 = vunpack.c.l.b16 %v1048
      %v4116 = vunpack.c.h.b16 %v1048
      %v4117 = vunpack.c.l.b16 %v1049
      %v4118 = vunpack.c.h.b16 %v1049
      %v4119 = vunpack.c.l.b16 %v1050
      %v4120 = vunpack.c.h.b16 %v1050
      %v4121 = vunpack.c.l.b16 %v1051
      %v4122 = vunpack.c.h.b16 %v1051
      %v4123 = vunpack.c.l.b16 %v1052
      %v4124 = vunpack.c.h.b16 %v1052
      %v4125 = vunpack.c.l.b16 %v1053
      %v4126 = vunpack.c.h.b16 %v1053
      %v4127 = vunpack.c.l.b16 %v1054
      %v4128 = vunpack.c.h.b16 %v1054
      %v4129 = vunpack.c.l.b16 %v1055
      %v4130 = vunpack.c.h.b16 %v1055
      %v4131 = vunpack.c.l.b16 %v1056
      %v4132 = vunpack.c.h.b16 %v1056
      %v4133 = vunpack.c.l.b16 %v1057
      %v4134 = vunpack.c.h.b16 %v1057
      %v4135 = vunpack.c.l.b16 %v1058
      %v4136 = vunpack.c.h.b16 %v1058
      %v4137 = vunpack.c.l.b16 %v1059
      %v4138 = vunpack.c.h.b16 %v1059
      %v4139 = vunpack.c.l.b16 %v1060
      %v4140 = vunpack.c.h.b16 %v1060
      %v4141 = vunpack.c.l.b16 %v1061
      %v4142 = vunpack.c.h.b16 %v1061
      %v4143 = vunpack.c.l.b16 %v1062
      %v4144 = vunpack.c.h.b16 %v1062
      %v4145 = vunpack.c.l.b16 %v1063
      %v4146 = vunpack.c.h.b16 %v1063
      %v4147 = vunpack.c.l.b16 %v1064
      %v4148 = vunpack.c.h.b16 %v1064
      %v4149 = vunpack.c.l.b16 %v1065
      %v4150 = vunpack.c.h.b16 %v1065
      %v4151 = vunpack.c.l.b16 %v1066
      %v4152 = vunpack.c.h.b16 %v1066
      %v4153 = vunpack.c.l.b16 %v1067
      %v4154 = vunpack.c.h.b16 %v1067
      %v4155 = vunpack.c.l.b16 %v1068
      %v4156 = vunpack.c.h.b16 %v1068
      %v4157 = vunpack.c.l.b16 %v1069
      %v4158 = vunpack.c.h.b16 %v1069
      %v4159 = vunpack.c.l.b16 %v1070
      %v4160 = vunpack.c.h.b16 %v1070
      %v4161 = vunpack.c.l.b16 %v1071
      %v4162 = vunpack.c.h.b16 %v1071
      %v4163 = vunpack.c.l.b16 %v1072
      %v4164 = vunpack.c.h.b16 %v1072
      %v4165 = vunpack.c.l.b16 %v1073
      %v4166 = vunpack.c.h.b16 %v1073
      %v4167 = vunpack.c.l.b16 %v1074
      %v4168 = vunpack.c.h.b16 %v1074
      %v4169 = vunpack.c.l.b16 %v1075
      %v4170 = vunpack.c.h.b16 %v1075
      %v4171 = vunpack.c.l.b16 %v1076
      %v4172 = vunpack.c.h.b16 %v1076
      %v4173 = vunpack.c.l.b16 %v1077
      %v4174 = vunpack.c.h.b16 %v1077
      %v4175 = vunpack.c.l.b16 %v1078
      %v4176 = vunpack.c.h.b16 %v1078
      %v4177 = vunpack.c.l.b16 %v1079
      %v4178 = vunpack.c.h.b16 %v1079
      %v4179 = vunpack.c.l.b16 %v1080
      %v4180 = vunpack.c.h.b16 %v1080
      %v4181 = vunpack.c.l.b16 %v1081
      %v4182 = vunpack.c.h.b16 %v1081
      %v4183 = vunpack.c.l.b16 %v1082
      %v4184 = vunpack.c.h.b16 %v1082
      %v4185 = vunpack.c.l.b16 %v1083
      %v4186 = vunpack.c.h.b16 %v1083
      %v4187 = vunpack.c.l.b16 %v1084
      %v4188 = vunpack.c.h.b16 %v1084
      %v4189 = vunpack.c.l.b16 %v1085
      %v4190 = vunpack.c.h.b16 %v1085
      %v4191 = vunpack.c.l.b16 %v1086
      %v4192 = vunpack.c.h.b16 %v1086
      %v4193 = vunpack.c.l.b16 %v1087
      %v4194 = vunpack.c.h.b16 %v1087
      %v4195 = vunpack.c.l.b16 %v1088
      %v4196 = vunpack.c.h.b16 %v1088
      %v4197 = vunpack.c.l.b16 %v1089
      %v4198 = vunpack.c.h.b16 %v1089
      %v4199 = vunpack.c.l.b16 %v1090
      %v4200 = vunpack.c.h.b16 %v1090
      %v4201 = vunpack.c.l.b16 %v1091
      %v4202 = vunpack.c.h.b16 %v1091
      %v4203 = vunpack.c.l.b16 %v1092
      %v4204 = vunpack.c.h.b16 %v1092
      %v4205 = vunpack.c.l.b16 %v1093
      %v4206 = vunpack.c.h.b16 %v1093
      %v4207 = vunpack.c.l.b16 %v1094
      %v4208 = vunpack.c.h.b16 %v1094
      %v4209 = vunpack.c.l.b16 %v1095
      %v4210 = vunpack.c.h.b16 %v1095
      %v4211 = vunpack.c.l.b16 %v1096
      %v4212 = vunpack.c.h.b16 %v1096
      %v4213 = vunpack.c.l.b16 %v1097
      %v4214 = vunpack.c.h.b16 %v1097
      %v4215 = vunpack.c.l.b16 %v1098
      %v4216 = vunpack.c.h.b16 %v1098
      %v4217 = vunpack.c.l.b16 %v1099
      %v4218 = vunpack.c.h.b16 %v1099
      %v4219 = vunpack.c.l.b16 %v1100
      %v4220 = vunpack.c.h.b16 %v1100
      %v4221 = vunpack.c.l.b16 %v1101
      %v4222 = vunpack.c.h.b16 %v1101
      %v4223 = vunpack.c.l.b16 %v1102
      %v4224 = vunpack.c.h.b16 %v1102
      %v4225 = vunpack.c.l.b16 %v1103
      %v4226 = vunpack.c.h.b16 %v1103
      %v4227 = vunpack.c.l.b16 %v1104
      %v4228 = vunpack.c.h.b16 %v1104
      %v4229 = vunpack.c.l.b16 %v1105
      %v4230 = vunpack.c.h.b16 %v1105
      %v4231 = vunpack.c.l.b16 %v1106
      %v4232 = vunpack.c.h.b16 %v1106
      %v4233 = vunpack.c.l.b16 %v1107
      %v4234 = vunpack.c.h.b16 %v1107
      %v4235 = vunpack.c.l.b16 %v1108
      %v4236 = vunpack.c.h.b16 %v1108
      %v4237 = vunpack.c.l.b16 %v1109
      %v4238 = vunpack.c.h.b16 %v1109
      %v4239 = vunpack.c.l.b16 %v1110
      %v4240 = vunpack.c.h.b16 %v1110
      %v4241 = vunpack.c.l.b16 %v1111
      %v4242 = vunpack.c.h.b16 %v1111
      %v4243 = vunpack.c.l.b16 %v1112
      %v4244 = vunpack.c.h.b16 %v1112
      %v4245 = vunpack.c.l.b16 %v1113
      %v4246 = vunpack.c.h.b16 %v1113
      %v4247 = vunpack.c.l.b16 %v1114
      %v4248 = vunpack.c.h.b16 %v1114
      %v4249 = vunpack.c.l.b16 %v1115
      %v4250 = vunpack.c.h.b16 %v1115
      %v4251 = vunpack.c.l.b16 %v1116
      %v4252 = vunpack.c.h.b16 %v1116
      %v4253 = vunpack.c.l.b16 %v1117
      %v4254 = vunpack.c.h.b16 %v1117
      %v4255 = vunpack.c.l.b16 %v1118
      %v4256 = vunpack.c.h.b16 %v1118
      %v4257 = vunpack.c.l.b16 %v1119
      %v4258 = vunpack.c.h.b16 %v1119
      %v4259 = vunpack.c.l.b16 %v1120
      %v4260 = vunpack.c.h.b16 %v1120
      %v4261 = vunpack.c.l.b16 %v1121
      %v4262 = vunpack.c.h.b16 %v1121
      %v4263 = vunpack.c.l.b16 %v1122
      %v4264 = vunpack.c.h.b16 %v1122
      %v4265 = vunpack.c.l.b16 %v1123
      %v4266 = vunpack.c.h.b16 %v1123
      %v4267 = vunpack.c.l.b16 %v1124
      %v4268 = vunpack.c.h.b16 %v1124
      %v4269 = vunpack.c.l.b16 %v1125
      %v4270 = vunpack.c.h.b16 %v1125
      %v4271 = vunpack.c.l.b16 %v1126
      %v4272 = vunpack.c.h.b16 %v1126
      %v4273 = vunpack.c.l.b16 %v1127
      %v4274 = vunpack.c.h.b16 %v1127
      %v4275 = vunpack.c.l.b16 %v1128
      %v4276 = vunpack.c.h.b16 %v1128
      %v4277 = vunpack.c.l.b16 %v1129
      %v4278 = vunpack.c.h.b16 %v1129
      %v4279 = vunpack.c.l.b16 %v1130
      %v4280 = vunpack.c.h.b16 %v1130
      %v4281 = vunpack.c.l.b16 %v1131
      %v4282 = vunpack.c.h.b16 %v1131
      %v4283 = vunpack.c.l.b16 %v1132
      %v4284 = vunpack.c.h.b16 %v1132
      %v4285 = vunpack.c.l.b16 %v1133
      %v4286 = vunpack.c.h.b16 %v1133
      %v4287 = vunpack.c.l.b16 %v1134
      %v4288 = vunpack.c.h.b16 %v1134
      %v4289 = vunpack.c.l.b16 %v1135
      %v4290 = vunpack.c.h.b16 %v1135
      %v4291 = vunpack.c.l.b16 %v1136
      %v4292 = vunpack.c.h.b16 %v1136
      %v4293 = vunpack.c.l.b16 %v1137
      %v4294 = vunpack.c.h.b16 %v1137
      %v4295 = vunpack.c.l.b16 %v1138
      %v4296 = vunpack.c.h.b16 %v1138
      %v4297 = vunpack.c.l.b16 %v1139
      %v4298 = vunpack.c.h.b16 %v1139
      %v4299 = vunpack.c.l.b16 %v1140
      %v4300 = vunpack.c.h.b16 %v1140
      %v4301 = vunpack.c.l.b16 %v1141
      %v4302 = vunpack.c.h.b16 %v1141
      %v4303 = vunpack.c.l.b16 %v1142
      %v4304 = vunpack.c.h.b16 %v1142
      %v4305 = vunpack.c.l.b16 %v1143
      %v4306 = vunpack.c.h.b16 %v1143
      %v4307 = vunpack.c.l.b16 %v1144
      %v4308 = vunpack.c.h.b16 %v1144
      %v4309 = vunpack.c.l.b16 %v1145
      %v4310 = vunpack.c.h.b16 %v1145
      %v4311 = vunpack.c.l.b16 %v1146
      %v4312 = vunpack.c.h.b16 %v1146
      %v4313 = vunpack.c.l.b16 %v1147
      %v4314 = vunpack.c.h.b16 %v1147
      %v4315 = vunpack.c.l.b16 %v1148
      %v4316 = vunpack.c.h.b16 %v1148
      %v4317 = vunpack.c.l.b16 %v1149
      %v4318 = vunpack.c.h.b16 %v1149
      %v4319 = vunpack.c.l.b16 %v1150
      %v4320 = vunpack.c.h.b16 %v1150
      %v4321 = vunpack.c.l.b16 %v1151
      %v4322 = vunpack.c.h.b16 %v1151
      %v4323 = vunpack.c.l.b16 %v1152
      %v4324 = vunpack.c.h.b16 %v1152
      %v4325 = vunpack.c.l.b16 %v1153
      %v4326 = vunpack.c.h.b16 %v1153
      %v4327 = vunpack.c.l.b16 %v1154
      %v4328 = vunpack.c.h.b16 %v1154
      %v4329 = vunpack.c.l.b16 %v1155
      %v4330 = vunpack.c.h.b16 %v1155
      %v4331 = vunpack.c.l.b16 %v1156
      %v4332 = vunpack.c.h.b16 %v1156
      %v4333 = vunpack.c.l.b16 %v1157
      %v4334 = vunpack.c.h.b16 %v1157
      %v4335 = vunpack.c.l.b16 %v1158
      %v4336 = vunpack.c.h.b16 %v1158
      %v4337 = vunpack.c.l.b16 %v1159
      %v4338 = vunpack.c.h.b16 %v1159
      %v4339 = vunpack.c.l.b16 %v1160
      %v4340 = vunpack.c.h.b16 %v1160
      %v4341 = vunpack.c.l.b16 %v1161
      %v4342 = vunpack.c.h.b16 %v1161
      %v4343 = vunpack.c.l.b16 %v1162
      %v4344 = vunpack.c.h.b16 %v1162
      %v4345 = vunpack.c.l.b16 %v1163
      %v4346 = vunpack.c.h.b16 %v1163
      %v4347 = vunpack.c.l.b16 %v1164
      %v4348 = vunpack.c.h.b16 %v1164
      %v4349 = vunpack.c.l.b16 %v1165
      %v4350 = vunpack.c.h.b16 %v1165
      %v4351 = vunpack.c.l.b16 %v1166
      %v4352 = vunpack.c.h.b16 %v1166
      %v4353 = vunpack.c.l.b16 %v1167
      %v4354 = vunpack.c.h.b16 %v1167
      %v4355 = vunpack.c.l.b16 %v1168
      %v4356 = vunpack.c.h.b16 %v1168
      %v4357 = vunpack.c.l.b16 %v1169
      %v4358 = vunpack.c.h.b16 %v1169
      %v4359 = vunpack.c.l.b16 %v1170
      %v4360 = vunpack.c.h.b16 %v1170
      %v4361 = vunpack.c.l.b16 %v1171
      %v4362 = vunpack.c.h.b16 %v1171
      %v4363 = vunpack.c.l.b16 %v1172
      %v4364 = vunpack.c.h.b16 %v1172
      %v4365 = vunpack.c.l.b16 %v1173
      %v4366 = vunpack.c.h.b16 %v1173
      %v4367 = vunpack.c.l.b16 %v1174
      %v4368 = vunpack.c.h.b16 %v1174
      %v4369 = vunpack.c.l.b16 %v1175
      %v4370 = vunpack.c.h.b16 %v1175
      %v4371 = vunpack.c.l.b16 %v1176
      %v4372 = vunpack.c.h.b16 %v1176
      %v4373 = vunpack.c.l.b16 %v1177
      %v4374 = vunpack.c.h.b16 %v1177
      %v4375 = vunpack.c.l.b16 %v1178
      %v4376 = vunpack.c.h.b16 %v1178
      %v4377 = vunpack.c.l.b16 %v1179
      %v4378 = vunpack.c.h.b16 %v1179
      %v4379 = vunpack.c.l.b16 %v1180
      %v4380 = vunpack.c.h.b16 %v1180
      %v4381 = vunpack.c.l.b16 %v1181
      %v4382 = vunpack.c.h.b16 %v1181
      %v4383 = vunpack.c.l.b16 %v1182
      %v4384 = vunpack.c.h.b16 %v1182
      %v4385 = vunpack.c.l.b16 %v1183
      %v4386 = vunpack.c.h.b16 %v1183
      %v4387 = vunpack.c.l.b16 %v1184
      %v4388 = vunpack.c.h.b16 %v1184
      %v4389 = vunpack.c.l.b16 %v1185
      %v4390 = vunpack.c.h.b16 %v1185
      %v4391 = vunpack.c.l.b16 %v1186
      %v4392 = vunpack.c.h.b16 %v1186
      %v4393 = vunpack.c.l.b16 %v1187
      %v4394 = vunpack.c.h.b16 %v1187
      %v4395 = vunpack.c.l.b16 %v1188
      %v4396 = vunpack.c.h.b16 %v1188
      %v4397 = vunpack.c.l.b16 %v1189
      %v4398 = vunpack.c.h.b16 %v1189
      %v4399 = vunpack.c.l.b16 %v1190
      %v4400 = vunpack.c.h.b16 %v1190
      %v4401 = vunpack.c.l.b16 %v1191
      %v4402 = vunpack.c.h.b16 %v1191
      %v4403 = vunpack.c.l.b16 %v1192
      %v4404 = vunpack.c.h.b16 %v1192
      %v4405 = vunpack.c.l.b16 %v1193
      %v4406 = vunpack.c.h.b16 %v1193
      %v4407 = vunpack.c.l.b16 %v1194
      %v4408 = vunpack.c.h.b16 %v1194
      %v4409 = vunpack.c.l.b16 %v1195
      %v4410 = vunpack.c.h.b16 %v1195
      %v4411 = vunpack.c.l.b16 %v1196
      %v4412 = vunpack.c.h.b16 %v1196
      %v4413 = vunpack.c.l.b16 %v1197
      %v4414 = vunpack.c.h.b16 %v1197
      %v4415 = vunpack.c.l.b16 %v1198
      %v4416 = vunpack.c.h.b16 %v1198
      %v4417 = vunpack.c.l.b16 %v1199
      %v4418 = vunpack.c.h.b16 %v1199
      %v4419 = vunpack.c.l.b16 %v1200
      %v4420 = vunpack.c.h.b16 %v1200
      %v4421 = vunpack.c.l.b16 %v1201
      %v4422 = vunpack.c.h.b16 %v1201
      %v4423 = vunpack.c.l.b16 %v1202
      %v4424 = vunpack.c.h.b16 %v1202
      %v4425 = vunpack.c.l.b16 %v1203
      %v4426 = vunpack.c.h.b16 %v1203
      %v4427 = vunpack.c.l.b16 %v1204
      %v4428 = vunpack.c.h.b16 %v1204
      %v4429 = vunpack.c.l.b16 %v1205
      %v4430 = vunpack.c.h.b16 %v1205
      %v4431 = vunpack.c.l.b16 %v1206
      %v4432 = vunpack.c.h.b16 %v1206
      %v4433 = vunpack.c.l.b16 %v1207
      %v4434 = vunpack.c.h.b16 %v1207
      %v4435 = vunpack.c.l.b16 %v1208
      %v4436 = vunpack.c.h.b16 %v1208
      %v4437 = vunpack.c.l.b16 %v1209
      %v4438 = vunpack.c.h.b16 %v1209
      %v4439 = vunpack.c.l.b16 %v1210
      %v4440 = vunpack.c.h.b16 %v1210
      %v4441 = vunpack.c.l.b16 %v1211
      %v4442 = vunpack.c.h.b16 %v1211
      %v4443 = vunpack.c.l.b16 %v1212
      %v4444 = vunpack.c.h.b16 %v1212
      %v4445 = vunpack.c.l.b16 %v1213
      %v4446 = vunpack.c.h.b16 %v1213
      %v4447 = vunpack.c.l.b16 %v1214
      %v4448 = vunpack.c.h.b16 %v1214
      %v4449 = vunpack.c.l.b16 %v1215
      %v4450 = vunpack.c.h.b16 %v1215
      %v4451 = vunpack.c.l.b16 %v1216
      %v4452 = vunpack.c.h.b16 %v1216
      %v4453 = vunpack.c.l.b16 %v1217
      %v4454 = vunpack.c.h.b16 %v1217
      %v4455 = vunpack.c.l.b16 %v1218
      %v4456 = vunpack.c.h.b16 %v1218
      %v4457 = vunpack.c.l.b16 %v1219
      %v4458 = vunpack.c.h.b16 %v1219
      %v4459 = vunpack.c.l.b16 %v1220
      %v4460 = vunpack.c.h.b16 %v1220
      %v4461 = vunpack.c.l.b16 %v1221
      %v4462 = vunpack.c.h.b16 %v1221
      %v4463 = vunpack.c.l.b16 %v1222
      %v4464 = vunpack.c.h.b16 %v1222
      %v4465 = vunpack.c.l.b16 %v1223
      %v4466 = vunpack.c.h.b16 %v1223
      %v4467 = vunpack.c.l.b16 %v1224
      %v4468 = vunpack.c.h.b16 %v1224
      %v4469 = vunpack.c.l.b16 %v1225
      %v4470 = vunpack.c.h.b16 %v1225
      %v4471 = vunpack.c.l.b16 %v1226
      %v4472 = vunpack.c.h.b16 %v1226
      %v4473 = vunpack.c.l.b16 %v1227
      %v4474 = vunpack.c.h.b16 %v1227
      %v4475 = vunpack.c.l.b16 %v1228
      %v4476 = vunpack.c.h.b16 %v1228
      %v4477 = vunpack.c.l.b16 %v1229
      %v4478 = vunpack.c.h.b16 %v1229
      %v4479 = vunpack.c.l.b16 %v1230
      %v4480 = vunpack.c.h.b16 %v1230
      %v4481 = vunpack.c.l.b16 %v1231
      %v4482 = vunpack.c.h.b16 %v1231
      %v4483 = vunpack.c.l.b16 %v1232
      %v4484 = vunpack.c.h.b16 %v1232
      %v4485 = vunpack.c.l.b16 %v1233
      %v4486 = vunpack.c.h.b16 %v1233
      %v4487 = vunpack.c.l.b16 %v1234
      %v4488 = vunpack.c.h.b16 %v1234
      %v4489 = vpack.c.b16 %v2445, %v2441
      %v4490 = vpack.c.b16 %v2446, %v2442
      %v4491 = vpack.c.b16 %v2447, %v2443
      %v4492 = vpack.c.b16 %v2448, %v2444
      %v4493 = vpack.c.b16 %v2453, %v2449
      %v4494 = vpack.c.b16 %v2454, %v2450
      %v4495 = vpack.c.b16 %v2455, %v2451
      %v4496 = vpack.c.b16 %v2456, %v2452
      %v4497 = vpack.c.b16 %v2461, %v2457
      %v4498 = vpack.c.b16 %v2462, %v2458
      %v4499 = vpack.c.b16 %v2463, %v2459
      %v4500 = vpack.c.b16 %v2464, %v2460
      %v4501 = vpack.c.b16 %v2469, %v2465
      %v4502 = vpack.c.b16 %v2470, %v2466
      %v4503 = vpack.c.b16 %v2471, %v2467
      %v4504 = vpack.c.b16 %v2472, %v2468
      %v4505 = vpack.c.b16 %v2477, %v2473
      %v4506 = vpack.c.b16 %v2478, %v2474
      %v4507 = vpack.c.b16 %v2479, %v2475
      %v4508 = vpack.c.b16 %v2480, %v2476
      %v4509 = vpack.c.b16 %v2485, %v2481
      %v4510 = vpack.c.b16 %v2486, %v2482
      %v4511 = vpack.c.b16 %v2487, %v2483
      %v4512 = vpack.c.b16 %v2488, %v2484
      %v4513 = vpack.c.b16 %v2493, %v2489
      %v4514 = vpack.c.b16 %v2494, %v2490
      %v4515 = vpack.c.b16 %v2495, %v2491
      %v4516 = vpack.c.b16 %v2496, %v2492
      %v4517 = vpack.c.b16 %v2501, %v2497
      %v4518 = vpack.c.b16 %v2502, %v2498
      %v4519 = vpack.c.b16 %v2503, %v2499
      %v4520 = vpack.c.b16 %v2504, %v2500
      %v4521 = vpack.c.b16 %v2509, %v2505
      %v4522 = vpack.c.b16 %v2510, %v2506
      %v4523 = vpack.c.b16 %v2511, %v2507
      %v4524 = vpack.c.b16 %v2512, %v2508
      %v4525 = vpack.c.b16 %v2517, %v2513
      %v4526 = vpack.c.b16 %v2518, %v2514
      %v4527 = vpack.c.b16 %v2519, %v2515
      %v4528 = vpack.c.b16 %v2520, %v2516
      %v4529 = vpack.c.b16 %v2525, %v2521
      %v4530 = vpack.c.b16 %v2526, %v2522
      %v4531 = vpack.c.b16 %v2527, %v2523
      %v4532 = vpack.c.b16 %v2528, %v2524
      %v4533 = vpack.c.b16 %v2533, %v2529
      %v4534 = vpack.c.b16 %v2534, %v2530
      %v4535 = vpack.c.b16 %v2535, %v2531
      %v4536 = vpack.c.b16 %v2536, %v2532
      %v4537 = vpack.c.b16 %v2541, %v2537
      %v4538 = vpack.c.b16 %v2542, %v2538
      %v4539 = vpack.c.b16 %v2543, %v2539
      %v4540 = vpack.c.b16 %v2544, %v2540
      %v4541 = vpack.c.b16 %v2549, %v2545
      %v4542 = vpack.c.b16 %v2550, %v2546
      %v4543 = vpack.c.b16 %v2551, %v2547
      %v4544 = vpack.c.b16 %v2552, %v2548
      %v4545 = vpack.c.b16 %v2557, %v2553
      %v4546 = vpack.c.b16 %v2558, %v2554
      %v4547 = vpack.c.b16 %v2559, %v2555
      %v4548 = vpack.c.b16 %v2560, %v2556
      %v4549 = vpack.c.b16 %v2565, %v2561
      %v4550 = vpack.c.b16 %v2566, %v2562
      %v4551 = vpack.c.b16 %v2567, %v2563
      %v4552 = vpack.c.b16 %v2568, %v2564
      %v4553 = vpack.c.b16 %v2573, %v2569
      %v4554 = vpack.c.b16 %v2574, %v2570
      %v4555 = vpack.c.b16 %v2575, %v2571
      %v4556 = vpack.c.b16 %v2576, %v2572
      %v4557 = vpack.c.b16 %v2581, %v2577
      %v4558 = vpack.c.b16 %v2582, %v2578
      %v4559 = vpack.c.b16 %v2583, %v2579
      %v4560 = vpack.c.b16 %v2584, %v2580
      %v4561 = vpack.c.b16 %v2589, %v2585
      %v4562 = vpack.c.b16 %v2590, %v2586
      %v4563 = vpack.c.b16 %v2591, %v2587
      %v4564 = vpack.c.b16 %v2592, %v2588
      %v4565 = vpack.c.b16 %v2597, %v2593
      %v4566 = vpack.c.b16 %v2598, %v2594
      %v4567 = vpack.c.b16 %v2599, %v2595
      %v4568 = vpack.c.b16 %v2600, %v2596
      %v4569 = vpack.c.b16 %v2605, %v2601
      %v4570 = vpack.c.b16 %v2606, %v2602
      %v4571 = vpack.c.b16 %v2607, %v2603
      %v4572 = vpack.c.b16 %v2608, %v2604
      %v4573 = vpack.c.b16 %v2613, %v2609
      %v4574 = vpack.c.b16 %v2614, %v2610
      %v4575 = vpack.c.b16 %v2615, %v2611
      %v4576 = vpack.c.b16 %v2616, %v2612
      %v4577 = vpack.c.b16 %v2621, %v2617
      %v4578 = vpack.c.b16 %v2622, %v2618
      %v4579 = vpack.c.b16 %v2623, %v2619
      %v4580 = vpack.c.b16 %v2624, %v2620
      %v4581 = vpack.c.b16 %v2629, %v2625
      %v4582 = vpack.c.b16 %v2630, %v2626
      %v4583 = vpack.c.b16 %v2631, %v2627
      %v4584 = vpack.c.b16 %v2632, %v2628
      %v4585 = vpack.c.b16 %v2637, %v2633
      %v4586 = vpack.c.b16 %v2638, %v2634
      %v4587 = vpack.c.b16 %v2639, %v2635
      %v4588 = vpack.c.b16 %v2640, %v2636
      %v4589 = vpack.c.b16 %v2645, %v2641
      %v4590 = vpack.c.b16 %v2646, %v2642
      %v4591 = vpack.c.b16 %v2647, %v2643
      %v4592 = vpack.c.b16 %v2648, %v2644
      %v4593 = vpack.c.b16 %v2653, %v2649
      %v4594 = vpack.c.b16 %v2654, %v2650
      %v4595 = vpack.c.b16 %v2655, %v2651
      %v4596 = vpack.c.b16 %v2656, %v2652
      %v4597 = vpack.c.b16 %v2661, %v2657
      %v4598 = vpack.c.b16 %v2662, %v2658
      %v4599 = vpack.c.b16 %v2663, %v2659
      %v4600 = vpack.c.b16 %v2664, %v2660
      %v4601 = vpack.c.b16 %v2669, %v2665
      %v4602 = vpack.c.b16 %v2670, %v2666
      %v4603 = vpack.c.b16 %v2671, %v2667
      %v4604 = vpack.c.b16 %v2672, %v2668
      %v4605 = vpack.c.b16 %v2677, %v2673
      %v4606 = vpack.c.b16 %v2678, %v2674
      %v4607 = vpack.c.b16 %v2679, %v2675
      %v4608 = vpack.c.b16 %v2680, %v2676
      %v4609 = vpack.c.b16 %v2685, %v2681
      %v4610 = vpack.c.b16 %v2686, %v2682
      %v4611 = vpack.c.b16 %v2687, %v2683
      %v4612 = vpack.c.b16 %v2688, %v2684
      %v4613 = vpack.c.b16 %v2693, %v2689
      %v4614 = vpack.c.b16 %v2694, %v2690
      %v4615 = vpack.c.b16 %v2695, %v2691
      %v4616 = vpack.c.b16 %v2696, %v2692
      %v4617 = vpack.c.b16 %v2701, %v2697
      %v4618 = vpack.c.b16 %v2702, %v2698
      %v4619 = vpack.c.b16 %v2703, %v2699
      %v4620 = vpack.c.b16 %v2704, %v2700
      %v4621 = vpack.c.b16 %v2709, %v2705
      %v4622 = vpack.c.b16 %v2710, %v2706
      %v4623 = vpack.c.b16 %v2711, %v2707
      %v4624 = vpack.c.b16 %v2712, %v2708
      %v4625 = vpack.c.b16 %v2717, %v2713
      %v4626 = vpack.c.b16 %v2718, %v2714
      %v4627 = vpack.c.b16 %v2719, %v2715
      %v4628 = vpack.c.b16 %v2720, %v2716
      %v4629 = vpack.c.b16 %v2725, %v2721
      %v4630 = vpack.c.b16 %v2726, %v2722
      %v4631 = vpack.c.b16 %v2727, %v2723
      %v4632 = vpack.c.b16 %v2728, %v2724
      %v4633 = vpack.c.b16 %v2733, %v2729
      %v4634 = vpack.c.b16 %v2734, %v2730
      %v4635 = vpack.c.b16 %v2735, %v2731
      %v4636 = vpack.c.b16 %v2736, %v2732
      %v4637 = vpack.c.b16 %v2741, %v2737
      %v4638 = vpack.c.b16 %v2742, %v2738
      %v4639 = vpack.c.b16 %v2743, %v2739
      %v4640 = vpack.c.b16 %v2744, %v2740
      %v4641 = vpack.c.b16 %v2749, %v2745
      %v4642 = vpack.c.b16 %v2750, %v2746
      %v4643 = vpack.c.b16 %v2751, %v2747
      %v4644 = vpack.c.b16 %v2752, %v2748
      %v4645 = vpack.c.b16 %v2757, %v2753
      %v4646 = vpack.c.b16 %v2758, %v2754
      %v4647 = vpack.c.b16 %v2759, %v2755
      %v4648 = vpack.c.b16 %v2760, %v2756
      %v4649 = vpack.c.b16 %v2765, %v2761
      %v4650 = vpack.c.b16 %v2766, %v2762
      %v4651 = vpack.c.b16 %v2767, %v2763
      %v4652 = vpack.c.b16 %v2768, %v2764
      %v4653 = vpack.c.b16 %v2773, %v2769
      %v4654 = vpack.c.b16 %v2774, %v2770
      %v4655 = vpack.c.b16 %v2775, %v2771
      %v4656 = vpack.c.b16 %v2776, %v2772
      %v4657 = vpack.c.b16 %v2781, %v2777
      %v4658 = vpack.c.b16 %v2782, %v2778
      %v4659 = vpack.c.b16 %v2783, %v2779
      %v4660 = vpack.c.b16 %v2784, %v2780
      %v4661 = vpack.c.b16 %v2789, %v2785
      %v4662 = vpack.c.b16 %v2790, %v2786
      %v4663 = vpack.c.b16 %v2791, %v2787
      %v4664 = vpack.c.b16 %v2792, %v2788
      %v4665 = vpack.c.b16 %v2797, %v2793
      %v4666 = vpack.c.b16 %v2798, %v2794
      %v4667 = vpack.c.b16 %v2799, %v2795
      %v4668 = vpack.c.b16 %v2800, %v2796
      %v4669 = vpack.c.b16 %v2805, %v2801
      %v4670 = vpack.c.b16 %v2806, %v2802
      %v4671 = vpack.c.b16 %v2807, %v2803
      %v4672 = vpack.c.b16 %v2808, %v2804
      %v4673 = vpack.c.b16 %v2813, %v2809
      %v4674 = vpack.c.b16 %v2814, %v2810
      %v4675 = vpack.c.b16 %v2815, %v2811
      %v4676 = vpack.c.b16 %v2816, %v2812
      %v4677 = vpack.c.b16 %v2821, %v2817
      %v4678 = vpack.c.b16 %v2822, %v2818
      %v4679 = vpack.c.b16 %v2823, %v2819
      %v4680 = vpack.c.b16 %v2824, %v2820
      %v4681 = vpack.c.b16 %v2829, %v2825
      %v4682 = vpack.c.b16 %v2830, %v2826
      %v4683 = vpack.c.b16 %v2831, %v2827
      %v4684 = vpack.c.b16 %v2832, %v2828
      %v4685 = vpack.c.b16 %v2837, %v2833
      %v4686 = vpack.c.b16 %v2838, %v2834
      %v4687 = vpack.c.b16 %v2839, %v2835
      %v4688 = vpack.c.b16 %v2840, %v2836
      %v4689 = vpack.c.b16 %v2845, %v2841
      %v4690 = vpack.c.b16 %v2846, %v2842
      %v4691 = vpack.c.b16 %v2847, %v2843
      %v4692 = vpack.c.b16 %v2848, %v2844
      %v4693 = vpack.c.b16 %v2853, %v2849
      %v4694 = vpack.c.b16 %v2854, %v2850
      %v4695 = vpack.c.b16 %v2855, %v2851
      %v4696 = vpack.c.b16 %v2856, %v2852
      %v4697 = vpack.c.b16 %v2861, %v2857
      %v4698 = vpack.c.b16 %v2862, %v2858
      %v4699 = vpack.c.b16 %v2863, %v2859
      %v4700 = vpack.c.b16 %v2864, %v2860
      %v4701 = vpack.c.b16 %v2869, %v2865
      %v4702 = vpack.c.b16 %v2870, %v2866
      %v4703 = vpack.c.b16 %v2871, %v2867
      %v4704 = vpack.c.b16 %v2872, %v2868
      %v4705 = vpack.c.b16 %v2877, %v2873
      %v4706 = vpack.c.b16 %v2878, %v2874
      %v4707 = vpack.c.b16 %v2879, %v2875
      %v4708 = vpack.c.b16 %v2880, %v2876
      %v4709 = vpack.c.b16 %v2885, %v2881
      %v4710 = vpack.c.b16 %v2886, %v2882
      %v4711 = vpack.c.b16 %v2887, %v2883
      %v4712 = vpack.c.b16 %v2888, %v2884
      %v4713 = vpack.c.b16 %v2893, %v2889
      %v4714 = vpack.c.b16 %v2894, %v2890
      %v4715 = vpack.c.b16 %v2895, %v2891
      %v4716 = vpack.c.b16 %v2896, %v2892
      %v4717 = vpack.c.b16 %v2901, %v2897
      %v4718 = vpack.c.b16 %v2902, %v2898
      %v4719 = vpack.c.b16 %v2903, %v2899
      %v4720 = vpack.c.b16 %v2904, %v2900
      %v4721 = vpack.c.b16 %v2909, %v2905
      %v4722 = vpack.c.b16 %v2910, %v2906
      %v4723 = vpack.c.b16 %v2911, %v2907
      %v4724 = vpack.c.b16 %v2912, %v2908
      %v4725 = vpack.c.b16 %v2917, %v2913
      %v4726 = vpack.c.b16 %v2918, %v2914
      %v4727 = vpack.c.b16 %v2919, %v2915
      %v4728 = vpack.c.b16 %v2920, %v2916
      %v4729 = vpack.c.b16 %v2925, %v2921
      %v4730 = vpack.c.b16 %v2926, %v2922
      %v4731 = vpack.c.b16 %v2927, %v2923
      %v4732 = vpack.c.b16 %v2928, %v2924
      %v4733 = vpack.c.b16 %v2933, %v2929
      %v4734 = vpack.c.b16 %v2934, %v2930
      %v4735 = vpack.c.b16 %v2935, %v2931
      %v4736 = vpack.c.b16 %v2936, %v2932
      %v4737 = vpack.c.b16 %v2941, %v2937
      %v4738 = vpack.c.b16 %v2942, %v2938
      %v4739 = vpack.c.b16 %v2943, %v2939
      %v4740 = vpack.c.b16 %v2944, %v2940
      %v4741 = vpack.c.b16 %v2949, %v2945
      %v4742 = vpack.c.b16 %v2950, %v2946
      %v4743 = vpack.c.b16 %v2951, %v2947
      %v4744 = vpack.c.b16 %v2952, %v2948
      %v4745 = vpack.c.b16 %v2957, %v2953
      %v4746 = vpack.c.b16 %v2958, %v2954
      %v4747 = vpack.c.b16 %v2959, %v2955
      %v4748 = vpack.c.b16 %v2960, %v2956
      %v4749 = vpack.c.b16 %v2965, %v2961
      %v4750 = vpack.c.b16 %v2966, %v2962
      %v4751 = vpack.c.b16 %v2967, %v2963
      %v4752 = vpack.c.b16 %v2968, %v2964
      %v4753 = vpack.c.b16 %v2973, %v2969
      %v4754 = vpack.c.b16 %v2974, %v2970
      %v4755 = vpack.c.b16 %v2975, %v2971
      %v4756 = vpack.c.b16 %v2976, %v2972
      %v4757 = vpack.c.b16 %v2981, %v2977
      %v4758 = vpack.c.b16 %v2982, %v2978
      %v4759 = vpack.c.b16 %v2983, %v2979
      %v4760 = vpack.c.b16 %v2984, %v2980
      %v4761 = vpack.c.b16 %v2989, %v2985
      %v4762 = vpack.c.b16 %v2990, %v2986
      %v4763 = vpack.c.b16 %v2991, %v2987
      %v4764 = vpack.c.b16 %v2992, %v2988
      %v4765 = vpack.c.b16 %v2997, %v2993
      %v4766 = vpack.c.b16 %v2998, %v2994
      %v4767 = vpack.c.b16 %v2999, %v2995
      %v4768 = vpack.c.b16 %v3000, %v2996
      %v4769 = vpack.c.b16 %v3005, %v3001
      %v4770 = vpack.c.b16 %v3006, %v3002
      %v4771 = vpack.c.b16 %v3007, %v3003
      %v4772 = vpack.c.b16 %v3008, %v3004
      %v4773 = vpack.c.b16 %v3013, %v3009
      %v4774 = vpack.c.b16 %v3014, %v3010
      %v4775 = vpack.c.b16 %v3015, %v3011
      %v4776 = vpack.c.b16 %v3016, %v3012
      %v4777 = vpack.c.b16 %v3021, %v3017
      %v4778 = vpack.c.b16 %v3022, %v3018
      %v4779 = vpack.c.b16 %v3023, %v3019
      %v4780 = vpack.c.b16 %v3024, %v3020
      %v4781 = vpack.c.b16 %v3029, %v3025
      %v4782 = vpack.c.b16 %v3030, %v3026
      %v4783 = vpack.c.b16 %v3031, %v3027
      %v4784 = vpack.c.b16 %v3032, %v3028
      %v4785 = vpack.c.b16 %v3037, %v3033
      %v4786 = vpack.c.b16 %v3038, %v3034
      %v4787 = vpack.c.b16 %v3039, %v3035
      %v4788 = vpack.c.b16 %v3040, %v3036
      %v4789 = vpack.c.b16 %v3045, %v3041
      %v4790 = vpack.c.b16 %v3046, %v3042
      %v4791 = vpack.c.b16 %v3047, %v3043
      %v4792 = vpack.c.b16 %v3048, %v3044
      %v4793 = vpack.c.b16 %v3053, %v3049
      %v4794 = vpack.c.b16 %v3054, %v3050
      %v4795 = vpack.c.b16 %v3055, %v3051
      %v4796 = vpack.c.b16 %v3056, %v3052
      %v4797 = vpack.c.b16 %v3061, %v3057
      %v4798 = vpack.c.b16 %v3062, %v3058
      %v4799 = vpack.c.b16 %v3063, %v3059
      %v4800 = vpack.c.b16 %v3064, %v3060
      %v4801 = vpack.c.b16 %v3069, %v3065
      %v4802 = vpack.c.b16 %v3070, %v3066
      %v4803 = vpack.c.b16 %v3071, %v3067
      %v4804 = vpack.c.b16 %v3072, %v3068
      %v4805 = vpack.c.b16 %v3077, %v3073
      %v4806 = vpack.c.b16 %v3078, %v3074
      %v4807 = vpack.c.b16 %v3079, %v3075
      %v4808 = vpack.c.b16 %v3080, %v3076
      %v4809 = vpack.c.b16 %v3085, %v3081
      %v4810 = vpack.c.b16 %v3086, %v3082
      %v4811 = vpack.c.b16 %v3087, %v3083
      %v4812 = vpack.c.b16 %v3088, %v3084
      %v4813 = vpack.c.b16 %v3093, %v3089
      %v4814 = vpack.c.b16 %v3094, %v3090
      %v4815 = vpack.c.b16 %v3095, %v3091
      %v4816 = vpack.c.b16 %v3096, %v3092
      %v4817 = vpack.c.b16 %v3101, %v3097
      %v4818 = vpack.c.b16 %v3102, %v3098
      %v4819 = vpack.c.b16 %v3103, %v3099
      %v4820 = vpack.c.b16 %v3104, %v3100
      %v4821 = vpack.c.b16 %v3109, %v3105
      %v4822 = vpack.c.b16 %v3110, %v3106
      %v4823 = vpack.c.b16 %v3111, %v3107
      %v4824 = vpack.c.b16 %v3112, %v3108
      %v4825 = vpack.c.b16 %v3117, %v3113
      %v4826 = vpack.c.b16 %v3118, %v3114
      %v4827 = vpack.c.b16 %v3119, %v3115
      %v4828 = vpack.c.b16 %v3120, %v3116
      %v4829 = vpack.c.b16 %v3125, %v3121
      %v4830 = vpack.c.b16 %v3126, %v3122
      %v4831 = vpack.c.b16 %v3127, %v3123
      %v4832 = vpack.c.b16 %v3128, %v3124
      %v4833 = vpack.c.b16 %v3133, %v3129
      %v4834 = vpack.c.b16 %v3134, %v3130
      %v4835 = vpack.c.b16 %v3135, %v3131
      %v4836 = vpack.c.b16 %v3136, %v3132
      %v4837 = vpack.c.b16 %v3141, %v3137
      %v4838 = vpack.c.b16 %v3142, %v3138
      %v4839 = vpack.c.b16 %v3143, %v3139
      %v4840 = vpack.c.b16 %v3144, %v3140
      %v4841 = vpack.c.b16 %v3149, %v3145
      %v4842 = vpack.c.b16 %v3150, %v3146
      %v4843 = vpack.c.b16 %v3151, %v3147
      %v4844 = vpack.c.b16 %v3152, %v3148
      %v4845 = vpack.c.b16 %v3157, %v3153
      %v4846 = vpack.c.b16 %v3158, %v3154
      %v4847 = vpack.c.b16 %v3159, %v3155
      %v4848 = vpack.c.b16 %v3160, %v3156
      %v4849 = vpack.c.b16 %v3165, %v3161
      %v4850 = vpack.c.b16 %v3166, %v3162
      %v4851 = vpack.c.b16 %v3167, %v3163
      %v4852 = vpack.c.b16 %v3168, %v3164
      %v4853 = vpack.c.b16 %v3173, %v3169
      %v4854 = vpack.c.b16 %v3174, %v3170
      %v4855 = vpack.c.b16 %v3175, %v3171
      %v4856 = vpack.c.b16 %v3176, %v3172
      %v4857 = vpack.c.b16 %v3181, %v3177
      %v4858 = vpack.c.b16 %v3182, %v3178
      %v4859 = vpack.c.b16 %v3183, %v3179
      %v4860 = vpack.c.b16 %v3184, %v3180
      %v4861 = vpack.c.b16 %v3189, %v3185
      %v4862 = vpack.c.b16 %v3190, %v3186
      %v4863 = vpack.c.b16 %v3191, %v3187
      %v4864 = vpack.c.b16 %v3192, %v3188
      %v4865 = vpack.c.b16 %v3197, %v3193
      %v4866 = vpack.c.b16 %v3198, %v3194
      %v4867 = vpack.c.b16 %v3199, %v3195
      %v4868 = vpack.c.b16 %v3200, %v3196
      %v4869 = vpack.c.b16 %v3205, %v3201
      %v4870 = vpack.c.b16 %v3206, %v3202
      %v4871 = vpack.c.b16 %v3207, %v3203
      %v4872 = vpack.c.b16 %v3208, %v3204
      %v4873 = vpack.c.b16 %v3213, %v3209
      %v4874 = vpack.c.b16 %v3214, %v3210
      %v4875 = vpack.c.b16 %v3215, %v3211
      %v4876 = vpack.c.b16 %v3216, %v3212
      %v4877 = vpack.c.b16 %v3221, %v3217
      %v4878 = vpack.c.b16 %v3222, %v3218
      %v4879 = vpack.c.b16 %v3223, %v3219
      %v4880 = vpack.c.b16 %v3224, %v3220
      %v4881 = vpack.c.b16 %v3229, %v3225
      %v4882 = vpack.c.b16 %v3230, %v3226
      %v4883 = vpack.c.b16 %v3231, %v3227
      %v4884 = vpack.c.b16 %v3232, %v3228
      %v4885 = vpack.c.b16 %v3237, %v3233
      %v4886 = vpack.c.b16 %v3238, %v3234
      %v4887 = vpack.c.b16 %v3239, %v3235
      %v4888 = vpack.c.b16 %v3240, %v3236
      %v4889 = vpack.c.b16 %v3245, %v3241
      %v4890 = vpack.c.b16 %v3246, %v3242
      %v4891 = vpack.c.b16 %v3247, %v3243
      %v4892 = vpack.c.b16 %v3248, %v3244
      %v4893 = vpack.c.b16 %v3253, %v3249
      %v4894 = vpack.c.b16 %v3254, %v3250
      %v4895 = vpack.c.b16 %v3255, %v3251
      %v4896 = vpack.c.b16 %v3256, %v3252
      %v4897 = vpack.c.b16 %v3261, %v3257
      %v4898 = vpack.c.b16 %v3262, %v3258
      %v4899 = vpack.c.b16 %v3263, %v3259
      %v4900 = vpack.c.b16 %v3264, %v3260
      %v4901 = vpack.c.b16 %v3269, %v3265
      %v4902 = vpack.c.b16 %v3270, %v3266
      %v4903 = vpack.c.b16 %v3271, %v3267
      %v4904 = vpack.c.b16 %v3272, %v3268
      %v4905 = vpack.c.b16 %v3277, %v3273
      %v4906 = vpack.c.b16 %v3278, %v3274
      %v4907 = vpack.c.b16 %v3279, %v3275
      %v4908 = vpack.c.b16 %v3280, %v3276
      %v4909 = vpack.c.b16 %v3285, %v3281
      %v4910 = vpack.c.b16 %v3286, %v3282
      %v4911 = vpack.c.b16 %v3287, %v3283
      %v4912 = vpack.c.b16 %v3288, %v3284
      %v4913 = vpack.c.b16 %v3293, %v3289
      %v4914 = vpack.c.b16 %v3294, %v3290
      %v4915 = vpack.c.b16 %v3295, %v3291
      %v4916 = vpack.c.b16 %v3296, %v3292
      %v4917 = vpack.c.b16 %v3301, %v3297
      %v4918 = vpack.c.b16 %v3302, %v3298
      %v4919 = vpack.c.b16 %v3303, %v3299
      %v4920 = vpack.c.b16 %v3304, %v3300
      %v4921 = vpack.c.b16 %v3309, %v3305
      %v4922 = vpack.c.b16 %v3310, %v3306
      %v4923 = vpack.c.b16 %v3311, %v3307
      %v4924 = vpack.c.b16 %v3312, %v3308
      %v4925 = vpack.c.b16 %v3317, %v3313
      %v4926 = vpack.c.b16 %v3318, %v3314
      %v4927 = vpack.c.b16 %v3319, %v3315
      %v4928 = vpack.c.b16 %v3320, %v3316
      %v4929 = vpack.c.b16 %v3325, %v3321
      %v4930 = vpack.c.b16 %v3326, %v3322
      %v4931 = vpack.c.b16 %v3327, %v3323
      %v4932 = vpack.c.b16 %v3328, %v3324
      %v4933 = vpack.c.b16 %v3333, %v3329
      %v4934 = vpack.c.b16 %v3334, %v3330
      %v4935 = vpack.c.b16 %v3335, %v3331
      %v4936 = vpack.c.b16 %v3336, %v3332
      %v4937 = vpack.c.b16 %v3341, %v3337
      %v4938 = vpack.c.b16 %v3342, %v3338
      %v4939 = vpack.c.b16 %v3343, %v3339
      %v4940 = vpack.c.b16 %v3344, %v3340
      %v4941 = vpack.c.b16 %v3349, %v3345
      %v4942 = vpack.c.b16 %v3350, %v3346
      %v4943 = vpack.c.b16 %v3351, %v3347
      %v4944 = vpack.c.b16 %v3352, %v3348
      %v4945 = vpack.c.b16 %v3357, %v3353
      %v4946 = vpack.c.b16 %v3358, %v3354
      %v4947 = vpack.c.b16 %v3359, %v3355
      %v4948 = vpack.c.b16 %v3360, %v3356
      %v4949 = vpack.c.b16 %v3365, %v3361
      %v4950 = vpack.c.b16 %v3366, %v3362
      %v4951 = vpack.c.b16 %v3367, %v3363
      %v4952 = vpack.c.b16 %v3368, %v3364
      %v4953 = vpack.c.b16 %v3373, %v3369
      %v4954 = vpack.c.b16 %v3374, %v3370
      %v4955 = vpack.c.b16 %v3375, %v3371
      %v4956 = vpack.c.b16 %v3376, %v3372
      %v4957 = vpack.c.b16 %v3381, %v3377
      %v4958 = vpack.c.b16 %v3382, %v3378
      %v4959 = vpack.c.b16 %v3383, %v3379
      %v4960 = vpack.c.b16 %v3384, %v3380
      %v4961 = vpack.c.b16 %v3389, %v3385
      %v4962 = vpack.c.b16 %v3390, %v3386
      %v4963 = vpack.c.b16 %v3391, %v3387
      %v4964 = vpack.c.b16 %v3392, %v3388
      %v4965 = vpack.c.b16 %v3397, %v3393
      %v4966 = vpack.c.b16 %v3398, %v3394
      %v4967 = vpack.c.b16 %v3399, %v3395
      %v4968 = vpack.c.b16 %v3400, %v3396
      %v4969 = vpack.c.b16 %v3405, %v3401
      %v4970 = vpack.c.b16 %v3406, %v3402
      %v4971 = vpack.c.b16 %v3407, %v3403
      %v4972 = vpack.c.b16 %v3408, %v3404
      %v4973 = vpack.c.b16 %v3413, %v3409
      %v4974 = vpack.c.b16 %v3414, %v3410
      %v4975 = vpack.c.b16 %v3415, %v3411
      %v4976 = vpack.c.b16 %v3416, %v3412
      %v4977 = vpack.c.b16 %v3421, %v3417
      %v4978 = vpack.c.b16 %v3422, %v3418
      %v4979 = vpack.c.b16 %v3423, %v3419
      %v4980 = vpack.c.b16 %v3424, %v3420
      %v4981 = vpack.c.b16 %v3429, %v3425
      %v4982 = vpack.c.b16 %v3430, %v3426
      %v4983 = vpack.c.b16 %v3431, %v3427
      %v4984 = vpack.c.b16 %v3432, %v3428
      %v4985 = vpack.c.b16 %v3437, %v3433
      %v4986 = vpack.c.b16 %v3438, %v3434
      %v4987 = vpack.c.b16 %v3439, %v3435
      %v4988 = vpack.c.b16 %v3440, %v3436
      %v4989 = vpack.c.b16 %v3445, %v3441
      %v4990 = vpack.c.b16 %v3446, %v3442
      %v4991 = vpack.c.b16 %v3447, %v3443
      %v4992 = vpack.c.b16 %v3448, %v3444
      %v4993 = vpack.c.b16 %v3453, %v3449
      %v4994 = vpack.c.b16 %v3454, %v3450
      %v4995 = vpack.c.b16 %v3455, %v3451
      %v4996 = vpack.c.b16 %v3456, %v3452
      %v4997 = vpack.c.b16 %v3461, %v3457
      %v4998 = vpack.c.b16 %v3462, %v3458
      %v4999 = vpack.c.b16 %v3463, %v3459
      %v5000 = vpack.c.b16 %v3464, %v3460
      %v5001 = vpack.c.b16 %v3469, %v3465
      %v5002 = vpack.c.b16 %v3470, %v3466
      %v5003 = vpack.c.b16 %v3471, %v3467
      %v5004 = vpack.c.b16 %v3472, %v3468
      %v5005 = vpack.c.b16 %v3477, %v3473
      %v5006 = vpack.c.b16 %v3478, %v3474
      %v5007 = vpack.c.b16 %v3479, %v3475
      %v5008 = vpack.c.b16 %v3480, %v3476
      %v5009 = vpack.c.b16 %v3485, %v3481
      %v5010 = vpack.c.b16 %v3486, %v3482
      %v5011 = vpack.c.b16 %v3487, %v3483
      %v5012 = vpack.c.b16 %v3488, %v3484
      %v5013 = vpack.c.b16 %v3493, %v3489
      %v5014 = vpack.c.b16 %v3494, %v3490
      %v5015 = vpack.c.b16 %v3495, %v3491
      %v5016 = vpack.c.b16 %v3496, %v3492
      %v5017 = vpack.c.b16 %v3501, %v3497
      %v5018 = vpack.c.b16 %v3502, %v3498
      %v5019 = vpack.c.b16 %v3503, %v3499
      %v5020 = vpack.c.b16 %v3504, %v3500
      %v5021 = vpack.c.b16 %v3509, %v3505
      %v5022 = vpack.c.b16 %v3510, %v3506
      %v5023 = vpack.c.b16 %v3511, %v3507
      %v5024 = vpack.c.b16 %v3512, %v3508
      %v5025 = vpack.c.b16 %v3517, %v3513
      %v5026 = vpack.c.b16 %v3518, %v3514
      %v5027 = vpack.c.b16 %v3519, %v3515
      %v5028 = vpack.c.b16 %v3520, %v3516
      %v5029 = vpack.c.b16 %v3525, %v3521
      %v5030 = vpack.c.b16 %v3526, %v3522
      %v5031 = vpack.c.b16 %v3527, %v3523
      %v5032 = vpack.c.b16 %v3528, %v3524
      %v5033 = vpack.c.b16 %v3533, %v3529
      %v5034 = vpack.c.b16 %v3534, %v3530
      %v5035 = vpack.c.b16 %v3535, %v3531
      %v5036 = vpack.c.b16 %v3536, %v3532
      %v5037 = vpack.c.b16 %v3541, %v3537
      %v5038 = vpack.c.b16 %v3542, %v3538
      %v5039 = vpack.c.b16 %v3543, %v3539
      %v5040 = vpack.c.b16 %v3544, %v3540
      %v5041 = vpack.c.b16 %v3549, %v3545
      %v5042 = vpack.c.b16 %v3550, %v3546
      %v5043 = vpack.c.b16 %v3551, %v3547
      %v5044 = vpack.c.b16 %v3552, %v3548
      %v5045 = vpack.c.b16 %v3557, %v3553
      %v5046 = vpack.c.b16 %v3558, %v3554
      %v5047 = vpack.c.b16 %v3559, %v3555
      %v5048 = vpack.c.b16 %v3560, %v3556
      %v5049 = vpack.c.b16 %v3565, %v3561
      %v5050 = vpack.c.b16 %v3566, %v3562
      %v5051 = vpack.c.b16 %v3567, %v3563
      %v5052 = vpack.c.b16 %v3568, %v3564
      %v5053 = vpack.c.b16 %v3573, %v3569
      %v5054 = vpack.c.b16 %v3574, %v3570
      %v5055 = vpack.c.b16 %v3575, %v3571
      %v5056 = vpack.c.b16 %v3576, %v3572
      %v5057 = vpack.c.b16 %v3581, %v3577
      %v5058 = vpack.c.b16 %v3582, %v3578
      %v5059 = vpack.c.b16 %v3583, %v3579
      %v5060 = vpack.c.b16 %v3584, %v3580
      %v5061 = vpack.c.b16 %v3589, %v3585
      %v5062 = vpack.c.b16 %v3590, %v3586
      %v5063 = vpack.c.b16 %v3591, %v3587
      %v5064 = vpack.c.b16 %v3592, %v3588
      %v5065 = vpack.c.b16 %v3597, %v3593
      %v5066 = vpack.c.b16 %v3598, %v3594
      %v5067 = vpack.c.b16 %v3599, %v3595
      %v5068 = vpack.c.b16 %v3600, %v3596
      %v5069 = vpack.c.b16 %v3605, %v3601
      %v5070 = vpack.c.b16 %v3606, %v3602
      %v5071 = vpack.c.b16 %v3607, %v3603
      %v5072 = vpack.c.b16 %v3608, %v3604
      %v5073 = vpack.c.b16 %v3613, %v3609
      %v5074 = vpack.c.b16 %v3614, %v3610
      %v5075 = vpack.c.b16 %v3615, %v3611
      %v5076 = vpack.c.b16 %v3616, %v3612
      %v5077 = vpack.c.b16 %v3621, %v3617
      %v5078 = vpack.c.b16 %v3622, %v3618
      %v5079 = vpack.c.b16 %v3623, %v3619
      %v5080 = vpack.c.b16 %v3624, %v3620
      %v5081 = vpack.c.b16 %v3629, %v3625
      %v5082 = vpack.c.b16 %v3630, %v3626
      %v5083 = vpack.c.b16 %v3631, %v3627
      %v5084 = vpack.c.b16 %v3632, %v3628
      %v5085 = vpack.c.b16 %v3637, %v3633
      %v5086 = vpack.c.b16 %v3638, %v3634
      %v5087 = vpack.c.b16 %v3639, %v3635
      %v5088 = vpack.c.b16 %v3640, %v3636
      %v5089 = vpack.c.b16 %v3645, %v3641
      %v5090 = vpack.c.b16 %v3646, %v3642
      %v5091 = vpack.c.b16 %v3647, %v3643
      %v5092 = vpack.c.b16 %v3648, %v3644
      %v5093 = vpack.c.b16 %v3653, %v3649
      %v5094 = vpack.c.b16 %v3654, %v3650
      %v5095 = vpack.c.b16 %v3655, %v3651
      %v5096 = vpack.c.b16 %v3656, %v3652
      %v5097 = vpack.c.b16 %v3661, %v3657
      %v5098 = vpack.c.b16 %v3662, %v3658
      %v5099 = vpack.c.b16 %v3663, %v3659
      %v5100 = vpack.c.b16 %v3664, %v3660
      %v5101 = vpack.c.b16 %v3669, %v3665
      %v5102 = vpack.c.b16 %v3670, %v3666
      %v5103 = vpack.c.b16 %v3671, %v3667
      %v5104 = vpack.c.b16 %v3672, %v3668
      %v5105 = vpack.c.b16 %v3677, %v3673
      %v5106 = vpack.c.b16 %v3678, %v3674
      %v5107 = vpack.c.b16 %v3679, %v3675
      %v5108 = vpack.c.b16 %v3680, %v3676
      %v5109 = vpack.c.b16 %v3685, %v3681
      %v5110 = vpack.c.b16 %v3686, %v3682
      %v5111 = vpack.c.b16 %v3687, %v3683
      %v5112 = vpack.c.b16 %v3688, %v3684
      %v5113 = vpack.c.b16 %v3693, %v3689
      %v5114 = vpack.c.b16 %v3694, %v3690
      %v5115 = vpack.c.b16 %v3695, %v3691
      %v5116 = vpack.c.b16 %v3696, %v3692
      %v5117 = vpack.c.b16 %v3701, %v3697
      %v5118 = vpack.c.b16 %v3702, %v3698
      %v5119 = vpack.c.b16 %v3703, %v3699
      %v5120 = vpack.c.b16 %v3704, %v3700
      %v5121 = vpack.c.b16 %v3709, %v3705
      %v5122 = vpack.c.b16 %v3710, %v3706
      %v5123 = vpack.c.b16 %v3711, %v3707
      %v5124 = vpack.c.b16 %v3712, %v3708
      %v5125 = vpack.c.b16 %v3717, %v3713
      %v5126 = vpack.c.b16 %v3718, %v3714
      %v5127 = vpack.c.b16 %v3719, %v3715
      %v5128 = vpack.c.b16 %v3720, %v3716
      %v5129 = vpack.c.b16 %v3725, %v3721
      %v5130 = vpack.c.b16 %v3726, %v3722
      %v5131 = vpack.c.b16 %v3727, %v3723
      %v5132 = vpack.c.b16 %v3728, %v3724
      %v5133 = vpack.c.b16 %v3733, %v3729
      %v5134 = vpack.c.b16 %v3734, %v3730
      %v5135 = vpack.c.b16 %v3735, %v3731
      %v5136 = vpack.c.b16 %v3736, %v3732
      %v5137 = vpack.c.b16 %v3741, %v3737
      %v5138 = vpack.c.b16 %v3742, %v3738
      %v5139 = vpack.c.b16 %v3743, %v3739
      %v5140 = vpack.c.b16 %v3744, %v3740
      %v5141 = vpack.c.b16 %v3749, %v3745
      %v5142 = vpack.c.b16 %v3750, %v3746
      %v5143 = vpack.c.b16 %v3751, %v3747
      %v5144 = vpack.c.b16 %v3752, %v3748
      %v5145 = vpack.c.b16 %v3757, %v3753
      %v5146 = vpack.c.b16 %v3758, %v3754
      %v5147 = vpack.c.b16 %v3759, %v3755
      %v5148 = vpack.c.b16 %v3760, %v3756
      %v5149 = vpack.c.b16 %v3765, %v3761
      %v5150 = vpack.c.b16 %v3766, %v3762
      %v5151 = vpack.c.b16 %v3767, %v3763
      %v5152 = vpack.c.b16 %v3768, %v3764
      %v5153 = vpack.c.b16 %v3773, %v3769
      %v5154 = vpack.c.b16 %v3774, %v3770
      %v5155 = vpack.c.b16 %v3775, %v3771
      %v5156 = vpack.c.b16 %v3776, %v3772
      %v5157 = vpack.c.b16 %v3781, %v3777
      %v5158 = vpack.c.b16 %v3782, %v3778
      %v5159 = vpack.c.b16 %v3783, %v3779
      %v5160 = vpack.c.b16 %v3784, %v3780
      %v5161 = vpack.c.b16 %v3789, %v3785
      %v5162 = vpack.c.b16 %v3790, %v3786
      %v5163 = vpack.c.b16 %v3791, %v3787
      %v5164 = vpack.c.b16 %v3792, %v3788
      %v5165 = vpack.c.b16 %v3797, %v3793
      %v5166 = vpack.c.b16 %v3798, %v3794
      %v5167 = vpack.c.b16 %v3799, %v3795
      %v5168 = vpack.c.b16 %v3800, %v3796
      %v5169 = vpack.c.b16 %v3805, %v3801
      %v5170 = vpack.c.b16 %v3806, %v3802
      %v5171 = vpack.c.b16 %v3807, %v3803
      %v5172 = vpack.c.b16 %v3808, %v3804
      %v5173 = vpack.c.b16 %v3813, %v3809
      %v5174 = vpack.c.b16 %v3814, %v3810
      %v5175 = vpack.c.b16 %v3815, %v3811
      %v5176 = vpack.c.b16 %v3816, %v3812
      %v5177 = vpack.c.b16 %v3821, %v3817
      %v5178 = vpack.c.b16 %v3822, %v3818
      %v5179 = vpack.c.b16 %v3823, %v3819
      %v5180 = vpack.c.b16 %v3824, %v3820
      %v5181 = vpack.c.b16 %v3829, %v3825
      %v5182 = vpack.c.b16 %v3830, %v3826
      %v5183 = vpack.c.b16 %v3831, %v3827
      %v5184 = vpack.c.b16 %v3832, %v3828
      %v5185 = vpack.c.b16 %v3837, %v3833
      %v5186 = vpack.c.b16 %v3838, %v3834
      %v5187 = vpack.c.b16 %v3839, %v3835
      %v5188 = vpack.c.b16 %v3840, %v3836
      %v5189 = vpack.c.b16 %v3845, %v3841
      %v5190 = vpack.c.b16 %v3846, %v3842
      %v5191 = vpack.c.b16 %v3847, %v3843
      %v5192 = vpack.c.b16 %v3848, %v3844
      %v5193 = vpack.c.b16 %v3853, %v3849
      %v5194 = vpack.c.b16 %v3854, %v3850
      %v5195 = vpack.c.b16 %v3855, %v3851
      %v5196 = vpack.c.b16 %v3856, %v3852
      %v5197 = vpack.c.b16 %v3861, %v3857
      %v5198 = vpack.c.b16 %v3862, %v3858
      %v5199 = vpack.c.b16 %v3863, %v3859
      %v5200 = vpack.c.b16 %v3864, %v3860
      %v5201 = vpack.c.b16 %v3869, %v3865
      %v5202 = vpack.c.b16 %v3870, %v3866
      %v5203 = vpack.c.b16 %v3871, %v3867
      %v5204 = vpack.c.b16 %v3872, %v3868
      %v5205 = vpack.c.b16 %v3877, %v3873
      %v5206 = vpack.c.b16 %v3878, %v3874
      %v5207 = vpack.c.b16 %v3879, %v3875
      %v5208 = vpack.c.b16 %v3880, %v3876
      %v5209 = vpack.c.b16 %v3885, %v3881
      %v5210 = vpack.c.b16 %v3886, %v3882
      %v5211 = vpack.c.b16 %v3887, %v3883
      %v5212 = vpack.c.b16 %v3888, %v3884
      %v5213 = vpack.c.b16 %v3893, %v3889
      %v5214 = vpack.c.b16 %v3894, %v3890
      %v5215 = vpack.c.b16 %v3895, %v3891
      %v5216 = vpack.c.b16 %v3896, %v3892
      %v5217 = vpack.c.b16 %v3901, %v3897
      %v5218 = vpack.c.b16 %v3902, %v3898
      %v5219 = vpack.c.b16 %v3903, %v3899
      %v5220 = vpack.c.b16 %v3904, %v3900
      %v5221 = vpack.c.b16 %v3909, %v3905
      %v5222 = vpack.c.b16 %v3910, %v3906
      %v5223 = vpack.c.b16 %v3911, %v3907
      %v5224 = vpack.c.b16 %v3912, %v3908
      %v5225 = vpack.c.b16 %v3917, %v3913
      %v5226 = vpack.c.b16 %v3918, %v3914
      %v5227 = vpack.c.b16 %v3919, %v3915
      %v5228 = vpack.c.b16 %v3920, %v3916
      %v5229 = vpack.c.b16 %v3925, %v3921
      %v5230 = vpack.c.b16 %v3926, %v3922
      %v5231 = vpack.c.b16 %v3927, %v3923
      %v5232 = vpack.c.b16 %v3928, %v3924
      %v5233 = vpack.c.b16 %v3933, %v3929
      %v5234 = vpack.c.b16 %v3934, %v3930
      %v5235 = vpack.c.b16 %v3935, %v3931
      %v5236 = vpack.c.b16 %v3936, %v3932
      %v5237 = vpack.c.b16 %v3941, %v3937
      %v5238 = vpack.c.b16 %v3942, %v3938
      %v5239 = vpack.c.b16 %v3943, %v3939
      %v5240 = vpack.c.b16 %v3944, %v3940
      %v5241 = vpack.c.b16 %v3949, %v3945
      %v5242 = vpack.c.b16 %v3950, %v3946
      %v5243 = vpack.c.b16 %v3951, %v3947
      %v5244 = vpack.c.b16 %v3952, %v3948
      %v5245 = vpack.c.b16 %v3957, %v3953
      %v5246 = vpack.c.b16 %v3958, %v3954
      %v5247 = vpack.c.b16 %v3959, %v3955
      %v5248 = vpack.c.b16 %v3960, %v3956
      %v5249 = vpack.c.b16 %v3965, %v3961
      %v5250 = vpack.c.b16 %v3966, %v3962
      %v5251 = vpack.c.b16 %v3967, %v3963
      %v5252 = vpack.c.b16 %v3968, %v3964
      %v5253 = vpack.c.b16 %v3973, %v3969
      %v5254 = vpack.c.b16 %v3974, %v3970
      %v5255 = vpack.c.b16 %v3975, %v3971
      %v5256 = vpack.c.b16 %v3976, %v3972
      %v5257 = vpack.c.b16 %v3981, %v3977
      %v5258 = vpack.c.b16 %v3982, %v3978
      %v5259 = vpack.c.b16 %v3983, %v3979
      %v5260 = vpack.c.b16 %v3984, %v3980
      %v5261 = vpack.c.b16 %v3989, %v3985
      %v5262 = vpack.c.b16 %v3990, %v3986
      %v5263 = vpack.c.b16 %v3991, %v3987
      %v5264 = vpack.c.b16 %v3992, %v3988
      %v5265 = vpack.c.b16 %v3997, %v3993
      %v5266 = vpack.c.b16 %v3998, %v3994
      %v5267 = vpack.c.b16 %v3999, %v3995
      %v5268 = vpack.c.b16 %v4000, %v3996
      %v5269 = vpack.c.b16 %v4005, %v4001
      %v5270 = vpack.c.b16 %v4006, %v4002
      %v5271 = vpack.c.b16 %v4007, %v4003
      %v5272 = vpack.c.b16 %v4008, %v4004
      %v5273 = vpack.c.b16 %v4013, %v4009
      %v5274 = vpack.c.b16 %v4014, %v4010
      %v5275 = vpack.c.b16 %v4015, %v4011
      %v5276 = vpack.c.b16 %v4016, %v4012
      %v5277 = vpack.c.b16 %v4021, %v4017
      %v5278 = vpack.c.b16 %v4022, %v4018
      %v5279 = vpack.c.b16 %v4023, %v4019
      %v5280 = vpack.c.b16 %v4024, %v4020
      %v5281 = vpack.c.b16 %v4029, %v4025
      %v5282 = vpack.c.b16 %v4030, %v4026
      %v5283 = vpack.c.b16 %v4031, %v4027
      %v5284 = vpack.c.b16 %v4032, %v4028
      %v5285 = vpack.c.b16 %v4037, %v4033
      %v5286 = vpack.c.b16 %v4038, %v4034
      %v5287 = vpack.c.b16 %v4039, %v4035
      %v5288 = vpack.c.b16 %v4040, %v4036
      %v5289 = vpack.c.b16 %v4045, %v4041
      %v5290 = vpack.c.b16 %v4046, %v4042
      %v5291 = vpack.c.b16 %v4047, %v4043
      %v5292 = vpack.c.b16 %v4048, %v4044
      %v5293 = vpack.c.b16 %v4053, %v4049
      %v5294 = vpack.c.b16 %v4054, %v4050
      %v5295 = vpack.c.b16 %v4055, %v4051
      %v5296 = vpack.c.b16 %v4056, %v4052
      %v5297 = vpack.c.b16 %v4061, %v4057
      %v5298 = vpack.c.b16 %v4062, %v4058
      %v5299 = vpack.c.b16 %v4063, %v4059
      %v5300 = vpack.c.b16 %v4064, %v4060
      %v5301 = vpack.c.b16 %v4069, %v4065
      %v5302 = vpack.c.b16 %v4070, %v4066
      %v5303 = vpack.c.b16 %v4071, %v4067
      %v5304 = vpack.c.b16 %v4072, %v4068
      %v5305 = vpack.c.b16 %v4077, %v4073
      %v5306 = vpack.c.b16 %v4078, %v4074
      %v5307 = vpack.c.b16 %v4079, %v4075
      %v5308 = vpack.c.b16 %v4080, %v4076
      %v5309 = vpack.c.b16 %v4085, %v4081
      %v5310 = vpack.c.b16 %v4086, %v4082
      %v5311 = vpack.c.b16 %v4087, %v4083
      %v5312 = vpack.c.b16 %v4088, %v4084
      %v5313 = vpack.c.b16 %v4093, %v4089
      %v5314 = vpack.c.b16 %v4094, %v4090
      %v5315 = vpack.c.b16 %v4095, %v4091
      %v5316 = vpack.c.b16 %v4096, %v4092
      %v5317 = vpack.c.b16 %v4101, %v4097
      %v5318 = vpack.c.b16 %v4102, %v4098
      %v5319 = vpack.c.b16 %v4103, %v4099
      %v5320 = vpack.c.b16 %v4104, %v4100
      %v5321 = vpack.c.b16 %v4109, %v4105
      %v5322 = vpack.c.b16 %v4110, %v4106
      %v5323 = vpack.c.b16 %v4111, %v4107
      %v5324 = vpack.c.b16 %v4112, %v4108
      %v5325 = vpack.c.b16 %v4117, %v4113
      %v5326 = vpack.c.b16 %v4118, %v4114
      %v5327 = vpack.c.b16 %v4119, %v4115
      %v5328 = vpack.c.b16 %v4120, %v4116
      %v5329 = vpack.c.b16 %v4125, %v4121
      %v5330 = vpack.c.b16 %v4126, %v4122
      %v5331 = vpack.c.b16 %v4127, %v4123
      %v5332 = vpack.c.b16 %v4128, %v4124
      %v5333 = vpack.c.b16 %v4133, %v4129
      %v5334 = vpack.c.b16 %v4134, %v4130
      %v5335 = vpack.c.b16 %v4135, %v4131
      %v5336 = vpack.c.b16 %v4136, %v4132
      %v5337 = vpack.c.b16 %v4141, %v4137
      %v5338 = vpack.c.b16 %v4142, %v4138
      %v5339 = vpack.c.b16 %v4143, %v4139
      %v5340 = vpack.c.b16 %v4144, %v4140
      %v5341 = vpack.c.b16 %v4149, %v4145
      %v5342 = vpack.c.b16 %v4150, %v4146
      %v5343 = vpack.c.b16 %v4151, %v4147
      %v5344 = vpack.c.b16 %v4152, %v4148
      %v5345 = vpack.c.b16 %v4157, %v4153
      %v5346 = vpack.c.b16 %v4158, %v4154
      %v5347 = vpack.c.b16 %v4159, %v4155
      %v5348 = vpack.c.b16 %v4160, %v4156
      %v5349 = vpack.c.b16 %v4165, %v4161
      %v5350 = vpack.c.b16 %v4166, %v4162
      %v5351 = vpack.c.b16 %v4167, %v4163
      %v5352 = vpack.c.b16 %v4168, %v4164
      %v5353 = vpack.c.b16 %v4173, %v4169
      %v5354 = vpack.c.b16 %v4174, %v4170
      %v5355 = vpack.c.b16 %v4175, %v4171
      %v5356 = vpack.c.b16 %v4176, %v4172
      %v5357 = vpack.c.b16 %v4181, %v4177
      %v5358 = vpack.c.b16 %v4182, %v4178
      %v5359 = vpack.c.b16 %v4183, %v4179
      %v5360 = vpack.c.b16 %v4184, %v4180
      %v5361 = vpack.c.b16 %v4189, %v4185
      %v5362 = vpack.c.b16 %v4190, %v4186
      %v5363 = vpack.c.b16 %v4191, %v4187
      %v5364 = vpack.c.b16 %v4192, %v4188
      %v5365 = vpack.c.b16 %v4197, %v4193
      %v5366 = vpack.c.b16 %v4198, %v4194
      %v5367 = vpack.c.b16 %v4199, %v4195
      %v5368 = vpack.c.b16 %v4200, %v4196
      %v5369 = vpack.c.b16 %v4205, %v4201
      %v5370 = vpack.c.b16 %v4206, %v4202
      %v5371 = vpack.c.b16 %v4207, %v4203
      %v5372 = vpack.c.b16 %v4208, %v4204
      %v5373 = vpack.c.b16 %v4213, %v4209
      %v5374 = vpack.c.b16 %v4214, %v4210
      %v5375 = vpack.c.b16 %v4215, %v4211
      %v5376 = vpack.c.b16 %v4216, %v4212
      %v5377 = vpack.c.b16 %v4221, %v4217
      %v5378 = vpack.c.b16 %v4222, %v4218
      %v5379 = vpack.c.b16 %v4223, %v4219
      %v5380 = vpack.c.b16 %v4224, %v4220
      %v5381 = vpack.c.b16 %v4229, %v4225
      %v5382 = vpack.c.b16 %v4230, %v4226
      %v5383 = vpack.c.b16 %v4231, %v4227
      %v5384 = vpack.c.b16 %v4232, %v4228
      %v5385 = vpack.c.b16 %v4237, %v4233
      %v5386 = vpack.c.b16 %v4238, %v4234
      %v5387 = vpack.c.b16 %v4239, %v4235
      %v5388 = vpack.c.b16 %v4240, %v4236
      %v5389 = vpack.c.b16 %v4245, %v4241
      %v5390 = vpack.c.b16 %v4246, %v4242
      %v5391 = vpack.c.b16 %v4247, %v4243
      %v5392 = vpack.c.b16 %v4248, %v4244
      %v5393 = vpack.c.b16 %v4253, %v4249
      %v5394 = vpack.c.b16 %v4254, %v4250
      %v5395 = vpack.c.b16 %v4255, %v4251
      %v5396 = vpack.c.b16 %v4256, %v4252
      %v5397 = vpack.c.b16 %v4261, %v4257
      %v5398 = vpack.c.b16 %v4262, %v4258
      %v5399 = vpack.c.b16 %v4263, %v4259
      %v5400 = vpack.c.b16 %v4264, %v4260
      %v5401 = vpack.c.b16 %v4269, %v4265
      %v5402 = vpack.c.b16 %v4270, %v4266
      %v5403 = vpack.c.b16 %v4271, %v4267
      %v5404 = vpack.c.b16 %v4272, %v4268
      %v5405 = vpack.c.b16 %v4277, %v4273
      %v5406 = vpack.c.b16 %v4278, %v4274
      %v5407 = vpack.c.b16 %v4279, %v4275
      %v5408 = vpack.c.b16 %v4280, %v4276
      %v5409 = vpack.c.b16 %v4285, %v4281
      %v5410 = vpack.c.b16 %v4286, %v4282
      %v5411 = vpack.c.b16 %v4287, %v4283
      %v5412 = vpack.c.b16 %v4288, %v4284
      %v5413 = vpack.c.b16 %v4293, %v4289
      %v5414 = vpack.c.b16 %v4294, %v4290
      %v5415 = vpack.c.b16 %v4295, %v4291
      %v5416 = vpack.c.b16 %v4296, %v4292
      %v5417 = vpack.c.b16 %v4301, %v4297
      %v5418 = vpack.c.b16 %v4302, %v4298
      %v5419 = vpack.c.b16 %v4303, %v4299
      %v5420 = vpack.c.b16 %v4304, %v4300
      %v5421 = vpack.c.b16 %v4309, %v4305
      %v5422 = vpack.c.b16 %v4310, %v4306
      %v5423 = vpack.c.b16 %v4311, %v4307
      %v5424 = vpack.c.b16 %v4312, %v4308
      %v5425 = vpack.c.b16 %v4317, %v4313
      %v5426 = vpack.c.b16 %v4318, %v4314
      %v5427 = vpack.c.b16 %v4319, %v4315
      %v5428 = vpack.c.b16 %v4320, %v4316
      %v5429 = vpack.c.b16 %v4325, %v4321
      %v5430 = vpack.c.b16 %v4326, %v4322
      %v5431 = vpack.c.b16 %v4327, %v4323
      %v5432 = vpack.c.b16 %v4328, %v4324
      %v5433 = vpack.c.b16 %v4333, %v4329
      %v5434 = vpack.c.b16 %v4334, %v4330
      %v5435 = vpack.c.b16 %v4335, %v4331
      %v5436 = vpack.c.b16 %v4336, %v4332
      %v5437 = vpack.c.b16 %v4341, %v4337
      %v5438 = vpack.c.b16 %v4342, %v4338
      %v5439 = vpack.c.b16 %v4343, %v4339
      %v5440 = vpack.c.b16 %v4344, %v4340
      %v5441 = vpack.c.b16 %v4349, %v4345
      %v5442 = vpack.c.b16 %v4350, %v4346
      %v5443 = vpack.c.b16 %v4351, %v4347
      %v5444 = vpack.c.b16 %v4352, %v4348
      %v5445 = vpack.c.b16 %v4357, %v4353
      %v5446 = vpack.c.b16 %v4358, %v4354
      %v5447 = vpack.c.b16 %v4359, %v4355
      %v5448 = vpack.c.b16 %v4360, %v4356
      %v5449 = vpack.c.b16 %v4365, %v4361
      %v5450 = vpack.c.b16 %v4366, %v4362
      %v5451 = vpack.c.b16 %v4367, %v4363
      %v5452 = vpack.c.b16 %v4368, %v4364
      %v5453 = vpack.c.b16 %v4373, %v4369
      %v5454 = vpack.c.b16 %v4374, %v4370
      %v5455 = vpack.c.b16 %v4375, %v4371
      %v5456 = vpack.c.b16 %v4376, %v4372
      %v5457 = vpack.c.b16 %v4381, %v4377
      %v5458 = vpack.c.b16 %v4382, %v4378
      %v5459 = vpack.c.b16 %v4383, %v4379
      %v5460 = vpack.c.b16 %v4384, %v4380
      %v5461 = vpack.c.b16 %v4389, %v4385
      %v5462 = vpack.c.b16 %v4390, %v4386
      %v5463 = vpack.c.b16 %v4391, %v4387
      %v5464 = vpack.c.b16 %v4392, %v4388
      %v5465 = vpack.c.b16 %v4397, %v4393
      %v5466 = vpack.c.b16 %v4398, %v4394
      %v5467 = vpack.c.b16 %v4399, %v4395
      %v5468 = vpack.c.b16 %v4400, %v4396
      %v5469 = vpack.c.b16 %v4405, %v4401
      %v5470 = vpack.c.b16 %v4406, %v4402
      %v5471 = vpack.c.b16 %v4407, %v4403
      %v5472 = vpack.c.b16 %v4408, %v4404
      %v5473 = vpack.c.b16 %v4413, %v4409
      %v5474 = vpack.c.b16 %v4414, %v4410
      %v5475 = vpack.c.b16 %v4415, %v4411
      %v5476 = vpack.c.b16 %v4416, %v4412
      %v5477 = vpack.c.b16 %v4421, %v4417
      %v5478 = vpack.c.b16 %v4422, %v4418
      %v5479 = vpack.c.b16 %v4423, %v4419
      %v5480 = vpack.c.b16 %v4424, %v4420
      %v5481 = vpack.c.b16 %v4429, %v4425
      %v5482 = vpack.c.b16 %v4430, %v4426
      %v5483 = vpack.c.b16 %v4431, %v4427
      %v5484 = vpack.c.b16 %v4432, %v4428
      %v5485 = vpack.c.b16 %v4437, %v4433
      %v5486 = vpack.c.b16 %v4438, %v4434
      %v5487 = vpack.c.b16 %v4439, %v4435
      %v5488 = vpack.c.b16 %v4440, %v4436
      %v5489 = vpack.c.b16 %v4445, %v4441
      %v5490 = vpack.c.b16 %v4446, %v4442
      %v5491 = vpack.c.b16 %v4447, %v4443
      %v5492 = vpack.c.b16 %v4448, %v4444
      %v5493 = vpack.c.b16 %v4453, %v4449
      %v5494 = vpack.c.b16 %v4454, %v4450
      %v5495 = vpack.c.b16 %v4455, %v4451
      %v5496 = vpack.c.b16 %v4456, %v4452
      %v5497 = vpack.c.b16 %v4461, %v4457
      %v5498 = vpack.c.b16 %v4462, %v4458
      %v5499 = vpack.c.b16 %v4463, %v4459
      %v5500 = vpack.c.b16 %v4464, %v4460
      %v5501 = vpack.c.b16 %v4469, %v4465
      %v5502 = vpack.c.b16 %v4470, %v4466
      %v5503 = vpack.c.b16 %v4471, %v4467
      %v5504 = vpack.c.b16 %v4472, %v4468
      %v5505 = vpack.c.b16 %v4477, %v4473
      %v5506 = vpack.c.b16 %v4478, %v4474
      %v5507 = vpack.c.b16 %v4479, %v4475
      %v5508 = vpack.c.b16 %v4480, %v4476
      %v5509 = vpack.c.b16 %v4485, %v4481
      %v5510 = vpack.c.b16 %v4486, %v4482
      %v5511 = vpack.c.b16 %v4487, %v4483
      %v5512 = vpack.c.b16 %v4488, %v4484
      %6537 = vmatprep.subr.bf16.mxu0 %v4518
      %6538 = vmatpush1.bf16.msra.mxu0 %v4517
      %6539 = vmatprep.subr.bf16.mxu0 %v4514
      %6540 = vmatpush1.bf16.msra.mxu0 %v4513
      %6541 = vmatprep.subr.bf16.mxu0 %v4510
      %6542 = vmatpush1.bf16.msra.mxu0 %v4509
      %6543 = vmatprep.subr.bf16.mxu0 %v4506
      %6544 = vmatpush1.bf16.msra.mxu0 %v4505
      %6545 = vmatprep.subr.bf16.mxu0 %v4502
      %6546 = vmatpush1.bf16.msra.mxu0 %v4501
      %6547 = vmatprep.subr.bf16.mxu0 %v4498
      %6548 = vmatpush1.bf16.msra.mxu0 %v4497
      %6549 = vmatprep.subr.bf16.mxu0 %v4494
      %6550 = vmatpush1.bf16.msra.mxu0 %v4493
      %6551 = vmatprep.subr.bf16.mxu0 %v4490
      %6552 = vmatpush1.bf16.msra.mxu0 %v4489
      %6553 = vmatprep.subr.bf16.mxu0 %v4550
      %6554 = vmatpush2.bf16.msra.mxu0 %v4549
      %6555 = vmatprep.subr.bf16.mxu0 %v4546
      %6556 = vmatpush2.bf16.msra.mxu0 %v4545
      %6557 = vmatprep.subr.bf16.mxu0 %v4542
      %6558 = vmatpush2.bf16.msra.mxu0 %v4541
      %6559 = vmatprep.subr.bf16.mxu0 %v4538
      %6560 = vmatpush2.bf16.msra.mxu0 %v4537
      %6561 = vmatprep.subr.bf16.mxu0 %v4534
      %6562 = vmatpush2.bf16.msra.mxu0 %v4533
      %6563 = vmatprep.subr.bf16.mxu0 %v4530
      %6564 = vmatpush2.bf16.msra.mxu0 %v4529
      %6565 = vmatprep.subr.bf16.mxu0 %v4526
      %6566 = vmatpush2.bf16.msra.mxu0 %v4525
      %6567 = vmatprep.subr.bf16.mxu0 %v4522
      %6568 = vmatpush2.bf16.msra.mxu0 %v4521
      %6569 = vmatprep.mubr.bf16.mxu0 %v1354
      %6570 = vmatmul.mubr.bf16.gmra.mxu0 %v1353
      %v6571 = vpop.f32.mrf.mxu0
      %v6572 = vadd.f32 %v1240, %v6571
      %v6573 = vpop.f32.mrf.mxu0
      %v6574 = vadd.f32 %v1244, %v6573
      %v6575 = vpop.f32.mrf.mxu0
      %v6576 = vadd.f32 %v1240, %v6575
      %v6577 = vpop.f32.mrf.mxu0
      %v6578 = vadd.f32 %v1244, %v6577
      %6579 = vdwg.mxu0
      %6580 = vmatprep.subr.bf16.mxu0 %v4582
      %6581 = vmatpush1.bf16.msra.mxu0 %v4581
      %6582 = vmatprep.subr.bf16.mxu0 %v4578
      %6583 = vmatpush1.bf16.msra.mxu0 %v4577
      %6584 = vmatprep.subr.bf16.mxu0 %v4574
      %6585 = vmatpush1.bf16.msra.mxu0 %v4573
      %6586 = vmatprep.subr.bf16.mxu0 %v4570
      %6587 = vmatpush1.bf16.msra.mxu0 %v4569
      %6588 = vmatprep.subr.bf16.mxu0 %v4566
      %6589 = vmatpush1.bf16.msra.mxu0 %v4565
      %6590 = vmatprep.subr.bf16.mxu0 %v4562
      %6591 = vmatpush1.bf16.msra.mxu0 %v4561
      %6592 = vmatprep.subr.bf16.mxu0 %v4558
      %6593 = vmatpush1.bf16.msra.mxu0 %v4557
      %6594 = vmatprep.subr.bf16.mxu0 %v4554
      %6595 = vmatpush1.bf16.msra.mxu0 %v4553
      %6596 = vmatprep.subr.bf16.mxu0 %v4614
      %6597 = vmatpush2.bf16.msra.mxu0 %v4613
      %6598 = vmatprep.subr.bf16.mxu0 %v4610
      %6599 = vmatpush2.bf16.msra.mxu0 %v4609
      %6600 = vmatprep.subr.bf16.mxu0 %v4606
      %6601 = vmatpush2.bf16.msra.mxu0 %v4605
      %6602 = vmatprep.subr.bf16.mxu0 %v4602
      %6603 = vmatpush2.bf16.msra.mxu0 %v4601
      %6604 = vmatprep.subr.bf16.mxu0 %v4598
      %6605 = vmatpush2.bf16.msra.mxu0 %v4597
      %6606 = vmatprep.subr.bf16.mxu0 %v4594
      %6607 = vmatpush2.bf16.msra.mxu0 %v4593
      %6608 = vmatprep.subr.bf16.mxu0 %v4590
      %6609 = vmatpush2.bf16.msra.mxu0 %v4589
      %6610 = vmatprep.subr.bf16.mxu0 %v4586
      %6611 = vmatpush2.bf16.msra.mxu0 %v4585
      %6612 = vmatprep.mubr.bf16.mxu0 %v1356
      %6613 = vmatmul.mubr.bf16.gmra.mxu0 %v1355
      %v6614 = vpop.f32.mrf.mxu0
      %v6615 = vadd.f32 %v6572, %v6614
      %v6616 = vpop.f32.mrf.mxu0
      %v6617 = vadd.f32 %v6574, %v6616
      %v6618 = vpop.f32.mrf.mxu0
      %v6619 = vadd.f32 %v6576, %v6618
      %v6620 = vpop.f32.mrf.mxu0
      %v6621 = vadd.f32 %v6578, %v6620
      %6622 = vdwg.mxu0
      %6623 = vmatprep.subr.bf16.mxu0 %v4646
      %6624 = vmatpush1.bf16.msra.mxu0 %v4645
      %6625 = vmatprep.subr.bf16.mxu0 %v4642
      %6626 = vmatpush1.bf16.msra.mxu0 %v4641
      %6627 = vmatprep.subr.bf16.mxu0 %v4638
      %6628 = vmatpush1.bf16.msra.mxu0 %v4637
      %6629 = vmatprep.subr.bf16.mxu0 %v4634
      %6630 = vmatpush1.bf16.msra.mxu0 %v4633
      %6631 = vmatprep.subr.bf16.mxu0 %v4630
      %6632 = vmatpush1.bf16.msra.mxu0 %v4629
      %6633 = vmatprep.subr.bf16.mxu0 %v4626
      %6634 = vmatpush1.bf16.msra.mxu0 %v4625
      %6635 = vmatprep.subr.bf16.mxu0 %v4622
      %6636 = vmatpush1.bf16.msra.mxu0 %v4621
      %6637 = vmatprep.subr.bf16.mxu0 %v4618
      %6638 = vmatpush1.bf16.msra.mxu0 %v4617
      %6639 = vmatprep.subr.bf16.mxu0 %v4678
      %6640 = vmatpush2.bf16.msra.mxu0 %v4677
      %6641 = vmatprep.subr.bf16.mxu0 %v4674
      %6642 = vmatpush2.bf16.msra.mxu0 %v4673
      %6643 = vmatprep.subr.bf16.mxu0 %v4670
      %6644 = vmatpush2.bf16.msra.mxu0 %v4669
      %6645 = vmatprep.subr.bf16.mxu0 %v4666
      %6646 = vmatpush2.bf16.msra.mxu0 %v4665
      %6647 = vmatprep.subr.bf16.mxu0 %v4662
      %6648 = vmatpush2.bf16.msra.mxu0 %v4661
      %6649 = vmatprep.subr.bf16.mxu0 %v4658
      %6650 = vmatpush2.bf16.msra.mxu0 %v4657
      %6651 = vmatprep.subr.bf16.mxu0 %v4654
      %6652 = vmatpush2.bf16.msra.mxu0 %v4653
      %6653 = vmatprep.subr.bf16.mxu0 %v4650
      %6654 = vmatpush2.bf16.msra.mxu0 %v4649
      %6655 = vmatprep.mubr.bf16.mxu0 %v1358
      %6656 = vmatmul.mubr.bf16.gmra.mxu0 %v1357
      %v6657 = vpop.f32.mrf.mxu0
      %v6658 = vadd.f32 %v6615, %v6657
      %v6659 = vpop.f32.mrf.mxu0
      %v6660 = vadd.f32 %v6617, %v6659
      %v6661 = vpop.f32.mrf.mxu0
      %v6662 = vadd.f32 %v6619, %v6661
      %v6663 = vpop.f32.mrf.mxu0
      %v6664 = vadd.f32 %v6621, %v6663
      %6665 = vdwg.mxu0
      %6666 = vmatprep.subr.bf16.mxu0 %v4710
      %6667 = vmatpush1.bf16.msra.mxu0 %v4709
      %6668 = vmatprep.subr.bf16.mxu0 %v4706
      %6669 = vmatpush1.bf16.msra.mxu0 %v4705
      %6670 = vmatprep.subr.bf16.mxu0 %v4702
      %6671 = vmatpush1.bf16.msra.mxu0 %v4701
      %6672 = vmatprep.subr.bf16.mxu0 %v4698
      %6673 = vmatpush1.bf16.msra.mxu0 %v4697
      %6674 = vmatprep.subr.bf16.mxu0 %v4694
      %6675 = vmatpush1.bf16.msra.mxu0 %v4693
      %6676 = vmatprep.subr.bf16.mxu0 %v4690
      %6677 = vmatpush1.bf16.msra.mxu0 %v4689
      %6678 = vmatprep.subr.bf16.mxu0 %v4686
      %6679 = vmatpush1.bf16.msra.mxu0 %v4685
      %6680 = vmatprep.subr.bf16.mxu0 %v4682
      %6681 = vmatpush1.bf16.msra.mxu0 %v4681
      %6682 = vmatprep.subr.bf16.mxu0 %v4742
      %6683 = vmatpush2.bf16.msra.mxu0 %v4741
      %6684 = vmatprep.subr.bf16.mxu0 %v4738
      %6685 = vmatpush2.bf16.msra.mxu0 %v4737
      %6686 = vmatprep.subr.bf16.mxu0 %v4734
      %6687 = vmatpush2.bf16.msra.mxu0 %v4733
      %6688 = vmatprep.subr.bf16.mxu0 %v4730
      %6689 = vmatpush2.bf16.msra.mxu0 %v4729
      %6690 = vmatprep.subr.bf16.mxu0 %v4726
      %6691 = vmatpush2.bf16.msra.mxu0 %v4725
      %6692 = vmatprep.subr.bf16.mxu0 %v4722
      %6693 = vmatpush2.bf16.msra.mxu0 %v4721
      %6694 = vmatprep.subr.bf16.mxu0 %v4718
      %6695 = vmatpush2.bf16.msra.mxu0 %v4717
      %6696 = vmatprep.subr.bf16.mxu0 %v4714
      %6697 = vmatpush2.bf16.msra.mxu0 %v4713
      %6698 = vmatprep.mubr.bf16.mxu0 %v1360
      %6699 = vmatmul.mubr.bf16.gmra.mxu0 %v1359
      %v6700 = vpop.f32.mrf.mxu0
      %v6701 = vadd.f32 %v6658, %v6700
      %v6702 = vpop.f32.mrf.mxu0
      %v6703 = vadd.f32 %v6660, %v6702
      %v6704 = vpop.f32.mrf.mxu0
      %v6705 = vadd.f32 %v6662, %v6704
      %v6706 = vpop.f32.mrf.mxu0
      %v6707 = vadd.f32 %v6664, %v6706
      %6708 = vdwg.mxu0
      %6709 = vmatprep.subr.bf16.mxu0 %v4774
      %6710 = vmatpush1.bf16.msra.mxu0 %v4773
      %6711 = vmatprep.subr.bf16.mxu0 %v4770
      %6712 = vmatpush1.bf16.msra.mxu0 %v4769
      %6713 = vmatprep.subr.bf16.mxu0 %v4766
      %6714 = vmatpush1.bf16.msra.mxu0 %v4765
      %6715 = vmatprep.subr.bf16.mxu0 %v4762
      %6716 = vmatpush1.bf16.msra.mxu0 %v4761
      %6717 = vmatprep.subr.bf16.mxu0 %v4758
      %6718 = vmatpush1.bf16.msra.mxu0 %v4757
      %6719 = vmatprep.subr.bf16.mxu0 %v4754
      %6720 = vmatpush1.bf16.msra.mxu0 %v4753
      %6721 = vmatprep.subr.bf16.mxu0 %v4750
      %6722 = vmatpush1.bf16.msra.mxu0 %v4749
      %6723 = vmatprep.subr.bf16.mxu0 %v4746
      %6724 = vmatpush1.bf16.msra.mxu0 %v4745
      %6725 = vmatprep.subr.bf16.mxu0 %v4806
      %6726 = vmatpush2.bf16.msra.mxu0 %v4805
      %6727 = vmatprep.subr.bf16.mxu0 %v4802
      %6728 = vmatpush2.bf16.msra.mxu0 %v4801
      %6729 = vmatprep.subr.bf16.mxu0 %v4798
      %6730 = vmatpush2.bf16.msra.mxu0 %v4797
      %6731 = vmatprep.subr.bf16.mxu0 %v4794
      %6732 = vmatpush2.bf16.msra.mxu0 %v4793
      %6733 = vmatprep.subr.bf16.mxu0 %v4790
      %6734 = vmatpush2.bf16.msra.mxu0 %v4789
      %6735 = vmatprep.subr.bf16.mxu0 %v4786
      %6736 = vmatpush2.bf16.msra.mxu0 %v4785
      %6737 = vmatprep.subr.bf16.mxu0 %v4782
      %6738 = vmatpush2.bf16.msra.mxu0 %v4781
      %6739 = vmatprep.subr.bf16.mxu0 %v4778
      %6740 = vmatpush2.bf16.msra.mxu0 %v4777
      %6741 = vmatprep.mubr.bf16.mxu0 %v1362
      %6742 = vmatmul.mubr.bf16.gmra.mxu0 %v1361
      %v6743 = vpop.f32.mrf.mxu0
      %v6744 = vadd.f32 %v6701, %v6743
      %v6745 = vpop.f32.mrf.mxu0
      %v6746 = vadd.f32 %v6703, %v6745
      %v6747 = vpop.f32.mrf.mxu0
      %v6748 = vadd.f32 %v6705, %v6747
      %v6749 = vpop.f32.mrf.mxu0
      %v6750 = vadd.f32 %v6707, %v6749
      %6751 = vdwg.mxu0
      %6752 = vmatprep.subr.bf16.mxu0 %v4838
      %6753 = vmatpush1.bf16.msra.mxu0 %v4837
      %6754 = vmatprep.subr.bf16.mxu0 %v4834
      %6755 = vmatpush1.bf16.msra.mxu0 %v4833
      %6756 = vmatprep.subr.bf16.mxu0 %v4830
      %6757 = vmatpush1.bf16.msra.mxu0 %v4829
      %6758 = vmatprep.subr.bf16.mxu0 %v4826
      %6759 = vmatpush1.bf16.msra.mxu0 %v4825
      %6760 = vmatprep.subr.bf16.mxu0 %v4822
      %6761 = vmatpush1.bf16.msra.mxu0 %v4821
      %6762 = vmatprep.subr.bf16.mxu0 %v4818
      %6763 = vmatpush1.bf16.msra.mxu0 %v4817
      %6764 = vmatprep.subr.bf16.mxu0 %v4814
      %6765 = vmatpush1.bf16.msra.mxu0 %v4813
      %6766 = vmatprep.subr.bf16.mxu0 %v4810
      %6767 = vmatpush1.bf16.msra.mxu0 %v4809
      %6768 = vmatprep.subr.bf16.mxu0 %v4870
      %6769 = vmatpush2.bf16.msra.mxu0 %v4869
      %6770 = vmatprep.subr.bf16.mxu0 %v4866
      %6771 = vmatpush2.bf16.msra.mxu0 %v4865
      %6772 = vmatprep.subr.bf16.mxu0 %v4862
      %6773 = vmatpush2.bf16.msra.mxu0 %v4861
      %6774 = vmatprep.subr.bf16.mxu0 %v4858
      %6775 = vmatpush2.bf16.msra.mxu0 %v4857
      %6776 = vmatprep.subr.bf16.mxu0 %v4854
      %6777 = vmatpush2.bf16.msra.mxu0 %v4853
      %6778 = vmatprep.subr.bf16.mxu0 %v4850
      %6779 = vmatpush2.bf16.msra.mxu0 %v4849
      %6780 = vmatprep.subr.bf16.mxu0 %v4846
      %6781 = vmatpush2.bf16.msra.mxu0 %v4845
      %6782 = vmatprep.subr.bf16.mxu0 %v4842
      %6783 = vmatpush2.bf16.msra.mxu0 %v4841
      %6784 = vmatprep.mubr.bf16.mxu0 %v1364
      %6785 = vmatmul.mubr.bf16.gmra.mxu0 %v1363
      %v6786 = vpop.f32.mrf.mxu0
      %v6787 = vadd.f32 %v6744, %v6786
      %v6788 = vpop.f32.mrf.mxu0
      %v6789 = vadd.f32 %v6746, %v6788
      %v6790 = vpop.f32.mrf.mxu0
      %v6791 = vadd.f32 %v6748, %v6790
      %v6792 = vpop.f32.mrf.mxu0
      %v6793 = vadd.f32 %v6750, %v6792
      %6794 = vdwg.mxu0
      %6795 = vmatprep.subr.bf16.mxu0 %v4902
      %6796 = vmatpush1.bf16.msra.mxu0 %v4901
      %6797 = vmatprep.subr.bf16.mxu0 %v4898
      %6798 = vmatpush1.bf16.msra.mxu0 %v4897
      %6799 = vmatprep.subr.bf16.mxu0 %v4894
      %6800 = vmatpush1.bf16.msra.mxu0 %v4893
      %6801 = vmatprep.subr.bf16.mxu0 %v4890
      %6802 = vmatpush1.bf16.msra.mxu0 %v4889
      %6803 = vmatprep.subr.bf16.mxu0 %v4886
      %6804 = vmatpush1.bf16.msra.mxu0 %v4885
      %6805 = vmatprep.subr.bf16.mxu0 %v4882
      %6806 = vmatpush1.bf16.msra.mxu0 %v4881
      %6807 = vmatprep.subr.bf16.mxu0 %v4878
      %6808 = vmatpush1.bf16.msra.mxu0 %v4877
      %6809 = vmatprep.subr.bf16.mxu0 %v4874
      %6810 = vmatpush1.bf16.msra.mxu0 %v4873
      %6811 = vmatprep.subr.bf16.mxu0 %v4934
      %6812 = vmatpush2.bf16.msra.mxu0 %v4933
      %6813 = vmatprep.subr.bf16.mxu0 %v4930
      %6814 = vmatpush2.bf16.msra.mxu0 %v4929
      %6815 = vmatprep.subr.bf16.mxu0 %v4926
      %6816 = vmatpush2.bf16.msra.mxu0 %v4925
      %6817 = vmatprep.subr.bf16.mxu0 %v4922
      %6818 = vmatpush2.bf16.msra.mxu0 %v4921
      %6819 = vmatprep.subr.bf16.mxu0 %v4918
      %6820 = vmatpush2.bf16.msra.mxu0 %v4917
      %6821 = vmatprep.subr.bf16.mxu0 %v4914
      %6822 = vmatpush2.bf16.msra.mxu0 %v4913
      %6823 = vmatprep.subr.bf16.mxu0 %v4910
      %6824 = vmatpush2.bf16.msra.mxu0 %v4909
      %6825 = vmatprep.subr.bf16.mxu0 %v4906
      %6826 = vmatpush2.bf16.msra.mxu0 %v4905
      %6827 = vmatprep.mubr.bf16.mxu0 %v1366
      %6828 = vmatmul.mubr.bf16.gmra.mxu0 %v1365
      %v6829 = vpop.f32.mrf.mxu0
      %v6830 = vadd.f32 %v6787, %v6829
      %v6831 = vpop.f32.mrf.mxu0
      %v6832 = vadd.f32 %v6789, %v6831
      %v6833 = vpop.f32.mrf.mxu0
      %v6834 = vadd.f32 %v6791, %v6833
      %v6835 = vpop.f32.mrf.mxu0
      %v6836 = vadd.f32 %v6793, %v6835
      %6837 = vdwg.mxu0
      %6838 = vmatprep.subr.bf16.mxu0 %v4966
      %6839 = vmatpush1.bf16.msra.mxu0 %v4965
      %6840 = vmatprep.subr.bf16.mxu0 %v4962
      %6841 = vmatpush1.bf16.msra.mxu0 %v4961
      %6842 = vmatprep.subr.bf16.mxu0 %v4958
      %6843 = vmatpush1.bf16.msra.mxu0 %v4957
      %6844 = vmatprep.subr.bf16.mxu0 %v4954
      %6845 = vmatpush1.bf16.msra.mxu0 %v4953
      %6846 = vmatprep.subr.bf16.mxu0 %v4950
      %6847 = vmatpush1.bf16.msra.mxu0 %v4949
      %6848 = vmatprep.subr.bf16.mxu0 %v4946
      %6849 = vmatpush1.bf16.msra.mxu0 %v4945
      %6850 = vmatprep.subr.bf16.mxu0 %v4942
      %6851 = vmatpush1.bf16.msra.mxu0 %v4941
      %6852 = vmatprep.subr.bf16.mxu0 %v4938
      %6853 = vmatpush1.bf16.msra.mxu0 %v4937
      %6854 = vmatprep.subr.bf16.mxu0 %v4998
      %6855 = vmatpush2.bf16.msra.mxu0 %v4997
      %6856 = vmatprep.subr.bf16.mxu0 %v4994
      %6857 = vmatpush2.bf16.msra.mxu0 %v4993
      %6858 = vmatprep.subr.bf16.mxu0 %v4990
      %6859 = vmatpush2.bf16.msra.mxu0 %v4989
      %6860 = vmatprep.subr.bf16.mxu0 %v4986
      %6861 = vmatpush2.bf16.msra.mxu0 %v4985
      %6862 = vmatprep.subr.bf16.mxu0 %v4982
      %6863 = vmatpush2.bf16.msra.mxu0 %v4981
      %6864 = vmatprep.subr.bf16.mxu0 %v4978
      %6865 = vmatpush2.bf16.msra.mxu0 %v4977
      %6866 = vmatprep.subr.bf16.mxu0 %v4974
      %6867 = vmatpush2.bf16.msra.mxu0 %v4973
      %6868 = vmatprep.subr.bf16.mxu0 %v4970
      %6869 = vmatpush2.bf16.msra.mxu0 %v4969
      %6870 = vmatprep.mubr.bf16.mxu0 %v1368
      %6871 = vmatmul.mubr.bf16.gmra.mxu0 %v1367
      %v6872 = vpop.f32.mrf.mxu0
      %v6873 = vadd.f32 %v6830, %v6872
      %v6874 = vpop.f32.mrf.mxu0
      %v6875 = vadd.f32 %v6832, %v6874
      %v6876 = vpop.f32.mrf.mxu0
      %v6877 = vadd.f32 %v6834, %v6876
      %v6878 = vpop.f32.mrf.mxu0
      %v6879 = vadd.f32 %v6836, %v6878
      %6880 = vdwg.mxu0
      %6881 = vmatprep.subr.bf16.mxu0 %v5030
      %6882 = vmatpush1.bf16.msra.mxu0 %v5029
      %6883 = vmatprep.subr.bf16.mxu0 %v5026
      %6884 = vmatpush1.bf16.msra.mxu0 %v5025
      %6885 = vmatprep.subr.bf16.mxu0 %v5022
      %6886 = vmatpush1.bf16.msra.mxu0 %v5021
      %6887 = vmatprep.subr.bf16.mxu0 %v5018
      %6888 = vmatpush1.bf16.msra.mxu0 %v5017
      %6889 = vmatprep.subr.bf16.mxu0 %v5014
      %6890 = vmatpush1.bf16.msra.mxu0 %v5013
      %6891 = vmatprep.subr.bf16.mxu0 %v5010
      %6892 = vmatpush1.bf16.msra.mxu0 %v5009
      %6893 = vmatprep.subr.bf16.mxu0 %v5006
      %6894 = vmatpush1.bf16.msra.mxu0 %v5005
      %6895 = vmatprep.subr.bf16.mxu0 %v5002
      %6896 = vmatpush1.bf16.msra.mxu0 %v5001
      %6897 = vmatprep.subr.bf16.mxu0 %v5062
      %6898 = vmatpush2.bf16.msra.mxu0 %v5061
      %6899 = vmatprep.subr.bf16.mxu0 %v5058
      %6900 = vmatpush2.bf16.msra.mxu0 %v5057
      %6901 = vmatprep.subr.bf16.mxu0 %v5054
      %6902 = vmatpush2.bf16.msra.mxu0 %v5053
      %6903 = vmatprep.subr.bf16.mxu0 %v5050
      %6904 = vmatpush2.bf16.msra.mxu0 %v5049
      %6905 = vmatprep.subr.bf16.mxu0 %v5046
      %6906 = vmatpush2.bf16.msra.mxu0 %v5045
      %6907 = vmatprep.subr.bf16.mxu0 %v5042
      %6908 = vmatpush2.bf16.msra.mxu0 %v5041
      %6909 = vmatprep.subr.bf16.mxu0 %v5038
      %6910 = vmatpush2.bf16.msra.mxu0 %v5037
      %6911 = vmatprep.subr.bf16.mxu0 %v5034
      %6912 = vmatpush2.bf16.msra.mxu0 %v5033
      %6913 = vmatprep.mubr.bf16.mxu0 %v1370
      %6914 = vmatmul.mubr.bf16.gmra.mxu0 %v1369
      %v6915 = vpop.f32.mrf.mxu0
      %v6916 = vadd.f32 %v6873, %v6915
      %v6917 = vpop.f32.mrf.mxu0
      %v6918 = vadd.f32 %v6875, %v6917
      %v6919 = vpop.f32.mrf.mxu0
      %v6920 = vadd.f32 %v6877, %v6919
      %v6921 = vpop.f32.mrf.mxu0
      %v6922 = vadd.f32 %v6879, %v6921
      %6923 = vdwg.mxu0
      %6924 = vmatprep.subr.bf16.mxu0 %v5094
      %6925 = vmatpush1.bf16.msra.mxu0 %v5093
      %6926 = vmatprep.subr.bf16.mxu0 %v5090
      %6927 = vmatpush1.bf16.msra.mxu0 %v5089
      %6928 = vmatprep.subr.bf16.mxu0 %v5086
      %6929 = vmatpush1.bf16.msra.mxu0 %v5085
      %6930 = vmatprep.subr.bf16.mxu0 %v5082
      %6931 = vmatpush1.bf16.msra.mxu0 %v5081
      %6932 = vmatprep.subr.bf16.mxu0 %v5078
      %6933 = vmatpush1.bf16.msra.mxu0 %v5077
      %6934 = vmatprep.subr.bf16.mxu0 %v5074
      %6935 = vmatpush1.bf16.msra.mxu0 %v5073
      %6936 = vmatprep.subr.bf16.mxu0 %v5070
      %6937 = vmatpush1.bf16.msra.mxu0 %v5069
      %6938 = vmatprep.subr.bf16.mxu0 %v5066
      %6939 = vmatpush1.bf16.msra.mxu0 %v5065
      %6940 = vmatprep.subr.bf16.mxu0 %v5126
      %6941 = vmatpush2.bf16.msra.mxu0 %v5125
      %6942 = vmatprep.subr.bf16.mxu0 %v5122
      %6943 = vmatpush2.bf16.msra.mxu0 %v5121
      %6944 = vmatprep.subr.bf16.mxu0 %v5118
      %6945 = vmatpush2.bf16.msra.mxu0 %v5117
      %6946 = vmatprep.subr.bf16.mxu0 %v5114
      %6947 = vmatpush2.bf16.msra.mxu0 %v5113
      %6948 = vmatprep.subr.bf16.mxu0 %v5110
      %6949 = vmatpush2.bf16.msra.mxu0 %v5109
      %6950 = vmatprep.subr.bf16.mxu0 %v5106
      %6951 = vmatpush2.bf16.msra.mxu0 %v5105
      %6952 = vmatprep.subr.bf16.mxu0 %v5102
      %6953 = vmatpush2.bf16.msra.mxu0 %v5101
      %6954 = vmatprep.subr.bf16.mxu0 %v5098
      %6955 = vmatpush2.bf16.msra.mxu0 %v5097
      %6956 = vmatprep.mubr.bf16.mxu0 %v1372
      %6957 = vmatmul.mubr.bf16.gmra.mxu0 %v1371
      %v6958 = vpop.f32.mrf.mxu0
      %v6959 = vadd.f32 %v6916, %v6958
      %v6960 = vpop.f32.mrf.mxu0
      %v6961 = vadd.f32 %v6918, %v6960
      %v6962 = vpop.f32.mrf.mxu0
      %v6963 = vadd.f32 %v6920, %v6962
      %v6964 = vpop.f32.mrf.mxu0
      %v6965 = vadd.f32 %v6922, %v6964
      %6966 = vdwg.mxu0
      %6967 = vmatprep.subr.bf16.mxu0 %v5158
      %6968 = vmatpush1.bf16.msra.mxu0 %v5157
      %6969 = vmatprep.subr.bf16.mxu0 %v5154
      %6970 = vmatpush1.bf16.msra.mxu0 %v5153
      %6971 = vmatprep.subr.bf16.mxu0 %v5150
      %6972 = vmatpush1.bf16.msra.mxu0 %v5149
      %6973 = vmatprep.subr.bf16.mxu0 %v5146
      %6974 = vmatpush1.bf16.msra.mxu0 %v5145
      %6975 = vmatprep.subr.bf16.mxu0 %v5142
      %6976 = vmatpush1.bf16.msra.mxu0 %v5141
      %6977 = vmatprep.subr.bf16.mxu0 %v5138
      %6978 = vmatpush1.bf16.msra.mxu0 %v5137
      %6979 = vmatprep.subr.bf16.mxu0 %v5134
      %6980 = vmatpush1.bf16.msra.mxu0 %v5133
      %6981 = vmatprep.subr.bf16.mxu0 %v5130
      %6982 = vmatpush1.bf16.msra.mxu0 %v5129
      %6983 = vmatprep.subr.bf16.mxu0 %v5190
      %6984 = vmatpush2.bf16.msra.mxu0 %v5189
      %6985 = vmatprep.subr.bf16.mxu0 %v5186
      %6986 = vmatpush2.bf16.msra.mxu0 %v5185
      %6987 = vmatprep.subr.bf16.mxu0 %v5182
      %6988 = vmatpush2.bf16.msra.mxu0 %v5181
      %6989 = vmatprep.subr.bf16.mxu0 %v5178
      %6990 = vmatpush2.bf16.msra.mxu0 %v5177
      %6991 = vmatprep.subr.bf16.mxu0 %v5174
      %6992 = vmatpush2.bf16.msra.mxu0 %v5173
      %6993 = vmatprep.subr.bf16.mxu0 %v5170
      %6994 = vmatpush2.bf16.msra.mxu0 %v5169
      %6995 = vmatprep.subr.bf16.mxu0 %v5166
      %6996 = vmatpush2.bf16.msra.mxu0 %v5165
      %6997 = vmatprep.subr.bf16.mxu0 %v5162
      %6998 = vmatpush2.bf16.msra.mxu0 %v5161
      %6999 = vmatprep.mubr.bf16.mxu0 %v1374
      %7000 = vmatmul.mubr.bf16.gmra.mxu0 %v1373
      %v7001 = vpop.f32.mrf.mxu0
      %v7002 = vadd.f32 %v6959, %v7001
      %v7003 = vpop.f32.mrf.mxu0
      %v7004 = vadd.f32 %v6961, %v7003
      %v7005 = vpop.f32.mrf.mxu0
      %v7006 = vadd.f32 %v6963, %v7005
      %v7007 = vpop.f32.mrf.mxu0
      %v7008 = vadd.f32 %v6965, %v7007
      %7009 = vdwg.mxu0
      %7010 = vmatprep.subr.bf16.mxu0 %v5222
      %7011 = vmatpush1.bf16.msra.mxu0 %v5221
      %7012 = vmatprep.subr.bf16.mxu0 %v5218
      %7013 = vmatpush1.bf16.msra.mxu0 %v5217
      %7014 = vmatprep.subr.bf16.mxu0 %v5214
      %7015 = vmatpush1.bf16.msra.mxu0 %v5213
      %7016 = vmatprep.subr.bf16.mxu0 %v5210
      %7017 = vmatpush1.bf16.msra.mxu0 %v5209
      %7018 = vmatprep.subr.bf16.mxu0 %v5206
      %7019 = vmatpush1.bf16.msra.mxu0 %v5205
      %7020 = vmatprep.subr.bf16.mxu0 %v5202
      %7021 = vmatpush1.bf16.msra.mxu0 %v5201
      %7022 = vmatprep.subr.bf16.mxu0 %v5198
      %7023 = vmatpush1.bf16.msra.mxu0 %v5197
      %7024 = vmatprep.subr.bf16.mxu0 %v5194
      %7025 = vmatpush1.bf16.msra.mxu0 %v5193
      %7026 = vmatprep.subr.bf16.mxu0 %v5254
      %7027 = vmatpush2.bf16.msra.mxu0 %v5253
      %7028 = vmatprep.subr.bf16.mxu0 %v5250
      %7029 = vmatpush2.bf16.msra.mxu0 %v5249
      %7030 = vmatprep.subr.bf16.mxu0 %v5246
      %7031 = vmatpush2.bf16.msra.mxu0 %v5245
      %7032 = vmatprep.subr.bf16.mxu0 %v5242
      %7033 = vmatpush2.bf16.msra.mxu0 %v5241
      %7034 = vmatprep.subr.bf16.mxu0 %v5238
      %7035 = vmatpush2.bf16.msra.mxu0 %v5237
      %7036 = vmatprep.subr.bf16.mxu0 %v5234
      %7037 = vmatpush2.bf16.msra.mxu0 %v5233
      %7038 = vmatprep.subr.bf16.mxu0 %v5230
      %7039 = vmatpush2.bf16.msra.mxu0 %v5229
      %7040 = vmatprep.subr.bf16.mxu0 %v5226
      %7041 = vmatpush2.bf16.msra.mxu0 %v5225
      %7042 = vmatprep.mubr.bf16.mxu0 %v1376
      %7043 = vmatmul.mubr.bf16.gmra.mxu0 %v1375
      %v7044 = vpop.f32.mrf.mxu0
      %v7045 = vadd.f32 %v7002, %v7044
      %v7046 = vpop.f32.mrf.mxu0
      %v7047 = vadd.f32 %v7004, %v7046
      %v7048 = vpop.f32.mrf.mxu0
      %v7049 = vadd.f32 %v7006, %v7048
      %v7050 = vpop.f32.mrf.mxu0
      %v7051 = vadd.f32 %v7008, %v7050
      %7052 = vdwg.mxu0
      %7053 = vmatprep.subr.bf16.mxu0 %v5286
      %7054 = vmatpush1.bf16.msra.mxu0 %v5285
      %7055 = vmatprep.subr.bf16.mxu0 %v5282
      %7056 = vmatpush1.bf16.msra.mxu0 %v5281
      %7057 = vmatprep.subr.bf16.mxu0 %v5278
      %7058 = vmatpush1.bf16.msra.mxu0 %v5277
      %7059 = vmatprep.subr.bf16.mxu0 %v5274
      %7060 = vmatpush1.bf16.msra.mxu0 %v5273
      %7061 = vmatprep.subr.bf16.mxu0 %v5270
      %7062 = vmatpush1.bf16.msra.mxu0 %v5269
      %7063 = vmatprep.subr.bf16.mxu0 %v5266
      %7064 = vmatpush1.bf16.msra.mxu0 %v5265
      %7065 = vmatprep.subr.bf16.mxu0 %v5262
      %7066 = vmatpush1.bf16.msra.mxu0 %v5261
      %7067 = vmatprep.subr.bf16.mxu0 %v5258
      %7068 = vmatpush1.bf16.msra.mxu0 %v5257
      %7069 = vmatprep.subr.bf16.mxu0 %v5318
      %7070 = vmatpush2.bf16.msra.mxu0 %v5317
      %7071 = vmatprep.subr.bf16.mxu0 %v5314
      %7072 = vmatpush2.bf16.msra.mxu0 %v5313
      %7073 = vmatprep.subr.bf16.mxu0 %v5310
      %7074 = vmatpush2.bf16.msra.mxu0 %v5309
      %7075 = vmatprep.subr.bf16.mxu0 %v5306
      %7076 = vmatpush2.bf16.msra.mxu0 %v5305
      %7077 = vmatprep.subr.bf16.mxu0 %v5302
      %7078 = vmatpush2.bf16.msra.mxu0 %v5301
      %7079 = vmatprep.subr.bf16.mxu0 %v5298
      %7080 = vmatpush2.bf16.msra.mxu0 %v5297
      %7081 = vmatprep.subr.bf16.mxu0 %v5294
      %7082 = vmatpush2.bf16.msra.mxu0 %v5293
      %7083 = vmatprep.subr.bf16.mxu0 %v5290
      %7084 = vmatpush2.bf16.msra.mxu0 %v5289
      %7085 = vmatprep.mubr.bf16.mxu0 %v1378
      %7086 = vmatmul.mubr.bf16.gmra.mxu0 %v1377
      %v7087 = vpop.f32.mrf.mxu0
      %v7088 = vadd.f32 %v7045, %v7087
      %v7089 = vpop.f32.mrf.mxu0
      %v7090 = vadd.f32 %v7047, %v7089
      %v7091 = vpop.f32.mrf.mxu0
      %v7092 = vadd.f32 %v7049, %v7091
      %v7093 = vpop.f32.mrf.mxu0
      %v7094 = vadd.f32 %v7051, %v7093
      %7095 = vdwg.mxu0
      %7096 = vmatprep.subr.bf16.mxu0 %v5350
      %7097 = vmatpush1.bf16.msra.mxu0 %v5349
      %7098 = vmatprep.subr.bf16.mxu0 %v5346
      %7099 = vmatpush1.bf16.msra.mxu0 %v5345
      %7100 = vmatprep.subr.bf16.mxu0 %v5342
      %7101 = vmatpush1.bf16.msra.mxu0 %v5341
      %7102 = vmatprep.subr.bf16.mxu0 %v5338
      %7103 = vmatpush1.bf16.msra.mxu0 %v5337
      %7104 = vmatprep.subr.bf16.mxu0 %v5334
      %7105 = vmatpush1.bf16.msra.mxu0 %v5333
      %7106 = vmatprep.subr.bf16.mxu0 %v5330
      %7107 = vmatpush1.bf16.msra.mxu0 %v5329
      %7108 = vmatprep.subr.bf16.mxu0 %v5326
      %7109 = vmatpush1.bf16.msra.mxu0 %v5325
      %7110 = vmatprep.subr.bf16.mxu0 %v5322
      %7111 = vmatpush1.bf16.msra.mxu0 %v5321
      %7112 = vmatprep.subr.bf16.mxu0 %v5382
      %7113 = vmatpush2.bf16.msra.mxu0 %v5381
      %7114 = vmatprep.subr.bf16.mxu0 %v5378
      %7115 = vmatpush2.bf16.msra.mxu0 %v5377
      %7116 = vmatprep.subr.bf16.mxu0 %v5374
      %7117 = vmatpush2.bf16.msra.mxu0 %v5373
      %7118 = vmatprep.subr.bf16.mxu0 %v5370
      %7119 = vmatpush2.bf16.msra.mxu0 %v5369
      %7120 = vmatprep.subr.bf16.mxu0 %v5366
      %7121 = vmatpush2.bf16.msra.mxu0 %v5365
      %7122 = vmatprep.subr.bf16.mxu0 %v5362
      %7123 = vmatpush2.bf16.msra.mxu0 %v5361
      %7124 = vmatprep.subr.bf16.mxu0 %v5358
      %7125 = vmatpush2.bf16.msra.mxu0 %v5357
      %7126 = vmatprep.subr.bf16.mxu0 %v5354
      %7127 = vmatpush2.bf16.msra.mxu0 %v5353
      %7128 = vmatprep.mubr.bf16.mxu0 %v1380
      %7129 = vmatmul.mubr.bf16.gmra.mxu0 %v1379
      %v7130 = vpop.f32.mrf.mxu0
      %v7131 = vadd.f32 %v7088, %v7130
      %v7132 = vpop.f32.mrf.mxu0
      %v7133 = vadd.f32 %v7090, %v7132
      %v7134 = vpop.f32.mrf.mxu0
      %v7135 = vadd.f32 %v7092, %v7134
      %v7136 = vpop.f32.mrf.mxu0
      %v7137 = vadd.f32 %v7094, %v7136
      %7138 = vdwg.mxu0
      %7139 = vmatprep.subr.bf16.mxu0 %v5414
      %7140 = vmatpush1.bf16.msra.mxu0 %v5413
      %7141 = vmatprep.subr.bf16.mxu0 %v5410
      %7142 = vmatpush1.bf16.msra.mxu0 %v5409
      %7143 = vmatprep.subr.bf16.mxu0 %v5406
      %7144 = vmatpush1.bf16.msra.mxu0 %v5405
      %7145 = vmatprep.subr.bf16.mxu0 %v5402
      %7146 = vmatpush1.bf16.msra.mxu0 %v5401
      %7147 = vmatprep.subr.bf16.mxu0 %v5398
      %7148 = vmatpush1.bf16.msra.mxu0 %v5397
      %7149 = vmatprep.subr.bf16.mxu0 %v5394
      %7150 = vmatpush1.bf16.msra.mxu0 %v5393
      %7151 = vmatprep.subr.bf16.mxu0 %v5390
      %7152 = vmatpush1.bf16.msra.mxu0 %v5389
      %7153 = vmatprep.subr.bf16.mxu0 %v5386
      %7154 = vmatpush1.bf16.msra.mxu0 %v5385
      %7155 = vmatprep.subr.bf16.mxu0 %v5446
      %7156 = vmatpush2.bf16.msra.mxu0 %v5445
      %7157 = vmatprep.subr.bf16.mxu0 %v5442
      %7158 = vmatpush2.bf16.msra.mxu0 %v5441
      %7159 = vmatprep.subr.bf16.mxu0 %v5438
      %7160 = vmatpush2.bf16.msra.mxu0 %v5437
      %7161 = vmatprep.subr.bf16.mxu0 %v5434
      %7162 = vmatpush2.bf16.msra.mxu0 %v5433
      %7163 = vmatprep.subr.bf16.mxu0 %v5430
      %7164 = vmatpush2.bf16.msra.mxu0 %v5429
      %7165 = vmatprep.subr.bf16.mxu0 %v5426
      %7166 = vmatpush2.bf16.msra.mxu0 %v5425
      %7167 = vmatprep.subr.bf16.mxu0 %v5422
      %7168 = vmatpush2.bf16.msra.mxu0 %v5421
      %7169 = vmatprep.subr.bf16.mxu0 %v5418
      %7170 = vmatpush2.bf16.msra.mxu0 %v5417
      %7171 = vmatprep.mubr.bf16.mxu0 %v1382
      %7172 = vmatmul.mubr.bf16.gmra.mxu0 %v1381
      %v7173 = vpop.f32.mrf.mxu0
      %v7174 = vadd.f32 %v7131, %v7173
      %v7175 = vpop.f32.mrf.mxu0
      %v7176 = vadd.f32 %v7133, %v7175
      %v7177 = vpop.f32.mrf.mxu0
      %v7178 = vadd.f32 %v7135, %v7177
      %v7179 = vpop.f32.mrf.mxu0
      %v7180 = vadd.f32 %v7137, %v7179
      %7181 = vdwg.mxu0
      %7182 = vmatprep.subr.bf16.mxu0 %v5478
      %7183 = vmatpush1.bf16.msra.mxu0 %v5477
      %7184 = vmatprep.subr.bf16.mxu0 %v5474
      %7185 = vmatpush1.bf16.msra.mxu0 %v5473
      %7186 = vmatprep.subr.bf16.mxu0 %v5470
      %7187 = vmatpush1.bf16.msra.mxu0 %v5469
      %7188 = vmatprep.subr.bf16.mxu0 %v5466
      %7189 = vmatpush1.bf16.msra.mxu0 %v5465
      %7190 = vmatprep.subr.bf16.mxu0 %v5462
      %7191 = vmatpush1.bf16.msra.mxu0 %v5461
      %7192 = vmatprep.subr.bf16.mxu0 %v5458
      %7193 = vmatpush1.bf16.msra.mxu0 %v5457
      %7194 = vmatprep.subr.bf16.mxu0 %v5454
      %7195 = vmatpush1.bf16.msra.mxu0 %v5453
      %7196 = vmatprep.subr.bf16.mxu0 %v5450
      %7197 = vmatpush1.bf16.msra.mxu0 %v5449
      %7198 = vmatprep.subr.bf16.mxu0 %v5510
      %7199 = vmatpush2.bf16.msra.mxu0 %v5509
      %7200 = vmatprep.subr.bf16.mxu0 %v5506
      %7201 = vmatpush2.bf16.msra.mxu0 %v5505
      %7202 = vmatprep.subr.bf16.mxu0 %v5502
      %7203 = vmatpush2.bf16.msra.mxu0 %v5501
      %7204 = vmatprep.subr.bf16.mxu0 %v5498
      %7205 = vmatpush2.bf16.msra.mxu0 %v5497
      %7206 = vmatprep.subr.bf16.mxu0 %v5494
      %7207 = vmatpush2.bf16.msra.mxu0 %v5493
      %7208 = vmatprep.subr.bf16.mxu0 %v5490
      %7209 = vmatpush2.bf16.msra.mxu0 %v5489
      %7210 = vmatprep.subr.bf16.mxu0 %v5486
      %7211 = vmatpush2.bf16.msra.mxu0 %v5485
      %7212 = vmatprep.subr.bf16.mxu0 %v5482
      %7213 = vmatpush2.bf16.msra.mxu0 %v5481
      %7214 = vmatprep.mubr.bf16.mxu0 %v1384
      %7215 = vmatmul.mubr.bf16.gmra.mxu0 %v1383
      %v7216 = vpop.f32.mrf.mxu0
      %v7217 = vadd.f32 %v7174, %v7216
      %v7218 = vpop.f32.mrf.mxu0
      %v7219 = vadd.f32 %v7176, %v7218
      %v7220 = vpop.f32.mrf.mxu0
      %v7221 = vadd.f32 %v7178, %v7220
      %v7222 = vpop.f32.mrf.mxu0
      %v7223 = vadd.f32 %v7180, %v7222
      %7224 = vdwg.mxu0
      %7225 = vmatprep.subr.bf16.mxu0 %v4520
      %7226 = vmatpush1.bf16.msra.mxu0 %v4519
      %7227 = vmatprep.subr.bf16.mxu0 %v4516
      %7228 = vmatpush1.bf16.msra.mxu0 %v4515
      %7229 = vmatprep.subr.bf16.mxu0 %v4512
      %7230 = vmatpush1.bf16.msra.mxu0 %v4511
      %7231 = vmatprep.subr.bf16.mxu0 %v4508
      %7232 = vmatpush1.bf16.msra.mxu0 %v4507
      %7233 = vmatprep.subr.bf16.mxu0 %v4504
      %7234 = vmatpush1.bf16.msra.mxu0 %v4503
      %7235 = vmatprep.subr.bf16.mxu0 %v4500
      %7236 = vmatpush1.bf16.msra.mxu0 %v4499
      %7237 = vmatprep.subr.bf16.mxu0 %v4496
      %7238 = vmatpush1.bf16.msra.mxu0 %v4495
      %7239 = vmatprep.subr.bf16.mxu0 %v4492
      %7240 = vmatpush1.bf16.msra.mxu0 %v4491
      %7241 = vmatprep.subr.bf16.mxu0 %v4552
      %7242 = vmatpush2.bf16.msra.mxu0 %v4551
      %7243 = vmatprep.subr.bf16.mxu0 %v4548
      %7244 = vmatpush2.bf16.msra.mxu0 %v4547
      %7245 = vmatprep.subr.bf16.mxu0 %v4544
      %7246 = vmatpush2.bf16.msra.mxu0 %v4543
      %7247 = vmatprep.subr.bf16.mxu0 %v4540
      %7248 = vmatpush2.bf16.msra.mxu0 %v4539
      %7249 = vmatprep.subr.bf16.mxu0 %v4536
      %7250 = vmatpush2.bf16.msra.mxu0 %v4535
      %7251 = vmatprep.subr.bf16.mxu0 %v4532
      %7252 = vmatpush2.bf16.msra.mxu0 %v4531
      %7253 = vmatprep.subr.bf16.mxu0 %v4528
      %7254 = vmatpush2.bf16.msra.mxu0 %v4527
      %7255 = vmatprep.subr.bf16.mxu0 %v4524
      %7256 = vmatpush2.bf16.msra.mxu0 %v4523
      %7257 = vmatprep.mubr.bf16.mxu0 %v1354
      %7258 = vmatmul.mubr.bf16.gmra.mxu0 %v1353
      %v7259 = vpop.f32.mrf.mxu0
      %v7260 = vadd.f32 %v1248, %v7259
      %v7261 = vpop.f32.mrf.mxu0
      %v7262 = vadd.f32 %v1252, %v7261
      %v7263 = vpop.f32.mrf.mxu0
      %v7264 = vadd.f32 %v1248, %v7263
      %v7265 = vpop.f32.mrf.mxu0
      %v7266 = vadd.f32 %v1252, %v7265
      %7267 = vdwg.mxu0
      %7268 = vmatprep.subr.bf16.mxu0 %v4584
      %7269 = vmatpush1.bf16.msra.mxu0 %v4583
      %7270 = vmatprep.subr.bf16.mxu0 %v4580
      %7271 = vmatpush1.bf16.msra.mxu0 %v4579
      %7272 = vmatprep.subr.bf16.mxu0 %v4576
      %7273 = vmatpush1.bf16.msra.mxu0 %v4575
      %7274 = vmatprep.subr.bf16.mxu0 %v4572
      %7275 = vmatpush1.bf16.msra.mxu0 %v4571
      %7276 = vmatprep.subr.bf16.mxu0 %v4568
      %7277 = vmatpush1.bf16.msra.mxu0 %v4567
      %7278 = vmatprep.subr.bf16.mxu0 %v4564
      %7279 = vmatpush1.bf16.msra.mxu0 %v4563
      %7280 = vmatprep.subr.bf16.mxu0 %v4560
      %7281 = vmatpush1.bf16.msra.mxu0 %v4559
      %7282 = vmatprep.subr.bf16.mxu0 %v4556
      %7283 = vmatpush1.bf16.msra.mxu0 %v4555
      %7284 = vmatprep.subr.bf16.mxu0 %v4616
      %7285 = vmatpush2.bf16.msra.mxu0 %v4615
      %7286 = vmatprep.subr.bf16.mxu0 %v4612
      %7287 = vmatpush2.bf16.msra.mxu0 %v4611
      %7288 = vmatprep.subr.bf16.mxu0 %v4608
      %7289 = vmatpush2.bf16.msra.mxu0 %v4607
      %7290 = vmatprep.subr.bf16.mxu0 %v4604
      %7291 = vmatpush2.bf16.msra.mxu0 %v4603
      %7292 = vmatprep.subr.bf16.mxu0 %v4600
      %7293 = vmatpush2.bf16.msra.mxu0 %v4599
      %7294 = vmatprep.subr.bf16.mxu0 %v4596
      %7295 = vmatpush2.bf16.msra.mxu0 %v4595
      %7296 = vmatprep.subr.bf16.mxu0 %v4592
      %7297 = vmatpush2.bf16.msra.mxu0 %v4591
      %7298 = vmatprep.subr.bf16.mxu0 %v4588
      %7299 = vmatpush2.bf16.msra.mxu0 %v4587
      %7300 = vmatprep.mubr.bf16.mxu0 %v1356
      %7301 = vmatmul.mubr.bf16.gmra.mxu0 %v1355
      %v7302 = vpop.f32.mrf.mxu0
      %v7303 = vadd.f32 %v7260, %v7302
      %v7304 = vpop.f32.mrf.mxu0
      %v7305 = vadd.f32 %v7262, %v7304
      %v7306 = vpop.f32.mrf.mxu0
      %v7307 = vadd.f32 %v7264, %v7306
      %v7308 = vpop.f32.mrf.mxu0
      %v7309 = vadd.f32 %v7266, %v7308
      %7310 = vdwg.mxu0
      %7311 = vmatprep.subr.bf16.mxu0 %v4648
      %7312 = vmatpush1.bf16.msra.mxu0 %v4647
      %7313 = vmatprep.subr.bf16.mxu0 %v4644
      %7314 = vmatpush1.bf16.msra.mxu0 %v4643
      %7315 = vmatprep.subr.bf16.mxu0 %v4640
      %7316 = vmatpush1.bf16.msra.mxu0 %v4639
      %7317 = vmatprep.subr.bf16.mxu0 %v4636
      %7318 = vmatpush1.bf16.msra.mxu0 %v4635
      %7319 = vmatprep.subr.bf16.mxu0 %v4632
      %7320 = vmatpush1.bf16.msra.mxu0 %v4631
      %7321 = vmatprep.subr.bf16.mxu0 %v4628
      %7322 = vmatpush1.bf16.msra.mxu0 %v4627
      %7323 = vmatprep.subr.bf16.mxu0 %v4624
      %7324 = vmatpush1.bf16.msra.mxu0 %v4623
      %7325 = vmatprep.subr.bf16.mxu0 %v4620
      %7326 = vmatpush1.bf16.msra.mxu0 %v4619
      %7327 = vmatprep.subr.bf16.mxu0 %v4680
      %7328 = vmatpush2.bf16.msra.mxu0 %v4679
      %7329 = vmatprep.subr.bf16.mxu0 %v4676
      %7330 = vmatpush2.bf16.msra.mxu0 %v4675
      %7331 = vmatprep.subr.bf16.mxu0 %v4672
      %7332 = vmatpush2.bf16.msra.mxu0 %v4671
      %7333 = vmatprep.subr.bf16.mxu0 %v4668
      %7334 = vmatpush2.bf16.msra.mxu0 %v4667
      %7335 = vmatprep.subr.bf16.mxu0 %v4664
      %7336 = vmatpush2.bf16.msra.mxu0 %v4663
      %7337 = vmatprep.subr.bf16.mxu0 %v4660
      %7338 = vmatpush2.bf16.msra.mxu0 %v4659
      %7339 = vmatprep.subr.bf16.mxu0 %v4656
      %7340 = vmatpush2.bf16.msra.mxu0 %v4655
      %7341 = vmatprep.subr.bf16.mxu0 %v4652
      %7342 = vmatpush2.bf16.msra.mxu0 %v4651
      %7343 = vmatprep.mubr.bf16.mxu0 %v1358
      %7344 = vmatmul.mubr.bf16.gmra.mxu0 %v1357
      %v7345 = vpop.f32.mrf.mxu0
      %v7346 = vadd.f32 %v7303, %v7345
      %v7347 = vpop.f32.mrf.mxu0
      %v7348 = vadd.f32 %v7305, %v7347
      %v7349 = vpop.f32.mrf.mxu0
      %v7350 = vadd.f32 %v7307, %v7349
      %v7351 = vpop.f32.mrf.mxu0
      %v7352 = vadd.f32 %v7309, %v7351
      %7353 = vdwg.mxu0
      %7354 = vmatprep.subr.bf16.mxu0 %v4712
      %7355 = vmatpush1.bf16.msra.mxu0 %v4711
      %7356 = vmatprep.subr.bf16.mxu0 %v4708
      %7357 = vmatpush1.bf16.msra.mxu0 %v4707
      %7358 = vmatprep.subr.bf16.mxu0 %v4704
      %7359 = vmatpush1.bf16.msra.mxu0 %v4703
      %7360 = vmatprep.subr.bf16.mxu0 %v4700
      %7361 = vmatpush1.bf16.msra.mxu0 %v4699
      %7362 = vmatprep.subr.bf16.mxu0 %v4696
      %7363 = vmatpush1.bf16.msra.mxu0 %v4695
      %7364 = vmatprep.subr.bf16.mxu0 %v4692
      %7365 = vmatpush1.bf16.msra.mxu0 %v4691
      %7366 = vmatprep.subr.bf16.mxu0 %v4688
      %7367 = vmatpush1.bf16.msra.mxu0 %v4687
      %7368 = vmatprep.subr.bf16.mxu0 %v4684
      %7369 = vmatpush1.bf16.msra.mxu0 %v4683
      %7370 = vmatprep.subr.bf16.mxu0 %v4744
      %7371 = vmatpush2.bf16.msra.mxu0 %v4743
      %7372 = vmatprep.subr.bf16.mxu0 %v4740
      %7373 = vmatpush2.bf16.msra.mxu0 %v4739
      %7374 = vmatprep.subr.bf16.mxu0 %v4736
      %7375 = vmatpush2.bf16.msra.mxu0 %v4735
      %7376 = vmatprep.subr.bf16.mxu0 %v4732
      %7377 = vmatpush2.bf16.msra.mxu0 %v4731
      %7378 = vmatprep.subr.bf16.mxu0 %v4728
      %7379 = vmatpush2.bf16.msra.mxu0 %v4727
      %7380 = vmatprep.subr.bf16.mxu0 %v4724
      %7381 = vmatpush2.bf16.msra.mxu0 %v4723
      %7382 = vmatprep.subr.bf16.mxu0 %v4720
      %7383 = vmatpush2.bf16.msra.mxu0 %v4719
      %7384 = vmatprep.subr.bf16.mxu0 %v4716
      %7385 = vmatpush2.bf16.msra.mxu0 %v4715
      %7386 = vmatprep.mubr.bf16.mxu0 %v1360
      %7387 = vmatmul.mubr.bf16.gmra.mxu0 %v1359
      %v7388 = vpop.f32.mrf.mxu0
      %v7389 = vadd.f32 %v7346, %v7388
      %v7390 = vpop.f32.mrf.mxu0
      %v7391 = vadd.f32 %v7348, %v7390
      %v7392 = vpop.f32.mrf.mxu0
      %v7393 = vadd.f32 %v7350, %v7392
      %v7394 = vpop.f32.mrf.mxu0
      %v7395 = vadd.f32 %v7352, %v7394
      %7396 = vdwg.mxu0
      %7397 = vmatprep.subr.bf16.mxu0 %v4776
      %7398 = vmatpush1.bf16.msra.mxu0 %v4775
      %7399 = vmatprep.subr.bf16.mxu0 %v4772
      %7400 = vmatpush1.bf16.msra.mxu0 %v4771
      %7401 = vmatprep.subr.bf16.mxu0 %v4768
      %7402 = vmatpush1.bf16.msra.mxu0 %v4767
      %7403 = vmatprep.subr.bf16.mxu0 %v4764
      %7404 = vmatpush1.bf16.msra.mxu0 %v4763
      %7405 = vmatprep.subr.bf16.mxu0 %v4760
      %7406 = vmatpush1.bf16.msra.mxu0 %v4759
      %7407 = vmatprep.subr.bf16.mxu0 %v4756
      %7408 = vmatpush1.bf16.msra.mxu0 %v4755
      %7409 = vmatprep.subr.bf16.mxu0 %v4752
      %7410 = vmatpush1.bf16.msra.mxu0 %v4751
      %7411 = vmatprep.subr.bf16.mxu0 %v4748
      %7412 = vmatpush1.bf16.msra.mxu0 %v4747
      %7413 = vmatprep.subr.bf16.mxu0 %v4808
      %7414 = vmatpush2.bf16.msra.mxu0 %v4807
      %7415 = vmatprep.subr.bf16.mxu0 %v4804
      %7416 = vmatpush2.bf16.msra.mxu0 %v4803
      %7417 = vmatprep.subr.bf16.mxu0 %v4800
      %7418 = vmatpush2.bf16.msra.mxu0 %v4799
      %7419 = vmatprep.subr.bf16.mxu0 %v4796
      %7420 = vmatpush2.bf16.msra.mxu0 %v4795
      %7421 = vmatprep.subr.bf16.mxu0 %v4792
      %7422 = vmatpush2.bf16.msra.mxu0 %v4791
      %7423 = vmatprep.subr.bf16.mxu0 %v4788
      %7424 = vmatpush2.bf16.msra.mxu0 %v4787
      %7425 = vmatprep.subr.bf16.mxu0 %v4784
      %7426 = vmatpush2.bf16.msra.mxu0 %v4783
      %7427 = vmatprep.subr.bf16.mxu0 %v4780
      %7428 = vmatpush2.bf16.msra.mxu0 %v4779
      %7429 = vmatprep.mubr.bf16.mxu0 %v1362
      %7430 = vmatmul.mubr.bf16.gmra.mxu0 %v1361
      %v7431 = vpop.f32.mrf.mxu0
      %v7432 = vadd.f32 %v7389, %v7431
      %v7433 = vpop.f32.mrf.mxu0
      %v7434 = vadd.f32 %v7391, %v7433
      %v7435 = vpop.f32.mrf.mxu0
      %v7436 = vadd.f32 %v7393, %v7435
      %v7437 = vpop.f32.mrf.mxu0
      %v7438 = vadd.f32 %v7395, %v7437
      %7439 = vdwg.mxu0
      %7440 = vmatprep.subr.bf16.mxu0 %v4840
      %7441 = vmatpush1.bf16.msra.mxu0 %v4839
      %7442 = vmatprep.subr.bf16.mxu0 %v4836
      %7443 = vmatpush1.bf16.msra.mxu0 %v4835
      %7444 = vmatprep.subr.bf16.mxu0 %v4832
      %7445 = vmatpush1.bf16.msra.mxu0 %v4831
      %7446 = vmatprep.subr.bf16.mxu0 %v4828
      %7447 = vmatpush1.bf16.msra.mxu0 %v4827
      %7448 = vmatprep.subr.bf16.mxu0 %v4824
      %7449 = vmatpush1.bf16.msra.mxu0 %v4823
      %7450 = vmatprep.subr.bf16.mxu0 %v4820
      %7451 = vmatpush1.bf16.msra.mxu0 %v4819
      %7452 = vmatprep.subr.bf16.mxu0 %v4816
      %7453 = vmatpush1.bf16.msra.mxu0 %v4815
      %7454 = vmatprep.subr.bf16.mxu0 %v4812
      %7455 = vmatpush1.bf16.msra.mxu0 %v4811
      %7456 = vmatprep.subr.bf16.mxu0 %v4872
      %7457 = vmatpush2.bf16.msra.mxu0 %v4871
      %7458 = vmatprep.subr.bf16.mxu0 %v4868
      %7459 = vmatpush2.bf16.msra.mxu0 %v4867
      %7460 = vmatprep.subr.bf16.mxu0 %v4864
      %7461 = vmatpush2.bf16.msra.mxu0 %v4863
      %7462 = vmatprep.subr.bf16.mxu0 %v4860
      %7463 = vmatpush2.bf16.msra.mxu0 %v4859
      %7464 = vmatprep.subr.bf16.mxu0 %v4856
      %7465 = vmatpush2.bf16.msra.mxu0 %v4855
      %7466 = vmatprep.subr.bf16.mxu0 %v4852
      %7467 = vmatpush2.bf16.msra.mxu0 %v4851
      %7468 = vmatprep.subr.bf16.mxu0 %v4848
      %7469 = vmatpush2.bf16.msra.mxu0 %v4847
      %7470 = vmatprep.subr.bf16.mxu0 %v4844
      %7471 = vmatpush2.bf16.msra.mxu0 %v4843
      %7472 = vmatprep.mubr.bf16.mxu0 %v1364
      %7473 = vmatmul.mubr.bf16.gmra.mxu0 %v1363
      %v7474 = vpop.f32.mrf.mxu0
      %v7475 = vadd.f32 %v7432, %v7474
      %v7476 = vpop.f32.mrf.mxu0
      %v7477 = vadd.f32 %v7434, %v7476
      %v7478 = vpop.f32.mrf.mxu0
      %v7479 = vadd.f32 %v7436, %v7478
      %v7480 = vpop.f32.mrf.mxu0
      %v7481 = vadd.f32 %v7438, %v7480
      %7482 = vdwg.mxu0
      %7483 = vmatprep.subr.bf16.mxu0 %v4904
      %7484 = vmatpush1.bf16.msra.mxu0 %v4903
      %7485 = vmatprep.subr.bf16.mxu0 %v4900
      %7486 = vmatpush1.bf16.msra.mxu0 %v4899
      %7487 = vmatprep.subr.bf16.mxu0 %v4896
      %7488 = vmatpush1.bf16.msra.mxu0 %v4895
      %7489 = vmatprep.subr.bf16.mxu0 %v4892
      %7490 = vmatpush1.bf16.msra.mxu0 %v4891
      %7491 = vmatprep.subr.bf16.mxu0 %v4888
      %7492 = vmatpush1.bf16.msra.mxu0 %v4887
      %7493 = vmatprep.subr.bf16.mxu0 %v4884
      %7494 = vmatpush1.bf16.msra.mxu0 %v4883
      %7495 = vmatprep.subr.bf16.mxu0 %v4880
      %7496 = vmatpush1.bf16.msra.mxu0 %v4879
      %7497 = vmatprep.subr.bf16.mxu0 %v4876
      %7498 = vmatpush1.bf16.msra.mxu0 %v4875
      %7499 = vmatprep.subr.bf16.mxu0 %v4936
      %7500 = vmatpush2.bf16.msra.mxu0 %v4935
      %7501 = vmatprep.subr.bf16.mxu0 %v4932
      %7502 = vmatpush2.bf16.msra.mxu0 %v4931
      %7503 = vmatprep.subr.bf16.mxu0 %v4928
      %7504 = vmatpush2.bf16.msra.mxu0 %v4927
      %7505 = vmatprep.subr.bf16.mxu0 %v4924
      %7506 = vmatpush2.bf16.msra.mxu0 %v4923
      %7507 = vmatprep.subr.bf16.mxu0 %v4920
      %7508 = vmatpush2.bf16.msra.mxu0 %v4919
      %7509 = vmatprep.subr.bf16.mxu0 %v4916
      %7510 = vmatpush2.bf16.msra.mxu0 %v4915
      %7511 = vmatprep.subr.bf16.mxu0 %v4912
      %7512 = vmatpush2.bf16.msra.mxu0 %v4911
      %7513 = vmatprep.subr.bf16.mxu0 %v4908
      %7514 = vmatpush2.bf16.msra.mxu0 %v4907
      %7515 = vmatprep.mubr.bf16.mxu0 %v1366
      %7516 = vmatmul.mubr.bf16.gmra.mxu0 %v1365
      %v7517 = vpop.f32.mrf.mxu0
      %v7518 = vadd.f32 %v7475, %v7517
      %v7519 = vpop.f32.mrf.mxu0
      %v7520 = vadd.f32 %v7477, %v7519
      %v7521 = vpop.f32.mrf.mxu0
      %v7522 = vadd.f32 %v7479, %v7521
      %v7523 = vpop.f32.mrf.mxu0
      %v7524 = vadd.f32 %v7481, %v7523
      %7525 = vdwg.mxu0
      %7526 = vmatprep.subr.bf16.mxu0 %v4968
      %7527 = vmatpush1.bf16.msra.mxu0 %v4967
      %7528 = vmatprep.subr.bf16.mxu0 %v4964
      %7529 = vmatpush1.bf16.msra.mxu0 %v4963
      %7530 = vmatprep.subr.bf16.mxu0 %v4960
      %7531 = vmatpush1.bf16.msra.mxu0 %v4959
      %7532 = vmatprep.subr.bf16.mxu0 %v4956
      %7533 = vmatpush1.bf16.msra.mxu0 %v4955
      %7534 = vmatprep.subr.bf16.mxu0 %v4952
      %7535 = vmatpush1.bf16.msra.mxu0 %v4951
      %7536 = vmatprep.subr.bf16.mxu0 %v4948
      %7537 = vmatpush1.bf16.msra.mxu0 %v4947
      %7538 = vmatprep.subr.bf16.mxu0 %v4944
      %7539 = vmatpush1.bf16.msra.mxu0 %v4943
      %7540 = vmatprep.subr.bf16.mxu0 %v4940
      %7541 = vmatpush1.bf16.msra.mxu0 %v4939
      %7542 = vmatprep.subr.bf16.mxu0 %v5000
      %7543 = vmatpush2.bf16.msra.mxu0 %v4999
      %7544 = vmatprep.subr.bf16.mxu0 %v4996
      %7545 = vmatpush2.bf16.msra.mxu0 %v4995
      %7546 = vmatprep.subr.bf16.mxu0 %v4992
      %7547 = vmatpush2.bf16.msra.mxu0 %v4991
      %7548 = vmatprep.subr.bf16.mxu0 %v4988
      %7549 = vmatpush2.bf16.msra.mxu0 %v4987
      %7550 = vmatprep.subr.bf16.mxu0 %v4984
      %7551 = vmatpush2.bf16.msra.mxu0 %v4983
      %7552 = vmatprep.subr.bf16.mxu0 %v4980
      %7553 = vmatpush2.bf16.msra.mxu0 %v4979
      %7554 = vmatprep.subr.bf16.mxu0 %v4976
      %7555 = vmatpush2.bf16.msra.mxu0 %v4975
      %7556 = vmatprep.subr.bf16.mxu0 %v4972
      %7557 = vmatpush2.bf16.msra.mxu0 %v4971
      %7558 = vmatprep.mubr.bf16.mxu0 %v1368
      %7559 = vmatmul.mubr.bf16.gmra.mxu0 %v1367
      %v7560 = vpop.f32.mrf.mxu0
      %v7561 = vadd.f32 %v7518, %v7560
      %v7562 = vpop.f32.mrf.mxu0
      %v7563 = vadd.f32 %v7520, %v7562
      %v7564 = vpop.f32.mrf.mxu0
      %v7565 = vadd.f32 %v7522, %v7564
      %v7566 = vpop.f32.mrf.mxu0
      %v7567 = vadd.f32 %v7524, %v7566
      %7568 = vdwg.mxu0
      %7569 = vmatprep.subr.bf16.mxu0 %v5032
      %7570 = vmatpush1.bf16.msra.mxu0 %v5031
      %7571 = vmatprep.subr.bf16.mxu0 %v5028
      %7572 = vmatpush1.bf16.msra.mxu0 %v5027
      %7573 = vmatprep.subr.bf16.mxu0 %v5024
      %7574 = vmatpush1.bf16.msra.mxu0 %v5023
      %7575 = vmatprep.subr.bf16.mxu0 %v5020
      %7576 = vmatpush1.bf16.msra.mxu0 %v5019
      %7577 = vmatprep.subr.bf16.mxu0 %v5016
      %7578 = vmatpush1.bf16.msra.mxu0 %v5015
      %7579 = vmatprep.subr.bf16.mxu0 %v5012
      %7580 = vmatpush1.bf16.msra.mxu0 %v5011
      %7581 = vmatprep.subr.bf16.mxu0 %v5008
      %7582 = vmatpush1.bf16.msra.mxu0 %v5007
      %7583 = vmatprep.subr.bf16.mxu0 %v5004
      %7584 = vmatpush1.bf16.msra.mxu0 %v5003
      %7585 = vmatprep.subr.bf16.mxu0 %v5064
      %7586 = vmatpush2.bf16.msra.mxu0 %v5063
      %7587 = vmatprep.subr.bf16.mxu0 %v5060
      %7588 = vmatpush2.bf16.msra.mxu0 %v5059
      %7589 = vmatprep.subr.bf16.mxu0 %v5056
      %7590 = vmatpush2.bf16.msra.mxu0 %v5055
      %7591 = vmatprep.subr.bf16.mxu0 %v5052
      %7592 = vmatpush2.bf16.msra.mxu0 %v5051
      %7593 = vmatprep.subr.bf16.mxu0 %v5048
      %7594 = vmatpush2.bf16.msra.mxu0 %v5047
      %7595 = vmatprep.subr.bf16.mxu0 %v5044
      %7596 = vmatpush2.bf16.msra.mxu0 %v5043
      %7597 = vmatprep.subr.bf16.mxu0 %v5040
      %7598 = vmatpush2.bf16.msra.mxu0 %v5039
      %7599 = vmatprep.subr.bf16.mxu0 %v5036
      %7600 = vmatpush2.bf16.msra.mxu0 %v5035
      %7601 = vmatprep.mubr.bf16.mxu0 %v1370
      %7602 = vmatmul.mubr.bf16.gmra.mxu0 %v1369
      %v7603 = vpop.f32.mrf.mxu0
      %v7604 = vadd.f32 %v7561, %v7603
      %v7605 = vpop.f32.mrf.mxu0
      %v7606 = vadd.f32 %v7563, %v7605
      %v7607 = vpop.f32.mrf.mxu0
      %v7608 = vadd.f32 %v7565, %v7607
      %v7609 = vpop.f32.mrf.mxu0
      %v7610 = vadd.f32 %v7567, %v7609
      %7611 = vdwg.mxu0
      %7612 = vmatprep.subr.bf16.mxu0 %v5096
      %7613 = vmatpush1.bf16.msra.mxu0 %v5095
      %7614 = vmatprep.subr.bf16.mxu0 %v5092
      %7615 = vmatpush1.bf16.msra.mxu0 %v5091
      %7616 = vmatprep.subr.bf16.mxu0 %v5088
      %7617 = vmatpush1.bf16.msra.mxu0 %v5087
      %7618 = vmatprep.subr.bf16.mxu0 %v5084
      %7619 = vmatpush1.bf16.msra.mxu0 %v5083
      %7620 = vmatprep.subr.bf16.mxu0 %v5080
      %7621 = vmatpush1.bf16.msra.mxu0 %v5079
      %7622 = vmatprep.subr.bf16.mxu0 %v5076
      %7623 = vmatpush1.bf16.msra.mxu0 %v5075
      %7624 = vmatprep.subr.bf16.mxu0 %v5072
      %7625 = vmatpush1.bf16.msra.mxu0 %v5071
      %7626 = vmatprep.subr.bf16.mxu0 %v5068
      %7627 = vmatpush1.bf16.msra.mxu0 %v5067
      %7628 = vmatprep.subr.bf16.mxu0 %v5128
      %7629 = vmatpush2.bf16.msra.mxu0 %v5127
      %7630 = vmatprep.subr.bf16.mxu0 %v5124
      %7631 = vmatpush2.bf16.msra.mxu0 %v5123
      %7632 = vmatprep.subr.bf16.mxu0 %v5120
      %7633 = vmatpush2.bf16.msra.mxu0 %v5119
      %7634 = vmatprep.subr.bf16.mxu0 %v5116
      %7635 = vmatpush2.bf16.msra.mxu0 %v5115
      %7636 = vmatprep.subr.bf16.mxu0 %v5112
      %7637 = vmatpush2.bf16.msra.mxu0 %v5111
      %7638 = vmatprep.subr.bf16.mxu0 %v5108
      %7639 = vmatpush2.bf16.msra.mxu0 %v5107
      %7640 = vmatprep.subr.bf16.mxu0 %v5104
      %7641 = vmatpush2.bf16.msra.mxu0 %v5103
      %7642 = vmatprep.subr.bf16.mxu0 %v5100
      %7643 = vmatpush2.bf16.msra.mxu0 %v5099
      %7644 = vmatprep.mubr.bf16.mxu0 %v1372
      %7645 = vmatmul.mubr.bf16.gmra.mxu0 %v1371
      %v7646 = vpop.f32.mrf.mxu0
      %v7647 = vadd.f32 %v7604, %v7646
      %v7648 = vpop.f32.mrf.mxu0
      %v7649 = vadd.f32 %v7606, %v7648
      %v7650 = vpop.f32.mrf.mxu0
      %v7651 = vadd.f32 %v7608, %v7650
      %v7652 = vpop.f32.mrf.mxu0
      %v7653 = vadd.f32 %v7610, %v7652
      %7654 = vdwg.mxu0
      %7655 = vmatprep.subr.bf16.mxu0 %v5160
      %7656 = vmatpush1.bf16.msra.mxu0 %v5159
      %7657 = vmatprep.subr.bf16.mxu0 %v5156
      %7658 = vmatpush1.bf16.msra.mxu0 %v5155
      %7659 = vmatprep.subr.bf16.mxu0 %v5152
      %7660 = vmatpush1.bf16.msra.mxu0 %v5151
      %7661 = vmatprep.subr.bf16.mxu0 %v5148
      %7662 = vmatpush1.bf16.msra.mxu0 %v5147
      %7663 = vmatprep.subr.bf16.mxu0 %v5144
      %7664 = vmatpush1.bf16.msra.mxu0 %v5143
      %7665 = vmatprep.subr.bf16.mxu0 %v5140
      %7666 = vmatpush1.bf16.msra.mxu0 %v5139
      %7667 = vmatprep.subr.bf16.mxu0 %v5136
      %7668 = vmatpush1.bf16.msra.mxu0 %v5135
      %7669 = vmatprep.subr.bf16.mxu0 %v5132
      %7670 = vmatpush1.bf16.msra.mxu0 %v5131
      %7671 = vmatprep.subr.bf16.mxu0 %v5192
      %7672 = vmatpush2.bf16.msra.mxu0 %v5191
      %7673 = vmatprep.subr.bf16.mxu0 %v5188
      %7674 = vmatpush2.bf16.msra.mxu0 %v5187
      %7675 = vmatprep.subr.bf16.mxu0 %v5184
      %7676 = vmatpush2.bf16.msra.mxu0 %v5183
      %7677 = vmatprep.subr.bf16.mxu0 %v5180
      %7678 = vmatpush2.bf16.msra.mxu0 %v5179
      %7679 = vmatprep.subr.bf16.mxu0 %v5176
      %7680 = vmatpush2.bf16.msra.mxu0 %v5175
      %7681 = vmatprep.subr.bf16.mxu0 %v5172
      %7682 = vmatpush2.bf16.msra.mxu0 %v5171
      %7683 = vmatprep.subr.bf16.mxu0 %v5168
      %7684 = vmatpush2.bf16.msra.mxu0 %v5167
      %7685 = vmatprep.subr.bf16.mxu0 %v5164
      %7686 = vmatpush2.bf16.msra.mxu0 %v5163
      %7687 = vmatprep.mubr.bf16.mxu0 %v1374
      %7688 = vmatmul.mubr.bf16.gmra.mxu0 %v1373
      %v7689 = vpop.f32.mrf.mxu0
      %v7690 = vadd.f32 %v7647, %v7689
      %v7691 = vpop.f32.mrf.mxu0
      %v7692 = vadd.f32 %v7649, %v7691
      %v7693 = vpop.f32.mrf.mxu0
      %v7694 = vadd.f32 %v7651, %v7693
      %v7695 = vpop.f32.mrf.mxu0
      %v7696 = vadd.f32 %v7653, %v7695
      %7697 = vdwg.mxu0
      %7698 = vmatprep.subr.bf16.mxu0 %v5224
      %7699 = vmatpush1.bf16.msra.mxu0 %v5223
      %7700 = vmatprep.subr.bf16.mxu0 %v5220
      %7701 = vmatpush1.bf16.msra.mxu0 %v5219
      %7702 = vmatprep.subr.bf16.mxu0 %v5216
      %7703 = vmatpush1.bf16.msra.mxu0 %v5215
      %7704 = vmatprep.subr.bf16.mxu0 %v5212
      %7705 = vmatpush1.bf16.msra.mxu0 %v5211
      %7706 = vmatprep.subr.bf16.mxu0 %v5208
      %7707 = vmatpush1.bf16.msra.mxu0 %v5207
      %7708 = vmatprep.subr.bf16.mxu0 %v5204
      %7709 = vmatpush1.bf16.msra.mxu0 %v5203
      %7710 = vmatprep.subr.bf16.mxu0 %v5200
      %7711 = vmatpush1.bf16.msra.mxu0 %v5199
      %7712 = vmatprep.subr.bf16.mxu0 %v5196
      %7713 = vmatpush1.bf16.msra.mxu0 %v5195
      %7714 = vmatprep.subr.bf16.mxu0 %v5256
      %7715 = vmatpush2.bf16.msra.mxu0 %v5255
      %7716 = vmatprep.subr.bf16.mxu0 %v5252
      %7717 = vmatpush2.bf16.msra.mxu0 %v5251
      %7718 = vmatprep.subr.bf16.mxu0 %v5248
      %7719 = vmatpush2.bf16.msra.mxu0 %v5247
      %7720 = vmatprep.subr.bf16.mxu0 %v5244
      %7721 = vmatpush2.bf16.msra.mxu0 %v5243
      %7722 = vmatprep.subr.bf16.mxu0 %v5240
      %7723 = vmatpush2.bf16.msra.mxu0 %v5239
      %7724 = vmatprep.subr.bf16.mxu0 %v5236
      %7725 = vmatpush2.bf16.msra.mxu0 %v5235
      %7726 = vmatprep.subr.bf16.mxu0 %v5232
      %7727 = vmatpush2.bf16.msra.mxu0 %v5231
      %7728 = vmatprep.subr.bf16.mxu0 %v5228
      %7729 = vmatpush2.bf16.msra.mxu0 %v5227
      %7730 = vmatprep.mubr.bf16.mxu0 %v1376
      %7731 = vmatmul.mubr.bf16.gmra.mxu0 %v1375
      %v7732 = vpop.f32.mrf.mxu0
      %v7733 = vadd.f32 %v7690, %v7732
      %v7734 = vpop.f32.mrf.mxu0
      %v7735 = vadd.f32 %v7692, %v7734
      %v7736 = vpop.f32.mrf.mxu0
      %v7737 = vadd.f32 %v7694, %v7736
      %v7738 = vpop.f32.mrf.mxu0
      %v7739 = vadd.f32 %v7696, %v7738
      %7740 = vdwg.mxu0
      %7741 = vmatprep.subr.bf16.mxu0 %v5288
      %7742 = vmatpush1.bf16.msra.mxu0 %v5287
      %7743 = vmatprep.subr.bf16.mxu0 %v5284
      %7744 = vmatpush1.bf16.msra.mxu0 %v5283
      %7745 = vmatprep.subr.bf16.mxu0 %v5280
      %7746 = vmatpush1.bf16.msra.mxu0 %v5279
      %7747 = vmatprep.subr.bf16.mxu0 %v5276
      %7748 = vmatpush1.bf16.msra.mxu0 %v5275
      %7749 = vmatprep.subr.bf16.mxu0 %v5272
      %7750 = vmatpush1.bf16.msra.mxu0 %v5271
      %7751 = vmatprep.subr.bf16.mxu0 %v5268
      %7752 = vmatpush1.bf16.msra.mxu0 %v5267
      %7753 = vmatprep.subr.bf16.mxu0 %v5264
      %7754 = vmatpush1.bf16.msra.mxu0 %v5263
      %7755 = vmatprep.subr.bf16.mxu0 %v5260
      %7756 = vmatpush1.bf16.msra.mxu0 %v5259
      %7757 = vmatprep.subr.bf16.mxu0 %v5320
      %7758 = vmatpush2.bf16.msra.mxu0 %v5319
      %7759 = vmatprep.subr.bf16.mxu0 %v5316
      %7760 = vmatpush2.bf16.msra.mxu0 %v5315
      %7761 = vmatprep.subr.bf16.mxu0 %v5312
      %7762 = vmatpush2.bf16.msra.mxu0 %v5311
      %7763 = vmatprep.subr.bf16.mxu0 %v5308
      %7764 = vmatpush2.bf16.msra.mxu0 %v5307
      %7765 = vmatprep.subr.bf16.mxu0 %v5304
      %7766 = vmatpush2.bf16.msra.mxu0 %v5303
      %7767 = vmatprep.subr.bf16.mxu0 %v5300
      %7768 = vmatpush2.bf16.msra.mxu0 %v5299
      %7769 = vmatprep.subr.bf16.mxu0 %v5296
      %7770 = vmatpush2.bf16.msra.mxu0 %v5295
      %7771 = vmatprep.subr.bf16.mxu0 %v5292
      %7772 = vmatpush2.bf16.msra.mxu0 %v5291
      %7773 = vmatprep.mubr.bf16.mxu0 %v1378
      %7774 = vmatmul.mubr.bf16.gmra.mxu0 %v1377
      %v7775 = vpop.f32.mrf.mxu0
      %v7776 = vadd.f32 %v7733, %v7775
      %v7777 = vpop.f32.mrf.mxu0
      %v7778 = vadd.f32 %v7735, %v7777
      %v7779 = vpop.f32.mrf.mxu0
      %v7780 = vadd.f32 %v7737, %v7779
      %v7781 = vpop.f32.mrf.mxu0
      %v7782 = vadd.f32 %v7739, %v7781
      %7783 = vdwg.mxu0
      %7784 = vmatprep.subr.bf16.mxu0 %v5352
      %7785 = vmatpush1.bf16.msra.mxu0 %v5351
      %7786 = vmatprep.subr.bf16.mxu0 %v5348
      %7787 = vmatpush1.bf16.msra.mxu0 %v5347
      %7788 = vmatprep.subr.bf16.mxu0 %v5344
      %7789 = vmatpush1.bf16.msra.mxu0 %v5343
      %7790 = vmatprep.subr.bf16.mxu0 %v5340
      %7791 = vmatpush1.bf16.msra.mxu0 %v5339
      %7792 = vmatprep.subr.bf16.mxu0 %v5336
      %7793 = vmatpush1.bf16.msra.mxu0 %v5335
      %7794 = vmatprep.subr.bf16.mxu0 %v5332
      %7795 = vmatpush1.bf16.msra.mxu0 %v5331
      %7796 = vmatprep.subr.bf16.mxu0 %v5328
      %7797 = vmatpush1.bf16.msra.mxu0 %v5327
      %7798 = vmatprep.subr.bf16.mxu0 %v5324
      %7799 = vmatpush1.bf16.msra.mxu0 %v5323
      %7800 = vmatprep.subr.bf16.mxu0 %v5384
      %7801 = vmatpush2.bf16.msra.mxu0 %v5383
      %7802 = vmatprep.subr.bf16.mxu0 %v5380
      %7803 = vmatpush2.bf16.msra.mxu0 %v5379
      %7804 = vmatprep.subr.bf16.mxu0 %v5376
      %7805 = vmatpush2.bf16.msra.mxu0 %v5375
      %7806 = vmatprep.subr.bf16.mxu0 %v5372
      %7807 = vmatpush2.bf16.msra.mxu0 %v5371
      %7808 = vmatprep.subr.bf16.mxu0 %v5368
      %7809 = vmatpush2.bf16.msra.mxu0 %v5367
      %7810 = vmatprep.subr.bf16.mxu0 %v5364
      %7811 = vmatpush2.bf16.msra.mxu0 %v5363
      %7812 = vmatprep.subr.bf16.mxu0 %v5360
      %7813 = vmatpush2.bf16.msra.mxu0 %v5359
      %7814 = vmatprep.subr.bf16.mxu0 %v5356
      %7815 = vmatpush2.bf16.msra.mxu0 %v5355
      %7816 = vmatprep.mubr.bf16.mxu0 %v1380
      %7817 = vmatmul.mubr.bf16.gmra.mxu0 %v1379
      %v7818 = vpop.f32.mrf.mxu0
      %v7819 = vadd.f32 %v7776, %v7818
      %v7820 = vpop.f32.mrf.mxu0
      %v7821 = vadd.f32 %v7778, %v7820
      %v7822 = vpop.f32.mrf.mxu0
      %v7823 = vadd.f32 %v7780, %v7822
      %v7824 = vpop.f32.mrf.mxu0
      %v7825 = vadd.f32 %v7782, %v7824
      %7826 = vdwg.mxu0
      %7827 = vmatprep.subr.bf16.mxu0 %v5416
      %7828 = vmatpush1.bf16.msra.mxu0 %v5415
      %7829 = vmatprep.subr.bf16.mxu0 %v5412
      %7830 = vmatpush1.bf16.msra.mxu0 %v5411
      %7831 = vmatprep.subr.bf16.mxu0 %v5408
      %7832 = vmatpush1.bf16.msra.mxu0 %v5407
      %7833 = vmatprep.subr.bf16.mxu0 %v5404
      %7834 = vmatpush1.bf16.msra.mxu0 %v5403
      %7835 = vmatprep.subr.bf16.mxu0 %v5400
      %7836 = vmatpush1.bf16.msra.mxu0 %v5399
      %7837 = vmatprep.subr.bf16.mxu0 %v5396
      %7838 = vmatpush1.bf16.msra.mxu0 %v5395
      %7839 = vmatprep.subr.bf16.mxu0 %v5392
      %7840 = vmatpush1.bf16.msra.mxu0 %v5391
      %7841 = vmatprep.subr.bf16.mxu0 %v5388
      %7842 = vmatpush1.bf16.msra.mxu0 %v5387
      %7843 = vmatprep.subr.bf16.mxu0 %v5448
      %7844 = vmatpush2.bf16.msra.mxu0 %v5447
      %7845 = vmatprep.subr.bf16.mxu0 %v5444
      %7846 = vmatpush2.bf16.msra.mxu0 %v5443
      %7847 = vmatprep.subr.bf16.mxu0 %v5440
      %7848 = vmatpush2.bf16.msra.mxu0 %v5439
      %7849 = vmatprep.subr.bf16.mxu0 %v5436
      %7850 = vmatpush2.bf16.msra.mxu0 %v5435
      %7851 = vmatprep.subr.bf16.mxu0 %v5432
      %7852 = vmatpush2.bf16.msra.mxu0 %v5431
      %7853 = vmatprep.subr.bf16.mxu0 %v5428
      %7854 = vmatpush2.bf16.msra.mxu0 %v5427
      %7855 = vmatprep.subr.bf16.mxu0 %v5424
      %7856 = vmatpush2.bf16.msra.mxu0 %v5423
      %7857 = vmatprep.subr.bf16.mxu0 %v5420
      %7858 = vmatpush2.bf16.msra.mxu0 %v5419
      %7859 = vmatprep.mubr.bf16.mxu0 %v1382
      %7860 = vmatmul.mubr.bf16.gmra.mxu0 %v1381
      %v7861 = vpop.f32.mrf.mxu0
      %v7862 = vadd.f32 %v7819, %v7861
      %v7863 = vpop.f32.mrf.mxu0
      %v7864 = vadd.f32 %v7821, %v7863
      %v7865 = vpop.f32.mrf.mxu0
      %v7866 = vadd.f32 %v7823, %v7865
      %v7867 = vpop.f32.mrf.mxu0
      %v7868 = vadd.f32 %v7825, %v7867
      %7869 = vdwg.mxu0
      %7870 = vmatprep.subr.bf16.mxu0 %v5480
      %7871 = vmatpush1.bf16.msra.mxu0 %v5479
      %7872 = vmatprep.subr.bf16.mxu0 %v5476
      %7873 = vmatpush1.bf16.msra.mxu0 %v5475
      %7874 = vmatprep.subr.bf16.mxu0 %v5472
      %7875 = vmatpush1.bf16.msra.mxu0 %v5471
      %7876 = vmatprep.subr.bf16.mxu0 %v5468
      %7877 = vmatpush1.bf16.msra.mxu0 %v5467
      %7878 = vmatprep.subr.bf16.mxu0 %v5464
      %7879 = vmatpush1.bf16.msra.mxu0 %v5463
      %7880 = vmatprep.subr.bf16.mxu0 %v5460
      %7881 = vmatpush1.bf16.msra.mxu0 %v5459
      %7882 = vmatprep.subr.bf16.mxu0 %v5456
      %7883 = vmatpush1.bf16.msra.mxu0 %v5455
      %7884 = vmatprep.subr.bf16.mxu0 %v5452
      %7885 = vmatpush1.bf16.msra.mxu0 %v5451
      %7886 = vmatprep.subr.bf16.mxu0 %v5512
      %7887 = vmatpush2.bf16.msra.mxu0 %v5511
      %7888 = vmatprep.subr.bf16.mxu0 %v5508
      %7889 = vmatpush2.bf16.msra.mxu0 %v5507
      %7890 = vmatprep.subr.bf16.mxu0 %v5504
      %7891 = vmatpush2.bf16.msra.mxu0 %v5503
      %7892 = vmatprep.subr.bf16.mxu0 %v5500
      %7893 = vmatpush2.bf16.msra.mxu0 %v5499
      %7894 = vmatprep.subr.bf16.mxu0 %v5496
      %7895 = vmatpush2.bf16.msra.mxu0 %v5495
      %7896 = vmatprep.subr.bf16.mxu0 %v5492
      %7897 = vmatpush2.bf16.msra.mxu0 %v5491
      %7898 = vmatprep.subr.bf16.mxu0 %v5488
      %7899 = vmatpush2.bf16.msra.mxu0 %v5487
      %7900 = vmatprep.subr.bf16.mxu0 %v5484
      %7901 = vmatpush2.bf16.msra.mxu0 %v5483
      %7902 = vmatprep.mubr.bf16.mxu0 %v1384
      %7903 = vmatmul.mubr.bf16.gmra.mxu0 %v1383
      %v7904 = vpop.f32.mrf.mxu0
      %v7905 = vadd.f32 %v7862, %v7904
      %v7906 = vpop.f32.mrf.mxu0
      %v7907 = vadd.f32 %v7864, %v7906
      %v7908 = vpop.f32.mrf.mxu0
      %v7909 = vadd.f32 %v7866, %v7908
      %v7910 = vpop.f32.mrf.mxu0
      %v7911 = vadd.f32 %v7868, %v7910
      %7912 = vdwg.mxu0
      %v7913 = vlaneseq
      %v7914 = vshrl.u32 %v7913, 7
      %v7915 = vadd.s32 %v7914, 8
      %vm7916 = vcmp.lt.s32.totalorder %v7914, 9
      %vm7917 = vcmp.lt.s32.totalorder %v7915, 9
      %v7918 = vsel %vm7916, 1, 0
      %v7919 = vsel %vm7917, 1, 0
      %v7920 = vcvt.s32.f32 %v7918
      %v7921 = vcvt.s32.f32 %v7919
      %v7922 = vmul.f32 %v7217, %v7920
      %v7923 = vmul.f32 %v7219, %v7920
      %v7924 = vmul.f32 %v7905, %v7920
      %v7925 = vmul.f32 %v7907, %v7920
      %v7926 = vmul.f32 %v7221, %v7921
      %v7927 = vmul.f32 %v7223, %v7921
      %v7928 = vmul.f32 %v7909, %v7921
      %v7929 = vmul.f32 %v7911, %v7921
      %v7930 = vadd.f32 %v7922, %v7926
      %v7931 = vrot.slane %v7930, 4
      %v7932 = vadd.f32 %v7930, %v7931
      %v7933 = vrot.slane %v7932, 2
      %v7934 = vadd.f32 %v7932, %v7933
      %v7935 = vrot.slane %v7934, 1
      %v7936 = vadd.f32 %v7934, %v7935
      %v7937 = vadd.f32 %v7923, %v7927
      %v7938 = vrot.slane %v7937, 4
      %v7939 = vadd.f32 %v7937, %v7938
      %v7940 = vrot.slane %v7939, 2
      %v7941 = vadd.f32 %v7939, %v7940
      %v7942 = vrot.slane %v7941, 1
      %v7943 = vadd.f32 %v7941, %v7942
      %v7944 = vadd.f32 %v7924, %v7928
      %v7945 = vrot.slane %v7944, 4
      %v7946 = vadd.f32 %v7944, %v7945
      %v7947 = vrot.slane %v7946, 2
      %v7948 = vadd.f32 %v7946, %v7947
      %v7949 = vrot.slane %v7948, 1
      %v7950 = vadd.f32 %v7948, %v7949
      %v7951 = vadd.f32 %v7925, %v7929
      %v7952 = vrot.slane %v7951, 4
      %v7953 = vadd.f32 %v7951, %v7952
      %v7954 = vrot.slane %v7953, 2
      %v7955 = vadd.f32 %v7953, %v7954
      %v7956 = vrot.slane %v7955, 1
      %v7957 = vadd.f32 %v7955, %v7956
      %v7958 = vmul.f32 %v7936, 0.11111111
      %v7959 = vmul.f32 %v7943, 0.11111111
      %v7960 = vmul.f32 %v7950, 0.11111111
      %v7961 = vmul.f32 %v7957, 0.11111111
      %v7962 = vsub.f32 %v7217, %v7958
      %v7963 = vsub.f32 %v7219, %v7959
      %v7964 = vsub.f32 %v7905, %v7960
      %v7965 = vsub.f32 %v7907, %v7961
      %v7966 = vsub.f32 %v7221, %v7958
      %v7967 = vsub.f32 %v7223, %v7959
      %v7968 = vsub.f32 %v7909, %v7960
      %v7969 = vsub.f32 %v7911, %v7961
      %v7970 = vmul.f32 %v7920, %v7962
      %v7971 = vmul.f32 %v7920, %v7963
      %v7972 = vmul.f32 %v7920, %v7964
      %v7973 = vmul.f32 %v7920, %v7965
      %v7974 = vmul.f32 %v7921, %v7966
      %v7975 = vmul.f32 %v7921, %v7967
      %v7976 = vmul.f32 %v7921, %v7968
      %v7977 = vmul.f32 %v7921, %v7969
      %v7978 = vmul.f32 %v7970, %v7970
      %v7979 = vmul.f32 %v7971, %v7971
      %v7980 = vmul.f32 %v7972, %v7972
      %v7981 = vmul.f32 %v7973, %v7973
      %v7982 = vmul.f32 %v7974, %v7974
      %v7983 = vmul.f32 %v7975, %v7975
      %v7984 = vmul.f32 %v7976, %v7976
      %v7985 = vmul.f32 %v7977, %v7977
      %v7986 = vadd.f32 %v7978, %v7982
      %v7987 = vrot.slane %v7986, 4
      %v7988 = vadd.f32 %v7986, %v7987
      %v7989 = vrot.slane %v7988, 2
      %v7990 = vadd.f32 %v7988, %v7989
      %v7991 = vrot.slane %v7990, 1
      %v7992 = vadd.f32 %v7990, %v7991
      %v7993 = vadd.f32 %v7979, %v7983
      %v7994 = vrot.slane %v7993, 4
      %v7995 = vadd.f32 %v7993, %v7994
      %v7996 = vrot.slane %v7995, 2
      %v7997 = vadd.f32 %v7995, %v7996
      %v7998 = vrot.slane %v7997, 1
      %v7999 = vadd.f32 %v7997, %v7998
      %v8000 = vadd.f32 %v7980, %v7984
      %v8001 = vrot.slane %v8000, 4
      %v8002 = vadd.f32 %v8000, %v8001
      %v8003 = vrot.slane %v8002, 2
      %v8004 = vadd.f32 %v8002, %v8003
      %v8005 = vrot.slane %v8004, 1
      %v8006 = vadd.f32 %v8004, %v8005
      %v8007 = vadd.f32 %v7981, %v7985
      %v8008 = vrot.slane %v8007, 4
      %v8009 = vadd.f32 %v8007, %v8008
      %v8010 = vrot.slane %v8009, 2
      %v8011 = vadd.f32 %v8009, %v8010
      %v8012 = vrot.slane %v8011, 1
      %v8013 = vadd.f32 %v8011, %v8012
      %v8014 = vmul.f32 %v7992, 0.11111111
      %v8015 = vmul.f32 %v7999, 0.11111111
      %v8016 = vmul.f32 %v8006, 0.11111111
      %v8017 = vmul.f32 %v8013, 0.11111111
      %v8018 = vadd.f32 %v8014, 1e-05
      %v8019 = vadd.f32 %v8015, 1e-05
      %v8020 = vadd.f32 %v8016, 1e-05
      %v8021 = vadd.f32 %v8017, 1e-05
      %v8022 = vrsqrt.pop %v8018
      %v8023 = vrsqrt.pop %v8019
      %v8024 = vrsqrt.pop %v8020
      %v8025 = vrsqrt.pop %v8021
      %v8026 = vmul.f32 %v7962, %v8022
      %v8027 = vmul.f32 %v7963, %v8023
      %v8028 = vmul.f32 %v7964, %v8024
      %v8029 = vmul.f32 %v7965, %v8025
      %v8030 = vmul.f32 %v7966, %v8022
      %v8031 = vmul.f32 %v7967, %v8023
      %v8032 = vmul.f32 %v7968, %v8024
      %v8033 = vmul.f32 %v7969, %v8025
      %v8034 = vmul.f32 %v8026, 0.2
      %v8035 = vmul.f32 %v8027, 0.2
      %v8036 = vmul.f32 %v8028, 0.2
      %v8037 = vmul.f32 %v8029, 0.2
      %v8038 = vmul.f32 %v8030, 0.2
      %v8039 = vmul.f32 %v8031, 0.2
      %v8040 = vmul.f32 %v8032, 0.2
      %v8041 = vmul.f32 %v8033, 0.2
      %v8042 = vmax.f32 %v8026, %v8034
      %v8043 = vmax.f32 %v8027, %v8035
      %v8044 = vmax.f32 %v8028, %v8036
      %v8045 = vmax.f32 %v8029, %v8037
      %v8046 = vmax.f32 %v8030, %v8038
      %v8047 = vmax.f32 %v8031, %v8039
      %v8048 = vmax.f32 %v8032, %v8040
      %v8049 = vmax.f32 %v8033, %v8041
      %8050 = vst [vmem:[%s177] sm:$0xff] %v8042
      %8051 = vst [vmem:[%s177 + $0x8] sm:$0xff] %v8043
      %8052 = vst [vmem:[%s177 + $0x10] sm:$0xff] %v8044
      %8053 = vst [vmem:[%s177 + $0x18] sm:$0xff] %v8045
      %8054 = vst [vmem:[%s177 + $0x20] sm:$0xff] %v8046
      %8055 = vst [vmem:[%s177 + $0x28] sm:$0xff] %v8047
      %8056 = vst [vmem:[%s177 + $0x30] sm:$0xff] %v8048
      %8057 = vst [vmem:[%s177 + $0x38] sm:$0xff] %v8049
      %s8058 = smul.u32 2, %s14
      %p8059 = scmp.lt.s32.totalorder %s8058, 3
      %s8060 = scalar_select %p8059, %s8058, 3
      %s8061 = smul.addr %s8060, 4
      %s8062 = smul.addr %s8061, 8
      %s8063 = scalar_lea.vmem %s3, %s8062
      // Predicated region
      $region33: #{discriminator2d_forward.8} parent=31 // pred_check
        %p8064 = pneg %p100
      $region34: #{discriminator2d_forward.8} parent=31 // pred_check_branch
        %8066 = sbr.rel (%p8064) target = $region36
      $region35: #{discriminator2d_forward.8} parent=31 // pred_region
        %s8067 = smul.u32 2, %s14
      $region36: #{discriminator2d_forward.8} parent=31 // pred_fallthru
        _
    $region32: #{discriminator2d_forward.8} parent=5 // pred_fallthru
      _
    %p8068 = scmp.le.s32.totalorder 2, %s9
    // Predicated region
    $region37: #{discriminator2d_forward.8} parent=5 // pred_check
      %p8069 = pneg %p8068
    $region38: #{discriminator2d_forward.8} parent=5 // pred_check_branch
      %8071 = sbr.rel (%p8069) target = $region40
    $region39: #{discriminator2d_forward.8} parent=5 // pred_region
      %s8072 = ssub.s32 %s9, 2
      // Predicated region
      $region41: #{discriminator2d_forward.8} parent=39 // pred_check
        %p8073 = pneg %p106
      $region42: #{discriminator2d_forward.8} parent=39 // pred_check_branch
        %8075 = sbr.rel (%p8073) target = $region44
      $region43: #{discriminator2d_forward.8} parent=39 // pred_region
        %s8076 = smul.u32 2, %s15
        %p8077 = scmp.lt.s32.totalorder %s8076, 3
        %s8078 = scalar_select %p8077, %s8076, 3
        %s8079 = smul.addr %s8078, 4
        %s8080 = smul.addr %s8079, 8
        %s8081 = scalar_lea.vmem %s3, %s8080
      $region44: #{discriminator2d_forward.8} parent=39 // pred_fallthru
        _
    $region40: #{discriminator2d_forward.8} parent=5 // pred_fallthru
      _
  $region6: #{discriminator2d_forward.8} parent=0 // loop_footer
    %s13 = sadd.s32 1, %s9
  $region7: #{discriminator2d_forward.8} parent=0 // loop_footer_branch
    %8 = sbr.rel target = $region3
  $region8: #{discriminator2d_forward.8} parent=0 // loop_exit
    _

</llo_original>
